<compile_context>
chip_gen: v5e
topology: v5e:2x2
jax: 0.10.0
libtpu: 0.0.40
codegen_flags: <defaults>
</compile_context>

<pallas_src>
import functools
import math

import jax
import jax.numpy as jnp
from jax import lax
from jax.experimental import pallas as pl
from jax.experimental.pallas import tpu as pltpu  # noqa: F401  (TPU backend)

# ----------------------------- model hyper-params -----------------------------
DIM_INPUT = 3
NUM_OUTPUTS = 1
DIM_OUTPUT = 40
NUM_INDS = 8          # small (module default 32)
DIM_HIDDEN = 32       # small (module default 128)
NUM_HEADS = 4
LN = True
N_IT = 1              # sinkhorn iterations
EPS = 1.0             # sinkhorn entropic regularisation (global `eps` in repo)

BATCH = 2
SET_SIZE = 16

DIN_PAD = 32                        # dQ / dK padded to 32 so every matmul is (.,32)x(32,.)
DH = DIM_HIDDEN // NUM_HEADS        # per-head dim (8)
OUT_PAD = 128                       # lane-dense final store width
NUM_BLOCKS = 5                      # enc0.mab0, enc0.mab1, enc1.mab0, enc1.mab1, pma.mab

# --- per-head projection-weight slab ("whd", 8 lanes wide) layout constants ---
W_ROWS_HEAD = DIN_PAD                               # 32 rows per (proj, head) weight
W_ROWS_PROJ = NUM_HEADS * W_ROWS_HEAD               # 128
W_ROWS_BLOCK = 3 * W_ROWS_PROJ                      # 384   (q, k, v)
W_SECTION_A = NUM_BLOCKS * W_ROWS_BLOCK             # 1920  (weights)
B_ROWS_BLOCK = 3 * NUM_HEADS                        # 12    (per-head biases)
WHD_ROWS = W_SECTION_A + NUM_BLOCKS * B_ROWS_BLOCK  # 1980
WHD_ROWS_PAD = ((WHD_ROWS + 7) // 8) * 8            # 1984

# --- fc_o / LN slab ("w32", 32 lanes): per block 32 wo rows + 8 vec rows ---
W32_STRIDE = DIM_HIDDEN + 8                         # 40
# vec rows (offset from +DIM_HIDDEN): 0 bo, 1 ln0_g, 2 ln0_b, 3 ln1_g, 4 ln1_b


# ------------------------------ fully fused kernel -----------------------------
def _fused_kernel(x_ref, ind_ref, whd_ref, w32_ref, dec_ref, out_ref, *,
                  B, N, ln, n_it):
    NH, dh, dV = NUM_HEADS, DH, DIM_HIDDEN

    def lse(x, axis):
        m = jnp.max(x, axis=axis, keepdims=True)
        return m + jnp.log(jnp.sum(jnp.exp(x - m), axis=axis, keepdims=True))

    def layernorm(x, g, b):
        mu = jnp.mean(x, axis=-1, keepdims=True)
        var = jnp.mean((x - mu) ** 2, axis=-1, keepdims=True)
        return (x - mu) * lax.rsqrt(var + 1e-5) * g + b

    def proj_heads(rows, bi, p):
        """rows (R, DIN_PAD) -> per-head projections stacked as (NH, R, dh).
        Per-head weights were sliced HOST-side, so no in-kernel lane slices."""
        wbase = bi * W_ROWS_BLOCK + p * W_ROWS_PROJ
        bbase = W_SECTION_A + bi * B_ROWS_BLOCK + p * NUM_HEADS
        outs = []
        for h in range(NH):
            w = whd_ref[wbase + h * W_ROWS_HEAD: wbase + (h + 1) * W_ROWS_HEAD, :]
            b = whd_ref[bbase + h: bbase + h + 1, :]
            outs.append(jnp.dot(rows, w, preferred_element_type=jnp.float32) + b)
        return jnp.stack(outs, axis=0)

    def rows2d(t3):
        """(B, Nq, d) -> (B*Nq, d).  Tile-aligned reshape when Nq % 8 == 0,
        tiny sublane-concat fallback for the PMA seed (Nq = 1)."""
        b_, n_, d_ = t3.shape
        if n_ % 8 == 0:
            return t3.reshape(b_ * n_, d_)
        return jnp.concatenate([t3[i] for i in range(b_)], axis=0)

    def mab(Qx, Kx, bi, Nq, Nk, shared_q):
        """MABSINK block.  Qx: (Nq, 32) if shared_q else (B*Nq, 32); Kx: (B*Nk, 32).
        Returns (B*Nq, dV)."""
        qh = proj_heads(Qx, bi, 0)                       # (NH, Rq, dh)
        kh = proj_heads(Kx, bi, 1)                       # (NH, B*Nk, dh)  scale folded in
        vh = proj_heads(Kx, bi, 2)                       # (NH, B*Nk, dh)

        # head-major batch dim (index = h*B + b); reshapes are tile-aligned splits/merges
        kh = kh.reshape(NH * B, Nk, dh)
        vh = vh.reshape(NH * B, Nk, dh)
        if shared_q:
            qh = jnp.broadcast_to(qh[:, None], (NH, B, Nq, dh)).reshape(NH * B, Nq, dh)
        else:
            qh = qh.reshape(NH * B, Nq, dh)

        # one batched score matmul per block; 1/(sqrt(dV)*eps) already in k
        M = jnp.einsum('bqd,bkd->bqk', qh, kh, preferred_element_type=jnp.float32)

        # peeled incremental Sinkhorn (u/w carried inside M, independent of eps here)
        log_mu = math.log(1.0 / Nq + 1e-8)
        log_nu = math.log(1.0 / Nk + 1e-8)
        for it in range(n_it):
            M = M + (log_mu - lse(M, -1))
            c = log_nu + (math.log(Nq) if it == n_it - 1 else 0.0)  # fold A*Nq rescale
            M = M + (c - lse(M, -2))
        A = jnp.exp(M)                                   # (NH*B, Nq, Nk)

        av = jnp.einsum('bqk,bkd->bqd', A, vh, preferred_element_type=jnp.float32)
        obh = qh + av                                    # per-head residual (Q_ + A.bmm(V_))

        # merge heads back to lanes, batch back to rows
        O = jnp.concatenate([obh[h * B:(h + 1) * B] for h in range(NH)], axis=-1)
        O = rows2d(O)                                    # (B*Nq, dV)

        r = bi * W32_STRIDE
        wo = w32_ref[r: r + dV, :]
        bo = w32_ref[r + dV + 0: r + dV + 1, :]
        g0 = w32_ref[r + dV + 1: r + dV + 2, :]
        b0 = w32_ref[r + dV + 2: r + dV + 3, :]
        g1 = w32_ref[r + dV + 3: r + dV + 4, :]
        b1 = w32_ref[r + dV + 4: r + dV + 5, :]

        if ln:
            O = layernorm(O, g0, b0)
        O = O + jnp.maximum(jnp.dot(O, wo, preferred_element_type=jnp.float32) + bo, 0.0)
        if ln:
            O = layernorm(O, g1, b1)
        return O

    X = x_ref[...]                                       # (B*N, 32) zero-padded features
    I0 = ind_ref[0:NUM_INDS, :]
    I1 = ind_ref[NUM_INDS:2 * NUM_INDS, :]
    S = ind_ref[2 * NUM_INDS:2 * NUM_INDS + NUM_OUTPUTS, :]

    # ---- encoder: two ISABSINK blocks ----
    H0 = mab(I0, X, 0, NUM_INDS, N, True)                # (B*num_inds, dV)
    Y0 = mab(X, H0, 1, N, NUM_INDS, False)               # (B*N, dV)
    H1 = mab(I1, Y0, 2, NUM_INDS, N, True)
    Y1 = mab(Y0, H1, 3, N, NUM_INDS, False)
    # ---- decoder: Dropout -> PMASINK -> Dropout -> Linear ----
    # TODO(synk): nn.Dropout has no deterministic in-kernel equivalent; eval-mode identity.
    Z = mab(S, Y1, 4, NUM_OUTPUTS, N, True)              # (B, dV)

    dec_w = dec_ref[0:dV, :]                             # (32, OUT_PAD)
    dec_b = dec_ref[dV:dV + 1, :]                        # (1, OUT_PAD)
    out_ref[...] = jnp.dot(Z, dec_w, preferred_element_type=jnp.float32) + dec_b


# ----------------------------------- wrapper -----------------------------------
def model_net_sink(X, params):
    """Full ModelNetSink forward in one Pallas launch."""
    B, N, dI = X.shape
    x_pad = jnp.zeros((B * N, DIN_PAD), jnp.float32).at[:, :dI].set(
        X.reshape(B * N, dI))
    kern = functools.partial(_fused_kernel, B=B, N=N, ln=LN, n_it=N_IT)
    out_pad = pl.pallas_call(
        kern,
        out_shape=jax.ShapeDtypeStruct((B * NUM_OUTPUTS, OUT_PAD), jnp.float32),
    )(x_pad, params["ind"], params["whd"], params["w32"], params["dec"])
    out = out_pad[:, :DIM_OUTPUT].reshape(B, NUM_OUTPUTS, DIM_OUTPUT)
    return jnp.squeeze(out)                              # .squeeze() as in torch


# --------------------------------- parameter init ------------------------------
def _xavier(key, shape):
    fan_in, fan_out = shape[-1], shape[-2]
    lim = math.sqrt(6.0 / (fan_in + fan_out))
    return jax.random.uniform(key, shape, jnp.float32, -lim, lim)


def _init_linear(key, din, dout):
    k1, k2 = jax.random.split(key)
    lim = 1.0 / math.sqrt(din)
    w = jax.random.uniform(k1, (din, dout), jnp.float32, -lim, lim)
    b = jax.random.uniform(k2, (1, dout), jnp.float32, -lim, lim)
    return w, b


def init_model(key):
    ks = jax.random.split(key, 9)
    scale = (1.0 / math.sqrt(DIM_HIDDEN)) / EPS          # folded into k projection

    def mab_raw(k, dQ, dK):
        kk = jax.random.split(k, 4)
        wq, bq = _init_linear(kk[0], dQ, DIM_HIDDEN)
        wk, bk = _init_linear(kk[1], dK, DIM_HIDDEN)
        wv, bv = _init_linear(kk[2], dK, DIM_HIDDEN)
        wo, bo = _init_linear(kk[3], DIM_HIDDEN, DIM_HIDDEN)
        return dict(wq=wq, bq=bq, wk=wk * scale, bk=bk * scale,
                    wv=wv, bv=bv, wo=wo, bo=bo)

    raw = [
        mab_raw(ks[1], DIM_HIDDEN, DIM_INPUT),    # enc0.mab0  (Q = inducing points)
        mab_raw(ks[2], DIM_INPUT, DIM_HIDDEN),    # enc0.mab1  (Q = X)
        mab_raw(ks[4], DIM_HIDDEN, DIM_HIDDEN),   # enc1.mab0
        mab_raw(ks[5], DIM_HIDDEN, DIM_HIDDEN),   # enc1.mab1
        mab_raw(ks[7], DIM_HIDDEN, DIM_HIDDEN),   # dec.pma.mab
    ]

    def pad_in(w):
        out = jnp.zeros((DIN_PAD, DIM_HIDDEN), jnp.float32)
        return out.at[:w.shape[0], :].set(w)

    # --- whd slab: per-(block, proj, head) weights then per-head biases (8 lanes) ---
    wsec, bsec = [], []
    for blk in raw:
        for (w, b) in ((blk["wq"], blk["bq"]),
                       (blk["wk"], blk["bk"]),
                       (blk["wv"], blk["bv"])):
            wp = pad_in(w)
            for h in range(NUM_HEADS):
                wsec.append(wp[:, h * DH:(h + 1) * DH])      # (32, 8)
                bsec.append(b[:, h * DH:(h + 1) * DH])       # (1, 8)
    whd = jnp.concatenate(wsec + bsec, axis=0)
    whd = jnp.concatenate(
        [whd, jnp.zeros((WHD_ROWS_PAD - WHD_ROWS, DH), jnp.float32)], axis=0)
    assert whd.shape == (WHD_ROWS_PAD, DH)

    # --- w32 slab: per-block fc_o weight + [bo, ln0_g, ln0_b, ln1_g, ln1_b] ---
    ones = jnp.ones((1, DIM_HIDDEN), jnp.float32)
    zeros = jnp.zeros((1, DIM_HIDDEN), jnp.float32)
    rows = []
    for blk in raw:
        rows += [blk["wo"], blk["bo"], ones, zeros, ones, zeros,
                 jnp.zeros((3, DIM_HIDDEN), jnp.float32)]
    w32 = jnp.concatenate(rows, axis=0)
    assert w32.shape == (NUM_BLOCKS * W32_STRIDE, DIM_HIDDEN)

    # --- inducing points / PMA seed slab ---
    ind = jnp.zeros((24, DIM_HIDDEN), jnp.float32)
    ind = ind.at[0:NUM_INDS].set(_xavier(ks[0], (NUM_INDS, DIM_HIDDEN)))
    ind = ind.at[NUM_INDS:2 * NUM_INDS].set(_xavier(ks[3], (NUM_INDS, DIM_HIDDEN)))
    ind = ind.at[2 * NUM_INDS:2 * NUM_INDS + NUM_OUTPUTS].set(
        _xavier(ks[6], (NUM_OUTPUTS, DIM_HIDDEN)))

    # --- decoder Linear, lane-dense padded to OUT_PAD lanes ---
    dec_w, dec_b = _init_linear(ks[8], DIM_HIDDEN, DIM_OUTPUT)
    dec = jnp.zeros((40, OUT_PAD), jnp.float32)
    dec = dec.at[0:DIM_HIDDEN, 0:DIM_OUTPUT].set(dec_w)
    dec = dec.at[DIM_HIDDEN, 0:DIM_OUTPUT].set(dec_b[0])

    return dict(ind=ind, whd=whd, w32=w32, dec=dec)


# ------------------------------------ main -------------------------------------
if __name__ == "__main__":
    key = jax.random.PRNGKey(0)
    k_param, k_x = jax.random.split(key)
    params = init_model(k_param)
    X = jax.random.normal(k_x, (BATCH, SET_SIZE, DIM_INPUT), jnp.float32)

    out = jax.jit(model_net_sink)(X, params)
    out = jax.block_until_ready(out)
    assert out.shape == (BATCH, DIM_OUTPUT), out.shape
    assert bool(jnp.all(jnp.isfinite(out)))
    print("KERNEL_OK")
</pallas_src>

<mosaic_0001>
module attributes {stable_mosaic.version = 11 : i64} {
  func.func @_fused_kernel(%arg0: memref<32x32xf32, #tpu.memory_space<vmem>>, %arg1: memref<24x32xf32, #tpu.memory_space<vmem>>, %arg2: memref<1984x8xf32, #tpu.memory_space<vmem>>, %arg3: memref<200x32xf32, #tpu.memory_space<vmem>>, %arg4: memref<40x128xf32, #tpu.memory_space<vmem>>, %arg5: memref<2x128xf32, #tpu.memory_space<vmem>>) attributes {dimension_semantics = [], scalar_prefetch = 0 : i64, scratch_operands = 0 : i64, tpu.core_type = #tpu.core_type<tc>} {
    %c0 = arith.constant 0 : index
    %c0_0 = arith.constant 0 : index
    %0 = vector.load %arg0[%c0, %c0_0] : memref<32x32xf32, #tpu.memory_space<vmem>>, vector<32x32xf32>
    %c0_1 = arith.constant 0 : index
    %c0_2 = arith.constant 0 : index
    %1 = vector.load %arg1[%c0_1, %c0_2] : memref<24x32xf32, #tpu.memory_space<vmem>>, vector<8x32xf32>
    %c8 = arith.constant 8 : index
    %c0_3 = arith.constant 0 : index
    %2 = vector.load %arg1[%c8, %c0_3] : memref<24x32xf32, #tpu.memory_space<vmem>>, vector<8x32xf32>
    %c16 = arith.constant 16 : index
    %c0_4 = arith.constant 0 : index
    %3 = vector.load %arg1[%c16, %c0_4] : memref<24x32xf32, #tpu.memory_space<vmem>>, vector<1x32xf32>
    %c0_5 = arith.constant 0 : index
    %c0_6 = arith.constant 0 : index
    %4 = vector.load %arg2[%c0_5, %c0_6] : memref<1984x8xf32, #tpu.memory_space<vmem>>, vector<32x8xf32>
    %c1920 = arith.constant 1920 : index
    %c0_7 = arith.constant 0 : index
    %5 = vector.load %arg2[%c1920, %c0_7] : memref<1984x8xf32, #tpu.memory_space<vmem>>, vector<1x8xf32>
    %cst = arith.constant dense<0.000000e+00> : vector<8x8xf32>
    %6 = tpu.matmul %1, %4, %cst {dimension_numbers = #tpu.dot_dimension_numbers<[1], [0], [0], [1], [0, 0, 1, 1], [], []>} : vector<8x32xf32>, vector<32x8xf32>, vector<8x8xf32> -> vector<8x8xf32>
    %7 = vector.broadcast %5 : vector<1x8xf32> to vector<8x8xf32>
    %8 = arith.addf %6, %7 : vector<8x8xf32>
    %c32 = arith.constant 32 : index
    %c0_8 = arith.constant 0 : index
    %9 = vector.load %arg2[%c32, %c0_8] : memref<1984x8xf32, #tpu.memory_space<vmem>>, vector<32x8xf32>
    %c1921 = arith.constant 1921 : index
    %c0_9 = arith.constant 0 : index
    %10 = vector.load %arg2[%c1921, %c0_9] : memref<1984x8xf32, #tpu.memory_space<vmem>>, vector<1x8xf32>
    %cst_10 = arith.constant dense<0.000000e+00> : vector<8x8xf32>
    %11 = tpu.matmul %1, %9, %cst_10 {dimension_numbers = #tpu.dot_dimension_numbers<[1], [0], [0], [1], [0, 0, 1, 1], [], []>} : vector<8x32xf32>, vector<32x8xf32>, vector<8x8xf32> -> vector<8x8xf32>
    %12 = vector.broadcast %10 : vector<1x8xf32> to vector<8x8xf32>
    %13 = arith.addf %11, %12 : vector<8x8xf32>
    %c64 = arith.constant 64 : index
    %c0_11 = arith.constant 0 : index
    %14 = vector.load %arg2[%c64, %c0_11] : memref<1984x8xf32, #tpu.memory_space<vmem>>, vector<32x8xf32>
    %c1922 = arith.constant 1922 : index
    %c0_12 = arith.constant 0 : index
    %15 = vector.load %arg2[%c1922, %c0_12] : memref<1984x8xf32, #tpu.memory_space<vmem>>, vector<1x8xf32>
    %cst_13 = arith.constant dense<0.000000e+00> : vector<8x8xf32>
    %16 = tpu.matmul %1, %14, %cst_13 {dimension_numbers = #tpu.dot_dimension_numbers<[1], [0], [0], [1], [0, 0, 1, 1], [], []>} : vector<8x32xf32>, vector<32x8xf32>, vector<8x8xf32> -> vector<8x8xf32>
    %17 = vector.broadcast %15 : vector<1x8xf32> to vector<8x8xf32>
    %18 = arith.addf %16, %17 : vector<8x8xf32>
    %c96 = arith.constant 96 : index
    %c0_14 = arith.constant 0 : index
    %19 = vector.load %arg2[%c96, %c0_14] : memref<1984x8xf32, #tpu.memory_space<vmem>>, vector<32x8xf32>
    %c1923 = arith.constant 1923 : index
    %c0_15 = arith.constant 0 : index
    %20 = vector.load %arg2[%c1923, %c0_15] : memref<1984x8xf32, #tpu.memory_space<vmem>>, vector<1x8xf32>
    %cst_16 = arith.constant dense<0.000000e+00> : vector<8x8xf32>
    %21 = tpu.matmul %1, %19, %cst_16 {dimension_numbers = #tpu.dot_dimension_numbers<[1], [0], [0], [1], [0, 0, 1, 1], [], []>} : vector<8x32xf32>, vector<32x8xf32>, vector<8x8xf32> -> vector<8x8xf32>
    %22 = vector.broadcast %20 : vector<1x8xf32> to vector<8x8xf32>
    %23 = arith.addf %21, %22 : vector<8x8xf32>
    %24 = vector.shape_cast %8 : vector<8x8xf32> to vector<1x8x8xf32>
    %25 = vector.shape_cast %13 : vector<8x8xf32> to vector<1x8x8xf32>
    %26 = vector.shape_cast %18 : vector<8x8xf32> to vector<1x8x8xf32>
    %27 = vector.shape_cast %23 : vector<8x8xf32> to vector<1x8x8xf32>
    %28 = tpu.concatenate %24, %25, %26, %27 in 0 : vector<1x8x8xf32>, vector<1x8x8xf32>, vector<1x8x8xf32>, vector<1x8x8xf32> -> vector<4x8x8xf32>
    %c128 = arith.constant 128 : index
    %c0_17 = arith.constant 0 : index
    %29 = vector.load %arg2[%c128, %c0_17] : memref<1984x8xf32, #tpu.memory_space<vmem>>, vector<32x8xf32>
    %c1924 = arith.constant 1924 : index
    %c0_18 = arith.constant 0 : index
    %30 = vector.load %arg2[%c1924, %c0_18] : memref<1984x8xf32, #tpu.memory_space<vmem>>, vector<1x8xf32>
    %cst_19 = arith.constant dense<0.000000e+00> : vector<32x8xf32>
    %31 = tpu.matmul %0, %29, %cst_19 {dimension_numbers = #tpu.dot_dimension_numbers<[1], [0], [0], [1], [0, 0, 1, 1], [], []>} : vector<32x32xf32>, vector<32x8xf32>, vector<32x8xf32> -> vector<32x8xf32>
    %32 = vector.broadcast %30 : vector<1x8xf32> to vector<32x8xf32>
    %33 = arith.addf %31, %32 : vector<32x8xf32>
    %c160 = arith.constant 160 : index
    %c0_20 = arith.constant 0 : index
    %34 = vector.load %arg2[%c160, %c0_20] : memref<1984x8xf32, #tpu.memory_space<vmem>>, vector<32x8xf32>
    %c1925 = arith.constant 1925 : index
    %c0_21 = arith.constant 0 : index
    %35 = vector.load %arg2[%c1925, %c0_21] : memref<1984x8xf32, #tpu.memory_space<vmem>>, vector<1x8xf32>
    %cst_22 = arith.constant dense<0.000000e+00> : vector<32x8xf32>
    %36 = tpu.matmul %0, %34, %cst_22 {dimension_numbers = #tpu.dot_dimension_numbers<[1], [0], [0], [1], [0, 0, 1, 1], [], []>} : vector<32x32xf32>, vector<32x8xf32>, vector<32x8xf32> -> vector<32x8xf32>
    %37 = vector.broadcast %35 : vector<1x8xf32> to vector<32x8xf32>
    %38 = arith.addf %36, %37 : vector<32x8xf32>
    %c192 = arith.constant 192 : index
    %c0_23 = arith.constant 0 : index
    %39 = vector.load %arg2[%c192, %c0_23] : memref<1984x8xf32, #tpu.memory_space<vmem>>, vector<32x8xf32>
    %c1926 = arith.constant 1926 : index
    %c0_24 = arith.constant 0 : index
    %40 = vector.load %arg2[%c1926, %c0_24] : memref<1984x8xf32, #tpu.memory_space<vmem>>, vector<1x8xf32>
    %cst_25 = arith.constant dense<0.000000e+00> : vector<32x8xf32>
    %41 = tpu.matmul %0, %39, %cst_25 {dimension_numbers = #tpu.dot_dimension_numbers<[1], [0], [0], [1], [0, 0, 1, 1], [], []>} : vector<32x32xf32>, vector<32x8xf32>, vector<32x8xf32> -> vector<32x8xf32>
    %42 = vector.broadcast %40 : vector<1x8xf32> to vector<32x8xf32>
    %43 = arith.addf %41, %42 : vector<32x8xf32>
    %c224 = arith.constant 224 : index
    %c0_26 = arith.constant 0 : index
    %44 = vector.load %arg2[%c224, %c0_26] : memref<1984x8xf32, #tpu.memory_space<vmem>>, vector<32x8xf32>
    %c1927 = arith.constant 1927 : index
    %c0_27 = arith.constant 0 : index
    %45 = vector.load %arg2[%c1927, %c0_27] : memref<1984x8xf32, #tpu.memory_space<vmem>>, vector<1x8xf32>
    %cst_28 = arith.constant dense<0.000000e+00> : vector<32x8xf32>
    %46 = tpu.matmul %0, %44, %cst_28 {dimension_numbers = #tpu.dot_dimension_numbers<[1], [0], [0], [1], [0, 0, 1, 1], [], []>} : vector<32x32xf32>, vector<32x8xf32>, vector<32x8xf32> -> vector<32x8xf32>
    %47 = vector.broadcast %45 : vector<1x8xf32> to vector<32x8xf32>
    %48 = arith.addf %46, %47 : vector<32x8xf32>
    %49 = vector.shape_cast %33 : vector<32x8xf32> to vector<1x32x8xf32>
    %50 = vector.shape_cast %38 : vector<32x8xf32> to vector<1x32x8xf32>
    %51 = vector.shape_cast %43 : vector<32x8xf32> to vector<1x32x8xf32>
    %52 = vector.shape_cast %48 : vector<32x8xf32> to vector<1x32x8xf32>
    %53 = tpu.concatenate %49, %50, %51, %52 in 0 : vector<1x32x8xf32>, vector<1x32x8xf32>, vector<1x32x8xf32>, vector<1x32x8xf32> -> vector<4x32x8xf32>
    %c256 = arith.constant 256 : index
    %c0_29 = arith.constant 0 : index
    %54 = vector.load %arg2[%c256, %c0_29] : memref<1984x8xf32, #tpu.memory_space<vmem>>, vector<32x8xf32>
    %c1928 = arith.constant 1928 : index
    %c0_30 = arith.constant 0 : index
    %55 = vector.load %arg2[%c1928, %c0_30] : memref<1984x8xf32, #tpu.memory_space<vmem>>, vector<1x8xf32>
    %cst_31 = arith.constant dense<0.000000e+00> : vector<32x8xf32>
    %56 = tpu.matmul %0, %54, %cst_31 {dimension_numbers = #tpu.dot_dimension_numbers<[1], [0], [0], [1], [0, 0, 1, 1], [], []>} : vector<32x32xf32>, vector<32x8xf32>, vector<32x8xf32> -> vector<32x8xf32>
    %57 = vector.broadcast %55 : vector<1x8xf32> to vector<32x8xf32>
    %58 = arith.addf %56, %57 : vector<32x8xf32>
    %c288 = arith.constant 288 : index
    %c0_32 = arith.constant 0 : index
    %59 = vector.load %arg2[%c288, %c0_32] : memref<1984x8xf32, #tpu.memory_space<vmem>>, vector<32x8xf32>
    %c1929 = arith.constant 1929 : index
    %c0_33 = arith.constant 0 : index
    %60 = vector.load %arg2[%c1929, %c0_33] : memref<1984x8xf32, #tpu.memory_space<vmem>>, vector<1x8xf32>
    %cst_34 = arith.constant dense<0.000000e+00> : vector<32x8xf32>
    %61 = tpu.matmul %0, %59, %cst_34 {dimension_numbers = #tpu.dot_dimension_numbers<[1], [0], [0], [1], [0, 0, 1, 1], [], []>} : vector<32x32xf32>, vector<32x8xf32>, vector<32x8xf32> -> vector<32x8xf32>
    %62 = vector.broadcast %60 : vector<1x8xf32> to vector<32x8xf32>
    %63 = arith.addf %61, %62 : vector<32x8xf32>
    %c320 = arith.constant 320 : index
    %c0_35 = arith.constant 0 : index
    %64 = vector.load %arg2[%c320, %c0_35] : memref<1984x8xf32, #tpu.memory_space<vmem>>, vector<32x8xf32>
    %c1930 = arith.constant 1930 : index
    %c0_36 = arith.constant 0 : index
    %65 = vector.load %arg2[%c1930, %c0_36] : memref<1984x8xf32, #tpu.memory_space<vmem>>, vector<1x8xf32>
    %cst_37 = arith.constant dense<0.000000e+00> : vector<32x8xf32>
    %66 = tpu.matmul %0, %64, %cst_37 {dimension_numbers = #tpu.dot_dimension_numbers<[1], [0], [0], [1], [0, 0, 1, 1], [], []>} : vector<32x32xf32>, vector<32x8xf32>, vector<32x8xf32> -> vector<32x8xf32>
    %67 = vector.broadcast %65 : vector<1x8xf32> to vector<32x8xf32>
    %68 = arith.addf %66, %67 : vector<32x8xf32>
    %c352 = arith.constant 352 : index
    %c0_38 = arith.constant 0 : index
    %69 = vector.load %arg2[%c352, %c0_38] : memref<1984x8xf32, #tpu.memory_space<vmem>>, vector<32x8xf32>
    %c1931 = arith.constant 1931 : index
    %c0_39 = arith.constant 0 : index
    %70 = vector.load %arg2[%c1931, %c0_39] : memref<1984x8xf32, #tpu.memory_space<vmem>>, vector<1x8xf32>
    %cst_40 = arith.constant dense<0.000000e+00> : vector<32x8xf32>
    %71 = tpu.matmul %0, %69, %cst_40 {dimension_numbers = #tpu.dot_dimension_numbers<[1], [0], [0], [1], [0, 0, 1, 1], [], []>} : vector<32x32xf32>, vector<32x8xf32>, vector<32x8xf32> -> vector<32x8xf32>
    %72 = vector.broadcast %70 : vector<1x8xf32> to vector<32x8xf32>
    %73 = arith.addf %71, %72 : vector<32x8xf32>
    %74 = vector.shape_cast %58 : vector<32x8xf32> to vector<1x32x8xf32>
    %75 = vector.shape_cast %63 : vector<32x8xf32> to vector<1x32x8xf32>
    %76 = vector.shape_cast %68 : vector<32x8xf32> to vector<1x32x8xf32>
    %77 = vector.shape_cast %73 : vector<32x8xf32> to vector<1x32x8xf32>
    %78 = tpu.concatenate %74, %75, %76, %77 in 0 : vector<1x32x8xf32>, vector<1x32x8xf32>, vector<1x32x8xf32>, vector<1x32x8xf32> -> vector<4x32x8xf32>
    %79 = vector.shape_cast %53 : vector<4x32x8xf32> to vector<8x16x8xf32>
    %80 = vector.shape_cast %78 : vector<4x32x8xf32> to vector<8x16x8xf32>
    %81 = vector.shape_cast %28 : vector<4x8x8xf32> to vector<4x1x8x8xf32>
    %82 = vector.shape_cast %81 : vector<4x1x8x8xf32> to vector<4x1x8x8xf32>
    %83 = vector.broadcast %82 : vector<4x1x8x8xf32> to vector<4x2x8x8xf32>
    %84 = vector.shape_cast %83 : vector<4x2x8x8xf32> to vector<8x8x8xf32>
    "tpu.trace_start"() <{level = 10 : i32, message = "bqd,bkd->bqk"}> : () -> ()
    %cst_41 = arith.constant dense<0.000000e+00> : vector<8x8x16xf32>
    %85 = tpu.matmul %84, %79, %cst_41 {dimension_numbers = #tpu.dot_dimension_numbers<[2], [2], [1], [1], [0, 0, 0, 1, 1, 1], [0], [0]>} : vector<8x8x8xf32>, vector<8x16x8xf32>, vector<8x8x16xf32> -> vector<8x8x16xf32>
    "tpu.trace_stop"() : () -> ()
    %cst_42 = arith.constant dense<0xFF800000> : vector<8x8xf32>
    %86 = vector.multi_reduction <maximumf>, %85, %cst_42 [2] : vector<8x8x16xf32> to vector<8x8xf32>
    %87 = vector.shape_cast %86 : vector<8x8xf32> to vector<8x8x1xf32>
    %88 = vector.broadcast %87 : vector<8x8x1xf32> to vector<8x8x16xf32>
    %89 = arith.subf %85, %88 : vector<8x8x16xf32>
    %90 = math.exp %89 : vector<8x8x16xf32>
    %cst_43 = arith.constant dense<0.000000e+00> : vector<8x8xf32>
    %91 = vector.multi_reduction <add>, %90, %cst_43 [2] : vector<8x8x16xf32> to vector<8x8xf32>
    %92 = vector.shape_cast %91 : vector<8x8xf32> to vector<8x8x1xf32>
    %93 = math.log %92 : vector<8x8x1xf32>
    %94 = arith.addf %87, %93 : vector<8x8x1xf32>
    %cst_44 = arith.constant -2.07944155 : f32
    %95 = vector.broadcast %cst_44 : f32 to vector<8x8x1xf32>
    %96 = arith.subf %95, %94 : vector<8x8x1xf32>
    %97 = vector.broadcast %96 : vector<8x8x1xf32> to vector<8x8x16xf32>
    %98 = arith.addf %85, %97 : vector<8x8x16xf32>
    %cst_45 = arith.constant dense<0xFF800000> : vector<8x16xf32>
    %99 = vector.multi_reduction <maximumf>, %98, %cst_45 [1] : vector<8x8x16xf32> to vector<8x16xf32>
    %100 = vector.shape_cast %99 : vector<8x16xf32> to vector<8x1x16xf32>
    %101 = vector.broadcast %100 : vector<8x1x16xf32> to vector<8x8x16xf32>
    %102 = arith.subf %98, %101 : vector<8x8x16xf32>
    %103 = math.exp %102 : vector<8x8x16xf32>
    %cst_46 = arith.constant dense<0.000000e+00> : vector<8x16xf32>
    %104 = vector.multi_reduction <add>, %103, %cst_46 [1] : vector<8x8x16xf32> to vector<8x16xf32>
    %105 = vector.shape_cast %104 : vector<8x16xf32> to vector<8x1x16xf32>
    %106 = math.log %105 : vector<8x1x16xf32>
    %107 = arith.addf %100, %106 : vector<8x1x16xf32>
    %cst_47 = arith.constant -6.931470e-01 : f32
    %108 = vector.broadcast %cst_47 : f32 to vector<8x1x16xf32>
    %109 = arith.subf %108, %107 : vector<8x1x16xf32>
    %110 = vector.broadcast %109 : vector<8x1x16xf32> to vector<8x8x16xf32>
    %111 = arith.addf %98, %110 : vector<8x8x16xf32>
    %112 = math.exp %111 : vector<8x8x16xf32>
    "tpu.trace_start"() <{level = 10 : i32, message = "bqk,bkd->bqd"}> : () -> ()
    %cst_48 = arith.constant dense<0.000000e+00> : vector<8x8x8xf32>
    %113 = tpu.matmul %112, %80, %cst_48 {dimension_numbers = #tpu.dot_dimension_numbers<[2], [1], [1], [2], [0, 0, 0, 1, 1, 2], [0], [0]>} : vector<8x8x16xf32>, vector<8x16x8xf32>, vector<8x8x8xf32> -> vector<8x8x8xf32>
    "tpu.trace_stop"() : () -> ()
    %114 = arith.addf %84, %113 : vector<8x8x8xf32>
    %115 = vector.extract_strided_slice %114 {offsets = [0, 0, 0], sizes = [2, 8, 8], strides = [1, 1, 1]} : vector<8x8x8xf32> to vector<2x8x8xf32>
    %116 = vector.extract_strided_slice %114 {offsets = [2, 0, 0], sizes = [2, 8, 8], strides = [1, 1, 1]} : vector<8x8x8xf32> to vector<2x8x8xf32>
    %117 = vector.extract_strided_slice %114 {offsets = [4, 0, 0], sizes = [2, 8, 8], strides = [1, 1, 1]} : vector<8x8x8xf32> to vector<2x8x8xf32>
    %118 = vector.extract_strided_slice %114 {offsets = [6, 0, 0], sizes = [2, 8, 8], strides = [1, 1, 1]} : vector<8x8x8xf32> to vector<2x8x8xf32>
    %119 = tpu.concatenate %115, %116, %117, %118 in 2 : vector<2x8x8xf32>, vector<2x8x8xf32>, vector<2x8x8xf32>, vector<2x8x8xf32> -> vector<2x8x32xf32>
    %120 = vector.shape_cast %119 : vector<2x8x32xf32> to vector<16x32xf32>
    %c0_49 = arith.constant 0 : index
    %c0_50 = arith.constant 0 : index
    %121 = vector.load %arg3[%c0_49, %c0_50] : memref<200x32xf32, #tpu.memory_space<vmem>>, vector<32x32xf32>
    %c32_51 = arith.constant 32 : index
    %c0_52 = arith.constant 0 : index
    %122 = vector.load %arg3[%c32_51, %c0_52] : memref<200x32xf32, #tpu.memory_space<vmem>>, vector<1x32xf32>
    %c33 = arith.constant 33 : index
    %c0_53 = arith.constant 0 : index
    %123 = vector.load %arg3[%c33, %c0_53] : memref<200x32xf32, #tpu.memory_space<vmem>>, vector<1x32xf32>
    %c34 = arith.constant 34 : index
    %c0_54 = arith.constant 0 : index
    %124 = vector.load %arg3[%c34, %c0_54] : memref<200x32xf32, #tpu.memory_space<vmem>>, vector<1x32xf32>
    %c35 = arith.constant 35 : index
    %c0_55 = arith.constant 0 : index
    %125 = vector.load %arg3[%c35, %c0_55] : memref<200x32xf32, #tpu.memory_space<vmem>>, vector<1x32xf32>
    %c36 = arith.constant 36 : index
    %c0_56 = arith.constant 0 : index
    %126 = vector.load %arg3[%c36, %c0_56] : memref<200x32xf32, #tpu.memory_space<vmem>>, vector<1x32xf32>
    %cst_57 = arith.constant dense<0.000000e+00> : vector<16xf32>
    %127 = vector.multi_reduction <add>, %120, %cst_57 [1] : vector<16x32xf32> to vector<16xf32>
    %128 = vector.shape_cast %127 : vector<16xf32> to vector<16x1xf32>
    %cst_58 = arith.constant 3.200000e+01 : f32
    %129 = vector.broadcast %cst_58 : f32 to vector<16x1xf32>
    %130 = arith.divf %128, %129 : vector<16x1xf32>
    %131 = vector.broadcast %130 : vector<16x1xf32> to vector<16x32xf32>
    %132 = arith.subf %120, %131 : vector<16x32xf32>
    %133 = arith.mulf %132, %132 : vector<16x32xf32>
    %cst_59 = arith.constant dense<0.000000e+00> : vector<16xf32>
    %134 = vector.multi_reduction <add>, %133, %cst_59 [1] : vector<16x32xf32> to vector<16xf32>
    %135 = vector.shape_cast %134 : vector<16xf32> to vector<16x1xf32>
    %cst_60 = arith.constant 3.200000e+01 : f32
    %136 = vector.broadcast %cst_60 : f32 to vector<16x1xf32>
    %137 = arith.divf %135, %136 : vector<16x1xf32>
    %138 = vector.broadcast %130 : vector<16x1xf32> to vector<16x32xf32>
    %139 = arith.subf %120, %138 : vector<16x32xf32>
    %cst_61 = arith.constant 9.99999974E-6 : f32
    %140 = vector.broadcast %cst_61 : f32 to vector<16x1xf32>
    %141 = arith.addf %137, %140 : vector<16x1xf32>
    %142 = math.rsqrt %141 : vector<16x1xf32>
    %143 = vector.broadcast %142 : vector<16x1xf32> to vector<16x32xf32>
    %144 = arith.mulf %139, %143 : vector<16x32xf32>
    %145 = vector.broadcast %123 : vector<1x32xf32> to vector<16x32xf32>
    %146 = arith.mulf %144, %145 : vector<16x32xf32>
    %147 = vector.broadcast %124 : vector<1x32xf32> to vector<16x32xf32>
    %148 = arith.addf %146, %147 : vector<16x32xf32>
    %cst_62 = arith.constant dense<0.000000e+00> : vector<16x32xf32>
    %149 = tpu.matmul %148, %121, %cst_62 {dimension_numbers = #tpu.dot_dimension_numbers<[1], [0], [0], [1], [0, 0, 1, 1], [], []>} : vector<16x32xf32>, vector<32x32xf32>, vector<16x32xf32> -> vector<16x32xf32>
    %150 = vector.broadcast %122 : vector<1x32xf32> to vector<16x32xf32>
    %151 = arith.addf %149, %150 : vector<16x32xf32>
    %cst_63 = arith.constant 0.000000e+00 : f32
    %152 = vector.broadcast %cst_63 : f32 to vector<16x32xf32>
    %153 = arith.maximumf %151, %152 : vector<16x32xf32>
    %154 = arith.addf %148, %153 : vector<16x32xf32>
    %cst_64 = arith.constant dense<0.000000e+00> : vector<16xf32>
    %155 = vector.multi_reduction <add>, %154, %cst_64 [1] : vector<16x32xf32> to vector<16xf32>
    %156 = vector.shape_cast %155 : vector<16xf32> to vector<16x1xf32>
    %cst_65 = arith.constant 3.200000e+01 : f32
    %157 = vector.broadcast %cst_65 : f32 to vector<16x1xf32>
    %158 = arith.divf %156, %157 : vector<16x1xf32>
    %159 = vector.broadcast %158 : vector<16x1xf32> to vector<16x32xf32>
    %160 = arith.subf %154, %159 : vector<16x32xf32>
    %161 = arith.mulf %160, %160 : vector<16x32xf32>
    %cst_66 = arith.constant dense<0.000000e+00> : vector<16xf32>
    %162 = vector.multi_reduction <add>, %161, %cst_66 [1] : vector<16x32xf32> to vector<16xf32>
    %163 = vector.shape_cast %162 : vector<16xf32> to vector<16x1xf32>
    %cst_67 = arith.constant 3.200000e+01 : f32
    %164 = vector.broadcast %cst_67 : f32 to vector<16x1xf32>
    %165 = arith.divf %163, %164 : vector<16x1xf32>
    %166 = vector.broadcast %158 : vector<16x1xf32> to vector<16x32xf32>
    %167 = arith.subf %154, %166 : vector<16x32xf32>
    %cst_68 = arith.constant 9.99999974E-6 : f32
    %168 = vector.broadcast %cst_68 : f32 to vector<16x1xf32>
    %169 = arith.addf %165, %168 : vector<16x1xf32>
    %170 = math.rsqrt %169 : vector<16x1xf32>
    %171 = vector.broadcast %170 : vector<16x1xf32> to vector<16x32xf32>
    %172 = arith.mulf %167, %171 : vector<16x32xf32>
    %173 = vector.broadcast %125 : vector<1x32xf32> to vector<16x32xf32>
    %174 = arith.mulf %172, %173 : vector<16x32xf32>
    %175 = vector.broadcast %126 : vector<1x32xf32> to vector<16x32xf32>
    %176 = arith.addf %174, %175 : vector<16x32xf32>
    %c384 = arith.constant 384 : index
    %c0_69 = arith.constant 0 : index
    %177 = vector.load %arg2[%c384, %c0_69] : memref<1984x8xf32, #tpu.memory_space<vmem>>, vector<32x8xf32>
    %c1932 = arith.constant 1932 : index
    %c0_70 = arith.constant 0 : index
    %178 = vector.load %arg2[%c1932, %c0_70] : memref<1984x8xf32, #tpu.memory_space<vmem>>, vector<1x8xf32>
    %cst_71 = arith.constant dense<0.000000e+00> : vector<32x8xf32>
    %179 = tpu.matmul %0, %177, %cst_71 {dimension_numbers = #tpu.dot_dimension_numbers<[1], [0], [0], [1], [0, 0, 1, 1], [], []>} : vector<32x32xf32>, vector<32x8xf32>, vector<32x8xf32> -> vector<32x8xf32>
    %180 = vector.broadcast %178 : vector<1x8xf32> to vector<32x8xf32>
    %181 = arith.addf %179, %180 : vector<32x8xf32>
    %c416 = arith.constant 416 : index
    %c0_72 = arith.constant 0 : index
    %182 = vector.load %arg2[%c416, %c0_72] : memref<1984x8xf32, #tpu.memory_space<vmem>>, vector<32x8xf32>
    %c1933 = arith.constant 1933 : index
    %c0_73 = arith.constant 0 : index
    %183 = vector.load %arg2[%c1933, %c0_73] : memref<1984x8xf32, #tpu.memory_space<vmem>>, vector<1x8xf32>
    %cst_74 = arith.constant dense<0.000000e+00> : vector<32x8xf32>
    %184 = tpu.matmul %0, %182, %cst_74 {dimension_numbers = #tpu.dot_dimension_numbers<[1], [0], [0], [1], [0, 0, 1, 1], [], []>} : vector<32x32xf32>, vector<32x8xf32>, vector<32x8xf32> -> vector<32x8xf32>
    %185 = vector.broadcast %183 : vector<1x8xf32> to vector<32x8xf32>
    %186 = arith.addf %184, %185 : vector<32x8xf32>
    %c448 = arith.constant 448 : index
    %c0_75 = arith.constant 0 : index
    %187 = vector.load %arg2[%c448, %c0_75] : memref<1984x8xf32, #tpu.memory_space<vmem>>, vector<32x8xf32>
    %c1934 = arith.constant 1934 : index
    %c0_76 = arith.constant 0 : index
    %188 = vector.load %arg2[%c1934, %c0_76] : memref<1984x8xf32, #tpu.memory_space<vmem>>, vector<1x8xf32>
    %cst_77 = arith.constant dense<0.000000e+00> : vector<32x8xf32>
    %189 = tpu.matmul %0, %187, %cst_77 {dimension_numbers = #tpu.dot_dimension_numbers<[1], [0], [0], [1], [0, 0, 1, 1], [], []>} : vector<32x32xf32>, vector<32x8xf32>, vector<32x8xf32> -> vector<32x8xf32>
    %190 = vector.broadcast %188 : vector<1x8xf32> to vector<32x8xf32>
    %191 = arith.addf %189, %190 : vector<32x8xf32>
    %c480 = arith.constant 480 : index
    %c0_78 = arith.constant 0 : index
    %192 = vector.load %arg2[%c480, %c0_78] : memref<1984x8xf32, #tpu.memory_space<vmem>>, vector<32x8xf32>
    %c1935 = arith.constant 1935 : index
    %c0_79 = arith.constant 0 : index
    %193 = vector.load %arg2[%c1935, %c0_79] : memref<1984x8xf32, #tpu.memory_space<vmem>>, vector<1x8xf32>
    %cst_80 = arith.constant dense<0.000000e+00> : vector<32x8xf32>
    %194 = tpu.matmul %0, %192, %cst_80 {dimension_numbers = #tpu.dot_dimension_numbers<[1], [0], [0], [1], [0, 0, 1, 1], [], []>} : vector<32x32xf32>, vector<32x8xf32>, vector<32x8xf32> -> vector<32x8xf32>
    %195 = vector.broadcast %193 : vector<1x8xf32> to vector<32x8xf32>
    %196 = arith.addf %194, %195 : vector<32x8xf32>
    %197 = vector.shape_cast %181 : vector<32x8xf32> to vector<1x32x8xf32>
    %198 = vector.shape_cast %186 : vector<32x8xf32> to vector<1x32x8xf32>
    %199 = vector.shape_cast %191 : vector<32x8xf32> to vector<1x32x8xf32>
    %200 = vector.shape_cast %196 : vector<32x8xf32> to vector<1x32x8xf32>
    %201 = tpu.concatenate %197, %198, %199, %200 in 0 : vector<1x32x8xf32>, vector<1x32x8xf32>, vector<1x32x8xf32>, vector<1x32x8xf32> -> vector<4x32x8xf32>
    %c512 = arith.constant 512 : index
    %c0_81 = arith.constant 0 : index
    %202 = vector.load %arg2[%c512, %c0_81] : memref<1984x8xf32, #tpu.memory_space<vmem>>, vector<32x8xf32>
    %c1936 = arith.constant 1936 : index
    %c0_82 = arith.constant 0 : index
    %203 = vector.load %arg2[%c1936, %c0_82] : memref<1984x8xf32, #tpu.memory_space<vmem>>, vector<1x8xf32>
    %cst_83 = arith.constant dense<0.000000e+00> : vector<16x8xf32>
    %204 = tpu.matmul %176, %202, %cst_83 {dimension_numbers = #tpu.dot_dimension_numbers<[1], [0], [0], [1], [0, 0, 1, 1], [], []>} : vector<16x32xf32>, vector<32x8xf32>, vector<16x8xf32> -> vector<16x8xf32>
    %205 = vector.broadcast %203 : vector<1x8xf32> to vector<16x8xf32>
    %206 = arith.addf %204, %205 : vector<16x8xf32>
    %c544 = arith.constant 544 : index
    %c0_84 = arith.constant 0 : index
    %207 = vector.load %arg2[%c544, %c0_84] : memref<1984x8xf32, #tpu.memory_space<vmem>>, vector<32x8xf32>
    %c1937 = arith.constant 1937 : index
    %c0_85 = arith.constant 0 : index
    %208 = vector.load %arg2[%c1937, %c0_85] : memref<1984x8xf32, #tpu.memory_space<vmem>>, vector<1x8xf32>
    %cst_86 = arith.constant dense<0.000000e+00> : vector<16x8xf32>
    %209 = tpu.matmul %176, %207, %cst_86 {dimension_numbers = #tpu.dot_dimension_numbers<[1], [0], [0], [1], [0, 0, 1, 1], [], []>} : vector<16x32xf32>, vector<32x8xf32>, vector<16x8xf32> -> vector<16x8xf32>
    %210 = vector.broadcast %208 : vector<1x8xf32> to vector<16x8xf32>
    %211 = arith.addf %209, %210 : vector<16x8xf32>
    %c576 = arith.constant 576 : index
    %c0_87 = arith.constant 0 : index
    %212 = vector.load %arg2[%c576, %c0_87] : memref<1984x8xf32, #tpu.memory_space<vmem>>, vector<32x8xf32>
    %c1938 = arith.constant 1938 : index
    %c0_88 = arith.constant 0 : index
    %213 = vector.load %arg2[%c1938, %c0_88] : memref<1984x8xf32, #tpu.memory_space<vmem>>, vector<1x8xf32>
    %cst_89 = arith.constant dense<0.000000e+00> : vector<16x8xf32>
    %214 = tpu.matmul %176, %212, %cst_89 {dimension_numbers = #tpu.dot_dimension_numbers<[1], [0], [0], [1], [0, 0, 1, 1], [], []>} : vector<16x32xf32>, vector<32x8xf32>, vector<16x8xf32> -> vector<16x8xf32>
    %215 = vector.broadcast %213 : vector<1x8xf32> to vector<16x8xf32>
    %216 = arith.addf %214, %215 : vector<16x8xf32>
    %c608 = arith.constant 608 : index
    %c0_90 = arith.constant 0 : index
    %217 = vector.load %arg2[%c608, %c0_90] : memref<1984x8xf32, #tpu.memory_space<vmem>>, vector<32x8xf32>
    %c1939 = arith.constant 1939 : index
    %c0_91 = arith.constant 0 : index
    %218 = vector.load %arg2[%c1939, %c0_91] : memref<1984x8xf32, #tpu.memory_space<vmem>>, vector<1x8xf32>
    %cst_92 = arith.constant dense<0.000000e+00> : vector<16x8xf32>
    %219 = tpu.matmul %176, %217, %cst_92 {dimension_numbers = #tpu.dot_dimension_numbers<[1], [0], [0], [1], [0, 0, 1, 1], [], []>} : vector<16x32xf32>, vector<32x8xf32>, vector<16x8xf32> -> vector<16x8xf32>
    %220 = vector.broadcast %218 : vector<1x8xf32> to vector<16x8xf32>
    %221 = arith.addf %219, %220 : vector<16x8xf32>
    %222 = vector.shape_cast %206 : vector<16x8xf32> to vector<1x16x8xf32>
    %223 = vector.shape_cast %211 : vector<16x8xf32> to vector<1x16x8xf32>
    %224 = vector.shape_cast %216 : vector<16x8xf32> to vector<1x16x8xf32>
    %225 = vector.shape_cast %221 : vector<16x8xf32> to vector<1x16x8xf32>
    %226 = tpu.concatenate %222, %223, %224, %225 in 0 : vector<1x16x8xf32>, vector<1x16x8xf32>, vector<1x16x8xf32>, vector<1x16x8xf32> -> vector<4x16x8xf32>
    %c640 = arith.constant 640 : index
    %c0_93 = arith.constant 0 : index
    %227 = vector.load %arg2[%c640, %c0_93] : memref<1984x8xf32, #tpu.memory_space<vmem>>, vector<32x8xf32>
    %c1940 = arith.constant 1940 : index
    %c0_94 = arith.constant 0 : index
    %228 = vector.load %arg2[%c1940, %c0_94] : memref<1984x8xf32, #tpu.memory_space<vmem>>, vector<1x8xf32>
    %cst_95 = arith.constant dense<0.000000e+00> : vector<16x8xf32>
    %229 = tpu.matmul %176, %227, %cst_95 {dimension_numbers = #tpu.dot_dimension_numbers<[1], [0], [0], [1], [0, 0, 1, 1], [], []>} : vector<16x32xf32>, vector<32x8xf32>, vector<16x8xf32> -> vector<16x8xf32>
    %230 = vector.broadcast %228 : vector<1x8xf32> to vector<16x8xf32>
    %231 = arith.addf %229, %230 : vector<16x8xf32>
    %c672 = arith.constant 672 : index
    %c0_96 = arith.constant 0 : index
    %232 = vector.load %arg2[%c672, %c0_96] : memref<1984x8xf32, #tpu.memory_space<vmem>>, vector<32x8xf32>
    %c1941 = arith.constant 1941 : index
    %c0_97 = arith.constant 0 : index
    %233 = vector.load %arg2[%c1941, %c0_97] : memref<1984x8xf32, #tpu.memory_space<vmem>>, vector<1x8xf32>
    %cst_98 = arith.constant dense<0.000000e+00> : vector<16x8xf32>
    %234 = tpu.matmul %176, %232, %cst_98 {dimension_numbers = #tpu.dot_dimension_numbers<[1], [0], [0], [1], [0, 0, 1, 1], [], []>} : vector<16x32xf32>, vector<32x8xf32>, vector<16x8xf32> -> vector<16x8xf32>
    %235 = vector.broadcast %233 : vector<1x8xf32> to vector<16x8xf32>
    %236 = arith.addf %234, %235 : vector<16x8xf32>
    %c704 = arith.constant 704 : index
    %c0_99 = arith.constant 0 : index
    %237 = vector.load %arg2[%c704, %c0_99] : memref<1984x8xf32, #tpu.memory_space<vmem>>, vector<32x8xf32>
    %c1942 = arith.constant 1942 : index
    %c0_100 = arith.constant 0 : index
    %238 = vector.load %arg2[%c1942, %c0_100] : memref<1984x8xf32, #tpu.memory_space<vmem>>, vector<1x8xf32>
    %cst_101 = arith.constant dense<0.000000e+00> : vector<16x8xf32>
    %239 = tpu.matmul %176, %237, %cst_101 {dimension_numbers = #tpu.dot_dimension_numbers<[1], [0], [0], [1], [0, 0, 1, 1], [], []>} : vector<16x32xf32>, vector<32x8xf32>, vector<16x8xf32> -> vector<16x8xf32>
    %240 = vector.broadcast %238 : vector<1x8xf32> to vector<16x8xf32>
    %241 = arith.addf %239, %240 : vector<16x8xf32>
    %c736 = arith.constant 736 : index
    %c0_102 = arith.constant 0 : index
    %242 = vector.load %arg2[%c736, %c0_102] : memref<1984x8xf32, #tpu.memory_space<vmem>>, vector<32x8xf32>
    %c1943 = arith.constant 1943 : index
    %c0_103 = arith.constant 0 : index
    %243 = vector.load %arg2[%c1943, %c0_103] : memref<1984x8xf32, #tpu.memory_space<vmem>>, vector<1x8xf32>
    %cst_104 = arith.constant dense<0.000000e+00> : vector<16x8xf32>
    %244 = tpu.matmul %176, %242, %cst_104 {dimension_numbers = #tpu.dot_dimension_numbers<[1], [0], [0], [1], [0, 0, 1, 1], [], []>} : vector<16x32xf32>, vector<32x8xf32>, vector<16x8xf32> -> vector<16x8xf32>
    %245 = vector.broadcast %243 : vector<1x8xf32> to vector<16x8xf32>
    %246 = arith.addf %244, %245 : vector<16x8xf32>
    %247 = vector.shape_cast %231 : vector<16x8xf32> to vector<1x16x8xf32>
    %248 = vector.shape_cast %236 : vector<16x8xf32> to vector<1x16x8xf32>
    %249 = vector.shape_cast %241 : vector<16x8xf32> to vector<1x16x8xf32>
    %250 = vector.shape_cast %246 : vector<16x8xf32> to vector<1x16x8xf32>
    %251 = tpu.concatenate %247, %248, %249, %250 in 0 : vector<1x16x8xf32>, vector<1x16x8xf32>, vector<1x16x8xf32>, vector<1x16x8xf32> -> vector<4x16x8xf32>
    %252 = vector.shape_cast %226 : vector<4x16x8xf32> to vector<8x8x8xf32>
    %253 = vector.shape_cast %251 : vector<4x16x8xf32> to vector<8x8x8xf32>
    %254 = vector.shape_cast %201 : vector<4x32x8xf32> to vector<8x16x8xf32>
    "tpu.trace_start"() <{level = 10 : i32, message = "bqd,bkd->bqk"}> : () -> ()
    %cst_105 = arith.constant dense<0.000000e+00> : vector<8x16x8xf32>
    %255 = tpu.matmul %254, %252, %cst_105 {dimension_numbers = #tpu.dot_dimension_numbers<[2], [2], [1], [1], [0, 0, 0, 1, 1, 1], [0], [0]>} : vector<8x16x8xf32>, vector<8x8x8xf32>, vector<8x16x8xf32> -> vector<8x16x8xf32>
    "tpu.trace_stop"() : () -> ()
    %cst_106 = arith.constant dense<0xFF800000> : vector<8x16xf32>
    %256 = vector.multi_reduction <maximumf>, %255, %cst_106 [2] : vector<8x16x8xf32> to vector<8x16xf32>
    %257 = vector.shape_cast %256 : vector<8x16xf32> to vector<8x16x1xf32>
    %258 = vector.broadcast %257 : vector<8x16x1xf32> to vector<8x16x8xf32>
    %259 = arith.subf %255, %258 : vector<8x16x8xf32>
    %260 = math.exp %259 : vector<8x16x8xf32>
    %cst_107 = arith.constant dense<0.000000e+00> : vector<8x16xf32>
    %261 = vector.multi_reduction <add>, %260, %cst_107 [2] : vector<8x16x8xf32> to vector<8x16xf32>
    %262 = vector.shape_cast %261 : vector<8x16xf32> to vector<8x16x1xf32>
    %263 = math.log %262 : vector<8x16x1xf32>
    %264 = arith.addf %257, %263 : vector<8x16x1xf32>
    %cst_108 = arith.constant -2.77258849 : f32
    %265 = vector.broadcast %cst_108 : f32 to vector<8x16x1xf32>
    %266 = arith.subf %265, %264 : vector<8x16x1xf32>
    %267 = vector.broadcast %266 : vector<8x16x1xf32> to vector<8x16x8xf32>
    %268 = arith.addf %255, %267 : vector<8x16x8xf32>
    %cst_109 = arith.constant dense<0xFF800000> : vector<8x8xf32>
    %269 = vector.multi_reduction <maximumf>, %268, %cst_109 [1] : vector<8x16x8xf32> to vector<8x8xf32>
    %270 = vector.shape_cast %269 : vector<8x8xf32> to vector<8x1x8xf32>
    %271 = vector.broadcast %270 : vector<8x1x8xf32> to vector<8x16x8xf32>
    %272 = arith.subf %268, %271 : vector<8x16x8xf32>
    %273 = math.exp %272 : vector<8x16x8xf32>
    %cst_110 = arith.constant dense<0.000000e+00> : vector<8x8xf32>
    %274 = vector.multi_reduction <add>, %273, %cst_110 [1] : vector<8x16x8xf32> to vector<8x8xf32>
    %275 = vector.shape_cast %274 : vector<8x8xf32> to vector<8x1x8xf32>
    %276 = math.log %275 : vector<8x1x8xf32>
    %277 = arith.addf %270, %276 : vector<8x1x8xf32>
    %cst_111 = arith.constant 0.693147242 : f32
    %278 = vector.broadcast %cst_111 : f32 to vector<8x1x8xf32>
    %279 = arith.subf %278, %277 : vector<8x1x8xf32>
    %280 = vector.broadcast %279 : vector<8x1x8xf32> to vector<8x16x8xf32>
    %281 = arith.addf %268, %280 : vector<8x16x8xf32>
    %282 = math.exp %281 : vector<8x16x8xf32>
    "tpu.trace_start"() <{level = 10 : i32, message = "bqk,bkd->bqd"}> : () -> ()
    %cst_112 = arith.constant dense<0.000000e+00> : vector<8x16x8xf32>
    %283 = tpu.matmul %282, %253, %cst_112 {dimension_numbers = #tpu.dot_dimension_numbers<[2], [1], [1], [2], [0, 0, 0, 1, 1, 2], [0], [0]>} : vector<8x16x8xf32>, vector<8x8x8xf32>, vector<8x16x8xf32> -> vector<8x16x8xf32>
    "tpu.trace_stop"() : () -> ()
    %284 = arith.addf %254, %283 : vector<8x16x8xf32>
    %285 = vector.extract_strided_slice %284 {offsets = [0, 0, 0], sizes = [2, 16, 8], strides = [1, 1, 1]} : vector<8x16x8xf32> to vector<2x16x8xf32>
    %286 = vector.extract_strided_slice %284 {offsets = [2, 0, 0], sizes = [2, 16, 8], strides = [1, 1, 1]} : vector<8x16x8xf32> to vector<2x16x8xf32>
    %287 = vector.extract_strided_slice %284 {offsets = [4, 0, 0], sizes = [2, 16, 8], strides = [1, 1, 1]} : vector<8x16x8xf32> to vector<2x16x8xf32>
    %288 = vector.extract_strided_slice %284 {offsets = [6, 0, 0], sizes = [2, 16, 8], strides = [1, 1, 1]} : vector<8x16x8xf32> to vector<2x16x8xf32>
    %289 = tpu.concatenate %285, %286, %287, %288 in 2 : vector<2x16x8xf32>, vector<2x16x8xf32>, vector<2x16x8xf32>, vector<2x16x8xf32> -> vector<2x16x32xf32>
    %290 = vector.shape_cast %289 : vector<2x16x32xf32> to vector<32x32xf32>
    %c40 = arith.constant 40 : index
    %c0_113 = arith.constant 0 : index
    %291 = vector.load %arg3[%c40, %c0_113] : memref<200x32xf32, #tpu.memory_space<vmem>>, vector<32x32xf32>
    %c72 = arith.constant 72 : index
    %c0_114 = arith.constant 0 : index
    %292 = vector.load %arg3[%c72, %c0_114] : memref<200x32xf32, #tpu.memory_space<vmem>>, vector<1x32xf32>
    %c73 = arith.constant 73 : index
    %c0_115 = arith.constant 0 : index
    %293 = vector.load %arg3[%c73, %c0_115] : memref<200x32xf32, #tpu.memory_space<vmem>>, vector<1x32xf32>
    %c74 = arith.constant 74 : index
    %c0_116 = arith.constant 0 : index
    %294 = vector.load %arg3[%c74, %c0_116] : memref<200x32xf32, #tpu.memory_space<vmem>>, vector<1x32xf32>
    %c75 = arith.constant 75 : index
    %c0_117 = arith.constant 0 : index
    %295 = vector.load %arg3[%c75, %c0_117] : memref<200x32xf32, #tpu.memory_space<vmem>>, vector<1x32xf32>
    %c76 = arith.constant 76 : index
    %c0_118 = arith.constant 0 : index
    %296 = vector.load %arg3[%c76, %c0_118] : memref<200x32xf32, #tpu.memory_space<vmem>>, vector<1x32xf32>
    %cst_119 = arith.constant dense<0.000000e+00> : vector<32xf32>
    %297 = vector.multi_reduction <add>, %290, %cst_119 [1] : vector<32x32xf32> to vector<32xf32>
    %298 = vector.shape_cast %297 : vector<32xf32> to vector<32x1xf32>
    %cst_120 = arith.constant 3.200000e+01 : f32
    %299 = vector.broadcast %cst_120 : f32 to vector<32x1xf32>
    %300 = arith.divf %298, %299 : vector<32x1xf32>
    %301 = vector.broadcast %300 : vector<32x1xf32> to vector<32x32xf32>
    %302 = arith.subf %290, %301 : vector<32x32xf32>
    %303 = arith.mulf %302, %302 : vector<32x32xf32>
    %cst_121 = arith.constant dense<0.000000e+00> : vector<32xf32>
    %304 = vector.multi_reduction <add>, %303, %cst_121 [1] : vector<32x32xf32> to vector<32xf32>
    %305 = vector.shape_cast %304 : vector<32xf32> to vector<32x1xf32>
    %cst_122 = arith.constant 3.200000e+01 : f32
    %306 = vector.broadcast %cst_122 : f32 to vector<32x1xf32>
    %307 = arith.divf %305, %306 : vector<32x1xf32>
    %308 = vector.broadcast %300 : vector<32x1xf32> to vector<32x32xf32>
    %309 = arith.subf %290, %308 : vector<32x32xf32>
    %cst_123 = arith.constant 9.99999974E-6 : f32
    %310 = vector.broadcast %cst_123 : f32 to vector<32x1xf32>
    %311 = arith.addf %307, %310 : vector<32x1xf32>
    %312 = math.rsqrt %311 : vector<32x1xf32>
    %313 = vector.broadcast %312 : vector<32x1xf32> to vector<32x32xf32>
    %314 = arith.mulf %309, %313 : vector<32x32xf32>
    %315 = vector.broadcast %293 : vector<1x32xf32> to vector<32x32xf32>
    %316 = arith.mulf %314, %315 : vector<32x32xf32>
    %317 = vector.broadcast %294 : vector<1x32xf32> to vector<32x32xf32>
    %318 = arith.addf %316, %317 : vector<32x32xf32>
    %cst_124 = arith.constant dense<0.000000e+00> : vector<32x32xf32>
    %319 = tpu.matmul %318, %291, %cst_124 {dimension_numbers = #tpu.dot_dimension_numbers<[1], [0], [0], [1], [0, 0, 1, 1], [], []>} : vector<32x32xf32>, vector<32x32xf32>, vector<32x32xf32> -> vector<32x32xf32>
    %320 = vector.broadcast %292 : vector<1x32xf32> to vector<32x32xf32>
    %321 = arith.addf %319, %320 : vector<32x32xf32>
    %cst_125 = arith.constant 0.000000e+00 : f32
    %322 = vector.broadcast %cst_125 : f32 to vector<32x32xf32>
    %323 = arith.maximumf %321, %322 : vector<32x32xf32>
    %324 = arith.addf %318, %323 : vector<32x32xf32>
    %cst_126 = arith.constant dense<0.000000e+00> : vector<32xf32>
    %325 = vector.multi_reduction <add>, %324, %cst_126 [1] : vector<32x32xf32> to vector<32xf32>
    %326 = vector.shape_cast %325 : vector<32xf32> to vector<32x1xf32>
    %cst_127 = arith.constant 3.200000e+01 : f32
    %327 = vector.broadcast %cst_127 : f32 to vector<32x1xf32>
    %328 = arith.divf %326, %327 : vector<32x1xf32>
    %329 = vector.broadcast %328 : vector<32x1xf32> to vector<32x32xf32>
    %330 = arith.subf %324, %329 : vector<32x32xf32>
    %331 = arith.mulf %330, %330 : vector<32x32xf32>
    %cst_128 = arith.constant dense<0.000000e+00> : vector<32xf32>
    %332 = vector.multi_reduction <add>, %331, %cst_128 [1] : vector<32x32xf32> to vector<32xf32>
    %333 = vector.shape_cast %332 : vector<32xf32> to vector<32x1xf32>
    %cst_129 = arith.constant 3.200000e+01 : f32
    %334 = vector.broadcast %cst_129 : f32 to vector<32x1xf32>
    %335 = arith.divf %333, %334 : vector<32x1xf32>
    %336 = vector.broadcast %328 : vector<32x1xf32> to vector<32x32xf32>
    %337 = arith.subf %324, %336 : vector<32x32xf32>
    %cst_130 = arith.constant 9.99999974E-6 : f32
    %338 = vector.broadcast %cst_130 : f32 to vector<32x1xf32>
    %339 = arith.addf %335, %338 : vector<32x1xf32>
    %340 = math.rsqrt %339 : vector<32x1xf32>
    %341 = vector.broadcast %340 : vector<32x1xf32> to vector<32x32xf32>
    %342 = arith.mulf %337, %341 : vector<32x32xf32>
    %343 = vector.broadcast %295 : vector<1x32xf32> to vector<32x32xf32>
    %344 = arith.mulf %342, %343 : vector<32x32xf32>
    %345 = vector.broadcast %296 : vector<1x32xf32> to vector<32x32xf32>
    %346 = arith.addf %344, %345 : vector<32x32xf32>
    %c768 = arith.constant 768 : index
    %c0_131 = arith.constant 0 : index
    %347 = vector.load %arg2[%c768, %c0_131] : memref<1984x8xf32, #tpu.memory_space<vmem>>, vector<32x8xf32>
    %c1944 = arith.constant 1944 : index
    %c0_132 = arith.constant 0 : index
    %348 = vector.load %arg2[%c1944, %c0_132] : memref<1984x8xf32, #tpu.memory_space<vmem>>, vector<1x8xf32>
    %cst_133 = arith.constant dense<0.000000e+00> : vector<8x8xf32>
    %349 = tpu.matmul %2, %347, %cst_133 {dimension_numbers = #tpu.dot_dimension_numbers<[1], [0], [0], [1], [0, 0, 1, 1], [], []>} : vector<8x32xf32>, vector<32x8xf32>, vector<8x8xf32> -> vector<8x8xf32>
    %350 = vector.broadcast %348 : vector<1x8xf32> to vector<8x8xf32>
    %351 = arith.addf %349, %350 : vector<8x8xf32>
    %c800 = arith.constant 800 : index
    %c0_134 = arith.constant 0 : index
    %352 = vector.load %arg2[%c800, %c0_134] : memref<1984x8xf32, #tpu.memory_space<vmem>>, vector<32x8xf32>
    %c1945 = arith.constant 1945 : index
    %c0_135 = arith.constant 0 : index
    %353 = vector.load %arg2[%c1945, %c0_135] : memref<1984x8xf32, #tpu.memory_space<vmem>>, vector<1x8xf32>
    %cst_136 = arith.constant dense<0.000000e+00> : vector<8x8xf32>
    %354 = tpu.matmul %2, %352, %cst_136 {dimension_numbers = #tpu.dot_dimension_numbers<[1], [0], [0], [1], [0, 0, 1, 1], [], []>} : vector<8x32xf32>, vector<32x8xf32>, vector<8x8xf32> -> vector<8x8xf32>
    %355 = vector.broadcast %353 : vector<1x8xf32> to vector<8x8xf32>
    %356 = arith.addf %354, %355 : vector<8x8xf32>
    %c832 = arith.constant 832 : index
    %c0_137 = arith.constant 0 : index
    %357 = vector.load %arg2[%c832, %c0_137] : memref<1984x8xf32, #tpu.memory_space<vmem>>, vector<32x8xf32>
    %c1946 = arith.constant 1946 : index
    %c0_138 = arith.constant 0 : index
    %358 = vector.load %arg2[%c1946, %c0_138] : memref<1984x8xf32, #tpu.memory_space<vmem>>, vector<1x8xf32>
    %cst_139 = arith.constant dense<0.000000e+00> : vector<8x8xf32>
    %359 = tpu.matmul %2, %357, %cst_139 {dimension_numbers = #tpu.dot_dimension_numbers<[1], [0], [0], [1], [0, 0, 1, 1], [], []>} : vector<8x32xf32>, vector<32x8xf32>, vector<8x8xf32> -> vector<8x8xf32>
    %360 = vector.broadcast %358 : vector<1x8xf32> to vector<8x8xf32>
    %361 = arith.addf %359, %360 : vector<8x8xf32>
    %c864 = arith.constant 864 : index
    %c0_140 = arith.constant 0 : index
    %362 = vector.load %arg2[%c864, %c0_140] : memref<1984x8xf32, #tpu.memory_space<vmem>>, vector<32x8xf32>
    %c1947 = arith.constant 1947 : index
    %c0_141 = arith.constant 0 : index
    %363 = vector.load %arg2[%c1947, %c0_141] : memref<1984x8xf32, #tpu.memory_space<vmem>>, vector<1x8xf32>
    %cst_142 = arith.constant dense<0.000000e+00> : vector<8x8xf32>
    %364 = tpu.matmul %2, %362, %cst_142 {dimension_numbers = #tpu.dot_dimension_numbers<[1], [0], [0], [1], [0, 0, 1, 1], [], []>} : vector<8x32xf32>, vector<32x8xf32>, vector<8x8xf32> -> vector<8x8xf32>
    %365 = vector.broadcast %363 : vector<1x8xf32> to vector<8x8xf32>
    %366 = arith.addf %364, %365 : vector<8x8xf32>
    %367 = vector.shape_cast %351 : vector<8x8xf32> to vector<1x8x8xf32>
    %368 = vector.shape_cast %356 : vector<8x8xf32> to vector<1x8x8xf32>
    %369 = vector.shape_cast %361 : vector<8x8xf32> to vector<1x8x8xf32>
    %370 = vector.shape_cast %366 : vector<8x8xf32> to vector<1x8x8xf32>
    %371 = tpu.concatenate %367, %368, %369, %370 in 0 : vector<1x8x8xf32>, vector<1x8x8xf32>, vector<1x8x8xf32>, vector<1x8x8xf32> -> vector<4x8x8xf32>
    %c896 = arith.constant 896 : index
    %c0_143 = arith.constant 0 : index
    %372 = vector.load %arg2[%c896, %c0_143] : memref<1984x8xf32, #tpu.memory_space<vmem>>, vector<32x8xf32>
    %c1948 = arith.constant 1948 : index
    %c0_144 = arith.constant 0 : index
    %373 = vector.load %arg2[%c1948, %c0_144] : memref<1984x8xf32, #tpu.memory_space<vmem>>, vector<1x8xf32>
    %cst_145 = arith.constant dense<0.000000e+00> : vector<32x8xf32>
    %374 = tpu.matmul %346, %372, %cst_145 {dimension_numbers = #tpu.dot_dimension_numbers<[1], [0], [0], [1], [0, 0, 1, 1], [], []>} : vector<32x32xf32>, vector<32x8xf32>, vector<32x8xf32> -> vector<32x8xf32>
    %375 = vector.broadcast %373 : vector<1x8xf32> to vector<32x8xf32>
    %376 = arith.addf %374, %375 : vector<32x8xf32>
    %c928 = arith.constant 928 : index
    %c0_146 = arith.constant 0 : index
    %377 = vector.load %arg2[%c928, %c0_146] : memref<1984x8xf32, #tpu.memory_space<vmem>>, vector<32x8xf32>
    %c1949 = arith.constant 1949 : index
    %c0_147 = arith.constant 0 : index
    %378 = vector.load %arg2[%c1949, %c0_147] : memref<1984x8xf32, #tpu.memory_space<vmem>>, vector<1x8xf32>
    %cst_148 = arith.constant dense<0.000000e+00> : vector<32x8xf32>
    %379 = tpu.matmul %346, %377, %cst_148 {dimension_numbers = #tpu.dot_dimension_numbers<[1], [0], [0], [1], [0, 0, 1, 1], [], []>} : vector<32x32xf32>, vector<32x8xf32>, vector<32x8xf32> -> vector<32x8xf32>
    %380 = vector.broadcast %378 : vector<1x8xf32> to vector<32x8xf32>
    %381 = arith.addf %379, %380 : vector<32x8xf32>
    %c960 = arith.constant 960 : index
    %c0_149 = arith.constant 0 : index
    %382 = vector.load %arg2[%c960, %c0_149] : memref<1984x8xf32, #tpu.memory_space<vmem>>, vector<32x8xf32>
    %c1950 = arith.constant 1950 : index
    %c0_150 = arith.constant 0 : index
    %383 = vector.load %arg2[%c1950, %c0_150] : memref<1984x8xf32, #tpu.memory_space<vmem>>, vector<1x8xf32>
    %cst_151 = arith.constant dense<0.000000e+00> : vector<32x8xf32>
    %384 = tpu.matmul %346, %382, %cst_151 {dimension_numbers = #tpu.dot_dimension_numbers<[1], [0], [0], [1], [0, 0, 1, 1], [], []>} : vector<32x32xf32>, vector<32x8xf32>, vector<32x8xf32> -> vector<32x8xf32>
    %385 = vector.broadcast %383 : vector<1x8xf32> to vector<32x8xf32>
    %386 = arith.addf %384, %385 : vector<32x8xf32>
    %c992 = arith.constant 992 : index
    %c0_152 = arith.constant 0 : index
    %387 = vector.load %arg2[%c992, %c0_152] : memref<1984x8xf32, #tpu.memory_space<vmem>>, vector<32x8xf32>
    %c1951 = arith.constant 1951 : index
    %c0_153 = arith.constant 0 : index
    %388 = vector.load %arg2[%c1951, %c0_153] : memref<1984x8xf32, #tpu.memory_space<vmem>>, vector<1x8xf32>
    %cst_154 = arith.constant dense<0.000000e+00> : vector<32x8xf32>
    %389 = tpu.matmul %346, %387, %cst_154 {dimension_numbers = #tpu.dot_dimension_numbers<[1], [0], [0], [1], [0, 0, 1, 1], [], []>} : vector<32x32xf32>, vector<32x8xf32>, vector<32x8xf32> -> vector<32x8xf32>
    %390 = vector.broadcast %388 : vector<1x8xf32> to vector<32x8xf32>
    %391 = arith.addf %389, %390 : vector<32x8xf32>
    %392 = vector.shape_cast %376 : vector<32x8xf32> to vector<1x32x8xf32>
    %393 = vector.shape_cast %381 : vector<32x8xf32> to vector<1x32x8xf32>
    %394 = vector.shape_cast %386 : vector<32x8xf32> to vector<1x32x8xf32>
    %395 = vector.shape_cast %391 : vector<32x8xf32> to vector<1x32x8xf32>
    %396 = tpu.concatenate %392, %393, %394, %395 in 0 : vector<1x32x8xf32>, vector<1x32x8xf32>, vector<1x32x8xf32>, vector<1x32x8xf32> -> vector<4x32x8xf32>
    %c1024 = arith.constant 1024 : index
    %c0_155 = arith.constant 0 : index
    %397 = vector.load %arg2[%c1024, %c0_155] : memref<1984x8xf32, #tpu.memory_space<vmem>>, vector<32x8xf32>
    %c1952 = arith.constant 1952 : index
    %c0_156 = arith.constant 0 : index
    %398 = vector.load %arg2[%c1952, %c0_156] : memref<1984x8xf32, #tpu.memory_space<vmem>>, vector<1x8xf32>
    %cst_157 = arith.constant dense<0.000000e+00> : vector<32x8xf32>
    %399 = tpu.matmul %346, %397, %cst_157 {dimension_numbers = #tpu.dot_dimension_numbers<[1], [0], [0], [1], [0, 0, 1, 1], [], []>} : vector<32x32xf32>, vector<32x8xf32>, vector<32x8xf32> -> vector<32x8xf32>
    %400 = vector.broadcast %398 : vector<1x8xf32> to vector<32x8xf32>
    %401 = arith.addf %399, %400 : vector<32x8xf32>
    %c1056 = arith.constant 1056 : index
    %c0_158 = arith.constant 0 : index
    %402 = vector.load %arg2[%c1056, %c0_158] : memref<1984x8xf32, #tpu.memory_space<vmem>>, vector<32x8xf32>
    %c1953 = arith.constant 1953 : index
    %c0_159 = arith.constant 0 : index
    %403 = vector.load %arg2[%c1953, %c0_159] : memref<1984x8xf32, #tpu.memory_space<vmem>>, vector<1x8xf32>
    %cst_160 = arith.constant dense<0.000000e+00> : vector<32x8xf32>
    %404 = tpu.matmul %346, %402, %cst_160 {dimension_numbers = #tpu.dot_dimension_numbers<[1], [0], [0], [1], [0, 0, 1, 1], [], []>} : vector<32x32xf32>, vector<32x8xf32>, vector<32x8xf32> -> vector<32x8xf32>
    %405 = vector.broadcast %403 : vector<1x8xf32> to vector<32x8xf32>
    %406 = arith.addf %404, %405 : vector<32x8xf32>
    %c1088 = arith.constant 1088 : index
    %c0_161 = arith.constant 0 : index
    %407 = vector.load %arg2[%c1088, %c0_161] : memref<1984x8xf32, #tpu.memory_space<vmem>>, vector<32x8xf32>
    %c1954 = arith.constant 1954 : index
    %c0_162 = arith.constant 0 : index
    %408 = vector.load %arg2[%c1954, %c0_162] : memref<1984x8xf32, #tpu.memory_space<vmem>>, vector<1x8xf32>
    %cst_163 = arith.constant dense<0.000000e+00> : vector<32x8xf32>
    %409 = tpu.matmul %346, %407, %cst_163 {dimension_numbers = #tpu.dot_dimension_numbers<[1], [0], [0], [1], [0, 0, 1, 1], [], []>} : vector<32x32xf32>, vector<32x8xf32>, vector<32x8xf32> -> vector<32x8xf32>
    %410 = vector.broadcast %408 : vector<1x8xf32> to vector<32x8xf32>
    %411 = arith.addf %409, %410 : vector<32x8xf32>
    %c1120 = arith.constant 1120 : index
    %c0_164 = arith.constant 0 : index
    %412 = vector.load %arg2[%c1120, %c0_164] : memref<1984x8xf32, #tpu.memory_space<vmem>>, vector<32x8xf32>
    %c1955 = arith.constant 1955 : index
    %c0_165 = arith.constant 0 : index
    %413 = vector.load %arg2[%c1955, %c0_165] : memref<1984x8xf32, #tpu.memory_space<vmem>>, vector<1x8xf32>
    %cst_166 = arith.constant dense<0.000000e+00> : vector<32x8xf32>
    %414 = tpu.matmul %346, %412, %cst_166 {dimension_numbers = #tpu.dot_dimension_numbers<[1], [0], [0], [1], [0, 0, 1, 1], [], []>} : vector<32x32xf32>, vector<32x8xf32>, vector<32x8xf32> -> vector<32x8xf32>
    %415 = vector.broadcast %413 : vector<1x8xf32> to vector<32x8xf32>
    %416 = arith.addf %414, %415 : vector<32x8xf32>
    %417 = vector.shape_cast %401 : vector<32x8xf32> to vector<1x32x8xf32>
    %418 = vector.shape_cast %406 : vector<32x8xf32> to vector<1x32x8xf32>
    %419 = vector.shape_cast %411 : vector<32x8xf32> to vector<1x32x8xf32>
    %420 = vector.shape_cast %416 : vector<32x8xf32> to vector<1x32x8xf32>
    %421 = tpu.concatenate %417, %418, %419, %420 in 0 : vector<1x32x8xf32>, vector<1x32x8xf32>, vector<1x32x8xf32>, vector<1x32x8xf32> -> vector<4x32x8xf32>
    %422 = vector.shape_cast %396 : vector<4x32x8xf32> to vector<8x16x8xf32>
    %423 = vector.shape_cast %421 : vector<4x32x8xf32> to vector<8x16x8xf32>
    %424 = vector.shape_cast %371 : vector<4x8x8xf32> to vector<4x1x8x8xf32>
    %425 = vector.shape_cast %424 : vector<4x1x8x8xf32> to vector<4x1x8x8xf32>
    %426 = vector.broadcast %425 : vector<4x1x8x8xf32> to vector<4x2x8x8xf32>
    %427 = vector.shape_cast %426 : vector<4x2x8x8xf32> to vector<8x8x8xf32>
    "tpu.trace_start"() <{level = 10 : i32, message = "bqd,bkd->bqk"}> : () -> ()
    %cst_167 = arith.constant dense<0.000000e+00> : vector<8x8x16xf32>
    %428 = tpu.matmul %427, %422, %cst_167 {dimension_numbers = #tpu.dot_dimension_numbers<[2], [2], [1], [1], [0, 0, 0, 1, 1, 1], [0], [0]>} : vector<8x8x8xf32>, vector<8x16x8xf32>, vector<8x8x16xf32> -> vector<8x8x16xf32>
    "tpu.trace_stop"() : () -> ()
    %cst_168 = arith.constant dense<0xFF800000> : vector<8x8xf32>
    %429 = vector.multi_reduction <maximumf>, %428, %cst_168 [2] : vector<8x8x16xf32> to vector<8x8xf32>
    %430 = vector.shape_cast %429 : vector<8x8xf32> to vector<8x8x1xf32>
    %431 = vector.broadcast %430 : vector<8x8x1xf32> to vector<8x8x16xf32>
    %432 = arith.subf %428, %431 : vector<8x8x16xf32>
    %433 = math.exp %432 : vector<8x8x16xf32>
    %cst_169 = arith.constant dense<0.000000e+00> : vector<8x8xf32>
    %434 = vector.multi_reduction <add>, %433, %cst_169 [2] : vector<8x8x16xf32> to vector<8x8xf32>
    %435 = vector.shape_cast %434 : vector<8x8xf32> to vector<8x8x1xf32>
    %436 = math.log %435 : vector<8x8x1xf32>
    %437 = arith.addf %430, %436 : vector<8x8x1xf32>
    %cst_170 = arith.constant -2.07944155 : f32
    %438 = vector.broadcast %cst_170 : f32 to vector<8x8x1xf32>
    %439 = arith.subf %438, %437 : vector<8x8x1xf32>
    %440 = vector.broadcast %439 : vector<8x8x1xf32> to vector<8x8x16xf32>
    %441 = arith.addf %428, %440 : vector<8x8x16xf32>
    %cst_171 = arith.constant dense<0xFF800000> : vector<8x16xf32>
    %442 = vector.multi_reduction <maximumf>, %441, %cst_171 [1] : vector<8x8x16xf32> to vector<8x16xf32>
    %443 = vector.shape_cast %442 : vector<8x16xf32> to vector<8x1x16xf32>
    %444 = vector.broadcast %443 : vector<8x1x16xf32> to vector<8x8x16xf32>
    %445 = arith.subf %441, %444 : vector<8x8x16xf32>
    %446 = math.exp %445 : vector<8x8x16xf32>
    %cst_172 = arith.constant dense<0.000000e+00> : vector<8x16xf32>
    %447 = vector.multi_reduction <add>, %446, %cst_172 [1] : vector<8x8x16xf32> to vector<8x16xf32>
    %448 = vector.shape_cast %447 : vector<8x16xf32> to vector<8x1x16xf32>
    %449 = math.log %448 : vector<8x1x16xf32>
    %450 = arith.addf %443, %449 : vector<8x1x16xf32>
    %cst_173 = arith.constant -6.931470e-01 : f32
    %451 = vector.broadcast %cst_173 : f32 to vector<8x1x16xf32>
    %452 = arith.subf %451, %450 : vector<8x1x16xf32>
    %453 = vector.broadcast %452 : vector<8x1x16xf32> to vector<8x8x16xf32>
    %454 = arith.addf %441, %453 : vector<8x8x16xf32>
    %455 = math.exp %454 : vector<8x8x16xf32>
    "tpu.trace_start"() <{level = 10 : i32, message = "bqk,bkd->bqd"}> : () -> ()
    %cst_174 = arith.constant dense<0.000000e+00> : vector<8x8x8xf32>
    %456 = tpu.matmul %455, %423, %cst_174 {dimension_numbers = #tpu.dot_dimension_numbers<[2], [1], [1], [2], [0, 0, 0, 1, 1, 2], [0], [0]>} : vector<8x8x16xf32>, vector<8x16x8xf32>, vector<8x8x8xf32> -> vector<8x8x8xf32>
    "tpu.trace_stop"() : () -> ()
    %457 = arith.addf %427, %456 : vector<8x8x8xf32>
    %458 = vector.extract_strided_slice %457 {offsets = [0, 0, 0], sizes = [2, 8, 8], strides = [1, 1, 1]} : vector<8x8x8xf32> to vector<2x8x8xf32>
    %459 = vector.extract_strided_slice %457 {offsets = [2, 0, 0], sizes = [2, 8, 8], strides = [1, 1, 1]} : vector<8x8x8xf32> to vector<2x8x8xf32>
    %460 = vector.extract_strided_slice %457 {offsets = [4, 0, 0], sizes = [2, 8, 8], strides = [1, 1, 1]} : vector<8x8x8xf32> to vector<2x8x8xf32>
    %461 = vector.extract_strided_slice %457 {offsets = [6, 0, 0], sizes = [2, 8, 8], strides = [1, 1, 1]} : vector<8x8x8xf32> to vector<2x8x8xf32>
    %462 = tpu.concatenate %458, %459, %460, %461 in 2 : vector<2x8x8xf32>, vector<2x8x8xf32>, vector<2x8x8xf32>, vector<2x8x8xf32> -> vector<2x8x32xf32>
    %463 = vector.shape_cast %462 : vector<2x8x32xf32> to vector<16x32xf32>
    %c80 = arith.constant 80 : index
    %c0_175 = arith.constant 0 : index
    %464 = vector.load %arg3[%c80, %c0_175] : memref<200x32xf32, #tpu.memory_space<vmem>>, vector<32x32xf32>
    %c112 = arith.constant 112 : index
    %c0_176 = arith.constant 0 : index
    %465 = vector.load %arg3[%c112, %c0_176] : memref<200x32xf32, #tpu.memory_space<vmem>>, vector<1x32xf32>
    %c113 = arith.constant 113 : index
    %c0_177 = arith.constant 0 : index
    %466 = vector.load %arg3[%c113, %c0_177] : memref<200x32xf32, #tpu.memory_space<vmem>>, vector<1x32xf32>
    %c114 = arith.constant 114 : index
    %c0_178 = arith.constant 0 : index
    %467 = vector.load %arg3[%c114, %c0_178] : memref<200x32xf32, #tpu.memory_space<vmem>>, vector<1x32xf32>
    %c115 = arith.constant 115 : index
    %c0_179 = arith.constant 0 : index
    %468 = vector.load %arg3[%c115, %c0_179] : memref<200x32xf32, #tpu.memory_space<vmem>>, vector<1x32xf32>
    %c116 = arith.constant 116 : index
    %c0_180 = arith.constant 0 : index
    %469 = vector.load %arg3[%c116, %c0_180] : memref<200x32xf32, #tpu.memory_space<vmem>>, vector<1x32xf32>
    %cst_181 = arith.constant dense<0.000000e+00> : vector<16xf32>
    %470 = vector.multi_reduction <add>, %463, %cst_181 [1] : vector<16x32xf32> to vector<16xf32>
    %471 = vector.shape_cast %470 : vector<16xf32> to vector<16x1xf32>
    %cst_182 = arith.constant 3.200000e+01 : f32
    %472 = vector.broadcast %cst_182 : f32 to vector<16x1xf32>
    %473 = arith.divf %471, %472 : vector<16x1xf32>
    %474 = vector.broadcast %473 : vector<16x1xf32> to vector<16x32xf32>
    %475 = arith.subf %463, %474 : vector<16x32xf32>
    %476 = arith.mulf %475, %475 : vector<16x32xf32>
    %cst_183 = arith.constant dense<0.000000e+00> : vector<16xf32>
    %477 = vector.multi_reduction <add>, %476, %cst_183 [1] : vector<16x32xf32> to vector<16xf32>
    %478 = vector.shape_cast %477 : vector<16xf32> to vector<16x1xf32>
    %cst_184 = arith.constant 3.200000e+01 : f32
    %479 = vector.broadcast %cst_184 : f32 to vector<16x1xf32>
    %480 = arith.divf %478, %479 : vector<16x1xf32>
    %481 = vector.broadcast %473 : vector<16x1xf32> to vector<16x32xf32>
    %482 = arith.subf %463, %481 : vector<16x32xf32>
    %cst_185 = arith.constant 9.99999974E-6 : f32
    %483 = vector.broadcast %cst_185 : f32 to vector<16x1xf32>
    %484 = arith.addf %480, %483 : vector<16x1xf32>
    %485 = math.rsqrt %484 : vector<16x1xf32>
    %486 = vector.broadcast %485 : vector<16x1xf32> to vector<16x32xf32>
    %487 = arith.mulf %482, %486 : vector<16x32xf32>
    %488 = vector.broadcast %466 : vector<1x32xf32> to vector<16x32xf32>
    %489 = arith.mulf %487, %488 : vector<16x32xf32>
    %490 = vector.broadcast %467 : vector<1x32xf32> to vector<16x32xf32>
    %491 = arith.addf %489, %490 : vector<16x32xf32>
    %cst_186 = arith.constant dense<0.000000e+00> : vector<16x32xf32>
    %492 = tpu.matmul %491, %464, %cst_186 {dimension_numbers = #tpu.dot_dimension_numbers<[1], [0], [0], [1], [0, 0, 1, 1], [], []>} : vector<16x32xf32>, vector<32x32xf32>, vector<16x32xf32> -> vector<16x32xf32>
    %493 = vector.broadcast %465 : vector<1x32xf32> to vector<16x32xf32>
    %494 = arith.addf %492, %493 : vector<16x32xf32>
    %cst_187 = arith.constant 0.000000e+00 : f32
    %495 = vector.broadcast %cst_187 : f32 to vector<16x32xf32>
    %496 = arith.maximumf %494, %495 : vector<16x32xf32>
    %497 = arith.addf %491, %496 : vector<16x32xf32>
    %cst_188 = arith.constant dense<0.000000e+00> : vector<16xf32>
    %498 = vector.multi_reduction <add>, %497, %cst_188 [1] : vector<16x32xf32> to vector<16xf32>
    %499 = vector.shape_cast %498 : vector<16xf32> to vector<16x1xf32>
    %cst_189 = arith.constant 3.200000e+01 : f32
    %500 = vector.broadcast %cst_189 : f32 to vector<16x1xf32>
    %501 = arith.divf %499, %500 : vector<16x1xf32>
    %502 = vector.broadcast %501 : vector<16x1xf32> to vector<16x32xf32>
    %503 = arith.subf %497, %502 : vector<16x32xf32>
    %504 = arith.mulf %503, %503 : vector<16x32xf32>
    %cst_190 = arith.constant dense<0.000000e+00> : vector<16xf32>
    %505 = vector.multi_reduction <add>, %504, %cst_190 [1] : vector<16x32xf32> to vector<16xf32>
    %506 = vector.shape_cast %505 : vector<16xf32> to vector<16x1xf32>
    %cst_191 = arith.constant 3.200000e+01 : f32
    %507 = vector.broadcast %cst_191 : f32 to vector<16x1xf32>
    %508 = arith.divf %506, %507 : vector<16x1xf32>
    %509 = vector.broadcast %501 : vector<16x1xf32> to vector<16x32xf32>
    %510 = arith.subf %497, %509 : vector<16x32xf32>
    %cst_192 = arith.constant 9.99999974E-6 : f32
    %511 = vector.broadcast %cst_192 : f32 to vector<16x1xf32>
    %512 = arith.addf %508, %511 : vector<16x1xf32>
    %513 = math.rsqrt %512 : vector<16x1xf32>
    %514 = vector.broadcast %513 : vector<16x1xf32> to vector<16x32xf32>
    %515 = arith.mulf %510, %514 : vector<16x32xf32>
    %516 = vector.broadcast %468 : vector<1x32xf32> to vector<16x32xf32>
    %517 = arith.mulf %515, %516 : vector<16x32xf32>
    %518 = vector.broadcast %469 : vector<1x32xf32> to vector<16x32xf32>
    %519 = arith.addf %517, %518 : vector<16x32xf32>
    %c1152 = arith.constant 1152 : index
    %c0_193 = arith.constant 0 : index
    %520 = vector.load %arg2[%c1152, %c0_193] : memref<1984x8xf32, #tpu.memory_space<vmem>>, vector<32x8xf32>
    %c1956 = arith.constant 1956 : index
    %c0_194 = arith.constant 0 : index
    %521 = vector.load %arg2[%c1956, %c0_194] : memref<1984x8xf32, #tpu.memory_space<vmem>>, vector<1x8xf32>
    %cst_195 = arith.constant dense<0.000000e+00> : vector<32x8xf32>
    %522 = tpu.matmul %346, %520, %cst_195 {dimension_numbers = #tpu.dot_dimension_numbers<[1], [0], [0], [1], [0, 0, 1, 1], [], []>} : vector<32x32xf32>, vector<32x8xf32>, vector<32x8xf32> -> vector<32x8xf32>
    %523 = vector.broadcast %521 : vector<1x8xf32> to vector<32x8xf32>
    %524 = arith.addf %522, %523 : vector<32x8xf32>
    %c1184 = arith.constant 1184 : index
    %c0_196 = arith.constant 0 : index
    %525 = vector.load %arg2[%c1184, %c0_196] : memref<1984x8xf32, #tpu.memory_space<vmem>>, vector<32x8xf32>
    %c1957 = arith.constant 1957 : index
    %c0_197 = arith.constant 0 : index
    %526 = vector.load %arg2[%c1957, %c0_197] : memref<1984x8xf32, #tpu.memory_space<vmem>>, vector<1x8xf32>
    %cst_198 = arith.constant dense<0.000000e+00> : vector<32x8xf32>
    %527 = tpu.matmul %346, %525, %cst_198 {dimension_numbers = #tpu.dot_dimension_numbers<[1], [0], [0], [1], [0, 0, 1, 1], [], []>} : vector<32x32xf32>, vector<32x8xf32>, vector<32x8xf32> -> vector<32x8xf32>
    %528 = vector.broadcast %526 : vector<1x8xf32> to vector<32x8xf32>
    %529 = arith.addf %527, %528 : vector<32x8xf32>
    %c1216 = arith.constant 1216 : index
    %c0_199 = arith.constant 0 : index
    %530 = vector.load %arg2[%c1216, %c0_199] : memref<1984x8xf32, #tpu.memory_space<vmem>>, vector<32x8xf32>
    %c1958 = arith.constant 1958 : index
    %c0_200 = arith.constant 0 : index
    %531 = vector.load %arg2[%c1958, %c0_200] : memref<1984x8xf32, #tpu.memory_space<vmem>>, vector<1x8xf32>
    %cst_201 = arith.constant dense<0.000000e+00> : vector<32x8xf32>
    %532 = tpu.matmul %346, %530, %cst_201 {dimension_numbers = #tpu.dot_dimension_numbers<[1], [0], [0], [1], [0, 0, 1, 1], [], []>} : vector<32x32xf32>, vector<32x8xf32>, vector<32x8xf32> -> vector<32x8xf32>
    %533 = vector.broadcast %531 : vector<1x8xf32> to vector<32x8xf32>
    %534 = arith.addf %532, %533 : vector<32x8xf32>
    %c1248 = arith.constant 1248 : index
    %c0_202 = arith.constant 0 : index
    %535 = vector.load %arg2[%c1248, %c0_202] : memref<1984x8xf32, #tpu.memory_space<vmem>>, vector<32x8xf32>
    %c1959 = arith.constant 1959 : index
    %c0_203 = arith.constant 0 : index
    %536 = vector.load %arg2[%c1959, %c0_203] : memref<1984x8xf32, #tpu.memory_space<vmem>>, vector<1x8xf32>
    %cst_204 = arith.constant dense<0.000000e+00> : vector<32x8xf32>
    %537 = tpu.matmul %346, %535, %cst_204 {dimension_numbers = #tpu.dot_dimension_numbers<[1], [0], [0], [1], [0, 0, 1, 1], [], []>} : vector<32x32xf32>, vector<32x8xf32>, vector<32x8xf32> -> vector<32x8xf32>
    %538 = vector.broadcast %536 : vector<1x8xf32> to vector<32x8xf32>
    %539 = arith.addf %537, %538 : vector<32x8xf32>
    %540 = vector.shape_cast %524 : vector<32x8xf32> to vector<1x32x8xf32>
    %541 = vector.shape_cast %529 : vector<32x8xf32> to vector<1x32x8xf32>
    %542 = vector.shape_cast %534 : vector<32x8xf32> to vector<1x32x8xf32>
    %543 = vector.shape_cast %539 : vector<32x8xf32> to vector<1x32x8xf32>
    %544 = tpu.concatenate %540, %541, %542, %543 in 0 : vector<1x32x8xf32>, vector<1x32x8xf32>, vector<1x32x8xf32>, vector<1x32x8xf32> -> vector<4x32x8xf32>
    %c1280 = arith.constant 1280 : index
    %c0_205 = arith.constant 0 : index
    %545 = vector.load %arg2[%c1280, %c0_205] : memref<1984x8xf32, #tpu.memory_space<vmem>>, vector<32x8xf32>
    %c1960 = arith.constant 1960 : index
    %c0_206 = arith.constant 0 : index
    %546 = vector.load %arg2[%c1960, %c0_206] : memref<1984x8xf32, #tpu.memory_space<vmem>>, vector<1x8xf32>
    %cst_207 = arith.constant dense<0.000000e+00> : vector<16x8xf32>
    %547 = tpu.matmul %519, %545, %cst_207 {dimension_numbers = #tpu.dot_dimension_numbers<[1], [0], [0], [1], [0, 0, 1, 1], [], []>} : vector<16x32xf32>, vector<32x8xf32>, vector<16x8xf32> -> vector<16x8xf32>
    %548 = vector.broadcast %546 : vector<1x8xf32> to vector<16x8xf32>
    %549 = arith.addf %547, %548 : vector<16x8xf32>
    %c1312 = arith.constant 1312 : index
    %c0_208 = arith.constant 0 : index
    %550 = vector.load %arg2[%c1312, %c0_208] : memref<1984x8xf32, #tpu.memory_space<vmem>>, vector<32x8xf32>
    %c1961 = arith.constant 1961 : index
    %c0_209 = arith.constant 0 : index
    %551 = vector.load %arg2[%c1961, %c0_209] : memref<1984x8xf32, #tpu.memory_space<vmem>>, vector<1x8xf32>
    %cst_210 = arith.constant dense<0.000000e+00> : vector<16x8xf32>
    %552 = tpu.matmul %519, %550, %cst_210 {dimension_numbers = #tpu.dot_dimension_numbers<[1], [0], [0], [1], [0, 0, 1, 1], [], []>} : vector<16x32xf32>, vector<32x8xf32>, vector<16x8xf32> -> vector<16x8xf32>
    %553 = vector.broadcast %551 : vector<1x8xf32> to vector<16x8xf32>
    %554 = arith.addf %552, %553 : vector<16x8xf32>
    %c1344 = arith.constant 1344 : index
    %c0_211 = arith.constant 0 : index
    %555 = vector.load %arg2[%c1344, %c0_211] : memref<1984x8xf32, #tpu.memory_space<vmem>>, vector<32x8xf32>
    %c1962 = arith.constant 1962 : index
    %c0_212 = arith.constant 0 : index
    %556 = vector.load %arg2[%c1962, %c0_212] : memref<1984x8xf32, #tpu.memory_space<vmem>>, vector<1x8xf32>
    %cst_213 = arith.constant dense<0.000000e+00> : vector<16x8xf32>
    %557 = tpu.matmul %519, %555, %cst_213 {dimension_numbers = #tpu.dot_dimension_numbers<[1], [0], [0], [1], [0, 0, 1, 1], [], []>} : vector<16x32xf32>, vector<32x8xf32>, vector<16x8xf32> -> vector<16x8xf32>
    %558 = vector.broadcast %556 : vector<1x8xf32> to vector<16x8xf32>
    %559 = arith.addf %557, %558 : vector<16x8xf32>
    %c1376 = arith.constant 1376 : index
    %c0_214 = arith.constant 0 : index
    %560 = vector.load %arg2[%c1376, %c0_214] : memref<1984x8xf32, #tpu.memory_space<vmem>>, vector<32x8xf32>
    %c1963 = arith.constant 1963 : index
    %c0_215 = arith.constant 0 : index
    %561 = vector.load %arg2[%c1963, %c0_215] : memref<1984x8xf32, #tpu.memory_space<vmem>>, vector<1x8xf32>
    %cst_216 = arith.constant dense<0.000000e+00> : vector<16x8xf32>
    %562 = tpu.matmul %519, %560, %cst_216 {dimension_numbers = #tpu.dot_dimension_numbers<[1], [0], [0], [1], [0, 0, 1, 1], [], []>} : vector<16x32xf32>, vector<32x8xf32>, vector<16x8xf32> -> vector<16x8xf32>
    %563 = vector.broadcast %561 : vector<1x8xf32> to vector<16x8xf32>
    %564 = arith.addf %562, %563 : vector<16x8xf32>
    %565 = vector.shape_cast %549 : vector<16x8xf32> to vector<1x16x8xf32>
    %566 = vector.shape_cast %554 : vector<16x8xf32> to vector<1x16x8xf32>
    %567 = vector.shape_cast %559 : vector<16x8xf32> to vector<1x16x8xf32>
    %568 = vector.shape_cast %564 : vector<16x8xf32> to vector<1x16x8xf32>
    %569 = tpu.concatenate %565, %566, %567, %568 in 0 : vector<1x16x8xf32>, vector<1x16x8xf32>, vector<1x16x8xf32>, vector<1x16x8xf32> -> vector<4x16x8xf32>
    %c1408 = arith.constant 1408 : index
    %c0_217 = arith.constant 0 : index
    %570 = vector.load %arg2[%c1408, %c0_217] : memref<1984x8xf32, #tpu.memory_space<vmem>>, vector<32x8xf32>
    %c1964 = arith.constant 1964 : index
    %c0_218 = arith.constant 0 : index
    %571 = vector.load %arg2[%c1964, %c0_218] : memref<1984x8xf32, #tpu.memory_space<vmem>>, vector<1x8xf32>
    %cst_219 = arith.constant dense<0.000000e+00> : vector<16x8xf32>
    %572 = tpu.matmul %519, %570, %cst_219 {dimension_numbers = #tpu.dot_dimension_numbers<[1], [0], [0], [1], [0, 0, 1, 1], [], []>} : vector<16x32xf32>, vector<32x8xf32>, vector<16x8xf32> -> vector<16x8xf32>
    %573 = vector.broadcast %571 : vector<1x8xf32> to vector<16x8xf32>
    %574 = arith.addf %572, %573 : vector<16x8xf32>
    %c1440 = arith.constant 1440 : index
    %c0_220 = arith.constant 0 : index
    %575 = vector.load %arg2[%c1440, %c0_220] : memref<1984x8xf32, #tpu.memory_space<vmem>>, vector<32x8xf32>
    %c1965 = arith.constant 1965 : index
    %c0_221 = arith.constant 0 : index
    %576 = vector.load %arg2[%c1965, %c0_221] : memref<1984x8xf32, #tpu.memory_space<vmem>>, vector<1x8xf32>
    %cst_222 = arith.constant dense<0.000000e+00> : vector<16x8xf32>
    %577 = tpu.matmul %519, %575, %cst_222 {dimension_numbers = #tpu.dot_dimension_numbers<[1], [0], [0], [1], [0, 0, 1, 1], [], []>} : vector<16x32xf32>, vector<32x8xf32>, vector<16x8xf32> -> vector<16x8xf32>
    %578 = vector.broadcast %576 : vector<1x8xf32> to vector<16x8xf32>
    %579 = arith.addf %577, %578 : vector<16x8xf32>
    %c1472 = arith.constant 1472 : index
    %c0_223 = arith.constant 0 : index
    %580 = vector.load %arg2[%c1472, %c0_223] : memref<1984x8xf32, #tpu.memory_space<vmem>>, vector<32x8xf32>
    %c1966 = arith.constant 1966 : index
    %c0_224 = arith.constant 0 : index
    %581 = vector.load %arg2[%c1966, %c0_224] : memref<1984x8xf32, #tpu.memory_space<vmem>>, vector<1x8xf32>
    %cst_225 = arith.constant dense<0.000000e+00> : vector<16x8xf32>
    %582 = tpu.matmul %519, %580, %cst_225 {dimension_numbers = #tpu.dot_dimension_numbers<[1], [0], [0], [1], [0, 0, 1, 1], [], []>} : vector<16x32xf32>, vector<32x8xf32>, vector<16x8xf32> -> vector<16x8xf32>
    %583 = vector.broadcast %581 : vector<1x8xf32> to vector<16x8xf32>
    %584 = arith.addf %582, %583 : vector<16x8xf32>
    %c1504 = arith.constant 1504 : index
    %c0_226 = arith.constant 0 : index
    %585 = vector.load %arg2[%c1504, %c0_226] : memref<1984x8xf32, #tpu.memory_space<vmem>>, vector<32x8xf32>
    %c1967 = arith.constant 1967 : index
    %c0_227 = arith.constant 0 : index
    %586 = vector.load %arg2[%c1967, %c0_227] : memref<1984x8xf32, #tpu.memory_space<vmem>>, vector<1x8xf32>
    %cst_228 = arith.constant dense<0.000000e+00> : vector<16x8xf32>
    %587 = tpu.matmul %519, %585, %cst_228 {dimension_numbers = #tpu.dot_dimension_numbers<[1], [0], [0], [1], [0, 0, 1, 1], [], []>} : vector<16x32xf32>, vector<32x8xf32>, vector<16x8xf32> -> vector<16x8xf32>
    %588 = vector.broadcast %586 : vector<1x8xf32> to vector<16x8xf32>
    %589 = arith.addf %587, %588 : vector<16x8xf32>
    %590 = vector.shape_cast %574 : vector<16x8xf32> to vector<1x16x8xf32>
    %591 = vector.shape_cast %579 : vector<16x8xf32> to vector<1x16x8xf32>
    %592 = vector.shape_cast %584 : vector<16x8xf32> to vector<1x16x8xf32>
    %593 = vector.shape_cast %589 : vector<16x8xf32> to vector<1x16x8xf32>
    %594 = tpu.concatenate %590, %591, %592, %593 in 0 : vector<1x16x8xf32>, vector<1x16x8xf32>, vector<1x16x8xf32>, vector<1x16x8xf32> -> vector<4x16x8xf32>
    %595 = vector.shape_cast %569 : vector<4x16x8xf32> to vector<8x8x8xf32>
    %596 = vector.shape_cast %594 : vector<4x16x8xf32> to vector<8x8x8xf32>
    %597 = vector.shape_cast %544 : vector<4x32x8xf32> to vector<8x16x8xf32>
    "tpu.trace_start"() <{level = 10 : i32, message = "bqd,bkd->bqk"}> : () -> ()
    %cst_229 = arith.constant dense<0.000000e+00> : vector<8x16x8xf32>
    %598 = tpu.matmul %597, %595, %cst_229 {dimension_numbers = #tpu.dot_dimension_numbers<[2], [2], [1], [1], [0, 0, 0, 1, 1, 1], [0], [0]>} : vector<8x16x8xf32>, vector<8x8x8xf32>, vector<8x16x8xf32> -> vector<8x16x8xf32>
    "tpu.trace_stop"() : () -> ()
    %cst_230 = arith.constant dense<0xFF800000> : vector<8x16xf32>
    %599 = vector.multi_reduction <maximumf>, %598, %cst_230 [2] : vector<8x16x8xf32> to vector<8x16xf32>
    %600 = vector.shape_cast %599 : vector<8x16xf32> to vector<8x16x1xf32>
    %601 = vector.broadcast %600 : vector<8x16x1xf32> to vector<8x16x8xf32>
    %602 = arith.subf %598, %601 : vector<8x16x8xf32>
    %603 = math.exp %602 : vector<8x16x8xf32>
    %cst_231 = arith.constant dense<0.000000e+00> : vector<8x16xf32>
    %604 = vector.multi_reduction <add>, %603, %cst_231 [2] : vector<8x16x8xf32> to vector<8x16xf32>
    %605 = vector.shape_cast %604 : vector<8x16xf32> to vector<8x16x1xf32>
    %606 = math.log %605 : vector<8x16x1xf32>
    %607 = arith.addf %600, %606 : vector<8x16x1xf32>
    %cst_232 = arith.constant -2.77258849 : f32
    %608 = vector.broadcast %cst_232 : f32 to vector<8x16x1xf32>
    %609 = arith.subf %608, %607 : vector<8x16x1xf32>
    %610 = vector.broadcast %609 : vector<8x16x1xf32> to vector<8x16x8xf32>
    %611 = arith.addf %598, %610 : vector<8x16x8xf32>
    %cst_233 = arith.constant dense<0xFF800000> : vector<8x8xf32>
    %612 = vector.multi_reduction <maximumf>, %611, %cst_233 [1] : vector<8x16x8xf32> to vector<8x8xf32>
    %613 = vector.shape_cast %612 : vector<8x8xf32> to vector<8x1x8xf32>
    %614 = vector.broadcast %613 : vector<8x1x8xf32> to vector<8x16x8xf32>
    %615 = arith.subf %611, %614 : vector<8x16x8xf32>
    %616 = math.exp %615 : vector<8x16x8xf32>
    %cst_234 = arith.constant dense<0.000000e+00> : vector<8x8xf32>
    %617 = vector.multi_reduction <add>, %616, %cst_234 [1] : vector<8x16x8xf32> to vector<8x8xf32>
    %618 = vector.shape_cast %617 : vector<8x8xf32> to vector<8x1x8xf32>
    %619 = math.log %618 : vector<8x1x8xf32>
    %620 = arith.addf %613, %619 : vector<8x1x8xf32>
    %cst_235 = arith.constant 0.693147242 : f32
    %621 = vector.broadcast %cst_235 : f32 to vector<8x1x8xf32>
    %622 = arith.subf %621, %620 : vector<8x1x8xf32>
    %623 = vector.broadcast %622 : vector<8x1x8xf32> to vector<8x16x8xf32>
    %624 = arith.addf %611, %623 : vector<8x16x8xf32>
    %625 = math.exp %624 : vector<8x16x8xf32>
    "tpu.trace_start"() <{level = 10 : i32, message = "bqk,bkd->bqd"}> : () -> ()
    %cst_236 = arith.constant dense<0.000000e+00> : vector<8x16x8xf32>
    %626 = tpu.matmul %625, %596, %cst_236 {dimension_numbers = #tpu.dot_dimension_numbers<[2], [1], [1], [2], [0, 0, 0, 1, 1, 2], [0], [0]>} : vector<8x16x8xf32>, vector<8x8x8xf32>, vector<8x16x8xf32> -> vector<8x16x8xf32>
    "tpu.trace_stop"() : () -> ()
    %627 = arith.addf %597, %626 : vector<8x16x8xf32>
    %628 = vector.extract_strided_slice %627 {offsets = [0, 0, 0], sizes = [2, 16, 8], strides = [1, 1, 1]} : vector<8x16x8xf32> to vector<2x16x8xf32>
    %629 = vector.extract_strided_slice %627 {offsets = [2, 0, 0], sizes = [2, 16, 8], strides = [1, 1, 1]} : vector<8x16x8xf32> to vector<2x16x8xf32>
    %630 = vector.extract_strided_slice %627 {offsets = [4, 0, 0], sizes = [2, 16, 8], strides = [1, 1, 1]} : vector<8x16x8xf32> to vector<2x16x8xf32>
    %631 = vector.extract_strided_slice %627 {offsets = [6, 0, 0], sizes = [2, 16, 8], strides = [1, 1, 1]} : vector<8x16x8xf32> to vector<2x16x8xf32>
    %632 = tpu.concatenate %628, %629, %630, %631 in 2 : vector<2x16x8xf32>, vector<2x16x8xf32>, vector<2x16x8xf32>, vector<2x16x8xf32> -> vector<2x16x32xf32>
    %633 = vector.shape_cast %632 : vector<2x16x32xf32> to vector<32x32xf32>
    %c120 = arith.constant 120 : index
    %c0_237 = arith.constant 0 : index
    %634 = vector.load %arg3[%c120, %c0_237] : memref<200x32xf32, #tpu.memory_space<vmem>>, vector<32x32xf32>
    %c152 = arith.constant 152 : index
    %c0_238 = arith.constant 0 : index
    %635 = vector.load %arg3[%c152, %c0_238] : memref<200x32xf32, #tpu.memory_space<vmem>>, vector<1x32xf32>
    %c153 = arith.constant 153 : index
    %c0_239 = arith.constant 0 : index
    %636 = vector.load %arg3[%c153, %c0_239] : memref<200x32xf32, #tpu.memory_space<vmem>>, vector<1x32xf32>
    %c154 = arith.constant 154 : index
    %c0_240 = arith.constant 0 : index
    %637 = vector.load %arg3[%c154, %c0_240] : memref<200x32xf32, #tpu.memory_space<vmem>>, vector<1x32xf32>
    %c155 = arith.constant 155 : index
    %c0_241 = arith.constant 0 : index
    %638 = vector.load %arg3[%c155, %c0_241] : memref<200x32xf32, #tpu.memory_space<vmem>>, vector<1x32xf32>
    %c156 = arith.constant 156 : index
    %c0_242 = arith.constant 0 : index
    %639 = vector.load %arg3[%c156, %c0_242] : memref<200x32xf32, #tpu.memory_space<vmem>>, vector<1x32xf32>
    %cst_243 = arith.constant dense<0.000000e+00> : vector<32xf32>
    %640 = vector.multi_reduction <add>, %633, %cst_243 [1] : vector<32x32xf32> to vector<32xf32>
    %641 = vector.shape_cast %640 : vector<32xf32> to vector<32x1xf32>
    %cst_244 = arith.constant 3.200000e+01 : f32
    %642 = vector.broadcast %cst_244 : f32 to vector<32x1xf32>
    %643 = arith.divf %641, %642 : vector<32x1xf32>
    %644 = vector.broadcast %643 : vector<32x1xf32> to vector<32x32xf32>
    %645 = arith.subf %633, %644 : vector<32x32xf32>
    %646 = arith.mulf %645, %645 : vector<32x32xf32>
    %cst_245 = arith.constant dense<0.000000e+00> : vector<32xf32>
    %647 = vector.multi_reduction <add>, %646, %cst_245 [1] : vector<32x32xf32> to vector<32xf32>
    %648 = vector.shape_cast %647 : vector<32xf32> to vector<32x1xf32>
    %cst_246 = arith.constant 3.200000e+01 : f32
    %649 = vector.broadcast %cst_246 : f32 to vector<32x1xf32>
    %650 = arith.divf %648, %649 : vector<32x1xf32>
    %651 = vector.broadcast %643 : vector<32x1xf32> to vector<32x32xf32>
    %652 = arith.subf %633, %651 : vector<32x32xf32>
    %cst_247 = arith.constant 9.99999974E-6 : f32
    %653 = vector.broadcast %cst_247 : f32 to vector<32x1xf32>
    %654 = arith.addf %650, %653 : vector<32x1xf32>
    %655 = math.rsqrt %654 : vector<32x1xf32>
    %656 = vector.broadcast %655 : vector<32x1xf32> to vector<32x32xf32>
    %657 = arith.mulf %652, %656 : vector<32x32xf32>
    %658 = vector.broadcast %636 : vector<1x32xf32> to vector<32x32xf32>
    %659 = arith.mulf %657, %658 : vector<32x32xf32>
    %660 = vector.broadcast %637 : vector<1x32xf32> to vector<32x32xf32>
    %661 = arith.addf %659, %660 : vector<32x32xf32>
    %cst_248 = arith.constant dense<0.000000e+00> : vector<32x32xf32>
    %662 = tpu.matmul %661, %634, %cst_248 {dimension_numbers = #tpu.dot_dimension_numbers<[1], [0], [0], [1], [0, 0, 1, 1], [], []>} : vector<32x32xf32>, vector<32x32xf32>, vector<32x32xf32> -> vector<32x32xf32>
    %663 = vector.broadcast %635 : vector<1x32xf32> to vector<32x32xf32>
    %664 = arith.addf %662, %663 : vector<32x32xf32>
    %cst_249 = arith.constant 0.000000e+00 : f32
    %665 = vector.broadcast %cst_249 : f32 to vector<32x32xf32>
    %666 = arith.maximumf %664, %665 : vector<32x32xf32>
    %667 = arith.addf %661, %666 : vector<32x32xf32>
    %cst_250 = arith.constant dense<0.000000e+00> : vector<32xf32>
    %668 = vector.multi_reduction <add>, %667, %cst_250 [1] : vector<32x32xf32> to vector<32xf32>
    %669 = vector.shape_cast %668 : vector<32xf32> to vector<32x1xf32>
    %cst_251 = arith.constant 3.200000e+01 : f32
    %670 = vector.broadcast %cst_251 : f32 to vector<32x1xf32>
    %671 = arith.divf %669, %670 : vector<32x1xf32>
    %672 = vector.broadcast %671 : vector<32x1xf32> to vector<32x32xf32>
    %673 = arith.subf %667, %672 : vector<32x32xf32>
    %674 = arith.mulf %673, %673 : vector<32x32xf32>
    %cst_252 = arith.constant dense<0.000000e+00> : vector<32xf32>
    %675 = vector.multi_reduction <add>, %674, %cst_252 [1] : vector<32x32xf32> to vector<32xf32>
    %676 = vector.shape_cast %675 : vector<32xf32> to vector<32x1xf32>
    %cst_253 = arith.constant 3.200000e+01 : f32
    %677 = vector.broadcast %cst_253 : f32 to vector<32x1xf32>
    %678 = arith.divf %676, %677 : vector<32x1xf32>
    %679 = vector.broadcast %671 : vector<32x1xf32> to vector<32x32xf32>
    %680 = arith.subf %667, %679 : vector<32x32xf32>
    %cst_254 = arith.constant 9.99999974E-6 : f32
    %681 = vector.broadcast %cst_254 : f32 to vector<32x1xf32>
    %682 = arith.addf %678, %681 : vector<32x1xf32>
    %683 = math.rsqrt %682 : vector<32x1xf32>
    %684 = vector.broadcast %683 : vector<32x1xf32> to vector<32x32xf32>
    %685 = arith.mulf %680, %684 : vector<32x32xf32>
    %686 = vector.broadcast %638 : vector<1x32xf32> to vector<32x32xf32>
    %687 = arith.mulf %685, %686 : vector<32x32xf32>
    %688 = vector.broadcast %639 : vector<1x32xf32> to vector<32x32xf32>
    %689 = arith.addf %687, %688 : vector<32x32xf32>
    %c1536 = arith.constant 1536 : index
    %c0_255 = arith.constant 0 : index
    %690 = vector.load %arg2[%c1536, %c0_255] : memref<1984x8xf32, #tpu.memory_space<vmem>>, vector<32x8xf32>
    %c1968 = arith.constant 1968 : index
    %c0_256 = arith.constant 0 : index
    %691 = vector.load %arg2[%c1968, %c0_256] : memref<1984x8xf32, #tpu.memory_space<vmem>>, vector<1x8xf32>
    %cst_257 = arith.constant dense<0.000000e+00> : vector<1x8xf32>
    %692 = tpu.matmul %3, %690, %cst_257 {dimension_numbers = #tpu.dot_dimension_numbers<[1], [0], [0], [1], [0, 0, 1, 1], [], []>} : vector<1x32xf32>, vector<32x8xf32>, vector<1x8xf32> -> vector<1x8xf32>
    %693 = arith.addf %692, %691 : vector<1x8xf32>
    %c1568 = arith.constant 1568 : index
    %c0_258 = arith.constant 0 : index
    %694 = vector.load %arg2[%c1568, %c0_258] : memref<1984x8xf32, #tpu.memory_space<vmem>>, vector<32x8xf32>
    %c1969 = arith.constant 1969 : index
    %c0_259 = arith.constant 0 : index
    %695 = vector.load %arg2[%c1969, %c0_259] : memref<1984x8xf32, #tpu.memory_space<vmem>>, vector<1x8xf32>
    %cst_260 = arith.constant dense<0.000000e+00> : vector<1x8xf32>
    %696 = tpu.matmul %3, %694, %cst_260 {dimension_numbers = #tpu.dot_dimension_numbers<[1], [0], [0], [1], [0, 0, 1, 1], [], []>} : vector<1x32xf32>, vector<32x8xf32>, vector<1x8xf32> -> vector<1x8xf32>
    %697 = arith.addf %696, %695 : vector<1x8xf32>
    %c1600 = arith.constant 1600 : index
    %c0_261 = arith.constant 0 : index
    %698 = vector.load %arg2[%c1600, %c0_261] : memref<1984x8xf32, #tpu.memory_space<vmem>>, vector<32x8xf32>
    %c1970 = arith.constant 1970 : index
    %c0_262 = arith.constant 0 : index
    %699 = vector.load %arg2[%c1970, %c0_262] : memref<1984x8xf32, #tpu.memory_space<vmem>>, vector<1x8xf32>
    %cst_263 = arith.constant dense<0.000000e+00> : vector<1x8xf32>
    %700 = tpu.matmul %3, %698, %cst_263 {dimension_numbers = #tpu.dot_dimension_numbers<[1], [0], [0], [1], [0, 0, 1, 1], [], []>} : vector<1x32xf32>, vector<32x8xf32>, vector<1x8xf32> -> vector<1x8xf32>
    %701 = arith.addf %700, %699 : vector<1x8xf32>
    %c1632 = arith.constant 1632 : index
    %c0_264 = arith.constant 0 : index
    %702 = vector.load %arg2[%c1632, %c0_264] : memref<1984x8xf32, #tpu.memory_space<vmem>>, vector<32x8xf32>
    %c1971 = arith.constant 1971 : index
    %c0_265 = arith.constant 0 : index
    %703 = vector.load %arg2[%c1971, %c0_265] : memref<1984x8xf32, #tpu.memory_space<vmem>>, vector<1x8xf32>
    %cst_266 = arith.constant dense<0.000000e+00> : vector<1x8xf32>
    %704 = tpu.matmul %3, %702, %cst_266 {dimension_numbers = #tpu.dot_dimension_numbers<[1], [0], [0], [1], [0, 0, 1, 1], [], []>} : vector<1x32xf32>, vector<32x8xf32>, vector<1x8xf32> -> vector<1x8xf32>
    %705 = arith.addf %704, %703 : vector<1x8xf32>
    %706 = vector.shape_cast %693 : vector<1x8xf32> to vector<1x1x8xf32>
    %707 = vector.shape_cast %697 : vector<1x8xf32> to vector<1x1x8xf32>
    %708 = vector.shape_cast %701 : vector<1x8xf32> to vector<1x1x8xf32>
    %709 = vector.shape_cast %705 : vector<1x8xf32> to vector<1x1x8xf32>
    %710 = tpu.concatenate %706, %707, %708, %709 in 0 : vector<1x1x8xf32>, vector<1x1x8xf32>, vector<1x1x8xf32>, vector<1x1x8xf32> -> vector<4x1x8xf32>
    %c1664 = arith.constant 1664 : index
    %c0_267 = arith.constant 0 : index
    %711 = vector.load %arg2[%c1664, %c0_267] : memref<1984x8xf32, #tpu.memory_space<vmem>>, vector<32x8xf32>
    %c1972 = arith.constant 1972 : index
    %c0_268 = arith.constant 0 : index
    %712 = vector.load %arg2[%c1972, %c0_268] : memref<1984x8xf32, #tpu.memory_space<vmem>>, vector<1x8xf32>
    %cst_269 = arith.constant dense<0.000000e+00> : vector<32x8xf32>
    %713 = tpu.matmul %689, %711, %cst_269 {dimension_numbers = #tpu.dot_dimension_numbers<[1], [0], [0], [1], [0, 0, 1, 1], [], []>} : vector<32x32xf32>, vector<32x8xf32>, vector<32x8xf32> -> vector<32x8xf32>
    %714 = vector.broadcast %712 : vector<1x8xf32> to vector<32x8xf32>
    %715 = arith.addf %713, %714 : vector<32x8xf32>
    %c1696 = arith.constant 1696 : index
    %c0_270 = arith.constant 0 : index
    %716 = vector.load %arg2[%c1696, %c0_270] : memref<1984x8xf32, #tpu.memory_space<vmem>>, vector<32x8xf32>
    %c1973 = arith.constant 1973 : index
    %c0_271 = arith.constant 0 : index
    %717 = vector.load %arg2[%c1973, %c0_271] : memref<1984x8xf32, #tpu.memory_space<vmem>>, vector<1x8xf32>
    %cst_272 = arith.constant dense<0.000000e+00> : vector<32x8xf32>
    %718 = tpu.matmul %689, %716, %cst_272 {dimension_numbers = #tpu.dot_dimension_numbers<[1], [0], [0], [1], [0, 0, 1, 1], [], []>} : vector<32x32xf32>, vector<32x8xf32>, vector<32x8xf32> -> vector<32x8xf32>
    %719 = vector.broadcast %717 : vector<1x8xf32> to vector<32x8xf32>
    %720 = arith.addf %718, %719 : vector<32x8xf32>
    %c1728 = arith.constant 1728 : index
    %c0_273 = arith.constant 0 : index
    %721 = vector.load %arg2[%c1728, %c0_273] : memref<1984x8xf32, #tpu.memory_space<vmem>>, vector<32x8xf32>
    %c1974 = arith.constant 1974 : index
    %c0_274 = arith.constant 0 : index
    %722 = vector.load %arg2[%c1974, %c0_274] : memref<1984x8xf32, #tpu.memory_space<vmem>>, vector<1x8xf32>
    %cst_275 = arith.constant dense<0.000000e+00> : vector<32x8xf32>
    %723 = tpu.matmul %689, %721, %cst_275 {dimension_numbers = #tpu.dot_dimension_numbers<[1], [0], [0], [1], [0, 0, 1, 1], [], []>} : vector<32x32xf32>, vector<32x8xf32>, vector<32x8xf32> -> vector<32x8xf32>
    %724 = vector.broadcast %722 : vector<1x8xf32> to vector<32x8xf32>
    %725 = arith.addf %723, %724 : vector<32x8xf32>
    %c1760 = arith.constant 1760 : index
    %c0_276 = arith.constant 0 : index
    %726 = vector.load %arg2[%c1760, %c0_276] : memref<1984x8xf32, #tpu.memory_space<vmem>>, vector<32x8xf32>
    %c1975 = arith.constant 1975 : index
    %c0_277 = arith.constant 0 : index
    %727 = vector.load %arg2[%c1975, %c0_277] : memref<1984x8xf32, #tpu.memory_space<vmem>>, vector<1x8xf32>
    %cst_278 = arith.constant dense<0.000000e+00> : vector<32x8xf32>
    %728 = tpu.matmul %689, %726, %cst_278 {dimension_numbers = #tpu.dot_dimension_numbers<[1], [0], [0], [1], [0, 0, 1, 1], [], []>} : vector<32x32xf32>, vector<32x8xf32>, vector<32x8xf32> -> vector<32x8xf32>
    %729 = vector.broadcast %727 : vector<1x8xf32> to vector<32x8xf32>
    %730 = arith.addf %728, %729 : vector<32x8xf32>
    %731 = vector.shape_cast %715 : vector<32x8xf32> to vector<1x32x8xf32>
    %732 = vector.shape_cast %720 : vector<32x8xf32> to vector<1x32x8xf32>
    %733 = vector.shape_cast %725 : vector<32x8xf32> to vector<1x32x8xf32>
    %734 = vector.shape_cast %730 : vector<32x8xf32> to vector<1x32x8xf32>
    %735 = tpu.concatenate %731, %732, %733, %734 in 0 : vector<1x32x8xf32>, vector<1x32x8xf32>, vector<1x32x8xf32>, vector<1x32x8xf32> -> vector<4x32x8xf32>
    %c1792 = arith.constant 1792 : index
    %c0_279 = arith.constant 0 : index
    %736 = vector.load %arg2[%c1792, %c0_279] : memref<1984x8xf32, #tpu.memory_space<vmem>>, vector<32x8xf32>
    %c1976 = arith.constant 1976 : index
    %c0_280 = arith.constant 0 : index
    %737 = vector.load %arg2[%c1976, %c0_280] : memref<1984x8xf32, #tpu.memory_space<vmem>>, vector<1x8xf32>
    %cst_281 = arith.constant dense<0.000000e+00> : vector<32x8xf32>
    %738 = tpu.matmul %689, %736, %cst_281 {dimension_numbers = #tpu.dot_dimension_numbers<[1], [0], [0], [1], [0, 0, 1, 1], [], []>} : vector<32x32xf32>, vector<32x8xf32>, vector<32x8xf32> -> vector<32x8xf32>
    %739 = vector.broadcast %737 : vector<1x8xf32> to vector<32x8xf32>
    %740 = arith.addf %738, %739 : vector<32x8xf32>
    %c1824 = arith.constant 1824 : index
    %c0_282 = arith.constant 0 : index
    %741 = vector.load %arg2[%c1824, %c0_282] : memref<1984x8xf32, #tpu.memory_space<vmem>>, vector<32x8xf32>
    %c1977 = arith.constant 1977 : index
    %c0_283 = arith.constant 0 : index
    %742 = vector.load %arg2[%c1977, %c0_283] : memref<1984x8xf32, #tpu.memory_space<vmem>>, vector<1x8xf32>
    %cst_284 = arith.constant dense<0.000000e+00> : vector<32x8xf32>
    %743 = tpu.matmul %689, %741, %cst_284 {dimension_numbers = #tpu.dot_dimension_numbers<[1], [0], [0], [1], [0, 0, 1, 1], [], []>} : vector<32x32xf32>, vector<32x8xf32>, vector<32x8xf32> -> vector<32x8xf32>
    %744 = vector.broadcast %742 : vector<1x8xf32> to vector<32x8xf32>
    %745 = arith.addf %743, %744 : vector<32x8xf32>
    %c1856 = arith.constant 1856 : index
    %c0_285 = arith.constant 0 : index
    %746 = vector.load %arg2[%c1856, %c0_285] : memref<1984x8xf32, #tpu.memory_space<vmem>>, vector<32x8xf32>
    %c1978 = arith.constant 1978 : index
    %c0_286 = arith.constant 0 : index
    %747 = vector.load %arg2[%c1978, %c0_286] : memref<1984x8xf32, #tpu.memory_space<vmem>>, vector<1x8xf32>
    %cst_287 = arith.constant dense<0.000000e+00> : vector<32x8xf32>
    %748 = tpu.matmul %689, %746, %cst_287 {dimension_numbers = #tpu.dot_dimension_numbers<[1], [0], [0], [1], [0, 0, 1, 1], [], []>} : vector<32x32xf32>, vector<32x8xf32>, vector<32x8xf32> -> vector<32x8xf32>
    %749 = vector.broadcast %747 : vector<1x8xf32> to vector<32x8xf32>
    %750 = arith.addf %748, %749 : vector<32x8xf32>
    %c1888 = arith.constant 1888 : index
    %c0_288 = arith.constant 0 : index
    %751 = vector.load %arg2[%c1888, %c0_288] : memref<1984x8xf32, #tpu.memory_space<vmem>>, vector<32x8xf32>
    %c1979 = arith.constant 1979 : index
    %c0_289 = arith.constant 0 : index
    %752 = vector.load %arg2[%c1979, %c0_289] : memref<1984x8xf32, #tpu.memory_space<vmem>>, vector<1x8xf32>
    %cst_290 = arith.constant dense<0.000000e+00> : vector<32x8xf32>
    %753 = tpu.matmul %689, %751, %cst_290 {dimension_numbers = #tpu.dot_dimension_numbers<[1], [0], [0], [1], [0, 0, 1, 1], [], []>} : vector<32x32xf32>, vector<32x8xf32>, vector<32x8xf32> -> vector<32x8xf32>
    %754 = vector.broadcast %752 : vector<1x8xf32> to vector<32x8xf32>
    %755 = arith.addf %753, %754 : vector<32x8xf32>
    %756 = vector.shape_cast %740 : vector<32x8xf32> to vector<1x32x8xf32>
    %757 = vector.shape_cast %745 : vector<32x8xf32> to vector<1x32x8xf32>
    %758 = vector.shape_cast %750 : vector<32x8xf32> to vector<1x32x8xf32>
    %759 = vector.shape_cast %755 : vector<32x8xf32> to vector<1x32x8xf32>
    %760 = tpu.concatenate %756, %757, %758, %759 in 0 : vector<1x32x8xf32>, vector<1x32x8xf32>, vector<1x32x8xf32>, vector<1x32x8xf32> -> vector<4x32x8xf32>
    %761 = vector.shape_cast %735 : vector<4x32x8xf32> to vector<8x16x8xf32>
    %762 = vector.shape_cast %760 : vector<4x32x8xf32> to vector<8x16x8xf32>
    %763 = vector.shape_cast %710 : vector<4x1x8xf32> to vector<4x1x1x8xf32>
    %764 = vector.shape_cast %763 : vector<4x1x1x8xf32> to vector<4x1x1x8xf32>
    %765 = vector.broadcast %764 : vector<4x1x1x8xf32> to vector<4x2x1x8xf32>
    %766 = vector.shape_cast %765 : vector<4x2x1x8xf32> to vector<8x1x8xf32>
    "tpu.trace_start"() <{level = 10 : i32, message = "bqd,bkd->bqk"}> : () -> ()
    %cst_291 = arith.constant dense<0.000000e+00> : vector<8x1x16xf32>
    %767 = tpu.matmul %766, %761, %cst_291 {dimension_numbers = #tpu.dot_dimension_numbers<[2], [2], [1], [1], [0, 0, 0, 1, 1, 1], [0], [0]>} : vector<8x1x8xf32>, vector<8x16x8xf32>, vector<8x1x16xf32> -> vector<8x1x16xf32>
    "tpu.trace_stop"() : () -> ()
    %cst_292 = arith.constant dense<0xFF800000> : vector<8x1xf32>
    %768 = vector.multi_reduction <maximumf>, %767, %cst_292 [2] : vector<8x1x16xf32> to vector<8x1xf32>
    %769 = vector.shape_cast %768 : vector<8x1xf32> to vector<8x1x1xf32>
    %770 = vector.broadcast %769 : vector<8x1x1xf32> to vector<8x1x16xf32>
    %771 = arith.subf %767, %770 : vector<8x1x16xf32>
    %772 = math.exp %771 : vector<8x1x16xf32>
    %cst_293 = arith.constant dense<0.000000e+00> : vector<8x1xf32>
    %773 = vector.multi_reduction <add>, %772, %cst_293 [2] : vector<8x1x16xf32> to vector<8x1xf32>
    %774 = vector.shape_cast %773 : vector<8x1xf32> to vector<8x1x1xf32>
    %775 = math.log %774 : vector<8x1x1xf32>
    %776 = arith.addf %769, %775 : vector<8x1x1xf32>
    %cst_294 = arith.constant 9.99999993E-9 : f32
    %777 = vector.broadcast %cst_294 : f32 to vector<8x1x1xf32>
    %778 = arith.subf %777, %776 : vector<8x1x1xf32>
    %779 = vector.broadcast %778 : vector<8x1x1xf32> to vector<8x1x16xf32>
    %780 = arith.addf %767, %779 : vector<8x1x16xf32>
    %cst_295 = arith.constant dense<0xFF800000> : vector<8x16xf32>
    %781 = vector.multi_reduction <maximumf>, %780, %cst_295 [1] : vector<8x1x16xf32> to vector<8x16xf32>
    %782 = vector.shape_cast %781 : vector<8x16xf32> to vector<8x1x16xf32>
    %783 = arith.subf %780, %782 : vector<8x1x16xf32>
    %784 = math.exp %783 : vector<8x1x16xf32>
    %cst_296 = arith.constant dense<0.000000e+00> : vector<8x16xf32>
    %785 = vector.multi_reduction <add>, %784, %cst_296 [1] : vector<8x1x16xf32> to vector<8x16xf32>
    %786 = vector.shape_cast %785 : vector<8x16xf32> to vector<8x1x16xf32>
    %787 = math.log %786 : vector<8x1x16xf32>
    %788 = arith.addf %782, %787 : vector<8x1x16xf32>
    %cst_297 = arith.constant -2.77258849 : f32
    %789 = vector.broadcast %cst_297 : f32 to vector<8x1x16xf32>
    %790 = arith.subf %789, %788 : vector<8x1x16xf32>
    %791 = arith.addf %780, %790 : vector<8x1x16xf32>
    %792 = math.exp %791 : vector<8x1x16xf32>
    "tpu.trace_start"() <{level = 10 : i32, message = "bqk,bkd->bqd"}> : () -> ()
    %cst_298 = arith.constant dense<0.000000e+00> : vector<8x1x8xf32>
    %793 = tpu.matmul %792, %762, %cst_298 {dimension_numbers = #tpu.dot_dimension_numbers<[2], [1], [1], [2], [0, 0, 0, 1, 1, 2], [0], [0]>} : vector<8x1x16xf32>, vector<8x16x8xf32>, vector<8x1x8xf32> -> vector<8x1x8xf32>
    "tpu.trace_stop"() : () -> ()
    %794 = arith.addf %766, %793 : vector<8x1x8xf32>
    %795 = vector.extract_strided_slice %794 {offsets = [0, 0, 0], sizes = [2, 1, 8], strides = [1, 1, 1]} : vector<8x1x8xf32> to vector<2x1x8xf32>
    %796 = vector.extract_strided_slice %794 {offsets = [2, 0, 0], sizes = [2, 1, 8], strides = [1, 1, 1]} : vector<8x1x8xf32> to vector<2x1x8xf32>
    %797 = vector.extract_strided_slice %794 {offsets = [4, 0, 0], sizes = [2, 1, 8], strides = [1, 1, 1]} : vector<8x1x8xf32> to vector<2x1x8xf32>
    %798 = vector.extract_strided_slice %794 {offsets = [6, 0, 0], sizes = [2, 1, 8], strides = [1, 1, 1]} : vector<8x1x8xf32> to vector<2x1x8xf32>
    %799 = tpu.concatenate %795, %796, %797, %798 in 2 : vector<2x1x8xf32>, vector<2x1x8xf32>, vector<2x1x8xf32>, vector<2x1x8xf32> -> vector<2x1x32xf32>
    %800 = vector.extract_strided_slice %799 {offsets = [0, 0, 0], sizes = [1, 1, 32], strides = [1, 1, 1]} : vector<2x1x32xf32> to vector<1x1x32xf32>
    %801 = vector.shape_cast %800 : vector<1x1x32xf32> to vector<1x32xf32>
    %802 = vector.extract_strided_slice %799 {offsets = [1, 0, 0], sizes = [1, 1, 32], strides = [1, 1, 1]} : vector<2x1x32xf32> to vector<1x1x32xf32>
    %803 = vector.shape_cast %802 : vector<1x1x32xf32> to vector<1x32xf32>
    %804 = tpu.concatenate %801, %803 in 0 : vector<1x32xf32>, vector<1x32xf32> -> vector<2x32xf32>
    %c160_299 = arith.constant 160 : index
    %c0_300 = arith.constant 0 : index
    %805 = vector.load %arg3[%c160_299, %c0_300] : memref<200x32xf32, #tpu.memory_space<vmem>>, vector<32x32xf32>
    %c192_301 = arith.constant 192 : index
    %c0_302 = arith.constant 0 : index
    %806 = vector.load %arg3[%c192_301, %c0_302] : memref<200x32xf32, #tpu.memory_space<vmem>>, vector<1x32xf32>
    %c193 = arith.constant 193 : index
    %c0_303 = arith.constant 0 : index
    %807 = vector.load %arg3[%c193, %c0_303] : memref<200x32xf32, #tpu.memory_space<vmem>>, vector<1x32xf32>
    %c194 = arith.constant 194 : index
    %c0_304 = arith.constant 0 : index
    %808 = vector.load %arg3[%c194, %c0_304] : memref<200x32xf32, #tpu.memory_space<vmem>>, vector<1x32xf32>
    %c195 = arith.constant 195 : index
    %c0_305 = arith.constant 0 : index
    %809 = vector.load %arg3[%c195, %c0_305] : memref<200x32xf32, #tpu.memory_space<vmem>>, vector<1x32xf32>
    %c196 = arith.constant 196 : index
    %c0_306 = arith.constant 0 : index
    %810 = vector.load %arg3[%c196, %c0_306] : memref<200x32xf32, #tpu.memory_space<vmem>>, vector<1x32xf32>
    %cst_307 = arith.constant dense<0.000000e+00> : vector<2xf32>
    %811 = vector.multi_reduction <add>, %804, %cst_307 [1] : vector<2x32xf32> to vector<2xf32>
    %812 = vector.shape_cast %811 : vector<2xf32> to vector<2x1xf32>
    %cst_308 = arith.constant 3.200000e+01 : f32
    %813 = vector.broadcast %cst_308 : f32 to vector<2x1xf32>
    %814 = arith.divf %812, %813 : vector<2x1xf32>
    %815 = vector.broadcast %814 : vector<2x1xf32> to vector<2x32xf32>
    %816 = arith.subf %804, %815 : vector<2x32xf32>
    %817 = arith.mulf %816, %816 : vector<2x32xf32>
    %cst_309 = arith.constant dense<0.000000e+00> : vector<2xf32>
    %818 = vector.multi_reduction <add>, %817, %cst_309 [1] : vector<2x32xf32> to vector<2xf32>
    %819 = vector.shape_cast %818 : vector<2xf32> to vector<2x1xf32>
    %cst_310 = arith.constant 3.200000e+01 : f32
    %820 = vector.broadcast %cst_310 : f32 to vector<2x1xf32>
    %821 = arith.divf %819, %820 : vector<2x1xf32>
    %822 = vector.broadcast %814 : vector<2x1xf32> to vector<2x32xf32>
    %823 = arith.subf %804, %822 : vector<2x32xf32>
    %cst_311 = arith.constant 9.99999974E-6 : f32
    %824 = vector.broadcast %cst_311 : f32 to vector<2x1xf32>
    %825 = arith.addf %821, %824 : vector<2x1xf32>
    %826 = math.rsqrt %825 : vector<2x1xf32>
    %827 = vector.broadcast %826 : vector<2x1xf32> to vector<2x32xf32>
    %828 = arith.mulf %823, %827 : vector<2x32xf32>
    %829 = vector.broadcast %807 : vector<1x32xf32> to vector<2x32xf32>
    %830 = arith.mulf %828, %829 : vector<2x32xf32>
    %831 = vector.broadcast %808 : vector<1x32xf32> to vector<2x32xf32>
    %832 = arith.addf %830, %831 : vector<2x32xf32>
    %cst_312 = arith.constant dense<0.000000e+00> : vector<2x32xf32>
    %833 = tpu.matmul %832, %805, %cst_312 {dimension_numbers = #tpu.dot_dimension_numbers<[1], [0], [0], [1], [0, 0, 1, 1], [], []>} : vector<2x32xf32>, vector<32x32xf32>, vector<2x32xf32> -> vector<2x32xf32>
    %834 = vector.broadcast %806 : vector<1x32xf32> to vector<2x32xf32>
    %835 = arith.addf %833, %834 : vector<2x32xf32>
    %cst_313 = arith.constant 0.000000e+00 : f32
    %836 = vector.broadcast %cst_313 : f32 to vector<2x32xf32>
    %837 = arith.maximumf %835, %836 : vector<2x32xf32>
    %838 = arith.addf %832, %837 : vector<2x32xf32>
    %cst_314 = arith.constant dense<0.000000e+00> : vector<2xf32>
    %839 = vector.multi_reduction <add>, %838, %cst_314 [1] : vector<2x32xf32> to vector<2xf32>
    %840 = vector.shape_cast %839 : vector<2xf32> to vector<2x1xf32>
    %cst_315 = arith.constant 3.200000e+01 : f32
    %841 = vector.broadcast %cst_315 : f32 to vector<2x1xf32>
    %842 = arith.divf %840, %841 : vector<2x1xf32>
    %843 = vector.broadcast %842 : vector<2x1xf32> to vector<2x32xf32>
    %844 = arith.subf %838, %843 : vector<2x32xf32>
    %845 = arith.mulf %844, %844 : vector<2x32xf32>
    %cst_316 = arith.constant dense<0.000000e+00> : vector<2xf32>
    %846 = vector.multi_reduction <add>, %845, %cst_316 [1] : vector<2x32xf32> to vector<2xf32>
    %847 = vector.shape_cast %846 : vector<2xf32> to vector<2x1xf32>
    %cst_317 = arith.constant 3.200000e+01 : f32
    %848 = vector.broadcast %cst_317 : f32 to vector<2x1xf32>
    %849 = arith.divf %847, %848 : vector<2x1xf32>
    %850 = vector.broadcast %842 : vector<2x1xf32> to vector<2x32xf32>
    %851 = arith.subf %838, %850 : vector<2x32xf32>
    %cst_318 = arith.constant 9.99999974E-6 : f32
    %852 = vector.broadcast %cst_318 : f32 to vector<2x1xf32>
    %853 = arith.addf %849, %852 : vector<2x1xf32>
    %854 = math.rsqrt %853 : vector<2x1xf32>
    %855 = vector.broadcast %854 : vector<2x1xf32> to vector<2x32xf32>
    %856 = arith.mulf %851, %855 : vector<2x32xf32>
    %857 = vector.broadcast %809 : vector<1x32xf32> to vector<2x32xf32>
    %858 = arith.mulf %856, %857 : vector<2x32xf32>
    %859 = vector.broadcast %810 : vector<1x32xf32> to vector<2x32xf32>
    %860 = arith.addf %858, %859 : vector<2x32xf32>
    %c0_319 = arith.constant 0 : index
    %c0_320 = arith.constant 0 : index
    %861 = vector.load %arg4[%c0_319, %c0_320] : memref<40x128xf32, #tpu.memory_space<vmem>>, vector<32x128xf32>
    %c32_321 = arith.constant 32 : index
    %c0_322 = arith.constant 0 : index
    %862 = vector.load %arg4[%c32_321, %c0_322] : memref<40x128xf32, #tpu.memory_space<vmem>>, vector<1x128xf32>
    %cst_323 = arith.constant dense<0.000000e+00> : vector<2x128xf32>
    %863 = tpu.matmul %860, %861, %cst_323 {dimension_numbers = #tpu.dot_dimension_numbers<[1], [0], [0], [1], [0, 0, 1, 1], [], []>} : vector<2x32xf32>, vector<32x128xf32>, vector<2x128xf32> -> vector<2x128xf32>
    %864 = vector.broadcast %862 : vector<1x128xf32> to vector<2x128xf32>
    %865 = arith.addf %863, %864 : vector<2x128xf32>
    %c0_324 = arith.constant 0 : index
    %c0_325 = arith.constant 0 : index
    %866 = vector.load %arg5[%c0_324, %c0_325] : memref<2x128xf32, #tpu.memory_space<vmem>>, vector<2x128xf32>
    tpu.vector_store %arg5[%c0_324, %c0_325], %865 {strides = array<i32>} : memref<2x128xf32, #tpu.memory_space<vmem>>, vector<2x128xf32>,
    return
  }
}

</mosaic_0001>

<llo_original>
// kernel: model_net_sink.1
$region0: #{model_net_sink.1}
  #allocation0 [shape = 'u32[]', space=smem, size = 0x4, offset = 0x4, fixed_abs, tag = 'smem constant byte address 0x4 - core index']
  #allocation1 [shape = 'u32[72,128]{1,0:T(1,128)}', space=vmem, size = 0x9000, scoped, tag = 'internal scratch']
  %s0 = inlined_call_operand.vmem [shape: f32[32,32], index: 0, kind: input, shape index: {}]
  %s1 = inlined_call_operand.vmem [shape: f32[24,32], index: 1, kind: input, shape index: {}]
  %s2 = inlined_call_operand.vmem [shape: f32[1984,8], index: 2, kind: input, shape index: {}]
  %s3 = inlined_call_operand.vmem [shape: f32[200,32], index: 3, kind: input, shape index: {}]
  %s4 = inlined_call_operand.vmem [shape: f32[40,128], index: 4, kind: input, shape index: {}]
  %s5 = inlined_call_operand.hbm [shape: f32[2,128], index: 5, kind: output, shape index: {}]
  %s6 = sld [smem:[#allocation0]]
  $region30: #{model_net_sink.1} parent=0
    _
  %s8 = ssub.s32 1, %s6
  %s9 = scalar_select 0, %s8, %s6
  $region1: #{model_net_sink.1} parent=0
    #allocation2 [shape = 'u8[1024]{0}', space=vmem, size = 0x400, scoped, tag = 'output window, operand 0, single buffered']
    #allocation3 [shape = 's32[1]{0}', space=sflag, size = 0x4, scoped, tag = 'scoped memory for model_net_sink.1']
    %10 = vsyncpa [#allocation3], 0
    // Predicated region
    $region2: #{model_net_sink.1} parent=1 // pred_check
      _
    $region3: #{model_net_sink.1} parent=1 // pred_check_branch
      %12 = sbr.rel (0) target = $region5
    $region4: #{model_net_sink.1} parent=1 // pred_region
      _
    $region5: #{model_net_sink.1} parent=1 // pred_fallthru
      _
    // Predicated region
    $region6: #{model_net_sink.1} parent=1 // pred_check
      _
    $region7: #{model_net_sink.1} parent=1 // pred_check_branch
      %14 = sbr.rel (0) target = $region9
    $region8: #{model_net_sink.1} parent=1 // pred_region
      _
    $region9: #{model_net_sink.1} parent=1 // pred_fallthru
      _
    // Predicated region
    $region10: #{model_net_sink.1} parent=1 // pred_check
      _
    $region11: #{model_net_sink.1} parent=1 // pred_check_branch
      %16 = sbr.rel (0) target = $region13
    $region12: #{model_net_sink.1} parent=1 // pred_region
      _
    $region13: #{model_net_sink.1} parent=1 // pred_fallthru
      _
    // Predicated region
    $region14: #{model_net_sink.1} parent=1 // pred_check
      _
    $region15: #{model_net_sink.1} parent=1 // pred_check_branch
      %18 = sbr.rel (0) target = $region17
    $region16: #{model_net_sink.1} parent=1 // pred_region
      _
    $region17: #{model_net_sink.1} parent=1 // pred_fallthru
      _
    // Predicated region
    $region18: #{model_net_sink.1} parent=1 // pred_check
      _
    $region19: #{model_net_sink.1} parent=1 // pred_check_branch
      %20 = sbr.rel (0) target = $region21
    $region20: #{model_net_sink.1} parent=1 // pred_region
      _
    $region21: #{model_net_sink.1} parent=1 // pred_fallthru
      _
    %v21 = vld [vmem:[%s0] sm:$0xff]
    %v22 = vld [vmem:[%s0 + $0x8] sm:$0xff]
    %v23 = vld [vmem:[%s0 + $0x10] sm:$0xff]
    %v24 = vld [vmem:[%s0 + $0x18] sm:$0xff]
    %v25 = vld [vmem:[%s1] sm:$0xff]
    %v26 = vld [vmem:[%s1 + $0x8] sm:$0xff]
    %v27 = vld [vmem:[%s1 + $0x10] sm:$0x1]
    %v28 = vld [vmem:[%s2] sm:$0xff]
    %v29 = vld [vmem:[%s2 + $0x8] sm:$0xff]
    %v30 = vld [vmem:[%s2 + $0x10] sm:$0xff]
    %v31 = vld [vmem:[%s2 + $0x18] sm:$0xff]
    %v32 = vld [vmem:[%s2 + $0x780] sm:$0x1]
    %v33 = vperm.slane %v32, 0
    %vm34 = vcmask 261120
    %v36 = vsel %vm34, %v25, 0
    %38 = vmatpush.msra.mxu0 0.0
    %39 = vmatpush.msra.mxu0 0.0
    %40 = vmatpush.msra.mxu0 0.0
    %41 = vmatpush.msra.mxu0 0.0
    %42 = vmatpush.msra.mxu0 0.0
    %43 = vmatpush.msra.mxu0 0.0
    %44 = vmatpush.msra.mxu0 0.0
    %45 = vmatpush.msra.mxu0 0.0
    %46 = vmatpush.msra.mxu0 0.0
    %47 = vmatpush.msra.mxu0 0.0
    %48 = vmatpush.msra.mxu0 0.0
    %49 = vmatpush.msra.mxu0 0.0
    %50 = vmatpush.msra.mxu0 %v31
    %51 = vmatpush.msra.mxu0 %v30
    %52 = vmatpush.msra.mxu0 %v29
    %53 = vmatpush.msra.mxu0 %v28
    %54 = vmatmul.f32.gmra.mxu0 %v36
    %v55 = vpop.f32.mrf.mxu0
    %v56 = vadd.f32 %v33, %v55
    %57 = vdwg.mxu0
    %v58 = vld [vmem:[%s2 + $0x20] sm:$0xff]
    %v59 = vld [vmem:[%s2 + $0x28] sm:$0xff]
    %v60 = vld [vmem:[%s2 + $0x30] sm:$0xff]
    %v61 = vld [vmem:[%s2 + $0x38] sm:$0xff]
    %v62 = vld [vmem:[%s2 + $0x781] sm:$0x1]
    %v63 = vperm.slane %v62, 0
    %64 = vmatpush.msra.mxu0 0.0
    %65 = vmatpush.msra.mxu0 0.0
    %66 = vmatpush.msra.mxu0 0.0
    %67 = vmatpush.msra.mxu0 0.0
    %68 = vmatpush.msra.mxu0 0.0
    %69 = vmatpush.msra.mxu0 0.0
    %70 = vmatpush.msra.mxu0 0.0
    %71 = vmatpush.msra.mxu0 0.0
    %72 = vmatpush.msra.mxu0 0.0
    %73 = vmatpush.msra.mxu0 0.0
    %74 = vmatpush.msra.mxu0 0.0
    %75 = vmatpush.msra.mxu0 0.0
    %76 = vmatpush.msra.mxu0 %v61
    %77 = vmatpush.msra.mxu0 %v60
    %78 = vmatpush.msra.mxu0 %v59
    %79 = vmatpush.msra.mxu0 %v58
    %80 = vmatmul.f32.gmra.mxu0 %v36
    %v81 = vpop.f32.mrf.mxu0
    %v82 = vadd.f32 %v63, %v81
    %83 = vdwg.mxu0
    %v84 = vld [vmem:[%s2 + $0x40] sm:$0xff]
    %v85 = vld [vmem:[%s2 + $0x48] sm:$0xff]
    %v86 = vld [vmem:[%s2 + $0x50] sm:$0xff]
    %v87 = vld [vmem:[%s2 + $0x58] sm:$0xff]
    %v88 = vld [vmem:[%s2 + $0x782] sm:$0x1]
    %v89 = vperm.slane %v88, 0
    %90 = vmatpush.msra.mxu0 0.0
    %91 = vmatpush.msra.mxu0 0.0
    %92 = vmatpush.msra.mxu0 0.0
    %93 = vmatpush.msra.mxu0 0.0
    %94 = vmatpush.msra.mxu0 0.0
    %95 = vmatpush.msra.mxu0 0.0
    %96 = vmatpush.msra.mxu0 0.0
    %97 = vmatpush.msra.mxu0 0.0
    %98 = vmatpush.msra.mxu0 0.0
    %99 = vmatpush.msra.mxu0 0.0
    %100 = vmatpush.msra.mxu0 0.0
    %101 = vmatpush.msra.mxu0 0.0
    %102 = vmatpush.msra.mxu0 %v87
    %103 = vmatpush.msra.mxu0 %v86
    %104 = vmatpush.msra.mxu0 %v85
    %105 = vmatpush.msra.mxu0 %v84
    %106 = vmatmul.f32.gmra.mxu0 %v36
    %v107 = vpop.f32.mrf.mxu0
    %v108 = vadd.f32 %v89, %v107
    %109 = vdwg.mxu0
    %v110 = vld [vmem:[%s2 + $0x60] sm:$0xff]
    %v111 = vld [vmem:[%s2 + $0x68] sm:$0xff]
    %v112 = vld [vmem:[%s2 + $0x70] sm:$0xff]
    %v113 = vld [vmem:[%s2 + $0x78] sm:$0xff]
    %v114 = vld [vmem:[%s2 + $0x783] sm:$0x1]
    %v115 = vperm.slane %v114, 0
    %116 = vmatpush.msra.mxu0 0.0
    %117 = vmatpush.msra.mxu0 0.0
    %118 = vmatpush.msra.mxu0 0.0
    %119 = vmatpush.msra.mxu0 0.0
    %120 = vmatpush.msra.mxu0 0.0
    %121 = vmatpush.msra.mxu0 0.0
    %122 = vmatpush.msra.mxu0 0.0
    %123 = vmatpush.msra.mxu0 0.0
    %124 = vmatpush.msra.mxu0 0.0
    %125 = vmatpush.msra.mxu0 0.0
    %126 = vmatpush.msra.mxu0 0.0
    %127 = vmatpush.msra.mxu0 0.0
    %128 = vmatpush.msra.mxu0 %v113
    %129 = vmatpush.msra.mxu0 %v112
    %130 = vmatpush.msra.mxu0 %v111
    %131 = vmatpush.msra.mxu0 %v110
    %132 = vmatmul.f32.gmra.mxu0 %v36
    %v133 = vpop.f32.mrf.mxu0
    %v134 = vadd.f32 %v115, %v133
    %135 = vdwg.mxu0
    %v136 = vld [vmem:[%s2 + $0x80] sm:$0xff]
    %v137 = vld [vmem:[%s2 + $0x88] sm:$0xff]
    %v138 = vld [vmem:[%s2 + $0x90] sm:$0xff]
    %v139 = vld [vmem:[%s2 + $0x98] sm:$0xff]
    %v140 = vld [vmem:[%s2 + $0x784] sm:$0x1]
    %v141 = vperm.slane %v140, 0
    %v143 = vsel %vm34, %v21, 0
    %v146 = vsel %vm34, %v22, 0
    %v149 = vsel %vm34, %v23, 0
    %v152 = vsel %vm34, %v24, 0
    %154 = vmatpush.msra.mxu0 0.0
    %155 = vmatpush.msra.mxu0 0.0
    %156 = vmatpush.msra.mxu0 0.0
    %157 = vmatpush.msra.mxu0 0.0
    %158 = vmatpush.msra.mxu0 0.0
    %159 = vmatpush.msra.mxu0 0.0
    %160 = vmatpush.msra.mxu0 0.0
    %161 = vmatpush.msra.mxu0 0.0
    %162 = vmatpush.msra.mxu0 0.0
    %163 = vmatpush.msra.mxu0 0.0
    %164 = vmatpush.msra.mxu0 0.0
    %165 = vmatpush.msra.mxu0 0.0
    %166 = vmatpush.msra.mxu0 %v139
    %167 = vmatpush.msra.mxu0 %v138
    %168 = vmatpush.msra.mxu0 %v137
    %169 = vmatpush.msra.mxu0 %v136
    %170 = vmatmul.f32.gmra.mxu0 %v143
    %v171 = vpop.f32.mrf.mxu0
    %v172 = vadd.f32 %v141, %v171
    %173 = vmatmul.f32.gmra.mxu0 %v146
    %v174 = vpop.f32.mrf.mxu0
    %v175 = vadd.f32 %v141, %v174
    %176 = vmatmul.f32.gmra.mxu0 %v149
    %v177 = vpop.f32.mrf.mxu0
    %v178 = vadd.f32 %v141, %v177
    %179 = vmatmul.f32.gmra.mxu0 %v152
    %v180 = vpop.f32.mrf.mxu0
    %v181 = vadd.f32 %v141, %v180
    %182 = vdwg.mxu0
    %v183 = vld [vmem:[%s2 + $0xa0] sm:$0xff]
    %v184 = vld [vmem:[%s2 + $0xa8] sm:$0xff]
    %v185 = vld [vmem:[%s2 + $0xb0] sm:$0xff]
    %v186 = vld [vmem:[%s2 + $0xb8] sm:$0xff]
    %v187 = vld [vmem:[%s2 + $0x785] sm:$0x1]
    %v188 = vperm.slane %v187, 0
    %189 = vmatpush.msra.mxu0 0.0
    %190 = vmatpush.msra.mxu0 0.0
    %191 = vmatpush.msra.mxu0 0.0
    %192 = vmatpush.msra.mxu0 0.0
    %193 = vmatpush.msra.mxu0 0.0
    %194 = vmatpush.msra.mxu0 0.0
    %195 = vmatpush.msra.mxu0 0.0
    %196 = vmatpush.msra.mxu0 0.0
    %197 = vmatpush.msra.mxu0 0.0
    %198 = vmatpush.msra.mxu0 0.0
    %199 = vmatpush.msra.mxu0 0.0
    %200 = vmatpush.msra.mxu0 0.0
    %201 = vmatpush.msra.mxu0 %v186
    %202 = vmatpush.msra.mxu0 %v185
    %203 = vmatpush.msra.mxu0 %v184
    %204 = vmatpush.msra.mxu0 %v183
    %205 = vmatmul.f32.gmra.mxu0 %v143
    %v206 = vpop.f32.mrf.mxu0
    %v207 = vadd.f32 %v188, %v206
    %208 = vmatmul.f32.gmra.mxu0 %v146
    %v209 = vpop.f32.mrf.mxu0
    %v210 = vadd.f32 %v188, %v209
    %211 = vmatmul.f32.gmra.mxu0 %v149
    %v212 = vpop.f32.mrf.mxu0
    %v213 = vadd.f32 %v188, %v212
    %214 = vmatmul.f32.gmra.mxu0 %v152
    %v215 = vpop.f32.mrf.mxu0
    %v216 = vadd.f32 %v188, %v215
    %217 = vdwg.mxu0
    %v218 = vld [vmem:[%s2 + $0xc0] sm:$0xff]
    %v219 = vld [vmem:[%s2 + $0xc8] sm:$0xff]
    %v220 = vld [vmem:[%s2 + $0xd0] sm:$0xff]
    %v221 = vld [vmem:[%s2 + $0xd8] sm:$0xff]
    %v222 = vld [vmem:[%s2 + $0x786] sm:$0x1]
    %v223 = vperm.slane %v222, 0
    %224 = vmatpush.msra.mxu0 0.0
    %225 = vmatpush.msra.mxu0 0.0
    %226 = vmatpush.msra.mxu0 0.0
    %227 = vmatpush.msra.mxu0 0.0
    %228 = vmatpush.msra.mxu0 0.0
    %229 = vmatpush.msra.mxu0 0.0
    %230 = vmatpush.msra.mxu0 0.0
    %231 = vmatpush.msra.mxu0 0.0
    %232 = vmatpush.msra.mxu0 0.0
    %233 = vmatpush.msra.mxu0 0.0
    %234 = vmatpush.msra.mxu0 0.0
    %235 = vmatpush.msra.mxu0 0.0
    %236 = vmatpush.msra.mxu0 %v221
    %237 = vmatpush.msra.mxu0 %v220
    %238 = vmatpush.msra.mxu0 %v219
    %239 = vmatpush.msra.mxu0 %v218
    %240 = vmatmul.f32.gmra.mxu0 %v143
    %v241 = vpop.f32.mrf.mxu0
    %v242 = vadd.f32 %v223, %v241
    %243 = vmatmul.f32.gmra.mxu0 %v146
    %v244 = vpop.f32.mrf.mxu0
    %v245 = vadd.f32 %v223, %v244
    %246 = vmatmul.f32.gmra.mxu0 %v149
    %v247 = vpop.f32.mrf.mxu0
    %v248 = vadd.f32 %v223, %v247
    %249 = vmatmul.f32.gmra.mxu0 %v152
    %v250 = vpop.f32.mrf.mxu0
    %v251 = vadd.f32 %v223, %v250
    %252 = vdwg.mxu0
    %v253 = vld [vmem:[%s2 + $0xe0] sm:$0xff]
    %v254 = vld [vmem:[%s2 + $0xe8] sm:$0xff]
    %v255 = vld [vmem:[%s2 + $0xf0] sm:$0xff]
    %v256 = vld [vmem:[%s2 + $0xf8] sm:$0xff]
    %v257 = vld [vmem:[%s2 + $0x787] sm:$0x1]
    %v258 = vperm.slane %v257, 0
    %259 = vmatpush.msra.mxu0 0.0
    %260 = vmatpush.msra.mxu0 0.0
    %261 = vmatpush.msra.mxu0 0.0
    %262 = vmatpush.msra.mxu0 0.0
    %263 = vmatpush.msra.mxu0 0.0
    %264 = vmatpush.msra.mxu0 0.0
    %265 = vmatpush.msra.mxu0 0.0
    %266 = vmatpush.msra.mxu0 0.0
    %267 = vmatpush.msra.mxu0 0.0
    %268 = vmatpush.msra.mxu0 0.0
    %269 = vmatpush.msra.mxu0 0.0
    %270 = vmatpush.msra.mxu0 0.0
    %271 = vmatpush.msra.mxu0 %v256
    %272 = vmatpush.msra.mxu0 %v255
    %273 = vmatpush.msra.mxu0 %v254
    %274 = vmatpush.msra.mxu0 %v253
    %275 = vmatmul.f32.gmra.mxu0 %v143
    %v276 = vpop.f32.mrf.mxu0
    %v277 = vadd.f32 %v258, %v276
    %278 = vmatmul.f32.gmra.mxu0 %v146
    %v279 = vpop.f32.mrf.mxu0
    %v280 = vadd.f32 %v258, %v279
    %281 = vmatmul.f32.gmra.mxu0 %v149
    %v282 = vpop.f32.mrf.mxu0
    %v283 = vadd.f32 %v258, %v282
    %284 = vmatmul.f32.gmra.mxu0 %v152
    %v285 = vpop.f32.mrf.mxu0
    %v286 = vadd.f32 %v258, %v285
    %287 = vdwg.mxu0
    %v288 = vld [vmem:[%s2 + $0x100] sm:$0xff]
    %v289 = vld [vmem:[%s2 + $0x108] sm:$0xff]
    %v290 = vld [vmem:[%s2 + $0x110] sm:$0xff]
    %v291 = vld [vmem:[%s2 + $0x118] sm:$0xff]
    %v292 = vld [vmem:[%s2 + $0x788] sm:$0x1]
    %v293 = vperm.slane %v292, 0
    %294 = vmatpush.msra.mxu0 0.0
    %295 = vmatpush.msra.mxu0 0.0
    %296 = vmatpush.msra.mxu0 0.0
    %297 = vmatpush.msra.mxu0 0.0
    %298 = vmatpush.msra.mxu0 0.0
    %299 = vmatpush.msra.mxu0 0.0
    %300 = vmatpush.msra.mxu0 0.0
    %301 = vmatpush.msra.mxu0 0.0
    %302 = vmatpush.msra.mxu0 0.0
    %303 = vmatpush.msra.mxu0 0.0
    %304 = vmatpush.msra.mxu0 0.0
    %305 = vmatpush.msra.mxu0 0.0
    %306 = vmatpush.msra.mxu0 %v291
    %307 = vmatpush.msra.mxu0 %v290
    %308 = vmatpush.msra.mxu0 %v289
    %309 = vmatpush.msra.mxu0 %v288
    %310 = vmatmul.f32.gmra.mxu0 %v143
    %v311 = vpop.f32.mrf.mxu0
    %v312 = vadd.f32 %v293, %v311
    %313 = vmatmul.f32.gmra.mxu0 %v146
    %v314 = vpop.f32.mrf.mxu0
    %v315 = vadd.f32 %v293, %v314
    %316 = vmatmul.f32.gmra.mxu0 %v149
    %v317 = vpop.f32.mrf.mxu0
    %v318 = vadd.f32 %v293, %v317
    %319 = vmatmul.f32.gmra.mxu0 %v152
    %v320 = vpop.f32.mrf.mxu0
    %v321 = vadd.f32 %v293, %v320
    %322 = vdwg.mxu0
    %v323 = vld [vmem:[%s2 + $0x120] sm:$0xff]
    %v324 = vld [vmem:[%s2 + $0x128] sm:$0xff]
    %v325 = vld [vmem:[%s2 + $0x130] sm:$0xff]
    %v326 = vld [vmem:[%s2 + $0x138] sm:$0xff]
    %v327 = vld [vmem:[%s2 + $0x789] sm:$0x1]
    %v328 = vperm.slane %v327, 0
    %329 = vmatpush.msra.mxu0 0.0
    %330 = vmatpush.msra.mxu0 0.0
    %331 = vmatpush.msra.mxu0 0.0
    %332 = vmatpush.msra.mxu0 0.0
    %333 = vmatpush.msra.mxu0 0.0
    %334 = vmatpush.msra.mxu0 0.0
    %335 = vmatpush.msra.mxu0 0.0
    %336 = vmatpush.msra.mxu0 0.0
    %337 = vmatpush.msra.mxu0 0.0
    %338 = vmatpush.msra.mxu0 0.0
    %339 = vmatpush.msra.mxu0 0.0
    %340 = vmatpush.msra.mxu0 0.0
    %341 = vmatpush.msra.mxu0 %v326
    %342 = vmatpush.msra.mxu0 %v325
    %343 = vmatpush.msra.mxu0 %v324
    %344 = vmatpush.msra.mxu0 %v323
    %345 = vmatmul.f32.gmra.mxu0 %v143
    %v346 = vpop.f32.mrf.mxu0
    %v347 = vadd.f32 %v328, %v346
    %348 = vmatmul.f32.gmra.mxu0 %v146
    %v349 = vpop.f32.mrf.mxu0
    %v350 = vadd.f32 %v328, %v349
    %351 = vmatmul.f32.gmra.mxu0 %v149
    %v352 = vpop.f32.mrf.mxu0
    %v353 = vadd.f32 %v328, %v352
    %354 = vmatmul.f32.gmra.mxu0 %v152
    %v355 = vpop.f32.mrf.mxu0
    %v356 = vadd.f32 %v328, %v355
    %357 = vdwg.mxu0
    %v358 = vld [vmem:[%s2 + $0x140] sm:$0xff]
    %v359 = vld [vmem:[%s2 + $0x148] sm:$0xff]
    %v360 = vld [vmem:[%s2 + $0x150] sm:$0xff]
    %v361 = vld [vmem:[%s2 + $0x158] sm:$0xff]
    %v362 = vld [vmem:[%s2 + $0x78a] sm:$0x1]
    %v363 = vperm.slane %v362, 0
    %364 = vmatpush.msra.mxu0 0.0
    %365 = vmatpush.msra.mxu0 0.0
    %366 = vmatpush.msra.mxu0 0.0
    %367 = vmatpush.msra.mxu0 0.0
    %368 = vmatpush.msra.mxu0 0.0
    %369 = vmatpush.msra.mxu0 0.0
    %370 = vmatpush.msra.mxu0 0.0
    %371 = vmatpush.msra.mxu0 0.0
    %372 = vmatpush.msra.mxu0 0.0
    %373 = vmatpush.msra.mxu0 0.0
    %374 = vmatpush.msra.mxu0 0.0
    %375 = vmatpush.msra.mxu0 0.0
    %376 = vmatpush.msra.mxu0 %v361
    %377 = vmatpush.msra.mxu0 %v360
    %378 = vmatpush.msra.mxu0 %v359
    %379 = vmatpush.msra.mxu0 %v358
    %380 = vmatmul.f32.gmra.mxu0 %v143
    %v381 = vpop.f32.mrf.mxu0
    %v382 = vadd.f32 %v363, %v381
    %383 = vmatmul.f32.gmra.mxu0 %v146
    %v384 = vpop.f32.mrf.mxu0
    %v385 = vadd.f32 %v363, %v384
    %386 = vmatmul.f32.gmra.mxu0 %v149
    %v387 = vpop.f32.mrf.mxu0
    %v388 = vadd.f32 %v363, %v387
    %389 = vmatmul.f32.gmra.mxu0 %v152
    %v390 = vpop.f32.mrf.mxu0
    %v391 = vadd.f32 %v363, %v390
    %392 = vdwg.mxu0
    %v393 = vld [vmem:[%s2 + $0x160] sm:$0xff]
    %v394 = vld [vmem:[%s2 + $0x168] sm:$0xff]
    %v395 = vld [vmem:[%s2 + $0x170] sm:$0xff]
    %v396 = vld [vmem:[%s2 + $0x178] sm:$0xff]
    %v397 = vld [vmem:[%s2 + $0x78b] sm:$0x1]
    %v398 = vperm.slane %v397, 0
    %399 = vmatpush.msra.mxu0 0.0
    %400 = vmatpush.msra.mxu0 0.0
    %401 = vmatpush.msra.mxu0 0.0
    %402 = vmatpush.msra.mxu0 0.0
    %403 = vmatpush.msra.mxu0 0.0
    %404 = vmatpush.msra.mxu0 0.0
    %405 = vmatpush.msra.mxu0 0.0
    %406 = vmatpush.msra.mxu0 0.0
    %407 = vmatpush.msra.mxu0 0.0
    %408 = vmatpush.msra.mxu0 0.0
    %409 = vmatpush.msra.mxu0 0.0
    %410 = vmatpush.msra.mxu0 0.0
    %411 = vmatpush.msra.mxu0 %v396
    %412 = vmatpush.msra.mxu0 %v395
    %413 = vmatpush.msra.mxu0 %v394
    %414 = vmatpush.msra.mxu0 %v393
    %415 = vmatmul.f32.gmra.mxu0 %v143
    %v416 = vpop.f32.mrf.mxu0
    %v417 = vadd.f32 %v398, %v416
    %418 = vmatmul.f32.gmra.mxu0 %v146
    %v419 = vpop.f32.mrf.mxu0
    %v420 = vadd.f32 %v398, %v419
    %421 = vmatmul.f32.gmra.mxu0 %v149
    %v422 = vpop.f32.mrf.mxu0
    %v423 = vadd.f32 %v398, %v422
    %424 = vmatmul.f32.gmra.mxu0 %v152
    %v425 = vpop.f32.mrf.mxu0
    %v426 = vadd.f32 %v398, %v425
    %427 = vdwg.mxu0
    %vm428 = vcmask 64512
    %v430 = vsel %vm428, %v56, 0
    %v433 = vsel %vm428, %v172, 0
    %v436 = vsel %vm428, %v175, 0
    %438 = vmatpush.xpose.msra.mxu0 0.0
    %439 = vmatpush.xpose.msra.mxu0 0.0
    %440 = vmatpush.xpose.msra.mxu0 0.0
    %441 = vmatpush.xpose.msra.mxu0 0.0
    %442 = vmatpush.xpose.msra.mxu0 0.0
    %443 = vmatpush.xpose.msra.mxu0 0.0
    %444 = vmatpush.xpose.msra.mxu0 0.0
    %445 = vmatpush.xpose.msra.mxu0 0.0
    %446 = vmatpush.xpose.msra.mxu0 0.0
    %447 = vmatpush.xpose.msra.mxu0 0.0
    %448 = vmatpush.xpose.msra.mxu0 0.0
    %449 = vmatpush.xpose.msra.mxu0 0.0
    %450 = vmatpush.xpose.msra.mxu0 0.0
    %451 = vmatpush.xpose.msra.mxu0 0.0
    %452 = vmatpush.xpose.msra.mxu0 %v436
    %453 = vmatpush.xpose.msra.mxu0 %v433
    %454 = vmatmul.f32.gmra.mxu0 %v430
    %v455 = vpop.f32.mrf.mxu0
    %v456 = vadd.f32 0.0, %v455
    %457 = vdwg.mxu0
    %v459 = vsel %vm428, %v178, 0
    %v462 = vsel %vm428, %v181, 0
    %464 = vmatpush.xpose.msra.mxu0 0.0
    %465 = vmatpush.xpose.msra.mxu0 0.0
    %466 = vmatpush.xpose.msra.mxu0 0.0
    %467 = vmatpush.xpose.msra.mxu0 0.0
    %468 = vmatpush.xpose.msra.mxu0 0.0
    %469 = vmatpush.xpose.msra.mxu0 0.0
    %470 = vmatpush.xpose.msra.mxu0 0.0
    %471 = vmatpush.xpose.msra.mxu0 0.0
    %472 = vmatpush.xpose.msra.mxu0 0.0
    %473 = vmatpush.xpose.msra.mxu0 0.0
    %474 = vmatpush.xpose.msra.mxu0 0.0
    %475 = vmatpush.xpose.msra.mxu0 0.0
    %476 = vmatpush.xpose.msra.mxu0 0.0
    %477 = vmatpush.xpose.msra.mxu0 0.0
    %478 = vmatpush.xpose.msra.mxu0 %v462
    %479 = vmatpush.xpose.msra.mxu0 %v459
    %480 = vmatmul.f32.gmra.mxu0 %v430
    %v481 = vpop.f32.mrf.mxu0
    %v482 = vadd.f32 0.0, %v481
    %483 = vdwg.mxu0
    %v485 = vsel %vm428, %v82, 0
    %v488 = vsel %vm428, %v207, 0
    %v491 = vsel %vm428, %v210, 0
    %493 = vmatpush.xpose.msra.mxu0 0.0
    %494 = vmatpush.xpose.msra.mxu0 0.0
    %495 = vmatpush.xpose.msra.mxu0 0.0
    %496 = vmatpush.xpose.msra.mxu0 0.0
    %497 = vmatpush.xpose.msra.mxu0 0.0
    %498 = vmatpush.xpose.msra.mxu0 0.0
    %499 = vmatpush.xpose.msra.mxu0 0.0
    %500 = vmatpush.xpose.msra.mxu0 0.0
    %501 = vmatpush.xpose.msra.mxu0 0.0
    %502 = vmatpush.xpose.msra.mxu0 0.0
    %503 = vmatpush.xpose.msra.mxu0 0.0
    %504 = vmatpush.xpose.msra.mxu0 0.0
    %505 = vmatpush.xpose.msra.mxu0 0.0
    %506 = vmatpush.xpose.msra.mxu0 0.0
    %507 = vmatpush.xpose.msra.mxu0 %v491
    %508 = vmatpush.xpose.msra.mxu0 %v488
    %509 = vmatmul.f32.gmra.mxu0 %v485
    %v510 = vpop.f32.mrf.mxu0
    %v511 = vadd.f32 0.0, %v510
    %512 = vdwg.mxu0
    %v514 = vsel %vm428, %v213, 0
    %v517 = vsel %vm428, %v216, 0
    %519 = vmatpush.xpose.msra.mxu0 0.0
    %520 = vmatpush.xpose.msra.mxu0 0.0
    %521 = vmatpush.xpose.msra.mxu0 0.0
    %522 = vmatpush.xpose.msra.mxu0 0.0
    %523 = vmatpush.xpose.msra.mxu0 0.0
    %524 = vmatpush.xpose.msra.mxu0 0.0
    %525 = vmatpush.xpose.msra.mxu0 0.0
    %526 = vmatpush.xpose.msra.mxu0 0.0
    %527 = vmatpush.xpose.msra.mxu0 0.0
    %528 = vmatpush.xpose.msra.mxu0 0.0
    %529 = vmatpush.xpose.msra.mxu0 0.0
    %530 = vmatpush.xpose.msra.mxu0 0.0
    %531 = vmatpush.xpose.msra.mxu0 0.0
    %532 = vmatpush.xpose.msra.mxu0 0.0
    %533 = vmatpush.xpose.msra.mxu0 %v517
    %534 = vmatpush.xpose.msra.mxu0 %v514
    %535 = vmatmul.f32.gmra.mxu0 %v485
    %v536 = vpop.f32.mrf.mxu0
    %v537 = vadd.f32 0.0, %v536
    %538 = vdwg.mxu0
    %v540 = vsel %vm428, %v108, 0
    %v543 = vsel %vm428, %v242, 0
    %v546 = vsel %vm428, %v245, 0
    %548 = vmatpush.xpose.msra.mxu0 0.0
    %549 = vmatpush.xpose.msra.mxu0 0.0
    %550 = vmatpush.xpose.msra.mxu0 0.0
    %551 = vmatpush.xpose.msra.mxu0 0.0
    %552 = vmatpush.xpose.msra.mxu0 0.0
    %553 = vmatpush.xpose.msra.mxu0 0.0
    %554 = vmatpush.xpose.msra.mxu0 0.0
    %555 = vmatpush.xpose.msra.mxu0 0.0
    %556 = vmatpush.xpose.msra.mxu0 0.0
    %557 = vmatpush.xpose.msra.mxu0 0.0
    %558 = vmatpush.xpose.msra.mxu0 0.0
    %559 = vmatpush.xpose.msra.mxu0 0.0
    %560 = vmatpush.xpose.msra.mxu0 0.0
    %561 = vmatpush.xpose.msra.mxu0 0.0
    %562 = vmatpush.xpose.msra.mxu0 %v546
    %563 = vmatpush.xpose.msra.mxu0 %v543
    %564 = vmatmul.f32.gmra.mxu0 %v540
    %v565 = vpop.f32.mrf.mxu0
    %v566 = vadd.f32 0.0, %v565
    %567 = vdwg.mxu0
    %v569 = vsel %vm428, %v248, 0
    %v572 = vsel %vm428, %v251, 0
    %574 = vmatpush.xpose.msra.mxu0 0.0
    %575 = vmatpush.xpose.msra.mxu0 0.0
    %576 = vmatpush.xpose.msra.mxu0 0.0
    %577 = vmatpush.xpose.msra.mxu0 0.0
    %578 = vmatpush.xpose.msra.mxu0 0.0
    %579 = vmatpush.xpose.msra.mxu0 0.0
    %580 = vmatpush.xpose.msra.mxu0 0.0
    %581 = vmatpush.xpose.msra.mxu0 0.0
    %582 = vmatpush.xpose.msra.mxu0 0.0
    %583 = vmatpush.xpose.msra.mxu0 0.0
    %584 = vmatpush.xpose.msra.mxu0 0.0
    %585 = vmatpush.xpose.msra.mxu0 0.0
    %586 = vmatpush.xpose.msra.mxu0 0.0
    %587 = vmatpush.xpose.msra.mxu0 0.0
    %588 = vmatpush.xpose.msra.mxu0 %v572
    %589 = vmatpush.xpose.msra.mxu0 %v569
    %590 = vmatmul.f32.gmra.mxu0 %v540
    %v591 = vpop.f32.mrf.mxu0
    %v592 = vadd.f32 0.0, %v591
    %593 = vdwg.mxu0
    %v595 = vsel %vm428, %v134, 0
    %v598 = vsel %vm428, %v277, 0
    %v601 = vsel %vm428, %v280, 0
    %603 = vmatpush.xpose.msra.mxu0 0.0
    %604 = vmatpush.xpose.msra.mxu0 0.0
    %605 = vmatpush.xpose.msra.mxu0 0.0
    %606 = vmatpush.xpose.msra.mxu0 0.0
    %607 = vmatpush.xpose.msra.mxu0 0.0
    %608 = vmatpush.xpose.msra.mxu0 0.0
    %609 = vmatpush.xpose.msra.mxu0 0.0
    %610 = vmatpush.xpose.msra.mxu0 0.0
    %611 = vmatpush.xpose.msra.mxu0 0.0
    %612 = vmatpush.xpose.msra.mxu0 0.0
    %613 = vmatpush.xpose.msra.mxu0 0.0
    %614 = vmatpush.xpose.msra.mxu0 0.0
    %615 = vmatpush.xpose.msra.mxu0 0.0
    %616 = vmatpush.xpose.msra.mxu0 0.0
    %617 = vmatpush.xpose.msra.mxu0 %v601
    %618 = vmatpush.xpose.msra.mxu0 %v598
    %619 = vmatmul.f32.gmra.mxu0 %v595
    %v620 = vpop.f32.mrf.mxu0
    %v621 = vadd.f32 0.0, %v620
    %622 = vdwg.mxu0
    %v624 = vsel %vm428, %v283, 0
    %v627 = vsel %vm428, %v286, 0
    %629 = vmatpush.xpose.msra.mxu0 0.0
    %630 = vmatpush.xpose.msra.mxu0 0.0
    %631 = vmatpush.xpose.msra.mxu0 0.0
    %632 = vmatpush.xpose.msra.mxu0 0.0
    %633 = vmatpush.xpose.msra.mxu0 0.0
    %634 = vmatpush.xpose.msra.mxu0 0.0
    %635 = vmatpush.xpose.msra.mxu0 0.0
    %636 = vmatpush.xpose.msra.mxu0 0.0
    %637 = vmatpush.xpose.msra.mxu0 0.0
    %638 = vmatpush.xpose.msra.mxu0 0.0
    %639 = vmatpush.xpose.msra.mxu0 0.0
    %640 = vmatpush.xpose.msra.mxu0 0.0
    %641 = vmatpush.xpose.msra.mxu0 0.0
    %642 = vmatpush.xpose.msra.mxu0 0.0
    %643 = vmatpush.xpose.msra.mxu0 %v627
    %644 = vmatpush.xpose.msra.mxu0 %v624
    %645 = vmatmul.f32.gmra.mxu0 %v595
    %v646 = vpop.f32.mrf.mxu0
    %v647 = vadd.f32 0.0, %v646
    %648 = vdwg.mxu0
    %vm649 = vcmask 130048
    %v650 = vsel %vm649, %v456, -inf
    %651 = vmax.xlane.f32.xlu0 %v650
    %v652 = vpop.xlane.xlu0 %651
    %v653 = vsel %vm649, %v482, -inf
    %654 = vmax.xlane.f32.xlu0 %v653
    %v655 = vpop.xlane.xlu0 %654
    %v656 = vsel %vm649, %v511, -inf
    %657 = vmax.xlane.f32.xlu0 %v656
    %v658 = vpop.xlane.xlu0 %657
    %v659 = vsel %vm649, %v537, -inf
    %660 = vmax.xlane.f32.xlu0 %v659
    %v661 = vpop.xlane.xlu0 %660
    %v662 = vsel %vm649, %v566, -inf
    %663 = vmax.xlane.f32.xlu0 %v662
    %v664 = vpop.xlane.xlu0 %663
    %v665 = vsel %vm649, %v592, -inf
    %666 = vmax.xlane.f32.xlu0 %v665
    %v667 = vpop.xlane.xlu0 %666
    %v668 = vsel %vm649, %v621, -inf
    %669 = vmax.xlane.f32.xlu0 %v668
    %v670 = vpop.xlane.xlu0 %669
    %v671 = vsel %vm649, %v647, -inf
    %672 = vmax.xlane.f32.xlu0 %v671
    %v673 = vpop.xlane.xlu0 %672
    %v674 = vsub.f32 %v456, %v652
    %v675 = vsub.f32 %v482, %v655
    %v676 = vsub.f32 %v511, %v658
    %v677 = vsub.f32 %v537, %v661
    %v678 = vsub.f32 %v566, %v664
    %v679 = vsub.f32 %v592, %v667
    %v680 = vsub.f32 %v621, %v670
    %v681 = vsub.f32 %v647, %v673
    %v682 = vmul.f32 %v674, 1.442695
    %v683 = vpow.pop %v682
    %v684 = vmul.f32 %v675, 1.442695
    %v685 = vpow.pop %v684
    %v686 = vmul.f32 %v676, 1.442695
    %v687 = vpow.pop %v686
    %v688 = vmul.f32 %v677, 1.442695
    %v689 = vpow.pop %v688
    %v690 = vmul.f32 %v678, 1.442695
    %v691 = vpow.pop %v690
    %v692 = vmul.f32 %v679, 1.442695
    %v693 = vpow.pop %v692
    %v694 = vmul.f32 %v680, 1.442695
    %v695 = vpow.pop %v694
    %v696 = vmul.f32 %v681, 1.442695
    %v697 = vpow.pop %v696
    %v698 = vsel %vm649, %v683, 0.0
    %699 = vadd.xlane.f32.xlu0 %v698
    %v700 = vpop.xlane.xlu0 %699
    %v701 = vsel %vm649, %v685, 0.0
    %702 = vadd.xlane.f32.xlu0 %v701
    %v703 = vpop.xlane.xlu0 %702
    %v704 = vsel %vm649, %v687, 0.0
    %705 = vadd.xlane.f32.xlu0 %v704
    %v706 = vpop.xlane.xlu0 %705
    %v707 = vsel %vm649, %v689, 0.0
    %708 = vadd.xlane.f32.xlu0 %v707
    %v709 = vpop.xlane.xlu0 %708
    %v710 = vsel %vm649, %v691, 0.0
    %711 = vadd.xlane.f32.xlu0 %v710
    %v712 = vpop.xlane.xlu0 %711
    %v713 = vsel %vm649, %v693, 0.0
    %714 = vadd.xlane.f32.xlu0 %v713
    %v715 = vpop.xlane.xlu0 %714
    %v716 = vsel %vm649, %v695, 0.0
    %717 = vadd.xlane.f32.xlu0 %v716
    %v718 = vpop.xlane.xlu0 %717
    %v719 = vsel %vm649, %v697, 0.0
    %720 = vadd.xlane.f32.xlu0 %v719
    %v721 = vpop.xlane.xlu0 %720
    %v722 = vlog2.pop %v700
    %v723 = vmul.f32 %v722, 0.6931472
    %v724 = vlog2.pop %v703
    %v725 = vmul.f32 %v724, 0.6931472
    %v726 = vlog2.pop %v706
    %v727 = vmul.f32 %v726, 0.6931472
    %v728 = vlog2.pop %v709
    %v729 = vmul.f32 %v728, 0.6931472
    %v730 = vlog2.pop %v712
    %v731 = vmul.f32 %v730, 0.6931472
    %v732 = vlog2.pop %v715
    %v733 = vmul.f32 %v732, 0.6931472
    %v734 = vlog2.pop %v718
    %v735 = vmul.f32 %v734, 0.6931472
    %v736 = vlog2.pop %v721
    %v737 = vmul.f32 %v736, 0.6931472
    %v738 = vadd.f32 %v652, %v723
    %v739 = vadd.f32 %v655, %v725
    %v740 = vadd.f32 %v658, %v727
    %v741 = vadd.f32 %v661, %v729
    %v742 = vadd.f32 %v664, %v731
    %v743 = vadd.f32 %v667, %v733
    %v744 = vadd.f32 %v670, %v735
    %v745 = vadd.f32 %v673, %v737
    %v746 = vsub.f32 -2.0794415, %v738
    %v747 = vsub.f32 -2.0794415, %v739
    %v748 = vsub.f32 -2.0794415, %v740
    %v749 = vsub.f32 -2.0794415, %v741
    %v750 = vsub.f32 -2.0794415, %v742
    %v751 = vsub.f32 -2.0794415, %v743
    %v752 = vsub.f32 -2.0794415, %v744
    %v753 = vsub.f32 -2.0794415, %v745
    %v754 = vadd.f32 %v456, %v746
    %v755 = vadd.f32 %v482, %v747
    %v756 = vadd.f32 %v511, %v748
    %v757 = vadd.f32 %v537, %v749
    %v758 = vadd.f32 %v566, %v750
    %v759 = vadd.f32 %v592, %v751
    %v760 = vadd.f32 %v621, %v752
    %v761 = vadd.f32 %v647, %v753
    %v762 = vsel %vm649, %v754, -inf
    %v763 = vrot.slane %v762, 4
    %v764 = vmax.f32 %v762, %v763
    %v765 = vrot.slane %v764, 2
    %v766 = vmax.f32 %v764, %v765
    %v767 = vrot.slane %v766, 1
    %v768 = vmax.f32 %v766, %v767
    %v769 = vsel %vm649, %v755, -inf
    %v770 = vrot.slane %v769, 4
    %v771 = vmax.f32 %v769, %v770
    %v772 = vrot.slane %v771, 2
    %v773 = vmax.f32 %v771, %v772
    %v774 = vrot.slane %v773, 1
    %v775 = vmax.f32 %v773, %v774
    %v776 = vsel %vm649, %v756, -inf
    %v777 = vrot.slane %v776, 4
    %v778 = vmax.f32 %v776, %v777
    %v779 = vrot.slane %v778, 2
    %v780 = vmax.f32 %v778, %v779
    %v781 = vrot.slane %v780, 1
    %v782 = vmax.f32 %v780, %v781
    %v783 = vsel %vm649, %v757, -inf
    %v784 = vrot.slane %v783, 4
    %v785 = vmax.f32 %v783, %v784
    %v786 = vrot.slane %v785, 2
    %v787 = vmax.f32 %v785, %v786
    %v788 = vrot.slane %v787, 1
    %v789 = vmax.f32 %v787, %v788
    %v790 = vsel %vm649, %v758, -inf
    %v791 = vrot.slane %v790, 4
    %v792 = vmax.f32 %v790, %v791
    %v793 = vrot.slane %v792, 2
    %v794 = vmax.f32 %v792, %v793
    %v795 = vrot.slane %v794, 1
    %v796 = vmax.f32 %v794, %v795
    %v797 = vsel %vm649, %v759, -inf
    %v798 = vrot.slane %v797, 4
    %v799 = vmax.f32 %v797, %v798
    %v800 = vrot.slane %v799, 2
    %v801 = vmax.f32 %v799, %v800
    %v802 = vrot.slane %v801, 1
    %v803 = vmax.f32 %v801, %v802
    %v804 = vsel %vm649, %v760, -inf
    %v805 = vrot.slane %v804, 4
    %v806 = vmax.f32 %v804, %v805
    %v807 = vrot.slane %v806, 2
    %v808 = vmax.f32 %v806, %v807
    %v809 = vrot.slane %v808, 1
    %v810 = vmax.f32 %v808, %v809
    %v811 = vsel %vm649, %v761, -inf
    %v812 = vrot.slane %v811, 4
    %v813 = vmax.f32 %v811, %v812
    %v814 = vrot.slane %v813, 2
    %v815 = vmax.f32 %v813, %v814
    %v816 = vrot.slane %v815, 1
    %v817 = vmax.f32 %v815, %v816
    %v818 = vsub.f32 %v754, %v768
    %v819 = vsub.f32 %v755, %v775
    %v820 = vsub.f32 %v756, %v782
    %v821 = vsub.f32 %v757, %v789
    %v822 = vsub.f32 %v758, %v796
    %v823 = vsub.f32 %v759, %v803
    %v824 = vsub.f32 %v760, %v810
    %v825 = vsub.f32 %v761, %v817
    %v826 = vmul.f32 %v818, 1.442695
    %v827 = vpow.pop %v826
    %v828 = vmul.f32 %v819, 1.442695
    %v829 = vpow.pop %v828
    %v830 = vmul.f32 %v820, 1.442695
    %v831 = vpow.pop %v830
    %v832 = vmul.f32 %v821, 1.442695
    %v833 = vpow.pop %v832
    %v834 = vmul.f32 %v822, 1.442695
    %v835 = vpow.pop %v834
    %v836 = vmul.f32 %v823, 1.442695
    %v837 = vpow.pop %v836
    %v838 = vmul.f32 %v824, 1.442695
    %v839 = vpow.pop %v838
    %v840 = vmul.f32 %v825, 1.442695
    %v841 = vpow.pop %v840
    %v842 = vsel %vm649, %v827, 0.0
    %v843 = vrot.slane %v842, 4
    %v844 = vadd.f32 %v842, %v843
    %v845 = vrot.slane %v844, 2
    %v846 = vadd.f32 %v844, %v845
    %v847 = vrot.slane %v846, 1
    %v848 = vadd.f32 %v846, %v847
    %v849 = vsel %vm649, %v829, 0.0
    %v850 = vrot.slane %v849, 4
    %v851 = vadd.f32 %v849, %v850
    %v852 = vrot.slane %v851, 2
    %v853 = vadd.f32 %v851, %v852
    %v854 = vrot.slane %v853, 1
    %v855 = vadd.f32 %v853, %v854
    %v856 = vsel %vm649, %v831, 0.0
    %v857 = vrot.slane %v856, 4
    %v858 = vadd.f32 %v856, %v857
    %v859 = vrot.slane %v858, 2
    %v860 = vadd.f32 %v858, %v859
    %v861 = vrot.slane %v860, 1
    %v862 = vadd.f32 %v860, %v861
    %v863 = vsel %vm649, %v833, 0.0
    %v864 = vrot.slane %v863, 4
    %v865 = vadd.f32 %v863, %v864
    %v866 = vrot.slane %v865, 2
    %v867 = vadd.f32 %v865, %v866
    %v868 = vrot.slane %v867, 1
    %v869 = vadd.f32 %v867, %v868
    %v870 = vsel %vm649, %v835, 0.0
    %v871 = vrot.slane %v870, 4
    %v872 = vadd.f32 %v870, %v871
    %v873 = vrot.slane %v872, 2
    %v874 = vadd.f32 %v872, %v873
    %v875 = vrot.slane %v874, 1
    %v876 = vadd.f32 %v874, %v875
    %v877 = vsel %vm649, %v837, 0.0
    %v878 = vrot.slane %v877, 4
    %v879 = vadd.f32 %v877, %v878
    %v880 = vrot.slane %v879, 2
    %v881 = vadd.f32 %v879, %v880
    %v882 = vrot.slane %v881, 1
    %v883 = vadd.f32 %v881, %v882
    %v884 = vsel %vm649, %v839, 0.0
    %v885 = vrot.slane %v884, 4
    %v886 = vadd.f32 %v884, %v885
    %v887 = vrot.slane %v886, 2
    %v888 = vadd.f32 %v886, %v887
    %v889 = vrot.slane %v888, 1
    %v890 = vadd.f32 %v888, %v889
    %v891 = vsel %vm649, %v841, 0.0
    %v892 = vrot.slane %v891, 4
    %v893 = vadd.f32 %v891, %v892
    %v894 = vrot.slane %v893, 2
    %v895 = vadd.f32 %v893, %v894
    %v896 = vrot.slane %v895, 1
    %v897 = vadd.f32 %v895, %v896
    %v898 = vlog2.pop %v848
    %v899 = vmul.f32 %v898, 0.6931472
    %v900 = vlog2.pop %v855
    %v901 = vmul.f32 %v900, 0.6931472
    %v902 = vlog2.pop %v862
    %v903 = vmul.f32 %v902, 0.6931472
    %v904 = vlog2.pop %v869
    %v905 = vmul.f32 %v904, 0.6931472
    %v906 = vlog2.pop %v876
    %v907 = vmul.f32 %v906, 0.6931472
    %v908 = vlog2.pop %v883
    %v909 = vmul.f32 %v908, 0.6931472
    %v910 = vlog2.pop %v890
    %v911 = vmul.f32 %v910, 0.6931472
    %v912 = vlog2.pop %v897
    %v913 = vmul.f32 %v912, 0.6931472
    %v914 = vadd.f32 %v768, %v899
    %v915 = vadd.f32 %v775, %v901
    %v916 = vadd.f32 %v782, %v903
    %v917 = vadd.f32 %v789, %v905
    %v918 = vadd.f32 %v796, %v907
    %v919 = vadd.f32 %v803, %v909
    %v920 = vadd.f32 %v810, %v911
    %v921 = vadd.f32 %v817, %v913
    %v922 = vsub.f32 -0.693147, %v914
    %v923 = vsub.f32 -0.693147, %v915
    %v924 = vsub.f32 -0.693147, %v916
    %v925 = vsub.f32 -0.693147, %v917
    %v926 = vsub.f32 -0.693147, %v918
    %v927 = vsub.f32 -0.693147, %v919
    %v928 = vsub.f32 -0.693147, %v920
    %v929 = vsub.f32 -0.693147, %v921
    %v930 = vadd.f32 %v754, %v922
    %v931 = vadd.f32 %v755, %v923
    %v932 = vadd.f32 %v756, %v924
    %v933 = vadd.f32 %v757, %v925
    %v934 = vadd.f32 %v758, %v926
    %v935 = vadd.f32 %v759, %v927
    %v936 = vadd.f32 %v760, %v928
    %v937 = vadd.f32 %v761, %v929
    %v938 = vmul.f32 %v930, 1.442695
    %v939 = vpow.pop %v938
    %v940 = vmul.f32 %v931, 1.442695
    %v941 = vpow.pop %v940
    %v942 = vmul.f32 %v932, 1.442695
    %v943 = vpow.pop %v942
    %v944 = vmul.f32 %v933, 1.442695
    %v945 = vpow.pop %v944
    %v946 = vmul.f32 %v934, 1.442695
    %v947 = vpow.pop %v946
    %v948 = vmul.f32 %v935, 1.442695
    %v949 = vpow.pop %v948
    %v950 = vmul.f32 %v936, 1.442695
    %v951 = vpow.pop %v950
    %v952 = vmul.f32 %v937, 1.442695
    %v953 = vpow.pop %v952
    %v955 = vsel %vm649, %v939, 0
    %957 = vmatpush.msra.mxu0 0.0
    %958 = vmatpush.msra.mxu0 0.0
    %959 = vmatpush.msra.mxu0 0.0
    %960 = vmatpush.msra.mxu0 0.0
    %961 = vmatpush.msra.mxu0 0.0
    %962 = vmatpush.msra.mxu0 0.0
    %963 = vmatpush.msra.mxu0 0.0
    %964 = vmatpush.msra.mxu0 0.0
    %965 = vmatpush.msra.mxu0 0.0
    %966 = vmatpush.msra.mxu0 0.0
    %967 = vmatpush.msra.mxu0 0.0
    %968 = vmatpush.msra.mxu0 0.0
    %969 = vmatpush.msra.mxu0 0.0
    %970 = vmatpush.msra.mxu0 0.0
    %971 = vmatpush.msra.mxu0 %v315
    %972 = vmatpush.msra.mxu0 %v312
    %973 = vmatmul.f32.gmra.mxu0 %v955
    %v974 = vpop.f32.mrf.mxu0
    %v975 = vadd.f32 0.0, %v974
    %976 = vdwg.mxu0
    %v978 = vsel %vm649, %v941, 0
    %980 = vmatpush.msra.mxu0 0.0
    %981 = vmatpush.msra.mxu0 0.0
    %982 = vmatpush.msra.mxu0 0.0
    %983 = vmatpush.msra.mxu0 0.0
    %984 = vmatpush.msra.mxu0 0.0
    %985 = vmatpush.msra.mxu0 0.0
    %986 = vmatpush.msra.mxu0 0.0
    %987 = vmatpush.msra.mxu0 0.0
    %988 = vmatpush.msra.mxu0 0.0
    %989 = vmatpush.msra.mxu0 0.0
    %990 = vmatpush.msra.mxu0 0.0
    %991 = vmatpush.msra.mxu0 0.0
    %992 = vmatpush.msra.mxu0 0.0
    %993 = vmatpush.msra.mxu0 0.0
    %994 = vmatpush.msra.mxu0 %v321
    %995 = vmatpush.msra.mxu0 %v318
    %996 = vmatmul.f32.gmra.mxu0 %v978
    %v997 = vpop.f32.mrf.mxu0
    %v998 = vadd.f32 0.0, %v997
    %999 = vdwg.mxu0
    %v1001 = vsel %vm649, %v943, 0
    %1003 = vmatpush.msra.mxu0 0.0
    %1004 = vmatpush.msra.mxu0 0.0
    %1005 = vmatpush.msra.mxu0 0.0
    %1006 = vmatpush.msra.mxu0 0.0
    %1007 = vmatpush.msra.mxu0 0.0
    %1008 = vmatpush.msra.mxu0 0.0
    %1009 = vmatpush.msra.mxu0 0.0
    %1010 = vmatpush.msra.mxu0 0.0
    %1011 = vmatpush.msra.mxu0 0.0
    %1012 = vmatpush.msra.mxu0 0.0
    %1013 = vmatpush.msra.mxu0 0.0
    %1014 = vmatpush.msra.mxu0 0.0
    %1015 = vmatpush.msra.mxu0 0.0
    %1016 = vmatpush.msra.mxu0 0.0
    %1017 = vmatpush.msra.mxu0 %v350
    %1018 = vmatpush.msra.mxu0 %v347
    %1019 = vmatmul.f32.gmra.mxu0 %v1001
    %v1020 = vpop.f32.mrf.mxu0
    %v1021 = vadd.f32 0.0, %v1020
    %1022 = vdwg.mxu0
    %v1024 = vsel %vm649, %v945, 0
    %1026 = vmatpush.msra.mxu0 0.0
    %1027 = vmatpush.msra.mxu0 0.0
    %1028 = vmatpush.msra.mxu0 0.0
    %1029 = vmatpush.msra.mxu0 0.0
    %1030 = vmatpush.msra.mxu0 0.0
    %1031 = vmatpush.msra.mxu0 0.0
    %1032 = vmatpush.msra.mxu0 0.0
    %1033 = vmatpush.msra.mxu0 0.0
    %1034 = vmatpush.msra.mxu0 0.0
    %1035 = vmatpush.msra.mxu0 0.0
    %1036 = vmatpush.msra.mxu0 0.0
    %1037 = vmatpush.msra.mxu0 0.0
    %1038 = vmatpush.msra.mxu0 0.0
    %1039 = vmatpush.msra.mxu0 0.0
    %1040 = vmatpush.msra.mxu0 %v356
    %1041 = vmatpush.msra.mxu0 %v353
    %1042 = vmatmul.f32.gmra.mxu0 %v1024
    %v1043 = vpop.f32.mrf.mxu0
    %v1044 = vadd.f32 0.0, %v1043
    %1045 = vdwg.mxu0
    %v1047 = vsel %vm649, %v947, 0
    %1049 = vmatpush.msra.mxu0 0.0
    %1050 = vmatpush.msra.mxu0 0.0
    %1051 = vmatpush.msra.mxu0 0.0
    %1052 = vmatpush.msra.mxu0 0.0
    %1053 = vmatpush.msra.mxu0 0.0
    %1054 = vmatpush.msra.mxu0 0.0
    %1055 = vmatpush.msra.mxu0 0.0
    %1056 = vmatpush.msra.mxu0 0.0
    %1057 = vmatpush.msra.mxu0 0.0
    %1058 = vmatpush.msra.mxu0 0.0
    %1059 = vmatpush.msra.mxu0 0.0
    %1060 = vmatpush.msra.mxu0 0.0
    %1061 = vmatpush.msra.mxu0 0.0
    %1062 = vmatpush.msra.mxu0 0.0
    %1063 = vmatpush.msra.mxu0 %v385
    %1064 = vmatpush.msra.mxu0 %v382
    %1065 = vmatmul.f32.gmra.mxu0 %v1047
    %v1066 = vpop.f32.mrf.mxu0
    %v1067 = vadd.f32 0.0, %v1066
    %1068 = vdwg.mxu0
    %v1070 = vsel %vm649, %v949, 0
    %1072 = vmatpush.msra.mxu0 0.0
    %1073 = vmatpush.msra.mxu0 0.0
    %1074 = vmatpush.msra.mxu0 0.0
    %1075 = vmatpush.msra.mxu0 0.0
    %1076 = vmatpush.msra.mxu0 0.0
    %1077 = vmatpush.msra.mxu0 0.0
    %1078 = vmatpush.msra.mxu0 0.0
    %1079 = vmatpush.msra.mxu0 0.0
    %1080 = vmatpush.msra.mxu0 0.0
    %1081 = vmatpush.msra.mxu0 0.0
    %1082 = vmatpush.msra.mxu0 0.0
    %1083 = vmatpush.msra.mxu0 0.0
    %1084 = vmatpush.msra.mxu0 0.0
    %1085 = vmatpush.msra.mxu0 0.0
    %1086 = vmatpush.msra.mxu0 %v391
    %1087 = vmatpush.msra.mxu0 %v388
    %1088 = vmatmul.f32.gmra.mxu0 %v1070
    %v1089 = vpop.f32.mrf.mxu0
    %v1090 = vadd.f32 0.0, %v1089
    %1091 = vdwg.mxu0
    %v1093 = vsel %vm649, %v951, 0
    %1095 = vmatpush.msra.mxu0 0.0
    %1096 = vmatpush.msra.mxu0 0.0
    %1097 = vmatpush.msra.mxu0 0.0
    %1098 = vmatpush.msra.mxu0 0.0
    %1099 = vmatpush.msra.mxu0 0.0
    %1100 = vmatpush.msra.mxu0 0.0
    %1101 = vmatpush.msra.mxu0 0.0
    %1102 = vmatpush.msra.mxu0 0.0
    %1103 = vmatpush.msra.mxu0 0.0
    %1104 = vmatpush.msra.mxu0 0.0
    %1105 = vmatpush.msra.mxu0 0.0
    %1106 = vmatpush.msra.mxu0 0.0
    %1107 = vmatpush.msra.mxu0 0.0
    %1108 = vmatpush.msra.mxu0 0.0
    %1109 = vmatpush.msra.mxu0 %v420
    %1110 = vmatpush.msra.mxu0 %v417
    %1111 = vmatmul.f32.gmra.mxu0 %v1093
    %v1112 = vpop.f32.mrf.mxu0
    %v1113 = vadd.f32 0.0, %v1112
    %1114 = vdwg.mxu0
    %v1116 = vsel %vm649, %v953, 0
    %1118 = vmatpush.msra.mxu0 0.0
    %1119 = vmatpush.msra.mxu0 0.0
    %1120 = vmatpush.msra.mxu0 0.0
    %1121 = vmatpush.msra.mxu0 0.0
    %1122 = vmatpush.msra.mxu0 0.0
    %1123 = vmatpush.msra.mxu0 0.0
    %1124 = vmatpush.msra.mxu0 0.0
    %1125 = vmatpush.msra.mxu0 0.0
    %1126 = vmatpush.msra.mxu0 0.0
    %1127 = vmatpush.msra.mxu0 0.0
    %1128 = vmatpush.msra.mxu0 0.0
    %1129 = vmatpush.msra.mxu0 0.0
    %1130 = vmatpush.msra.mxu0 0.0
    %1131 = vmatpush.msra.mxu0 0.0
    %1132 = vmatpush.msra.mxu0 %v426
    %1133 = vmatpush.msra.mxu0 %v423
    %1134 = vmatmul.f32.gmra.mxu0 %v1116
    %v1135 = vpop.f32.mrf.mxu0
    %v1136 = vadd.f32 0.0, %v1135
    %1137 = vdwg.mxu0
    %v1138 = vadd.f32 %v56, %v975
    %v1139 = vadd.f32 %v56, %v998
    %v1140 = vadd.f32 %v82, %v1021
    %v1141 = vadd.f32 %v82, %v1044
    %v1142 = vadd.f32 %v108, %v1067
    %v1143 = vadd.f32 %v108, %v1090
    %v1144 = vadd.f32 %v134, %v1113
    %v1145 = vadd.f32 %v134, %v1136
    %1148 = vrot.lane.b32.xlu0 %v1140, 8
    %v1149 = vpop.permute.xlu0 %1148
    %1150 = vrot.lane.b32.xlu0 %v1141, 8
    %v1151 = vpop.permute.xlu0 %1150
    %1156 = vrot.lane.b32.xlu0 %v1142, 16
    %v1157 = vpop.permute.xlu0 %1156
    %1158 = vrot.lane.b32.xlu0 %v1143, 16
    %v1159 = vpop.permute.xlu0 %1158
    %1164 = vrot.lane.b32.xlu0 %v1144, 24
    %v1165 = vpop.permute.xlu0 %1164
    %1166 = vrot.lane.b32.xlu0 %v1145, 24
    %v1167 = vpop.permute.xlu0 %1166
    %v1170 = vsel %vm428, %v1138, %v1149
    %v1171 = vsel %vm428, %v1139, %v1151
    %v1172 = vsel %vm649, %v1170, %v1157
    %v1173 = vsel %vm649, %v1171, %v1159
    %vm1174 = vcmask 195584
    %v1175 = vsel %vm1174, %v1172, %v1165
    %v1176 = vsel %vm1174, %v1173, %v1167
    %v1177 = vld [vmem:[%s3] sm:$0xff]
    %v1178 = vld [vmem:[%s3 + $0x8] sm:$0xff]
    %v1179 = vld [vmem:[%s3 + $0x10] sm:$0xff]
    %v1180 = vld [vmem:[%s3 + $0x18] sm:$0xff]
    %v1181 = vld [vmem:[%s3 + $0x20] sm:$0x1]
    %v1182 = vld [vmem:[%s3 + $0x21] sm:$0x1]
    %v1183 = vld [vmem:[%s3 + $0x22] sm:$0x1]
    %v1184 = vld [vmem:[%s3 + $0x23] sm:$0x1]
    %v1185 = vld [vmem:[%s3 + $0x24] sm:$0x1]
    %v1186 = vsel %vm34, %v1175, 0.0
    %1187 = vadd.xlane.f32.xlu0 %v1186
    %v1188 = vpop.xlane.xlu0 %1187
    %v1189 = vsel %vm34, %v1176, 0.0
    %1190 = vadd.xlane.f32.xlu0 %v1189
    %v1191 = vpop.xlane.xlu0 %1190
    %v1192 = vrcp.pop 32.0
    %v1193 = vmul.f32 32.0, %v1192
    %v1194 = vsub.f32 1.0, %v1193
    %v1195 = vmul.f32 %v1192, %v1194
    %v1196 = vadd.f32 %v1192, %v1195
    %vm1197 = vweird.f32 %v1192
    %v1198 = vsel %vm1197, %v1192, %v1196
    %v1199 = vmul.f32 %v1188, %v1198
    %v1200 = vmul.f32 %v1191, %v1198
    %v1201 = vsub.f32 %v1175, %v1199
    %v1202 = vsub.f32 %v1176, %v1200
    %v1203 = vmul.f32 %v1201, %v1201
    %v1204 = vmul.f32 %v1202, %v1202
    %v1205 = vsel %vm34, %v1203, 0.0
    %1206 = vadd.xlane.f32.xlu0 %v1205
    %v1207 = vpop.xlane.xlu0 %1206
    %v1208 = vsel %vm34, %v1204, 0.0
    %1209 = vadd.xlane.f32.xlu0 %v1208
    %v1210 = vpop.xlane.xlu0 %1209
    %v1211 = vmul.f32 %v1207, %v1198
    %v1212 = vmul.f32 %v1210, %v1198
    %v1213 = vadd.f32 %v1211, 1e-05
    %v1214 = vadd.f32 %v1212, 1e-05
    %v1215 = vrsqrt.pop %v1213
    %v1216 = vmul.f32 %v1215, %v1213
    %v1217 = vmul.f32 %v1216, %v1215
    %v1218 = vmul.f32 0.5, %v1217
    %v1219 = vsub.f32 1.5, %v1218
    %v1220 = vmul.f32 %v1215, %v1219
    %vm1221 = vweird.f32 %v1213
    %vm1222 = vweird.f32 %v1215
    %vm1223 = vmor %vm1221, %vm1222
    %v1224 = vsel %vm1223, %v1215, %v1220
    %v1225 = vrsqrt.pop %v1214
    %v1226 = vmul.f32 %v1225, %v1214
    %v1227 = vmul.f32 %v1226, %v1225
    %v1228 = vmul.f32 0.5, %v1227
    %v1229 = vsub.f32 1.5, %v1228
    %v1230 = vmul.f32 %v1225, %v1229
    %vm1231 = vweird.f32 %v1214
    %vm1232 = vweird.f32 %v1225
    %vm1233 = vmor %vm1231, %vm1232
    %v1234 = vsel %vm1233, %v1225, %v1230
    %v1235 = vmul.f32 %v1201, %v1224
    %v1236 = vmul.f32 %v1202, %v1234
    %v1237 = vperm.slane %v1182, 0
    %v1238 = vmul.f32 %v1235, %v1237
    %v1239 = vmul.f32 %v1236, %v1237
    %v1240 = vperm.slane %v1183, 0
    %v1241 = vadd.f32 %v1238, %v1240
    %v1242 = vadd.f32 %v1239, %v1240
    %v1243 = vperm.slane %v1181, 0
    %v1245 = vsel %vm34, %v1241, 0
    %v1248 = vsel %vm34, %v1242, 0
    %1250 = vmatpush.msra.mxu0 0.0
    %1251 = vmatpush.msra.mxu0 0.0
    %1252 = vmatpush.msra.mxu0 0.0
    %1253 = vmatpush.msra.mxu0 0.0
    %1254 = vmatpush.msra.mxu0 0.0
    %1255 = vmatpush.msra.mxu0 0.0
    %1256 = vmatpush.msra.mxu0 0.0
    %1257 = vmatpush.msra.mxu0 0.0
    %1258 = vmatpush.msra.mxu0 0.0
    %1259 = vmatpush.msra.mxu0 0.0
    %1260 = vmatpush.msra.mxu0 0.0
    %1261 = vmatpush.msra.mxu0 0.0
    %1262 = vmatpush.msra.mxu0 %v1180
    %1263 = vmatpush.msra.mxu0 %v1179
    %1264 = vmatpush.msra.mxu0 %v1178
    %1265 = vmatpush.msra.mxu0 %v1177
    %1266 = vmatmul.f32.gmra.mxu0 %v1245
    %v1267 = vpop.f32.mrf.mxu0
    %v1268 = vadd.f32 %v1243, %v1267
    %1269 = vmatmul.f32.gmra.mxu0 %v1248
    %v1270 = vpop.f32.mrf.mxu0
    %v1271 = vadd.f32 %v1243, %v1270
    %1272 = vdwg.mxu0
    %v1273 = vmax.f32 %v1268, 0.0
    %v1274 = vmax.f32 %v1271, 0.0
    %v1275 = vadd.f32 %v1241, %v1273
    %v1276 = vadd.f32 %v1242, %v1274
    %v1277 = vsel %vm34, %v1275, 0.0
    %1278 = vadd.xlane.f32.xlu0 %v1277
    %v1279 = vpop.xlane.xlu0 %1278
    %v1280 = vsel %vm34, %v1276, 0.0
    %1281 = vadd.xlane.f32.xlu0 %v1280
    %v1282 = vpop.xlane.xlu0 %1281
    %v1283 = vmul.f32 %v1279, %v1198
    %v1284 = vmul.f32 %v1282, %v1198
    %v1285 = vsub.f32 %v1275, %v1283
    %v1286 = vsub.f32 %v1276, %v1284
    %v1287 = vmul.f32 %v1285, %v1285
    %v1288 = vmul.f32 %v1286, %v1286
    %v1289 = vsel %vm34, %v1287, 0.0
    %1290 = vadd.xlane.f32.xlu0 %v1289
    %v1291 = vpop.xlane.xlu0 %1290
    %v1292 = vsel %vm34, %v1288, 0.0
    %1293 = vadd.xlane.f32.xlu0 %v1292
    %v1294 = vpop.xlane.xlu0 %1293
    %v1295 = vmul.f32 %v1291, %v1198
    %v1296 = vmul.f32 %v1294, %v1198
    %v1297 = vadd.f32 %v1295, 1e-05
    %v1298 = vadd.f32 %v1296, 1e-05
    %v1299 = vrsqrt.pop %v1297
    %v1300 = vmul.f32 %v1299, %v1297
    %v1301 = vmul.f32 %v1300, %v1299
    %v1302 = vmul.f32 0.5, %v1301
    %v1303 = vsub.f32 1.5, %v1302
    %v1304 = vmul.f32 %v1299, %v1303
    %vm1305 = vweird.f32 %v1297
    %vm1306 = vweird.f32 %v1299
    %vm1307 = vmor %vm1305, %vm1306
    %v1308 = vsel %vm1307, %v1299, %v1304
    %v1309 = vrsqrt.pop %v1298
    %v1310 = vmul.f32 %v1309, %v1298
    %v1311 = vmul.f32 %v1310, %v1309
    %v1312 = vmul.f32 0.5, %v1311
    %v1313 = vsub.f32 1.5, %v1312
    %v1314 = vmul.f32 %v1309, %v1313
    %vm1315 = vweird.f32 %v1298
    %vm1316 = vweird.f32 %v1309
    %vm1317 = vmor %vm1315, %vm1316
    %v1318 = vsel %vm1317, %v1309, %v1314
    %v1319 = vmul.f32 %v1285, %v1308
    %v1320 = vmul.f32 %v1286, %v1318
    %v1321 = vperm.slane %v1184, 0
    %v1322 = vmul.f32 %v1319, %v1321
    %v1323 = vmul.f32 %v1320, %v1321
    %v1324 = vperm.slane %v1185, 0
    %v1325 = vadd.f32 %v1322, %v1324
    %v1326 = vadd.f32 %v1323, %v1324
    %v1327 = vld [vmem:[%s2 + $0x180] sm:$0xff]
    %v1328 = vld [vmem:[%s2 + $0x188] sm:$0xff]
    %v1329 = vld [vmem:[%s2 + $0x190] sm:$0xff]
    %v1330 = vld [vmem:[%s2 + $0x198] sm:$0xff]
    %v1331 = vld [vmem:[%s2 + $0x78c] sm:$0x1]
    %v1332 = vperm.slane %v1331, 0
    %1333 = vmatpush.msra.mxu0 0.0
    %1334 = vmatpush.msra.mxu0 0.0
    %1335 = vmatpush.msra.mxu0 0.0
    %1336 = vmatpush.msra.mxu0 0.0
    %1337 = vmatpush.msra.mxu0 0.0
    %1338 = vmatpush.msra.mxu0 0.0
    %1339 = vmatpush.msra.mxu0 0.0
    %1340 = vmatpush.msra.mxu0 0.0
    %1341 = vmatpush.msra.mxu0 0.0
    %1342 = vmatpush.msra.mxu0 0.0
    %1343 = vmatpush.msra.mxu0 0.0
    %1344 = vmatpush.msra.mxu0 0.0
    %1345 = vmatpush.msra.mxu0 %v1330
    %1346 = vmatpush.msra.mxu0 %v1329
    %1347 = vmatpush.msra.mxu0 %v1328
    %1348 = vmatpush.msra.mxu0 %v1327
    %1349 = vmatmul.f32.gmra.mxu0 %v143
    %v1350 = vpop.f32.mrf.mxu0
    %v1351 = vadd.f32 %v1332, %v1350
    %1352 = vmatmul.f32.gmra.mxu0 %v146
    %v1353 = vpop.f32.mrf.mxu0
    %v1354 = vadd.f32 %v1332, %v1353
    %1355 = vmatmul.f32.gmra.mxu0 %v149
    %v1356 = vpop.f32.mrf.mxu0
    %v1357 = vadd.f32 %v1332, %v1356
    %1358 = vmatmul.f32.gmra.mxu0 %v152
    %v1359 = vpop.f32.mrf.mxu0
    %v1360 = vadd.f32 %v1332, %v1359
    %1361 = vdwg.mxu0
    %v1362 = vld [vmem:[%s2 + $0x1a0] sm:$0xff]
    %v1363 = vld [vmem:[%s2 + $0x1a8] sm:$0xff]
    %v1364 = vld [vmem:[%s2 + $0x1b0] sm:$0xff]
    %v1365 = vld [vmem:[%s2 + $0x1b8] sm:$0xff]
    %v1366 = vld [vmem:[%s2 + $0x78d] sm:$0x1]
    %v1367 = vperm.slane %v1366, 0
    %1368 = vmatpush.msra.mxu0 0.0
    %1369 = vmatpush.msra.mxu0 0.0
    %1370 = vmatpush.msra.mxu0 0.0
    %1371 = vmatpush.msra.mxu0 0.0
    %1372 = vmatpush.msra.mxu0 0.0
    %1373 = vmatpush.msra.mxu0 0.0
    %1374 = vmatpush.msra.mxu0 0.0
    %1375 = vmatpush.msra.mxu0 0.0
    %1376 = vmatpush.msra.mxu0 0.0
    %1377 = vmatpush.msra.mxu0 0.0
    %1378 = vmatpush.msra.mxu0 0.0
    %1379 = vmatpush.msra.mxu0 0.0
    %1380 = vmatpush.msra.mxu0 %v1365
    %1381 = vmatpush.msra.mxu0 %v1364
    %1382 = vmatpush.msra.mxu0 %v1363
    %1383 = vmatpush.msra.mxu0 %v1362
    %1384 = vmatmul.f32.gmra.mxu0 %v143
    %v1385 = vpop.f32.mrf.mxu0
    %v1386 = vadd.f32 %v1367, %v1385
    %1387 = vmatmul.f32.gmra.mxu0 %v146
    %v1388 = vpop.f32.mrf.mxu0
    %v1389 = vadd.f32 %v1367, %v1388
    %1390 = vmatmul.f32.gmra.mxu0 %v149
    %v1391 = vpop.f32.mrf.mxu0
    %v1392 = vadd.f32 %v1367, %v1391
    %1393 = vmatmul.f32.gmra.mxu0 %v152
    %v1394 = vpop.f32.mrf.mxu0
    %v1395 = vadd.f32 %v1367, %v1394
    %1396 = vdwg.mxu0
    %v1397 = vld [vmem:[%s2 + $0x1c0] sm:$0xff]
    %v1398 = vld [vmem:[%s2 + $0x1c8] sm:$0xff]
    %v1399 = vld [vmem:[%s2 + $0x1d0] sm:$0xff]
    %v1400 = vld [vmem:[%s2 + $0x1d8] sm:$0xff]
    %v1401 = vld [vmem:[%s2 + $0x78e] sm:$0x1]
    %v1402 = vperm.slane %v1401, 0
    %1403 = vmatpush.msra.mxu0 0.0
    %1404 = vmatpush.msra.mxu0 0.0
    %1405 = vmatpush.msra.mxu0 0.0
    %1406 = vmatpush.msra.mxu0 0.0
    %1407 = vmatpush.msra.mxu0 0.0
    %1408 = vmatpush.msra.mxu0 0.0
    %1409 = vmatpush.msra.mxu0 0.0
    %1410 = vmatpush.msra.mxu0 0.0
    %1411 = vmatpush.msra.mxu0 0.0
    %1412 = vmatpush.msra.mxu0 0.0
    %1413 = vmatpush.msra.mxu0 0.0
    %1414 = vmatpush.msra.mxu0 0.0
    %1415 = vmatpush.msra.mxu0 %v1400
    %1416 = vmatpush.msra.mxu0 %v1399
    %1417 = vmatpush.msra.mxu0 %v1398
    %1418 = vmatpush.msra.mxu0 %v1397
    %1419 = vmatmul.f32.gmra.mxu0 %v143
    %v1420 = vpop.f32.mrf.mxu0
    %v1421 = vadd.f32 %v1402, %v1420
    %1422 = vmatmul.f32.gmra.mxu0 %v146
    %v1423 = vpop.f32.mrf.mxu0
    %v1424 = vadd.f32 %v1402, %v1423
    %1425 = vmatmul.f32.gmra.mxu0 %v149
    %v1426 = vpop.f32.mrf.mxu0
    %v1427 = vadd.f32 %v1402, %v1426
    %1428 = vmatmul.f32.gmra.mxu0 %v152
    %v1429 = vpop.f32.mrf.mxu0
    %v1430 = vadd.f32 %v1402, %v1429
    %1431 = vdwg.mxu0
    %v1432 = vld [vmem:[%s2 + $0x1e0] sm:$0xff]
    %v1433 = vld [vmem:[%s2 + $0x1e8] sm:$0xff]
    %v1434 = vld [vmem:[%s2 + $0x1f0] sm:$0xff]
    %v1435 = vld [vmem:[%s2 + $0x1f8] sm:$0xff]
    %v1436 = vld [vmem:[%s2 + $0x78f] sm:$0x1]
    %v1437 = vperm.slane %v1436, 0
    %1438 = vmatpush.msra.mxu0 0.0
    %1439 = vmatpush.msra.mxu0 0.0
    %1440 = vmatpush.msra.mxu0 0.0
    %1441 = vmatpush.msra.mxu0 0.0
    %1442 = vmatpush.msra.mxu0 0.0
    %1443 = vmatpush.msra.mxu0 0.0
    %1444 = vmatpush.msra.mxu0 0.0
    %1445 = vmatpush.msra.mxu0 0.0
    %1446 = vmatpush.msra.mxu0 0.0
    %1447 = vmatpush.msra.mxu0 0.0
    %1448 = vmatpush.msra.mxu0 0.0
    %1449 = vmatpush.msra.mxu0 0.0
    %1450 = vmatpush.msra.mxu0 %v1435
    %1451 = vmatpush.msra.mxu0 %v1434
    %1452 = vmatpush.msra.mxu0 %v1433
    %1453 = vmatpush.msra.mxu0 %v1432
    %1454 = vmatmul.f32.gmra.mxu0 %v143
    %v1455 = vpop.f32.mrf.mxu0
    %v1456 = vadd.f32 %v1437, %v1455
    %1457 = vmatmul.f32.gmra.mxu0 %v146
    %v1458 = vpop.f32.mrf.mxu0
    %v1459 = vadd.f32 %v1437, %v1458
    %1460 = vmatmul.f32.gmra.mxu0 %v149
    %v1461 = vpop.f32.mrf.mxu0
    %v1462 = vadd.f32 %v1437, %v1461
    %1463 = vmatmul.f32.gmra.mxu0 %v152
    %v1464 = vpop.f32.mrf.mxu0
    %v1465 = vadd.f32 %v1437, %v1464
    %1466 = vdwg.mxu0
    %v1467 = vld [vmem:[%s2 + $0x200] sm:$0xff]
    %v1468 = vld [vmem:[%s2 + $0x208] sm:$0xff]
    %v1469 = vld [vmem:[%s2 + $0x210] sm:$0xff]
    %v1470 = vld [vmem:[%s2 + $0x218] sm:$0xff]
    %v1471 = vld [vmem:[%s2 + $0x790] sm:$0x1]
    %v1472 = vperm.slane %v1471, 0
    %v1474 = vsel %vm34, %v1325, 0
    %v1477 = vsel %vm34, %v1326, 0
    %1479 = vmatpush.msra.mxu0 0.0
    %1480 = vmatpush.msra.mxu0 0.0
    %1481 = vmatpush.msra.mxu0 0.0
    %1482 = vmatpush.msra.mxu0 0.0
    %1483 = vmatpush.msra.mxu0 0.0
    %1484 = vmatpush.msra.mxu0 0.0
    %1485 = vmatpush.msra.mxu0 0.0
    %1486 = vmatpush.msra.mxu0 0.0
    %1487 = vmatpush.msra.mxu0 0.0
    %1488 = vmatpush.msra.mxu0 0.0
    %1489 = vmatpush.msra.mxu0 0.0
    %1490 = vmatpush.msra.mxu0 0.0
    %1491 = vmatpush.msra.mxu0 %v1470
    %1492 = vmatpush.msra.mxu0 %v1469
    %1493 = vmatpush.msra.mxu0 %v1468
    %1494 = vmatpush.msra.mxu0 %v1467
    %1495 = vmatmul.f32.gmra.mxu0 %v1474
    %v1496 = vpop.f32.mrf.mxu0
    %v1497 = vadd.f32 %v1472, %v1496
    %1498 = vmatmul.f32.gmra.mxu0 %v1477
    %v1499 = vpop.f32.mrf.mxu0
    %v1500 = vadd.f32 %v1472, %v1499
    %1501 = vdwg.mxu0
    %v1502 = vld [vmem:[%s2 + $0x220] sm:$0xff]
    %v1503 = vld [vmem:[%s2 + $0x228] sm:$0xff]
    %v1504 = vld [vmem:[%s2 + $0x230] sm:$0xff]
    %v1505 = vld [vmem:[%s2 + $0x238] sm:$0xff]
    %v1506 = vld [vmem:[%s2 + $0x791] sm:$0x1]
    %v1507 = vperm.slane %v1506, 0
    %1508 = vmatpush.msra.mxu0 0.0
    %1509 = vmatpush.msra.mxu0 0.0
    %1510 = vmatpush.msra.mxu0 0.0
    %1511 = vmatpush.msra.mxu0 0.0
    %1512 = vmatpush.msra.mxu0 0.0
    %1513 = vmatpush.msra.mxu0 0.0
    %1514 = vmatpush.msra.mxu0 0.0
    %1515 = vmatpush.msra.mxu0 0.0
    %1516 = vmatpush.msra.mxu0 0.0
    %1517 = vmatpush.msra.mxu0 0.0
    %1518 = vmatpush.msra.mxu0 0.0
    %1519 = vmatpush.msra.mxu0 0.0
    %1520 = vmatpush.msra.mxu0 %v1505
    %1521 = vmatpush.msra.mxu0 %v1504
    %1522 = vmatpush.msra.mxu0 %v1503
    %1523 = vmatpush.msra.mxu0 %v1502
    %1524 = vmatmul.f32.gmra.mxu0 %v1474
    %v1525 = vpop.f32.mrf.mxu0
    %v1526 = vadd.f32 %v1507, %v1525
    %1527 = vmatmul.f32.gmra.mxu0 %v1477
    %v1528 = vpop.f32.mrf.mxu0
    %v1529 = vadd.f32 %v1507, %v1528
    %1530 = vdwg.mxu0
    %v1531 = vld [vmem:[%s2 + $0x240] sm:$0xff]
    %v1532 = vld [vmem:[%s2 + $0x248] sm:$0xff]
    %v1533 = vld [vmem:[%s2 + $0x250] sm:$0xff]
    %v1534 = vld [vmem:[%s2 + $0x258] sm:$0xff]
    %v1535 = vld [vmem:[%s2 + $0x792] sm:$0x1]
    %v1536 = vperm.slane %v1535, 0
    %1537 = vmatpush.msra.mxu0 0.0
    %1538 = vmatpush.msra.mxu0 0.0
    %1539 = vmatpush.msra.mxu0 0.0
    %1540 = vmatpush.msra.mxu0 0.0
    %1541 = vmatpush.msra.mxu0 0.0
    %1542 = vmatpush.msra.mxu0 0.0
    %1543 = vmatpush.msra.mxu0 0.0
    %1544 = vmatpush.msra.mxu0 0.0
    %1545 = vmatpush.msra.mxu0 0.0
    %1546 = vmatpush.msra.mxu0 0.0
    %1547 = vmatpush.msra.mxu0 0.0
    %1548 = vmatpush.msra.mxu0 0.0
    %1549 = vmatpush.msra.mxu0 %v1534
    %1550 = vmatpush.msra.mxu0 %v1533
    %1551 = vmatpush.msra.mxu0 %v1532
    %1552 = vmatpush.msra.mxu0 %v1531
    %1553 = vmatmul.f32.gmra.mxu0 %v1474
    %v1554 = vpop.f32.mrf.mxu0
    %v1555 = vadd.f32 %v1536, %v1554
    %1556 = vmatmul.f32.gmra.mxu0 %v1477
    %v1557 = vpop.f32.mrf.mxu0
    %v1558 = vadd.f32 %v1536, %v1557
    %1559 = vdwg.mxu0
    %v1560 = vld [vmem:[%s2 + $0x260] sm:$0xff]
    %v1561 = vld [vmem:[%s2 + $0x268] sm:$0xff]
    %v1562 = vld [vmem:[%s2 + $0x270] sm:$0xff]
    %v1563 = vld [vmem:[%s2 + $0x278] sm:$0xff]
    %v1564 = vld [vmem:[%s2 + $0x793] sm:$0x1]
    %v1565 = vperm.slane %v1564, 0
    %1566 = vmatpush.msra.mxu0 0.0
    %1567 = vmatpush.msra.mxu0 0.0
    %1568 = vmatpush.msra.mxu0 0.0
    %1569 = vmatpush.msra.mxu0 0.0
    %1570 = vmatpush.msra.mxu0 0.0
    %1571 = vmatpush.msra.mxu0 0.0
    %1572 = vmatpush.msra.mxu0 0.0
    %1573 = vmatpush.msra.mxu0 0.0
    %1574 = vmatpush.msra.mxu0 0.0
    %1575 = vmatpush.msra.mxu0 0.0
    %1576 = vmatpush.msra.mxu0 0.0
    %1577 = vmatpush.msra.mxu0 0.0
    %1578 = vmatpush.msra.mxu0 %v1563
    %1579 = vmatpush.msra.mxu0 %v1562
    %1580 = vmatpush.msra.mxu0 %v1561
    %1581 = vmatpush.msra.mxu0 %v1560
    %1582 = vmatmul.f32.gmra.mxu0 %v1474
    %v1583 = vpop.f32.mrf.mxu0
    %v1584 = vadd.f32 %v1565, %v1583
    %1585 = vmatmul.f32.gmra.mxu0 %v1477
    %v1586 = vpop.f32.mrf.mxu0
    %v1587 = vadd.f32 %v1565, %v1586
    %1588 = vdwg.mxu0
    %v1589 = vld [vmem:[%s2 + $0x280] sm:$0xff]
    %v1590 = vld [vmem:[%s2 + $0x288] sm:$0xff]
    %v1591 = vld [vmem:[%s2 + $0x290] sm:$0xff]
    %v1592 = vld [vmem:[%s2 + $0x298] sm:$0xff]
    %v1593 = vld [vmem:[%s2 + $0x794] sm:$0x1]
    %v1594 = vperm.slane %v1593, 0
    %1595 = vmatpush.msra.mxu0 0.0
    %1596 = vmatpush.msra.mxu0 0.0
    %1597 = vmatpush.msra.mxu0 0.0
    %1598 = vmatpush.msra.mxu0 0.0
    %1599 = vmatpush.msra.mxu0 0.0
    %1600 = vmatpush.msra.mxu0 0.0
    %1601 = vmatpush.msra.mxu0 0.0
    %1602 = vmatpush.msra.mxu0 0.0
    %1603 = vmatpush.msra.mxu0 0.0
    %1604 = vmatpush.msra.mxu0 0.0
    %1605 = vmatpush.msra.mxu0 0.0
    %1606 = vmatpush.msra.mxu0 0.0
    %1607 = vmatpush.msra.mxu0 %v1592
    %1608 = vmatpush.msra.mxu0 %v1591
    %1609 = vmatpush.msra.mxu0 %v1590
    %1610 = vmatpush.msra.mxu0 %v1589
    %1611 = vmatmul.f32.gmra.mxu0 %v1474
    %v1612 = vpop.f32.mrf.mxu0
    %v1613 = vadd.f32 %v1594, %v1612
    %1614 = vmatmul.f32.gmra.mxu0 %v1477
    %v1615 = vpop.f32.mrf.mxu0
    %v1616 = vadd.f32 %v1594, %v1615
    %1617 = vdwg.mxu0
    %v1618 = vld [vmem:[%s2 + $0x2a0] sm:$0xff]
    %v1619 = vld [vmem:[%s2 + $0x2a8] sm:$0xff]
    %v1620 = vld [vmem:[%s2 + $0x2b0] sm:$0xff]
    %v1621 = vld [vmem:[%s2 + $0x2b8] sm:$0xff]
    %v1622 = vld [vmem:[%s2 + $0x795] sm:$0x1]
    %v1623 = vperm.slane %v1622, 0
    %1624 = vmatpush.msra.mxu0 0.0
    %1625 = vmatpush.msra.mxu0 0.0
    %1626 = vmatpush.msra.mxu0 0.0
    %1627 = vmatpush.msra.mxu0 0.0
    %1628 = vmatpush.msra.mxu0 0.0
    %1629 = vmatpush.msra.mxu0 0.0
    %1630 = vmatpush.msra.mxu0 0.0
    %1631 = vmatpush.msra.mxu0 0.0
    %1632 = vmatpush.msra.mxu0 0.0
    %1633 = vmatpush.msra.mxu0 0.0
    %1634 = vmatpush.msra.mxu0 0.0
    %1635 = vmatpush.msra.mxu0 0.0
    %1636 = vmatpush.msra.mxu0 %v1621
    %1637 = vmatpush.msra.mxu0 %v1620
    %1638 = vmatpush.msra.mxu0 %v1619
    %1639 = vmatpush.msra.mxu0 %v1618
    %1640 = vmatmul.f32.gmra.mxu0 %v1474
    %v1641 = vpop.f32.mrf.mxu0
    %v1642 = vadd.f32 %v1623, %v1641
    %1643 = vmatmul.f32.gmra.mxu0 %v1477
    %v1644 = vpop.f32.mrf.mxu0
    %v1645 = vadd.f32 %v1623, %v1644
    %1646 = vdwg.mxu0
    %v1647 = vld [vmem:[%s2 + $0x2c0] sm:$0xff]
    %v1648 = vld [vmem:[%s2 + $0x2c8] sm:$0xff]
    %v1649 = vld [vmem:[%s2 + $0x2d0] sm:$0xff]
    %v1650 = vld [vmem:[%s2 + $0x2d8] sm:$0xff]
    %v1651 = vld [vmem:[%s2 + $0x796] sm:$0x1]
    %v1652 = vperm.slane %v1651, 0
    %1653 = vmatpush.msra.mxu0 0.0
    %1654 = vmatpush.msra.mxu0 0.0
    %1655 = vmatpush.msra.mxu0 0.0
    %1656 = vmatpush.msra.mxu0 0.0
    %1657 = vmatpush.msra.mxu0 0.0
    %1658 = vmatpush.msra.mxu0 0.0
    %1659 = vmatpush.msra.mxu0 0.0
    %1660 = vmatpush.msra.mxu0 0.0
    %1661 = vmatpush.msra.mxu0 0.0
    %1662 = vmatpush.msra.mxu0 0.0
    %1663 = vmatpush.msra.mxu0 0.0
    %1664 = vmatpush.msra.mxu0 0.0
    %1665 = vmatpush.msra.mxu0 %v1650
    %1666 = vmatpush.msra.mxu0 %v1649
    %1667 = vmatpush.msra.mxu0 %v1648
    %1668 = vmatpush.msra.mxu0 %v1647
    %1669 = vmatmul.f32.gmra.mxu0 %v1474
    %v1670 = vpop.f32.mrf.mxu0
    %v1671 = vadd.f32 %v1652, %v1670
    %1672 = vmatmul.f32.gmra.mxu0 %v1477
    %v1673 = vpop.f32.mrf.mxu0
    %v1674 = vadd.f32 %v1652, %v1673
    %1675 = vdwg.mxu0
    %v1676 = vld [vmem:[%s2 + $0x2e0] sm:$0xff]
    %v1677 = vld [vmem:[%s2 + $0x2e8] sm:$0xff]
    %v1678 = vld [vmem:[%s2 + $0x2f0] sm:$0xff]
    %v1679 = vld [vmem:[%s2 + $0x2f8] sm:$0xff]
    %v1680 = vld [vmem:[%s2 + $0x797] sm:$0x1]
    %v1681 = vperm.slane %v1680, 0
    %1682 = vmatpush.msra.mxu0 0.0
    %1683 = vmatpush.msra.mxu0 0.0
    %1684 = vmatpush.msra.mxu0 0.0
    %1685 = vmatpush.msra.mxu0 0.0
    %1686 = vmatpush.msra.mxu0 0.0
    %1687 = vmatpush.msra.mxu0 0.0
    %1688 = vmatpush.msra.mxu0 0.0
    %1689 = vmatpush.msra.mxu0 0.0
    %1690 = vmatpush.msra.mxu0 0.0
    %1691 = vmatpush.msra.mxu0 0.0
    %1692 = vmatpush.msra.mxu0 0.0
    %1693 = vmatpush.msra.mxu0 0.0
    %1694 = vmatpush.msra.mxu0 %v1679
    %1695 = vmatpush.msra.mxu0 %v1678
    %1696 = vmatpush.msra.mxu0 %v1677
    %1697 = vmatpush.msra.mxu0 %v1676
    %1698 = vmatmul.f32.gmra.mxu0 %v1474
    %v1699 = vpop.f32.mrf.mxu0
    %v1700 = vadd.f32 %v1681, %v1699
    %1701 = vmatmul.f32.gmra.mxu0 %v1477
    %v1702 = vpop.f32.mrf.mxu0
    %v1703 = vadd.f32 %v1681, %v1702
    %1704 = vdwg.mxu0
    %v1706 = vsel %vm428, %v1351, 0
    %v1709 = vsel %vm428, %v1354, 0
    %v1712 = vsel %vm428, %v1497, 0
    %1714 = vmatpush.xpose.msra.mxu0 0.0
    %1715 = vmatpush.xpose.msra.mxu0 0.0
    %1716 = vmatpush.xpose.msra.mxu0 0.0
    %1717 = vmatpush.xpose.msra.mxu0 0.0
    %1718 = vmatpush.xpose.msra.mxu0 0.0
    %1719 = vmatpush.xpose.msra.mxu0 0.0
    %1720 = vmatpush.xpose.msra.mxu0 0.0
    %1721 = vmatpush.xpose.msra.mxu0 0.0
    %1722 = vmatpush.xpose.msra.mxu0 0.0
    %1723 = vmatpush.xpose.msra.mxu0 0.0
    %1724 = vmatpush.xpose.msra.mxu0 0.0
    %1725 = vmatpush.xpose.msra.mxu0 0.0
    %1726 = vmatpush.xpose.msra.mxu0 0.0
    %1727 = vmatpush.xpose.msra.mxu0 0.0
    %1728 = vmatpush.xpose.msra.mxu0 0.0
    %1729 = vmatpush.xpose.msra.mxu0 %v1712
    %1730 = vmatmul.f32.gmra.mxu0 %v1706
    %v1731 = vpop.f32.mrf.mxu0
    %v1732 = vadd.f32 0.0, %v1731
    %1733 = vmatmul.f32.gmra.mxu0 %v1709
    %v1734 = vpop.f32.mrf.mxu0
    %v1735 = vadd.f32 0.0, %v1734
    %1736 = vdwg.mxu0
    %v1738 = vsel %vm428, %v1357, 0
    %v1741 = vsel %vm428, %v1360, 0
    %v1744 = vsel %vm428, %v1500, 0
    %1746 = vmatpush.xpose.msra.mxu0 0.0
    %1747 = vmatpush.xpose.msra.mxu0 0.0
    %1748 = vmatpush.xpose.msra.mxu0 0.0
    %1749 = vmatpush.xpose.msra.mxu0 0.0
    %1750 = vmatpush.xpose.msra.mxu0 0.0
    %1751 = vmatpush.xpose.msra.mxu0 0.0
    %1752 = vmatpush.xpose.msra.mxu0 0.0
    %1753 = vmatpush.xpose.msra.mxu0 0.0
    %1754 = vmatpush.xpose.msra.mxu0 0.0
    %1755 = vmatpush.xpose.msra.mxu0 0.0
    %1756 = vmatpush.xpose.msra.mxu0 0.0
    %1757 = vmatpush.xpose.msra.mxu0 0.0
    %1758 = vmatpush.xpose.msra.mxu0 0.0
    %1759 = vmatpush.xpose.msra.mxu0 0.0
    %1760 = vmatpush.xpose.msra.mxu0 0.0
    %1761 = vmatpush.xpose.msra.mxu0 %v1744
    %1762 = vmatmul.f32.gmra.mxu0 %v1738
    %v1763 = vpop.f32.mrf.mxu0
    %v1764 = vadd.f32 0.0, %v1763
    %1765 = vmatmul.f32.gmra.mxu0 %v1741
    %v1766 = vpop.f32.mrf.mxu0
    %v1767 = vadd.f32 0.0, %v1766
    %1768 = vdwg.mxu0
    %v1770 = vsel %vm428, %v1386, 0
    %v1773 = vsel %vm428, %v1389, 0
    %v1776 = vsel %vm428, %v1526, 0
    %1778 = vmatpush.xpose.msra.mxu0 0.0
    %1779 = vmatpush.xpose.msra.mxu0 0.0
    %1780 = vmatpush.xpose.msra.mxu0 0.0
    %1781 = vmatpush.xpose.msra.mxu0 0.0
    %1782 = vmatpush.xpose.msra.mxu0 0.0
    %1783 = vmatpush.xpose.msra.mxu0 0.0
    %1784 = vmatpush.xpose.msra.mxu0 0.0
    %1785 = vmatpush.xpose.msra.mxu0 0.0
    %1786 = vmatpush.xpose.msra.mxu0 0.0
    %1787 = vmatpush.xpose.msra.mxu0 0.0
    %1788 = vmatpush.xpose.msra.mxu0 0.0
    %1789 = vmatpush.xpose.msra.mxu0 0.0
    %1790 = vmatpush.xpose.msra.mxu0 0.0
    %1791 = vmatpush.xpose.msra.mxu0 0.0
    %1792 = vmatpush.xpose.msra.mxu0 0.0
    %1793 = vmatpush.xpose.msra.mxu0 %v1776
    %1794 = vmatmul.f32.gmra.mxu0 %v1770
    %v1795 = vpop.f32.mrf.mxu0
    %v1796 = vadd.f32 0.0, %v1795
    %1797 = vmatmul.f32.gmra.mxu0 %v1773
    %v1798 = vpop.f32.mrf.mxu0
    %v1799 = vadd.f32 0.0, %v1798
    %1800 = vdwg.mxu0
    %v1802 = vsel %vm428, %v1392, 0
    %v1805 = vsel %vm428, %v1395, 0
    %v1808 = vsel %vm428, %v1529, 0
    %1810 = vmatpush.xpose.msra.mxu0 0.0
    %1811 = vmatpush.xpose.msra.mxu0 0.0
    %1812 = vmatpush.xpose.msra.mxu0 0.0
    %1813 = vmatpush.xpose.msra.mxu0 0.0
    %1814 = vmatpush.xpose.msra.mxu0 0.0
    %1815 = vmatpush.xpose.msra.mxu0 0.0
    %1816 = vmatpush.xpose.msra.mxu0 0.0
    %1817 = vmatpush.xpose.msra.mxu0 0.0
    %1818 = vmatpush.xpose.msra.mxu0 0.0
    %1819 = vmatpush.xpose.msra.mxu0 0.0
    %1820 = vmatpush.xpose.msra.mxu0 0.0
    %1821 = vmatpush.xpose.msra.mxu0 0.0
    %1822 = vmatpush.xpose.msra.mxu0 0.0
    %1823 = vmatpush.xpose.msra.mxu0 0.0
    %1824 = vmatpush.xpose.msra.mxu0 0.0
    %1825 = vmatpush.xpose.msra.mxu0 %v1808
    %1826 = vmatmul.f32.gmra.mxu0 %v1802
    %v1827 = vpop.f32.mrf.mxu0
    %v1828 = vadd.f32 0.0, %v1827
    %1829 = vmatmul.f32.gmra.mxu0 %v1805
    %v1830 = vpop.f32.mrf.mxu0
    %v1831 = vadd.f32 0.0, %v1830
    %1832 = vdwg.mxu0
    %v1834 = vsel %vm428, %v1421, 0
    %v1837 = vsel %vm428, %v1424, 0
    %v1840 = vsel %vm428, %v1555, 0
    %1842 = vmatpush.xpose.msra.mxu0 0.0
    %1843 = vmatpush.xpose.msra.mxu0 0.0
    %1844 = vmatpush.xpose.msra.mxu0 0.0
    %1845 = vmatpush.xpose.msra.mxu0 0.0
    %1846 = vmatpush.xpose.msra.mxu0 0.0
    %1847 = vmatpush.xpose.msra.mxu0 0.0
    %1848 = vmatpush.xpose.msra.mxu0 0.0
    %1849 = vmatpush.xpose.msra.mxu0 0.0
    %1850 = vmatpush.xpose.msra.mxu0 0.0
    %1851 = vmatpush.xpose.msra.mxu0 0.0
    %1852 = vmatpush.xpose.msra.mxu0 0.0
    %1853 = vmatpush.xpose.msra.mxu0 0.0
    %1854 = vmatpush.xpose.msra.mxu0 0.0
    %1855 = vmatpush.xpose.msra.mxu0 0.0
    %1856 = vmatpush.xpose.msra.mxu0 0.0
    %1857 = vmatpush.xpose.msra.mxu0 %v1840
    %1858 = vmatmul.f32.gmra.mxu0 %v1834
    %v1859 = vpop.f32.mrf.mxu0
    %v1860 = vadd.f32 0.0, %v1859
    %1861 = vmatmul.f32.gmra.mxu0 %v1837
    %v1862 = vpop.f32.mrf.mxu0
    %v1863 = vadd.f32 0.0, %v1862
    %1864 = vdwg.mxu0
    %v1866 = vsel %vm428, %v1427, 0
    %v1869 = vsel %vm428, %v1430, 0
    %v1872 = vsel %vm428, %v1558, 0
    %1874 = vmatpush.xpose.msra.mxu0 0.0
    %1875 = vmatpush.xpose.msra.mxu0 0.0
    %1876 = vmatpush.xpose.msra.mxu0 0.0
    %1877 = vmatpush.xpose.msra.mxu0 0.0
    %1878 = vmatpush.xpose.msra.mxu0 0.0
    %1879 = vmatpush.xpose.msra.mxu0 0.0
    %1880 = vmatpush.xpose.msra.mxu0 0.0
    %1881 = vmatpush.xpose.msra.mxu0 0.0
    %1882 = vmatpush.xpose.msra.mxu0 0.0
    %1883 = vmatpush.xpose.msra.mxu0 0.0
    %1884 = vmatpush.xpose.msra.mxu0 0.0
    %1885 = vmatpush.xpose.msra.mxu0 0.0
    %1886 = vmatpush.xpose.msra.mxu0 0.0
    %1887 = vmatpush.xpose.msra.mxu0 0.0
    %1888 = vmatpush.xpose.msra.mxu0 0.0
    %1889 = vmatpush.xpose.msra.mxu0 %v1872
    %1890 = vmatmul.f32.gmra.mxu0 %v1866
    %v1891 = vpop.f32.mrf.mxu0
    %v1892 = vadd.f32 0.0, %v1891
    %1893 = vmatmul.f32.gmra.mxu0 %v1869
    %v1894 = vpop.f32.mrf.mxu0
    %v1895 = vadd.f32 0.0, %v1894
    %1896 = vdwg.mxu0
    %v1898 = vsel %vm428, %v1456, 0
    %v1901 = vsel %vm428, %v1459, 0
    %v1904 = vsel %vm428, %v1584, 0
    %1906 = vmatpush.xpose.msra.mxu0 0.0
    %1907 = vmatpush.xpose.msra.mxu0 0.0
    %1908 = vmatpush.xpose.msra.mxu0 0.0
    %1909 = vmatpush.xpose.msra.mxu0 0.0
    %1910 = vmatpush.xpose.msra.mxu0 0.0
    %1911 = vmatpush.xpose.msra.mxu0 0.0
    %1912 = vmatpush.xpose.msra.mxu0 0.0
    %1913 = vmatpush.xpose.msra.mxu0 0.0
    %1914 = vmatpush.xpose.msra.mxu0 0.0
    %1915 = vmatpush.xpose.msra.mxu0 0.0
    %1916 = vmatpush.xpose.msra.mxu0 0.0
    %1917 = vmatpush.xpose.msra.mxu0 0.0
    %1918 = vmatpush.xpose.msra.mxu0 0.0
    %1919 = vmatpush.xpose.msra.mxu0 0.0
    %1920 = vmatpush.xpose.msra.mxu0 0.0
    %1921 = vmatpush.xpose.msra.mxu0 %v1904
    %1922 = vmatmul.f32.gmra.mxu0 %v1898
    %v1923 = vpop.f32.mrf.mxu0
    %v1924 = vadd.f32 0.0, %v1923
    %1925 = vmatmul.f32.gmra.mxu0 %v1901
    %v1926 = vpop.f32.mrf.mxu0
    %v1927 = vadd.f32 0.0, %v1926
    %1928 = vdwg.mxu0
    %v1930 = vsel %vm428, %v1462, 0
    %v1933 = vsel %vm428, %v1465, 0
    %v1936 = vsel %vm428, %v1587, 0
    %1938 = vmatpush.xpose.msra.mxu0 0.0
    %1939 = vmatpush.xpose.msra.mxu0 0.0
    %1940 = vmatpush.xpose.msra.mxu0 0.0
    %1941 = vmatpush.xpose.msra.mxu0 0.0
    %1942 = vmatpush.xpose.msra.mxu0 0.0
    %1943 = vmatpush.xpose.msra.mxu0 0.0
    %1944 = vmatpush.xpose.msra.mxu0 0.0
    %1945 = vmatpush.xpose.msra.mxu0 0.0
    %1946 = vmatpush.xpose.msra.mxu0 0.0
    %1947 = vmatpush.xpose.msra.mxu0 0.0
    %1948 = vmatpush.xpose.msra.mxu0 0.0
    %1949 = vmatpush.xpose.msra.mxu0 0.0
    %1950 = vmatpush.xpose.msra.mxu0 0.0
    %1951 = vmatpush.xpose.msra.mxu0 0.0
    %1952 = vmatpush.xpose.msra.mxu0 0.0
    %1953 = vmatpush.xpose.msra.mxu0 %v1936
    %1954 = vmatmul.f32.gmra.mxu0 %v1930
    %v1955 = vpop.f32.mrf.mxu0
    %v1956 = vadd.f32 0.0, %v1955
    %1957 = vmatmul.f32.gmra.mxu0 %v1933
    %v1958 = vpop.f32.mrf.mxu0
    %v1959 = vadd.f32 0.0, %v1958
    %1960 = vdwg.mxu0
    %v1961 = vsel %vm428, %v1732, -inf
    %1962 = vmax.xlane.f32.xlu0 %v1961
    %v1963 = vpop.xlane.xlu0 %1962
    %v1964 = vsel %vm428, %v1735, -inf
    %1965 = vmax.xlane.f32.xlu0 %v1964
    %v1966 = vpop.xlane.xlu0 %1965
    %v1967 = vsel %vm428, %v1764, -inf
    %1968 = vmax.xlane.f32.xlu0 %v1967
    %v1969 = vpop.xlane.xlu0 %1968
    %v1970 = vsel %vm428, %v1767, -inf
    %1971 = vmax.xlane.f32.xlu0 %v1970
    %v1972 = vpop.xlane.xlu0 %1971
    %v1973 = vsel %vm428, %v1796, -inf
    %1974 = vmax.xlane.f32.xlu0 %v1973
    %v1975 = vpop.xlane.xlu0 %1974
    %v1976 = vsel %vm428, %v1799, -inf
    %1977 = vmax.xlane.f32.xlu0 %v1976
    %v1978 = vpop.xlane.xlu0 %1977
    %v1979 = vsel %vm428, %v1828, -inf
    %1980 = vmax.xlane.f32.xlu0 %v1979
    %v1981 = vpop.xlane.xlu0 %1980
    %v1982 = vsel %vm428, %v1831, -inf
    %1983 = vmax.xlane.f32.xlu0 %v1982
    %v1984 = vpop.xlane.xlu0 %1983
    %v1985 = vsel %vm428, %v1860, -inf
    %1986 = vmax.xlane.f32.xlu0 %v1985
    %v1987 = vpop.xlane.xlu0 %1986
    %v1988 = vsel %vm428, %v1863, -inf
    %1989 = vmax.xlane.f32.xlu0 %v1988
    %v1990 = vpop.xlane.xlu0 %1989
    %v1991 = vsel %vm428, %v1892, -inf
    %1992 = vmax.xlane.f32.xlu0 %v1991
    %v1993 = vpop.xlane.xlu0 %1992
    %v1994 = vsel %vm428, %v1895, -inf
    %1995 = vmax.xlane.f32.xlu0 %v1994
    %v1996 = vpop.xlane.xlu0 %1995
    %v1997 = vsel %vm428, %v1924, -inf
    %1998 = vmax.xlane.f32.xlu0 %v1997
    %v1999 = vpop.xlane.xlu0 %1998
    %v2000 = vsel %vm428, %v1927, -inf
    %2001 = vmax.xlane.f32.xlu0 %v2000
    %v2002 = vpop.xlane.xlu0 %2001
    %v2003 = vsel %vm428, %v1956, -inf
    %2004 = vmax.xlane.f32.xlu0 %v2003
    %v2005 = vpop.xlane.xlu0 %2004
    %v2006 = vsel %vm428, %v1959, -inf
    %2007 = vmax.xlane.f32.xlu0 %v2006
    %v2008 = vpop.xlane.xlu0 %2007
    %v2009 = vsub.f32 %v1732, %v1963
    %v2010 = vsub.f32 %v1735, %v1966
    %v2011 = vsub.f32 %v1764, %v1969
    %v2012 = vsub.f32 %v1767, %v1972
    %v2013 = vsub.f32 %v1796, %v1975
    %v2014 = vsub.f32 %v1799, %v1978
    %v2015 = vsub.f32 %v1828, %v1981
    %v2016 = vsub.f32 %v1831, %v1984
    %v2017 = vsub.f32 %v1860, %v1987
    %v2018 = vsub.f32 %v1863, %v1990
    %v2019 = vsub.f32 %v1892, %v1993
    %v2020 = vsub.f32 %v1895, %v1996
    %v2021 = vsub.f32 %v1924, %v1999
    %v2022 = vsub.f32 %v1927, %v2002
    %v2023 = vsub.f32 %v1956, %v2005
    %v2024 = vsub.f32 %v1959, %v2008
    %v2025 = vmul.f32 %v2009, 1.442695
    %v2026 = vpow.pop %v2025
    %v2027 = vmul.f32 %v2010, 1.442695
    %v2028 = vpow.pop %v2027
    %v2029 = vmul.f32 %v2011, 1.442695
    %v2030 = vpow.pop %v2029
    %v2031 = vmul.f32 %v2012, 1.442695
    %v2032 = vpow.pop %v2031
    %v2033 = vmul.f32 %v2013, 1.442695
    %v2034 = vpow.pop %v2033
    %v2035 = vmul.f32 %v2014, 1.442695
    %v2036 = vpow.pop %v2035
    %v2037 = vmul.f32 %v2015, 1.442695
    %v2038 = vpow.pop %v2037
    %v2039 = vmul.f32 %v2016, 1.442695
    %v2040 = vpow.pop %v2039
    %v2041 = vmul.f32 %v2017, 1.442695
    %v2042 = vpow.pop %v2041
    %v2043 = vmul.f32 %v2018, 1.442695
    %v2044 = vpow.pop %v2043
    %v2045 = vmul.f32 %v2019, 1.442695
    %v2046 = vpow.pop %v2045
    %v2047 = vmul.f32 %v2020, 1.442695
    %v2048 = vpow.pop %v2047
    %v2049 = vmul.f32 %v2021, 1.442695
    %v2050 = vpow.pop %v2049
    %v2051 = vmul.f32 %v2022, 1.442695
    %v2052 = vpow.pop %v2051
    %v2053 = vmul.f32 %v2023, 1.442695
    %v2054 = vpow.pop %v2053
    %v2055 = vmul.f32 %v2024, 1.442695
    %v2056 = vpow.pop %v2055
    %v2057 = vsel %vm428, %v2026, 0.0
    %2058 = vadd.xlane.f32.xlu0 %v2057
    %v2059 = vpop.xlane.xlu0 %2058
    %v2060 = vsel %vm428, %v2028, 0.0
    %2061 = vadd.xlane.f32.xlu0 %v2060
    %v2062 = vpop.xlane.xlu0 %2061
    %v2063 = vsel %vm428, %v2030, 0.0
    %2064 = vadd.xlane.f32.xlu0 %v2063
    %v2065 = vpop.xlane.xlu0 %2064
    %v2066 = vsel %vm428, %v2032, 0.0
    %2067 = vadd.xlane.f32.xlu0 %v2066
    %v2068 = vpop.xlane.xlu0 %2067
    %v2069 = vsel %vm428, %v2034, 0.0
    %2070 = vadd.xlane.f32.xlu0 %v2069
    %v2071 = vpop.xlane.xlu0 %2070
    %v2072 = vsel %vm428, %v2036, 0.0
    %2073 = vadd.xlane.f32.xlu0 %v2072
    %v2074 = vpop.xlane.xlu0 %2073
    %v2075 = vsel %vm428, %v2038, 0.0
    %2076 = vadd.xlane.f32.xlu0 %v2075
    %v2077 = vpop.xlane.xlu0 %2076
    %v2078 = vsel %vm428, %v2040, 0.0
    %2079 = vadd.xlane.f32.xlu0 %v2078
    %v2080 = vpop.xlane.xlu0 %2079
    %v2081 = vsel %vm428, %v2042, 0.0
    %2082 = vadd.xlane.f32.xlu0 %v2081
    %v2083 = vpop.xlane.xlu0 %2082
    %v2084 = vsel %vm428, %v2044, 0.0
    %2085 = vadd.xlane.f32.xlu0 %v2084
    %v2086 = vpop.xlane.xlu0 %2085
    %v2087 = vsel %vm428, %v2046, 0.0
    %2088 = vadd.xlane.f32.xlu0 %v2087
    %v2089 = vpop.xlane.xlu0 %2088
    %v2090 = vsel %vm428, %v2048, 0.0
    %2091 = vadd.xlane.f32.xlu0 %v2090
    %v2092 = vpop.xlane.xlu0 %2091
    %v2093 = vsel %vm428, %v2050, 0.0
    %2094 = vadd.xlane.f32.xlu0 %v2093
    %v2095 = vpop.xlane.xlu0 %2094
    %v2096 = vsel %vm428, %v2052, 0.0
    %2097 = vadd.xlane.f32.xlu0 %v2096
    %v2098 = vpop.xlane.xlu0 %2097
    %v2099 = vsel %vm428, %v2054, 0.0
    %2100 = vadd.xlane.f32.xlu0 %v2099
    %v2101 = vpop.xlane.xlu0 %2100
    %v2102 = vsel %vm428, %v2056, 0.0
    %2103 = vadd.xlane.f32.xlu0 %v2102
    %v2104 = vpop.xlane.xlu0 %2103
    %v2105 = vlog2.pop %v2059
    %v2106 = vmul.f32 %v2105, 0.6931472
    %v2107 = vlog2.pop %v2062
    %v2108 = vmul.f32 %v2107, 0.6931472
    %v2109 = vlog2.pop %v2065
    %v2110 = vmul.f32 %v2109, 0.6931472
    %v2111 = vlog2.pop %v2068
    %v2112 = vmul.f32 %v2111, 0.6931472
    %v2113 = vlog2.pop %v2071
    %v2114 = vmul.f32 %v2113, 0.6931472
    %v2115 = vlog2.pop %v2074
    %v2116 = vmul.f32 %v2115, 0.6931472
    %v2117 = vlog2.pop %v2077
    %v2118 = vmul.f32 %v2117, 0.6931472
    %v2119 = vlog2.pop %v2080
    %v2120 = vmul.f32 %v2119, 0.6931472
    %v2121 = vlog2.pop %v2083
    %v2122 = vmul.f32 %v2121, 0.6931472
    %v2123 = vlog2.pop %v2086
    %v2124 = vmul.f32 %v2123, 0.6931472
    %v2125 = vlog2.pop %v2089
    %v2126 = vmul.f32 %v2125, 0.6931472
    %v2127 = vlog2.pop %v2092
    %v2128 = vmul.f32 %v2127, 0.6931472
    %v2129 = vlog2.pop %v2095
    %v2130 = vmul.f32 %v2129, 0.6931472
    %v2131 = vlog2.pop %v2098
    %v2132 = vmul.f32 %v2131, 0.6931472
    %v2133 = vlog2.pop %v2101
    %v2134 = vmul.f32 %v2133, 0.6931472
    %v2135 = vlog2.pop %v2104
    %v2136 = vmul.f32 %v2135, 0.6931472
    %v2137 = vadd.f32 %v1963, %v2106
    %v2138 = vadd.f32 %v1966, %v2108
    %v2139 = vadd.f32 %v1969, %v2110
    %v2140 = vadd.f32 %v1972, %v2112
    %v2141 = vadd.f32 %v1975, %v2114
    %v2142 = vadd.f32 %v1978, %v2116
    %v2143 = vadd.f32 %v1981, %v2118
    %v2144 = vadd.f32 %v1984, %v2120
    %v2145 = vadd.f32 %v1987, %v2122
    %v2146 = vadd.f32 %v1990, %v2124
    %v2147 = vadd.f32 %v1993, %v2126
    %v2148 = vadd.f32 %v1996, %v2128
    %v2149 = vadd.f32 %v1999, %v2130
    %v2150 = vadd.f32 %v2002, %v2132
    %v2151 = vadd.f32 %v2005, %v2134
    %v2152 = vadd.f32 %v2008, %v2136
    %v2153 = vsub.f32 -2.7725885, %v2137
    %v2154 = vsub.f32 -2.7725885, %v2138
    %v2155 = vsub.f32 -2.7725885, %v2139
    %v2156 = vsub.f32 -2.7725885, %v2140
    %v2157 = vsub.f32 -2.7725885, %v2141
    %v2158 = vsub.f32 -2.7725885, %v2142
    %v2159 = vsub.f32 -2.7725885, %v2143
    %v2160 = vsub.f32 -2.7725885, %v2144
    %v2161 = vsub.f32 -2.7725885, %v2145
    %v2162 = vsub.f32 -2.7725885, %v2146
    %v2163 = vsub.f32 -2.7725885, %v2147
    %v2164 = vsub.f32 -2.7725885, %v2148
    %v2165 = vsub.f32 -2.7725885, %v2149
    %v2166 = vsub.f32 -2.7725885, %v2150
    %v2167 = vsub.f32 -2.7725885, %v2151
    %v2168 = vsub.f32 -2.7725885, %v2152
    %v2169 = vadd.f32 %v1732, %v2153
    %v2170 = vadd.f32 %v1735, %v2154
    %v2171 = vadd.f32 %v1764, %v2155
    %v2172 = vadd.f32 %v1767, %v2156
    %v2173 = vadd.f32 %v1796, %v2157
    %v2174 = vadd.f32 %v1799, %v2158
    %v2175 = vadd.f32 %v1828, %v2159
    %v2176 = vadd.f32 %v1831, %v2160
    %v2177 = vadd.f32 %v1860, %v2161
    %v2178 = vadd.f32 %v1863, %v2162
    %v2179 = vadd.f32 %v1892, %v2163
    %v2180 = vadd.f32 %v1895, %v2164
    %v2181 = vadd.f32 %v1924, %v2165
    %v2182 = vadd.f32 %v1927, %v2166
    %v2183 = vadd.f32 %v1956, %v2167
    %v2184 = vadd.f32 %v1959, %v2168
    %v2185 = vsel %vm428, %v2169, -inf
    %v2186 = vsel %vm428, %v2170, -inf
    %v2187 = vmax.f32 %v2185, %v2186
    %v2188 = vrot.slane %v2187, 4
    %v2189 = vmax.f32 %v2187, %v2188
    %v2190 = vrot.slane %v2189, 2
    %v2191 = vmax.f32 %v2189, %v2190
    %v2192 = vrot.slane %v2191, 1
    %v2193 = vmax.f32 %v2191, %v2192
    %v2194 = vsel %vm428, %v2171, -inf
    %v2195 = vsel %vm428, %v2172, -inf
    %v2196 = vmax.f32 %v2194, %v2195
    %v2197 = vrot.slane %v2196, 4
    %v2198 = vmax.f32 %v2196, %v2197
    %v2199 = vrot.slane %v2198, 2
    %v2200 = vmax.f32 %v2198, %v2199
    %v2201 = vrot.slane %v2200, 1
    %v2202 = vmax.f32 %v2200, %v2201
    %v2203 = vsel %vm428, %v2173, -inf
    %v2204 = vsel %vm428, %v2174, -inf
    %v2205 = vmax.f32 %v2203, %v2204
    %v2206 = vrot.slane %v2205, 4
    %v2207 = vmax.f32 %v2205, %v2206
    %v2208 = vrot.slane %v2207, 2
    %v2209 = vmax.f32 %v2207, %v2208
    %v2210 = vrot.slane %v2209, 1
    %v2211 = vmax.f32 %v2209, %v2210
    %v2212 = vsel %vm428, %v2175, -inf
    %v2213 = vsel %vm428, %v2176, -inf
    %v2214 = vmax.f32 %v2212, %v2213
    %v2215 = vrot.slane %v2214, 4
    %v2216 = vmax.f32 %v2214, %v2215
    %v2217 = vrot.slane %v2216, 2
    %v2218 = vmax.f32 %v2216, %v2217
    %v2219 = vrot.slane %v2218, 1
    %v2220 = vmax.f32 %v2218, %v2219
    %v2221 = vsel %vm428, %v2177, -inf
    %v2222 = vsel %vm428, %v2178, -inf
    %v2223 = vmax.f32 %v2221, %v2222
    %v2224 = vrot.slane %v2223, 4
    %v2225 = vmax.f32 %v2223, %v2224
    %v2226 = vrot.slane %v2225, 2
    %v2227 = vmax.f32 %v2225, %v2226
    %v2228 = vrot.slane %v2227, 1
    %v2229 = vmax.f32 %v2227, %v2228
    %v2230 = vsel %vm428, %v2179, -inf
    %v2231 = vsel %vm428, %v2180, -inf
    %v2232 = vmax.f32 %v2230, %v2231
    %v2233 = vrot.slane %v2232, 4
    %v2234 = vmax.f32 %v2232, %v2233
    %v2235 = vrot.slane %v2234, 2
    %v2236 = vmax.f32 %v2234, %v2235
    %v2237 = vrot.slane %v2236, 1
    %v2238 = vmax.f32 %v2236, %v2237
    %v2239 = vsel %vm428, %v2181, -inf
    %v2240 = vsel %vm428, %v2182, -inf
    %v2241 = vmax.f32 %v2239, %v2240
    %v2242 = vrot.slane %v2241, 4
    %v2243 = vmax.f32 %v2241, %v2242
    %v2244 = vrot.slane %v2243, 2
    %v2245 = vmax.f32 %v2243, %v2244
    %v2246 = vrot.slane %v2245, 1
    %v2247 = vmax.f32 %v2245, %v2246
    %v2248 = vsel %vm428, %v2183, -inf
    %v2249 = vsel %vm428, %v2184, -inf
    %v2250 = vmax.f32 %v2248, %v2249
    %v2251 = vrot.slane %v2250, 4
    %v2252 = vmax.f32 %v2250, %v2251
    %v2253 = vrot.slane %v2252, 2
    %v2254 = vmax.f32 %v2252, %v2253
    %v2255 = vrot.slane %v2254, 1
    %v2256 = vmax.f32 %v2254, %v2255
    %v2257 = vsub.f32 %v2169, %v2193
    %v2258 = vsub.f32 %v2170, %v2193
    %v2259 = vsub.f32 %v2171, %v2202
    %v2260 = vsub.f32 %v2172, %v2202
    %v2261 = vsub.f32 %v2173, %v2211
    %v2262 = vsub.f32 %v2174, %v2211
    %v2263 = vsub.f32 %v2175, %v2220
    %v2264 = vsub.f32 %v2176, %v2220
    %v2265 = vsub.f32 %v2177, %v2229
    %v2266 = vsub.f32 %v2178, %v2229
    %v2267 = vsub.f32 %v2179, %v2238
    %v2268 = vsub.f32 %v2180, %v2238
    %v2269 = vsub.f32 %v2181, %v2247
    %v2270 = vsub.f32 %v2182, %v2247
    %v2271 = vsub.f32 %v2183, %v2256
    %v2272 = vsub.f32 %v2184, %v2256
    %v2273 = vmul.f32 %v2257, 1.442695
    %v2274 = vpow.pop %v2273
    %v2275 = vmul.f32 %v2258, 1.442695
    %v2276 = vpow.pop %v2275
    %v2277 = vmul.f32 %v2259, 1.442695
    %v2278 = vpow.pop %v2277
    %v2279 = vmul.f32 %v2260, 1.442695
    %v2280 = vpow.pop %v2279
    %v2281 = vmul.f32 %v2261, 1.442695
    %v2282 = vpow.pop %v2281
    %v2283 = vmul.f32 %v2262, 1.442695
    %v2284 = vpow.pop %v2283
    %v2285 = vmul.f32 %v2263, 1.442695
    %v2286 = vpow.pop %v2285
    %v2287 = vmul.f32 %v2264, 1.442695
    %v2288 = vpow.pop %v2287
    %v2289 = vmul.f32 %v2265, 1.442695
    %v2290 = vpow.pop %v2289
    %v2291 = vmul.f32 %v2266, 1.442695
    %v2292 = vpow.pop %v2291
    %v2293 = vmul.f32 %v2267, 1.442695
    %v2294 = vpow.pop %v2293
    %v2295 = vmul.f32 %v2268, 1.442695
    %v2296 = vpow.pop %v2295
    %v2297 = vmul.f32 %v2269, 1.442695
    %v2298 = vpow.pop %v2297
    %v2299 = vmul.f32 %v2270, 1.442695
    %v2300 = vpow.pop %v2299
    %v2301 = vmul.f32 %v2271, 1.442695
    %v2302 = vpow.pop %v2301
    %v2303 = vmul.f32 %v2272, 1.442695
    %v2304 = vpow.pop %v2303
    %v2305 = vsel %vm428, %v2274, 0.0
    %v2306 = vsel %vm428, %v2276, 0.0
    %v2307 = vadd.f32 %v2305, %v2306
    %v2308 = vrot.slane %v2307, 4
    %v2309 = vadd.f32 %v2307, %v2308
    %v2310 = vrot.slane %v2309, 2
    %v2311 = vadd.f32 %v2309, %v2310
    %v2312 = vrot.slane %v2311, 1
    %v2313 = vadd.f32 %v2311, %v2312
    %v2314 = vsel %vm428, %v2278, 0.0
    %v2315 = vsel %vm428, %v2280, 0.0
    %v2316 = vadd.f32 %v2314, %v2315
    %v2317 = vrot.slane %v2316, 4
    %v2318 = vadd.f32 %v2316, %v2317
    %v2319 = vrot.slane %v2318, 2
    %v2320 = vadd.f32 %v2318, %v2319
    %v2321 = vrot.slane %v2320, 1
    %v2322 = vadd.f32 %v2320, %v2321
    %v2323 = vsel %vm428, %v2282, 0.0
    %v2324 = vsel %vm428, %v2284, 0.0
    %v2325 = vadd.f32 %v2323, %v2324
    %v2326 = vrot.slane %v2325, 4
    %v2327 = vadd.f32 %v2325, %v2326
    %v2328 = vrot.slane %v2327, 2
    %v2329 = vadd.f32 %v2327, %v2328
    %v2330 = vrot.slane %v2329, 1
    %v2331 = vadd.f32 %v2329, %v2330
    %v2332 = vsel %vm428, %v2286, 0.0
    %v2333 = vsel %vm428, %v2288, 0.0
    %v2334 = vadd.f32 %v2332, %v2333
    %v2335 = vrot.slane %v2334, 4
    %v2336 = vadd.f32 %v2334, %v2335
    %v2337 = vrot.slane %v2336, 2
    %v2338 = vadd.f32 %v2336, %v2337
    %v2339 = vrot.slane %v2338, 1
    %v2340 = vadd.f32 %v2338, %v2339
    %v2341 = vsel %vm428, %v2290, 0.0
    %v2342 = vsel %vm428, %v2292, 0.0
    %v2343 = vadd.f32 %v2341, %v2342
    %v2344 = vrot.slane %v2343, 4
    %v2345 = vadd.f32 %v2343, %v2344
    %v2346 = vrot.slane %v2345, 2
    %v2347 = vadd.f32 %v2345, %v2346
    %v2348 = vrot.slane %v2347, 1
    %v2349 = vadd.f32 %v2347, %v2348
    %v2350 = vsel %vm428, %v2294, 0.0
    %v2351 = vsel %vm428, %v2296, 0.0
    %v2352 = vadd.f32 %v2350, %v2351
    %v2353 = vrot.slane %v2352, 4
    %v2354 = vadd.f32 %v2352, %v2353
    %v2355 = vrot.slane %v2354, 2
    %v2356 = vadd.f32 %v2354, %v2355
    %v2357 = vrot.slane %v2356, 1
    %v2358 = vadd.f32 %v2356, %v2357
    %v2359 = vsel %vm428, %v2298, 0.0
    %v2360 = vsel %vm428, %v2300, 0.0
    %v2361 = vadd.f32 %v2359, %v2360
    %v2362 = vrot.slane %v2361, 4
    %v2363 = vadd.f32 %v2361, %v2362
    %v2364 = vrot.slane %v2363, 2
    %v2365 = vadd.f32 %v2363, %v2364
    %v2366 = vrot.slane %v2365, 1
    %v2367 = vadd.f32 %v2365, %v2366
    %v2368 = vsel %vm428, %v2302, 0.0
    %v2369 = vsel %vm428, %v2304, 0.0
    %v2370 = vadd.f32 %v2368, %v2369
    %v2371 = vrot.slane %v2370, 4
    %v2372 = vadd.f32 %v2370, %v2371
    %v2373 = vrot.slane %v2372, 2
    %v2374 = vadd.f32 %v2372, %v2373
    %v2375 = vrot.slane %v2374, 1
    %v2376 = vadd.f32 %v2374, %v2375
    %v2377 = vlog2.pop %v2313
    %v2378 = vmul.f32 %v2377, 0.6931472
    %v2379 = vlog2.pop %v2322
    %v2380 = vmul.f32 %v2379, 0.6931472
    %v2381 = vlog2.pop %v2331
    %v2382 = vmul.f32 %v2381, 0.6931472
    %v2383 = vlog2.pop %v2340
    %v2384 = vmul.f32 %v2383, 0.6931472
    %v2385 = vlog2.pop %v2349
    %v2386 = vmul.f32 %v2385, 0.6931472
    %v2387 = vlog2.pop %v2358
    %v2388 = vmul.f32 %v2387, 0.6931472
    %v2389 = vlog2.pop %v2367
    %v2390 = vmul.f32 %v2389, 0.6931472
    %v2391 = vlog2.pop %v2376
    %v2392 = vmul.f32 %v2391, 0.6931472
    %v2393 = vadd.f32 %v2193, %v2378
    %v2394 = vadd.f32 %v2202, %v2380
    %v2395 = vadd.f32 %v2211, %v2382
    %v2396 = vadd.f32 %v2220, %v2384
    %v2397 = vadd.f32 %v2229, %v2386
    %v2398 = vadd.f32 %v2238, %v2388
    %v2399 = vadd.f32 %v2247, %v2390
    %v2400 = vadd.f32 %v2256, %v2392
    %v2401 = vsub.f32 0.69314724, %v2393
    %v2402 = vsub.f32 0.69314724, %v2394
    %v2403 = vsub.f32 0.69314724, %v2395
    %v2404 = vsub.f32 0.69314724, %v2396
    %v2405 = vsub.f32 0.69314724, %v2397
    %v2406 = vsub.f32 0.69314724, %v2398
    %v2407 = vsub.f32 0.69314724, %v2399
    %v2408 = vsub.f32 0.69314724, %v2400
    %v2409 = vadd.f32 %v2169, %v2401
    %v2410 = vadd.f32 %v2170, %v2401
    %v2411 = vadd.f32 %v2171, %v2402
    %v2412 = vadd.f32 %v2172, %v2402
    %v2413 = vadd.f32 %v2173, %v2403
    %v2414 = vadd.f32 %v2174, %v2403
    %v2415 = vadd.f32 %v2175, %v2404
    %v2416 = vadd.f32 %v2176, %v2404
    %v2417 = vadd.f32 %v2177, %v2405
    %v2418 = vadd.f32 %v2178, %v2405
    %v2419 = vadd.f32 %v2179, %v2406
    %v2420 = vadd.f32 %v2180, %v2406
    %v2421 = vadd.f32 %v2181, %v2407
    %v2422 = vadd.f32 %v2182, %v2407
    %v2423 = vadd.f32 %v2183, %v2408
    %v2424 = vadd.f32 %v2184, %v2408
    %v2425 = vmul.f32 %v2409, 1.442695
    %v2426 = vpow.pop %v2425
    %v2427 = vmul.f32 %v2410, 1.442695
    %v2428 = vpow.pop %v2427
    %v2429 = vmul.f32 %v2411, 1.442695
    %v2430 = vpow.pop %v2429
    %v2431 = vmul.f32 %v2412, 1.442695
    %v2432 = vpow.pop %v2431
    %v2433 = vmul.f32 %v2413, 1.442695
    %v2434 = vpow.pop %v2433
    %v2435 = vmul.f32 %v2414, 1.442695
    %v2436 = vpow.pop %v2435
    %v2437 = vmul.f32 %v2415, 1.442695
    %v2438 = vpow.pop %v2437
    %v2439 = vmul.f32 %v2416, 1.442695
    %v2440 = vpow.pop %v2439
    %v2441 = vmul.f32 %v2417, 1.442695
    %v2442 = vpow.pop %v2441
    %v2443 = vmul.f32 %v2418, 1.442695
    %v2444 = vpow.pop %v2443
    %v2445 = vmul.f32 %v2419, 1.442695
    %v2446 = vpow.pop %v2445
    %v2447 = vmul.f32 %v2420, 1.442695
    %v2448 = vpow.pop %v2447
    %v2449 = vmul.f32 %v2421, 1.442695
    %v2450 = vpow.pop %v2449
    %v2451 = vmul.f32 %v2422, 1.442695
    %v2452 = vpow.pop %v2451
    %v2453 = vmul.f32 %v2423, 1.442695
    %v2454 = vpow.pop %v2453
    %v2455 = vmul.f32 %v2424, 1.442695
    %v2456 = vpow.pop %v2455
    %v2458 = vsel %vm428, %v2426, 0
    %v2461 = vsel %vm428, %v2428, 0
    %2463 = vmatpush.msra.mxu0 0.0
    %2464 = vmatpush.msra.mxu0 0.0
    %2465 = vmatpush.msra.mxu0 0.0
    %2466 = vmatpush.msra.mxu0 0.0
    %2467 = vmatpush.msra.mxu0 0.0
    %2468 = vmatpush.msra.mxu0 0.0
    %2469 = vmatpush.msra.mxu0 0.0
    %2470 = vmatpush.msra.mxu0 0.0
    %2471 = vmatpush.msra.mxu0 0.0
    %2472 = vmatpush.msra.mxu0 0.0
    %2473 = vmatpush.msra.mxu0 0.0
    %2474 = vmatpush.msra.mxu0 0.0
    %2475 = vmatpush.msra.mxu0 0.0
    %2476 = vmatpush.msra.mxu0 0.0
    %2477 = vmatpush.msra.mxu0 0.0
    %2478 = vmatpush.msra.mxu0 %v1613
    %2479 = vmatmul.f32.gmra.mxu0 %v2458
    %v2480 = vpop.f32.mrf.mxu0
    %v2481 = vadd.f32 0.0, %v2480
    %2482 = vmatmul.f32.gmra.mxu0 %v2461
    %v2483 = vpop.f32.mrf.mxu0
    %v2484 = vadd.f32 0.0, %v2483
    %2485 = vdwg.mxu0
    %v2487 = vsel %vm428, %v2430, 0
    %v2490 = vsel %vm428, %v2432, 0
    %2492 = vmatpush.msra.mxu0 0.0
    %2493 = vmatpush.msra.mxu0 0.0
    %2494 = vmatpush.msra.mxu0 0.0
    %2495 = vmatpush.msra.mxu0 0.0
    %2496 = vmatpush.msra.mxu0 0.0
    %2497 = vmatpush.msra.mxu0 0.0
    %2498 = vmatpush.msra.mxu0 0.0
    %2499 = vmatpush.msra.mxu0 0.0
    %2500 = vmatpush.msra.mxu0 0.0
    %2501 = vmatpush.msra.mxu0 0.0
    %2502 = vmatpush.msra.mxu0 0.0
    %2503 = vmatpush.msra.mxu0 0.0
    %2504 = vmatpush.msra.mxu0 0.0
    %2505 = vmatpush.msra.mxu0 0.0
    %2506 = vmatpush.msra.mxu0 0.0
    %2507 = vmatpush.msra.mxu0 %v1616
    %2508 = vmatmul.f32.gmra.mxu0 %v2487
    %v2509 = vpop.f32.mrf.mxu0
    %v2510 = vadd.f32 0.0, %v2509
    %2511 = vmatmul.f32.gmra.mxu0 %v2490
    %v2512 = vpop.f32.mrf.mxu0
    %v2513 = vadd.f32 0.0, %v2512
    %2514 = vdwg.mxu0
    %v2516 = vsel %vm428, %v2434, 0
    %v2519 = vsel %vm428, %v2436, 0
    %2521 = vmatpush.msra.mxu0 0.0
    %2522 = vmatpush.msra.mxu0 0.0
    %2523 = vmatpush.msra.mxu0 0.0
    %2524 = vmatpush.msra.mxu0 0.0
    %2525 = vmatpush.msra.mxu0 0.0
    %2526 = vmatpush.msra.mxu0 0.0
    %2527 = vmatpush.msra.mxu0 0.0
    %2528 = vmatpush.msra.mxu0 0.0
    %2529 = vmatpush.msra.mxu0 0.0
    %2530 = vmatpush.msra.mxu0 0.0
    %2531 = vmatpush.msra.mxu0 0.0
    %2532 = vmatpush.msra.mxu0 0.0
    %2533 = vmatpush.msra.mxu0 0.0
    %2534 = vmatpush.msra.mxu0 0.0
    %2535 = vmatpush.msra.mxu0 0.0
    %2536 = vmatpush.msra.mxu0 %v1642
    %2537 = vmatmul.f32.gmra.mxu0 %v2516
    %v2538 = vpop.f32.mrf.mxu0
    %v2539 = vadd.f32 0.0, %v2538
    %2540 = vmatmul.f32.gmra.mxu0 %v2519
    %v2541 = vpop.f32.mrf.mxu0
    %v2542 = vadd.f32 0.0, %v2541
    %2543 = vdwg.mxu0
    %v2545 = vsel %vm428, %v2438, 0
    %v2548 = vsel %vm428, %v2440, 0
    %2550 = vmatpush.msra.mxu0 0.0
    %2551 = vmatpush.msra.mxu0 0.0
    %2552 = vmatpush.msra.mxu0 0.0
    %2553 = vmatpush.msra.mxu0 0.0
    %2554 = vmatpush.msra.mxu0 0.0
    %2555 = vmatpush.msra.mxu0 0.0
    %2556 = vmatpush.msra.mxu0 0.0
    %2557 = vmatpush.msra.mxu0 0.0
    %2558 = vmatpush.msra.mxu0 0.0
    %2559 = vmatpush.msra.mxu0 0.0
    %2560 = vmatpush.msra.mxu0 0.0
    %2561 = vmatpush.msra.mxu0 0.0
    %2562 = vmatpush.msra.mxu0 0.0
    %2563 = vmatpush.msra.mxu0 0.0
    %2564 = vmatpush.msra.mxu0 0.0
    %2565 = vmatpush.msra.mxu0 %v1645
    %2566 = vmatmul.f32.gmra.mxu0 %v2545
    %v2567 = vpop.f32.mrf.mxu0
    %v2568 = vadd.f32 0.0, %v2567
    %2569 = vmatmul.f32.gmra.mxu0 %v2548
    %v2570 = vpop.f32.mrf.mxu0
    %v2571 = vadd.f32 0.0, %v2570
    %2572 = vdwg.mxu0
    %v2574 = vsel %vm428, %v2442, 0
    %v2577 = vsel %vm428, %v2444, 0
    %2579 = vmatpush.msra.mxu0 0.0
    %2580 = vmatpush.msra.mxu0 0.0
    %2581 = vmatpush.msra.mxu0 0.0
    %2582 = vmatpush.msra.mxu0 0.0
    %2583 = vmatpush.msra.mxu0 0.0
    %2584 = vmatpush.msra.mxu0 0.0
    %2585 = vmatpush.msra.mxu0 0.0
    %2586 = vmatpush.msra.mxu0 0.0
    %2587 = vmatpush.msra.mxu0 0.0
    %2588 = vmatpush.msra.mxu0 0.0
    %2589 = vmatpush.msra.mxu0 0.0
    %2590 = vmatpush.msra.mxu0 0.0
    %2591 = vmatpush.msra.mxu0 0.0
    %2592 = vmatpush.msra.mxu0 0.0
    %2593 = vmatpush.msra.mxu0 0.0
    %2594 = vmatpush.msra.mxu0 %v1671
    %2595 = vmatmul.f32.gmra.mxu0 %v2574
    %v2596 = vpop.f32.mrf.mxu0
    %v2597 = vadd.f32 0.0, %v2596
    %2598 = vmatmul.f32.gmra.mxu0 %v2577
    %v2599 = vpop.f32.mrf.mxu0
    %v2600 = vadd.f32 0.0, %v2599
    %2601 = vdwg.mxu0
    %v2603 = vsel %vm428, %v2446, 0
    %v2606 = vsel %vm428, %v2448, 0
    %2608 = vmatpush.msra.mxu0 0.0
    %2609 = vmatpush.msra.mxu0 0.0
    %2610 = vmatpush.msra.mxu0 0.0
    %2611 = vmatpush.msra.mxu0 0.0
    %2612 = vmatpush.msra.mxu0 0.0
    %2613 = vmatpush.msra.mxu0 0.0
    %2614 = vmatpush.msra.mxu0 0.0
    %2615 = vmatpush.msra.mxu0 0.0
    %2616 = vmatpush.msra.mxu0 0.0
    %2617 = vmatpush.msra.mxu0 0.0
    %2618 = vmatpush.msra.mxu0 0.0
    %2619 = vmatpush.msra.mxu0 0.0
    %2620 = vmatpush.msra.mxu0 0.0
    %2621 = vmatpush.msra.mxu0 0.0
    %2622 = vmatpush.msra.mxu0 0.0
    %2623 = vmatpush.msra.mxu0 %v1674
    %2624 = vmatmul.f32.gmra.mxu0 %v2603
    %v2625 = vpop.f32.mrf.mxu0
    %v2626 = vadd.f32 0.0, %v2625
    %2627 = vmatmul.f32.gmra.mxu0 %v2606
    %v2628 = vpop.f32.mrf.mxu0
    %v2629 = vadd.f32 0.0, %v2628
    %2630 = vdwg.mxu0
    %v2632 = vsel %vm428, %v2450, 0
    %v2635 = vsel %vm428, %v2452, 0
    %2637 = vmatpush.msra.mxu0 0.0
    %2638 = vmatpush.msra.mxu0 0.0
    %2639 = vmatpush.msra.mxu0 0.0
    %2640 = vmatpush.msra.mxu0 0.0
    %2641 = vmatpush.msra.mxu0 0.0
    %2642 = vmatpush.msra.mxu0 0.0
    %2643 = vmatpush.msra.mxu0 0.0
    %2644 = vmatpush.msra.mxu0 0.0
    %2645 = vmatpush.msra.mxu0 0.0
    %2646 = vmatpush.msra.mxu0 0.0
    %2647 = vmatpush.msra.mxu0 0.0
    %2648 = vmatpush.msra.mxu0 0.0
    %2649 = vmatpush.msra.mxu0 0.0
    %2650 = vmatpush.msra.mxu0 0.0
    %2651 = vmatpush.msra.mxu0 0.0
    %2652 = vmatpush.msra.mxu0 %v1700
    %2653 = vmatmul.f32.gmra.mxu0 %v2632
    %v2654 = vpop.f32.mrf.mxu0
    %v2655 = vadd.f32 0.0, %v2654
    %2656 = vmatmul.f32.gmra.mxu0 %v2635
    %v2657 = vpop.f32.mrf.mxu0
    %v2658 = vadd.f32 0.0, %v2657
    %2659 = vdwg.mxu0
    %v2661 = vsel %vm428, %v2454, 0
    %v2664 = vsel %vm428, %v2456, 0
    %2666 = vmatpush.msra.mxu0 0.0
    %2667 = vmatpush.msra.mxu0 0.0
    %2668 = vmatpush.msra.mxu0 0.0
    %2669 = vmatpush.msra.mxu0 0.0
    %2670 = vmatpush.msra.mxu0 0.0
    %2671 = vmatpush.msra.mxu0 0.0
    %2672 = vmatpush.msra.mxu0 0.0
    %2673 = vmatpush.msra.mxu0 0.0
    %2674 = vmatpush.msra.mxu0 0.0
    %2675 = vmatpush.msra.mxu0 0.0
    %2676 = vmatpush.msra.mxu0 0.0
    %2677 = vmatpush.msra.mxu0 0.0
    %2678 = vmatpush.msra.mxu0 0.0
    %2679 = vmatpush.msra.mxu0 0.0
    %2680 = vmatpush.msra.mxu0 0.0
    %2681 = vmatpush.msra.mxu0 %v1703
    %2682 = vmatmul.f32.gmra.mxu0 %v2661
    %v2683 = vpop.f32.mrf.mxu0
    %v2684 = vadd.f32 0.0, %v2683
    %2685 = vmatmul.f32.gmra.mxu0 %v2664
    %v2686 = vpop.f32.mrf.mxu0
    %v2687 = vadd.f32 0.0, %v2686
    %2688 = vdwg.mxu0
    %v2689 = vadd.f32 %v1351, %v2481
    %v2690 = vadd.f32 %v1354, %v2484
    %v2691 = vadd.f32 %v1357, %v2510
    %v2692 = vadd.f32 %v1360, %v2513
    %v2693 = vadd.f32 %v1386, %v2539
    %v2694 = vadd.f32 %v1389, %v2542
    %v2695 = vadd.f32 %v1392, %v2568
    %v2696 = vadd.f32 %v1395, %v2571
    %v2697 = vadd.f32 %v1421, %v2597
    %v2698 = vadd.f32 %v1424, %v2600
    %v2699 = vadd.f32 %v1427, %v2626
    %v2700 = vadd.f32 %v1430, %v2629
    %v2701 = vadd.f32 %v1456, %v2655
    %v2702 = vadd.f32 %v1459, %v2658
    %v2703 = vadd.f32 %v1462, %v2684
    %v2704 = vadd.f32 %v1465, %v2687
    %2709 = vrot.lane.b32.xlu0 %v2693, 8
    %v2710 = vpop.permute.xlu0 %2709
    %2711 = vrot.lane.b32.xlu0 %v2694, 8
    %v2712 = vpop.permute.xlu0 %2711
    %2713 = vrot.lane.b32.xlu0 %v2695, 8
    %v2714 = vpop.permute.xlu0 %2713
    %2715 = vrot.lane.b32.xlu0 %v2696, 8
    %v2716 = vpop.permute.xlu0 %2715
    %2725 = vrot.lane.b32.xlu0 %v2697, 16
    %v2726 = vpop.permute.xlu0 %2725
    %2727 = vrot.lane.b32.xlu0 %v2698, 16
    %v2728 = vpop.permute.xlu0 %2727
    %2729 = vrot.lane.b32.xlu0 %v2699, 16
    %v2730 = vpop.permute.xlu0 %2729
    %2731 = vrot.lane.b32.xlu0 %v2700, 16
    %v2732 = vpop.permute.xlu0 %2731
    %2741 = vrot.lane.b32.xlu0 %v2701, 24
    %v2742 = vpop.permute.xlu0 %2741
    %2743 = vrot.lane.b32.xlu0 %v2702, 24
    %v2744 = vpop.permute.xlu0 %2743
    %2745 = vrot.lane.b32.xlu0 %v2703, 24
    %v2746 = vpop.permute.xlu0 %2745
    %2747 = vrot.lane.b32.xlu0 %v2704, 24
    %v2748 = vpop.permute.xlu0 %2747
    %v2753 = vsel %vm428, %v2689, %v2710
    %v2754 = vsel %vm428, %v2690, %v2712
    %v2755 = vsel %vm428, %v2691, %v2714
    %v2756 = vsel %vm428, %v2692, %v2716
    %v2757 = vsel %vm649, %v2753, %v2726
    %v2758 = vsel %vm649, %v2754, %v2728
    %v2759 = vsel %vm649, %v2755, %v2730
    %v2760 = vsel %vm649, %v2756, %v2732
    %v2761 = vsel %vm1174, %v2757, %v2742
    %v2762 = vsel %vm1174, %v2758, %v2744
    %v2763 = vsel %vm1174, %v2759, %v2746
    %v2764 = vsel %vm1174, %v2760, %v2748
    %v2765 = vld [vmem:[%s3 + $0x28] sm:$0xff]
    %v2766 = vld [vmem:[%s3 + $0x30] sm:$0xff]
    %v2767 = vld [vmem:[%s3 + $0x38] sm:$0xff]
    %v2768 = vld [vmem:[%s3 + $0x40] sm:$0xff]
    %v2769 = vld [vmem:[%s3 + $0x48] sm:$0x1]
    %v2770 = vld [vmem:[%s3 + $0x49] sm:$0x1]
    %v2771 = vld [vmem:[%s3 + $0x4a] sm:$0x1]
    %v2772 = vld [vmem:[%s3 + $0x4b] sm:$0x1]
    %v2773 = vld [vmem:[%s3 + $0x4c] sm:$0x1]
    %v2774 = vsel %vm34, %v2761, 0.0
    %2775 = vadd.xlane.f32.xlu0 %v2774
    %v2776 = vpop.xlane.xlu0 %2775
    %v2777 = vsel %vm34, %v2762, 0.0
    %2778 = vadd.xlane.f32.xlu0 %v2777
    %v2779 = vpop.xlane.xlu0 %2778
    %v2780 = vsel %vm34, %v2763, 0.0
    %2781 = vadd.xlane.f32.xlu0 %v2780
    %v2782 = vpop.xlane.xlu0 %2781
    %v2783 = vsel %vm34, %v2764, 0.0
    %2784 = vadd.xlane.f32.xlu0 %v2783
    %v2785 = vpop.xlane.xlu0 %2784
    %v2786 = vmul.f32 %v2776, %v1198
    %v2787 = vmul.f32 %v2779, %v1198
    %v2788 = vmul.f32 %v2782, %v1198
    %v2789 = vmul.f32 %v2785, %v1198
    %v2790 = vsub.f32 %v2761, %v2786
    %v2791 = vsub.f32 %v2762, %v2787
    %v2792 = vsub.f32 %v2763, %v2788
    %v2793 = vsub.f32 %v2764, %v2789
    %v2794 = vmul.f32 %v2790, %v2790
    %v2795 = vmul.f32 %v2791, %v2791
    %v2796 = vmul.f32 %v2792, %v2792
    %v2797 = vmul.f32 %v2793, %v2793
    %v2798 = vsel %vm34, %v2794, 0.0
    %2799 = vadd.xlane.f32.xlu0 %v2798
    %v2800 = vpop.xlane.xlu0 %2799
    %v2801 = vsel %vm34, %v2795, 0.0
    %2802 = vadd.xlane.f32.xlu0 %v2801
    %v2803 = vpop.xlane.xlu0 %2802
    %v2804 = vsel %vm34, %v2796, 0.0
    %2805 = vadd.xlane.f32.xlu0 %v2804
    %v2806 = vpop.xlane.xlu0 %2805
    %v2807 = vsel %vm34, %v2797, 0.0
    %2808 = vadd.xlane.f32.xlu0 %v2807
    %v2809 = vpop.xlane.xlu0 %2808
    %v2810 = vmul.f32 %v2800, %v1198
    %v2811 = vmul.f32 %v2803, %v1198
    %v2812 = vmul.f32 %v2806, %v1198
    %v2813 = vmul.f32 %v2809, %v1198
    %v2814 = vadd.f32 %v2810, 1e-05
    %v2815 = vadd.f32 %v2811, 1e-05
    %v2816 = vadd.f32 %v2812, 1e-05
    %v2817 = vadd.f32 %v2813, 1e-05
    %v2818 = vrsqrt.pop %v2814
    %v2819 = vmul.f32 %v2818, %v2814
    %v2820 = vmul.f32 %v2819, %v2818
    %v2821 = vmul.f32 0.5, %v2820
    %v2822 = vsub.f32 1.5, %v2821
    %v2823 = vmul.f32 %v2818, %v2822
    %vm2824 = vweird.f32 %v2814
    %vm2825 = vweird.f32 %v2818
    %vm2826 = vmor %vm2824, %vm2825
    %v2827 = vsel %vm2826, %v2818, %v2823
    %v2828 = vrsqrt.pop %v2815
    %v2829 = vmul.f32 %v2828, %v2815
    %v2830 = vmul.f32 %v2829, %v2828
    %v2831 = vmul.f32 0.5, %v2830
    %v2832 = vsub.f32 1.5, %v2831
    %v2833 = vmul.f32 %v2828, %v2832
    %vm2834 = vweird.f32 %v2815
    %vm2835 = vweird.f32 %v2828
    %vm2836 = vmor %vm2834, %vm2835
    %v2837 = vsel %vm2836, %v2828, %v2833
    %v2838 = vrsqrt.pop %v2816
    %v2839 = vmul.f32 %v2838, %v2816
    %v2840 = vmul.f32 %v2839, %v2838
    %v2841 = vmul.f32 0.5, %v2840
    %v2842 = vsub.f32 1.5, %v2841
    %v2843 = vmul.f32 %v2838, %v2842
    %vm2844 = vweird.f32 %v2816
    %vm2845 = vweird.f32 %v2838
    %vm2846 = vmor %vm2844, %vm2845
    %v2847 = vsel %vm2846, %v2838, %v2843
    %v2848 = vrsqrt.pop %v2817
    %v2849 = vmul.f32 %v2848, %v2817
    %v2850 = vmul.f32 %v2849, %v2848
    %v2851 = vmul.f32 0.5, %v2850
    %v2852 = vsub.f32 1.5, %v2851
    %v2853 = vmul.f32 %v2848, %v2852
    %vm2854 = vweird.f32 %v2817
    %vm2855 = vweird.f32 %v2848
    %vm2856 = vmor %vm2854, %vm2855
    %v2857 = vsel %vm2856, %v2848, %v2853
    %v2858 = vmul.f32 %v2790, %v2827
    %v2859 = vmul.f32 %v2791, %v2837
    %v2860 = vmul.f32 %v2792, %v2847
    %v2861 = vmul.f32 %v2793, %v2857
    %v2862 = vperm.slane %v2770, 0
    %v2863 = vmul.f32 %v2858, %v2862
    %v2864 = vmul.f32 %v2859, %v2862
    %v2865 = vmul.f32 %v2860, %v2862
    %v2866 = vmul.f32 %v2861, %v2862
    %v2867 = vperm.slane %v2771, 0
    %v2868 = vadd.f32 %v2863, %v2867
    %v2869 = vadd.f32 %v2864, %v2867
    %v2870 = vadd.f32 %v2865, %v2867
    %v2871 = vadd.f32 %v2866, %v2867
    %v2872 = vperm.slane %v2769, 0
    %v2874 = vsel %vm34, %v2868, 0
    %v2877 = vsel %vm34, %v2869, 0
    %v2880 = vsel %vm34, %v2870, 0
    %v2883 = vsel %vm34, %v2871, 0
    %2885 = vmatpush.msra.mxu0 0.0
    %2886 = vmatpush.msra.mxu0 0.0
    %2887 = vmatpush.msra.mxu0 0.0
    %2888 = vmatpush.msra.mxu0 0.0
    %2889 = vmatpush.msra.mxu0 0.0
    %2890 = vmatpush.msra.mxu0 0.0
    %2891 = vmatpush.msra.mxu0 0.0
    %2892 = vmatpush.msra.mxu0 0.0
    %2893 = vmatpush.msra.mxu0 0.0
    %2894 = vmatpush.msra.mxu0 0.0
    %2895 = vmatpush.msra.mxu0 0.0
    %2896 = vmatpush.msra.mxu0 0.0
    %2897 = vmatpush.msra.mxu0 %v2768
    %2898 = vmatpush.msra.mxu0 %v2767
    %2899 = vmatpush.msra.mxu0 %v2766
    %2900 = vmatpush.msra.mxu0 %v2765
    %2901 = vmatmul.f32.gmra.mxu0 %v2874
    %v2902 = vpop.f32.mrf.mxu0
    %v2903 = vadd.f32 %v2872, %v2902
    %2904 = vmatmul.f32.gmra.mxu0 %v2877
    %v2905 = vpop.f32.mrf.mxu0
    %v2906 = vadd.f32 %v2872, %v2905
    %2907 = vmatmul.f32.gmra.mxu0 %v2880
    %v2908 = vpop.f32.mrf.mxu0
    %v2909 = vadd.f32 %v2872, %v2908
    %2910 = vmatmul.f32.gmra.mxu0 %v2883
    %v2911 = vpop.f32.mrf.mxu0
    %v2912 = vadd.f32 %v2872, %v2911
    %2913 = vdwg.mxu0
    %v2914 = vmax.f32 %v2903, 0.0
    %v2915 = vmax.f32 %v2906, 0.0
    %v2916 = vmax.f32 %v2909, 0.0
    %v2917 = vmax.f32 %v2912, 0.0
    %v2918 = vadd.f32 %v2868, %v2914
    %v2919 = vadd.f32 %v2869, %v2915
    %v2920 = vadd.f32 %v2870, %v2916
    %v2921 = vadd.f32 %v2871, %v2917
    %v2922 = vsel %vm34, %v2918, 0.0
    %2923 = vadd.xlane.f32.xlu0 %v2922
    %v2924 = vpop.xlane.xlu0 %2923
    %v2925 = vsel %vm34, %v2919, 0.0
    %2926 = vadd.xlane.f32.xlu0 %v2925
    %v2927 = vpop.xlane.xlu0 %2926
    %v2928 = vsel %vm34, %v2920, 0.0
    %2929 = vadd.xlane.f32.xlu0 %v2928
    %v2930 = vpop.xlane.xlu0 %2929
    %v2931 = vsel %vm34, %v2921, 0.0
    %2932 = vadd.xlane.f32.xlu0 %v2931
    %v2933 = vpop.xlane.xlu0 %2932
    %v2934 = vmul.f32 %v2924, %v1198
    %v2935 = vmul.f32 %v2927, %v1198
    %v2936 = vmul.f32 %v2930, %v1198
    %v2937 = vmul.f32 %v2933, %v1198
    %v2938 = vsub.f32 %v2918, %v2934
    %v2939 = vsub.f32 %v2919, %v2935
    %v2940 = vsub.f32 %v2920, %v2936
    %v2941 = vsub.f32 %v2921, %v2937
    %v2942 = vmul.f32 %v2938, %v2938
    %v2943 = vmul.f32 %v2939, %v2939
    %v2944 = vmul.f32 %v2940, %v2940
    %v2945 = vmul.f32 %v2941, %v2941
    %v2946 = vsel %vm34, %v2942, 0.0
    %2947 = vadd.xlane.f32.xlu0 %v2946
    %v2948 = vpop.xlane.xlu0 %2947
    %v2949 = vsel %vm34, %v2943, 0.0
    %2950 = vadd.xlane.f32.xlu0 %v2949
    %v2951 = vpop.xlane.xlu0 %2950
    %v2952 = vsel %vm34, %v2944, 0.0
    %2953 = vadd.xlane.f32.xlu0 %v2952
    %v2954 = vpop.xlane.xlu0 %2953
    %v2955 = vsel %vm34, %v2945, 0.0
    %2956 = vadd.xlane.f32.xlu0 %v2955
    %v2957 = vpop.xlane.xlu0 %2956
    %v2958 = vmul.f32 %v2948, %v1198
    %v2959 = vmul.f32 %v2951, %v1198
    %v2960 = vmul.f32 %v2954, %v1198
    %v2961 = vmul.f32 %v2957, %v1198
    %v2962 = vadd.f32 %v2958, 1e-05
    %v2963 = vadd.f32 %v2959, 1e-05
    %v2964 = vadd.f32 %v2960, 1e-05
    %v2965 = vadd.f32 %v2961, 1e-05
    %v2966 = vrsqrt.pop %v2962
    %v2967 = vmul.f32 %v2966, %v2962
    %v2968 = vmul.f32 %v2967, %v2966
    %v2969 = vmul.f32 0.5, %v2968
    %v2970 = vsub.f32 1.5, %v2969
    %v2971 = vmul.f32 %v2966, %v2970
    %vm2972 = vweird.f32 %v2962
    %vm2973 = vweird.f32 %v2966
    %vm2974 = vmor %vm2972, %vm2973
    %v2975 = vsel %vm2974, %v2966, %v2971
    %v2976 = vrsqrt.pop %v2963
    %v2977 = vmul.f32 %v2976, %v2963
    %v2978 = vmul.f32 %v2977, %v2976
    %v2979 = vmul.f32 0.5, %v2978
    %v2980 = vsub.f32 1.5, %v2979
    %v2981 = vmul.f32 %v2976, %v2980
    %vm2982 = vweird.f32 %v2963
    %vm2983 = vweird.f32 %v2976
    %vm2984 = vmor %vm2982, %vm2983
    %v2985 = vsel %vm2984, %v2976, %v2981
    %v2986 = vrsqrt.pop %v2964
    %v2987 = vmul.f32 %v2986, %v2964
    %v2988 = vmul.f32 %v2987, %v2986
    %v2989 = vmul.f32 0.5, %v2988
    %v2990 = vsub.f32 1.5, %v2989
    %v2991 = vmul.f32 %v2986, %v2990
    %vm2992 = vweird.f32 %v2964
    %vm2993 = vweird.f32 %v2986
    %vm2994 = vmor %vm2992, %vm2993
    %v2995 = vsel %vm2994, %v2986, %v2991
    %v2996 = vrsqrt.pop %v2965
    %v2997 = vmul.f32 %v2996, %v2965
    %v2998 = vmul.f32 %v2997, %v2996
    %v2999 = vmul.f32 0.5, %v2998
    %v3000 = vsub.f32 1.5, %v2999
    %v3001 = vmul.f32 %v2996, %v3000
    %vm3002 = vweird.f32 %v2965
    %vm3003 = vweird.f32 %v2996
    %vm3004 = vmor %vm3002, %vm3003
    %v3005 = vsel %vm3004, %v2996, %v3001
    %v3006 = vmul.f32 %v2938, %v2975
    %v3007 = vmul.f32 %v2939, %v2985
    %v3008 = vmul.f32 %v2940, %v2995
    %v3009 = vmul.f32 %v2941, %v3005
    %v3010 = vperm.slane %v2772, 0
    %v3011 = vmul.f32 %v3006, %v3010
    %v3012 = vmul.f32 %v3007, %v3010
    %v3013 = vmul.f32 %v3008, %v3010
    %v3014 = vmul.f32 %v3009, %v3010
    %v3015 = vperm.slane %v2773, 0
    %v3016 = vadd.f32 %v3011, %v3015
    %v3017 = vadd.f32 %v3012, %v3015
    %v3018 = vadd.f32 %v3013, %v3015
    %v3019 = vadd.f32 %v3014, %v3015
    %v3020 = vld [vmem:[%s2 + $0x300] sm:$0xff]
    %v3021 = vld [vmem:[%s2 + $0x308] sm:$0xff]
    %v3022 = vld [vmem:[%s2 + $0x310] sm:$0xff]
    %v3023 = vld [vmem:[%s2 + $0x318] sm:$0xff]
    %v3024 = vld [vmem:[%s2 + $0x798] sm:$0x1]
    %v3025 = vperm.slane %v3024, 0
    %v3027 = vsel %vm34, %v26, 0
    %3029 = vmatpush.msra.mxu0 0.0
    %3030 = vmatpush.msra.mxu0 0.0
    %3031 = vmatpush.msra.mxu0 0.0
    %3032 = vmatpush.msra.mxu0 0.0
    %3033 = vmatpush.msra.mxu0 0.0
    %3034 = vmatpush.msra.mxu0 0.0
    %3035 = vmatpush.msra.mxu0 0.0
    %3036 = vmatpush.msra.mxu0 0.0
    %3037 = vmatpush.msra.mxu0 0.0
    %3038 = vmatpush.msra.mxu0 0.0
    %3039 = vmatpush.msra.mxu0 0.0
    %3040 = vmatpush.msra.mxu0 0.0
    %3041 = vmatpush.msra.mxu0 %v3023
    %3042 = vmatpush.msra.mxu0 %v3022
    %3043 = vmatpush.msra.mxu0 %v3021
    %3044 = vmatpush.msra.mxu0 %v3020
    %3045 = vmatmul.f32.gmra.mxu0 %v3027
    %v3046 = vpop.f32.mrf.mxu0
    %v3047 = vadd.f32 %v3025, %v3046
    %3048 = vdwg.mxu0
    %v3049 = vld [vmem:[%s2 + $0x320] sm:$0xff]
    %v3050 = vld [vmem:[%s2 + $0x328] sm:$0xff]
    %v3051 = vld [vmem:[%s2 + $0x330] sm:$0xff]
    %v3052 = vld [vmem:[%s2 + $0x338] sm:$0xff]
    %v3053 = vld [vmem:[%s2 + $0x799] sm:$0x1]
    %v3054 = vperm.slane %v3053, 0
    %3055 = vmatpush.msra.mxu0 0.0
    %3056 = vmatpush.msra.mxu0 0.0
    %3057 = vmatpush.msra.mxu0 0.0
    %3058 = vmatpush.msra.mxu0 0.0
    %3059 = vmatpush.msra.mxu0 0.0
    %3060 = vmatpush.msra.mxu0 0.0
    %3061 = vmatpush.msra.mxu0 0.0
    %3062 = vmatpush.msra.mxu0 0.0
    %3063 = vmatpush.msra.mxu0 0.0
    %3064 = vmatpush.msra.mxu0 0.0
    %3065 = vmatpush.msra.mxu0 0.0
    %3066 = vmatpush.msra.mxu0 0.0
    %3067 = vmatpush.msra.mxu0 %v3052
    %3068 = vmatpush.msra.mxu0 %v3051
    %3069 = vmatpush.msra.mxu0 %v3050
    %3070 = vmatpush.msra.mxu0 %v3049
    %3071 = vmatmul.f32.gmra.mxu0 %v3027
    %v3072 = vpop.f32.mrf.mxu0
    %v3073 = vadd.f32 %v3054, %v3072
    %3074 = vdwg.mxu0
    %v3075 = vld [vmem:[%s2 + $0x340] sm:$0xff]
    %v3076 = vld [vmem:[%s2 + $0x348] sm:$0xff]
    %v3077 = vld [vmem:[%s2 + $0x350] sm:$0xff]
    %v3078 = vld [vmem:[%s2 + $0x358] sm:$0xff]
    %v3079 = vld [vmem:[%s2 + $0x79a] sm:$0x1]
    %v3080 = vperm.slane %v3079, 0
    %3081 = vmatpush.msra.mxu0 0.0
    %3082 = vmatpush.msra.mxu0 0.0
    %3083 = vmatpush.msra.mxu0 0.0
    %3084 = vmatpush.msra.mxu0 0.0
    %3085 = vmatpush.msra.mxu0 0.0
    %3086 = vmatpush.msra.mxu0 0.0
    %3087 = vmatpush.msra.mxu0 0.0
    %3088 = vmatpush.msra.mxu0 0.0
    %3089 = vmatpush.msra.mxu0 0.0
    %3090 = vmatpush.msra.mxu0 0.0
    %3091 = vmatpush.msra.mxu0 0.0
    %3092 = vmatpush.msra.mxu0 0.0
    %3093 = vmatpush.msra.mxu0 %v3078
    %3094 = vmatpush.msra.mxu0 %v3077
    %3095 = vmatpush.msra.mxu0 %v3076
    %3096 = vmatpush.msra.mxu0 %v3075
    %3097 = vmatmul.f32.gmra.mxu0 %v3027
    %v3098 = vpop.f32.mrf.mxu0
    %v3099 = vadd.f32 %v3080, %v3098
    %3100 = vdwg.mxu0
    %v3101 = vld [vmem:[%s2 + $0x360] sm:$0xff]
    %v3102 = vld [vmem:[%s2 + $0x368] sm:$0xff]
    %v3103 = vld [vmem:[%s2 + $0x370] sm:$0xff]
    %v3104 = vld [vmem:[%s2 + $0x378] sm:$0xff]
    %v3105 = vld [vmem:[%s2 + $0x79b] sm:$0x1]
    %v3106 = vperm.slane %v3105, 0
    %3107 = vmatpush.msra.mxu0 0.0
    %3108 = vmatpush.msra.mxu0 0.0
    %3109 = vmatpush.msra.mxu0 0.0
    %3110 = vmatpush.msra.mxu0 0.0
    %3111 = vmatpush.msra.mxu0 0.0
    %3112 = vmatpush.msra.mxu0 0.0
    %3113 = vmatpush.msra.mxu0 0.0
    %3114 = vmatpush.msra.mxu0 0.0
    %3115 = vmatpush.msra.mxu0 0.0
    %3116 = vmatpush.msra.mxu0 0.0
    %3117 = vmatpush.msra.mxu0 0.0
    %3118 = vmatpush.msra.mxu0 0.0
    %3119 = vmatpush.msra.mxu0 %v3104
    %3120 = vmatpush.msra.mxu0 %v3103
    %3121 = vmatpush.msra.mxu0 %v3102
    %3122 = vmatpush.msra.mxu0 %v3101
    %3123 = vmatmul.f32.gmra.mxu0 %v3027
    %v3124 = vpop.f32.mrf.mxu0
    %v3125 = vadd.f32 %v3106, %v3124
    %3126 = vdwg.mxu0
    %v3127 = vld [vmem:[%s2 + $0x380] sm:$0xff]
    %v3128 = vld [vmem:[%s2 + $0x388] sm:$0xff]
    %v3129 = vld [vmem:[%s2 + $0x390] sm:$0xff]
    %v3130 = vld [vmem:[%s2 + $0x398] sm:$0xff]
    %v3131 = vld [vmem:[%s2 + $0x79c] sm:$0x1]
    %v3132 = vperm.slane %v3131, 0
    %v3134 = vsel %vm34, %v3016, 0
    %v3137 = vsel %vm34, %v3017, 0
    %v3140 = vsel %vm34, %v3018, 0
    %v3143 = vsel %vm34, %v3019, 0
    %3145 = vmatpush.msra.mxu0 0.0
    %3146 = vmatpush.msra.mxu0 0.0
    %3147 = vmatpush.msra.mxu0 0.0
    %3148 = vmatpush.msra.mxu0 0.0
    %3149 = vmatpush.msra.mxu0 0.0
    %3150 = vmatpush.msra.mxu0 0.0
    %3151 = vmatpush.msra.mxu0 0.0
    %3152 = vmatpush.msra.mxu0 0.0
    %3153 = vmatpush.msra.mxu0 0.0
    %3154 = vmatpush.msra.mxu0 0.0
    %3155 = vmatpush.msra.mxu0 0.0
    %3156 = vmatpush.msra.mxu0 0.0
    %3157 = vmatpush.msra.mxu0 %v3130
    %3158 = vmatpush.msra.mxu0 %v3129
    %3159 = vmatpush.msra.mxu0 %v3128
    %3160 = vmatpush.msra.mxu0 %v3127
    %3161 = vmatmul.f32.gmra.mxu0 %v3134
    %v3162 = vpop.f32.mrf.mxu0
    %v3163 = vadd.f32 %v3132, %v3162
    %3164 = vmatmul.f32.gmra.mxu0 %v3137
    %v3165 = vpop.f32.mrf.mxu0
    %v3166 = vadd.f32 %v3132, %v3165
    %3167 = vmatmul.f32.gmra.mxu0 %v3140
    %v3168 = vpop.f32.mrf.mxu0
    %v3169 = vadd.f32 %v3132, %v3168
    %3170 = vmatmul.f32.gmra.mxu0 %v3143
    %v3171 = vpop.f32.mrf.mxu0
    %v3172 = vadd.f32 %v3132, %v3171
    %3173 = vdwg.mxu0
    %v3174 = vld [vmem:[%s2 + $0x3a0] sm:$0xff]
    %v3175 = vld [vmem:[%s2 + $0x3a8] sm:$0xff]
    %v3176 = vld [vmem:[%s2 + $0x3b0] sm:$0xff]
    %v3177 = vld [vmem:[%s2 + $0x3b8] sm:$0xff]
    %v3178 = vld [vmem:[%s2 + $0x79d] sm:$0x1]
    %v3179 = vperm.slane %v3178, 0
    %3180 = vmatpush.msra.mxu0 0.0
    %3181 = vmatpush.msra.mxu0 0.0
    %3182 = vmatpush.msra.mxu0 0.0
    %3183 = vmatpush.msra.mxu0 0.0
    %3184 = vmatpush.msra.mxu0 0.0
    %3185 = vmatpush.msra.mxu0 0.0
    %3186 = vmatpush.msra.mxu0 0.0
    %3187 = vmatpush.msra.mxu0 0.0
    %3188 = vmatpush.msra.mxu0 0.0
    %3189 = vmatpush.msra.mxu0 0.0
    %3190 = vmatpush.msra.mxu0 0.0
    %3191 = vmatpush.msra.mxu0 0.0
    %3192 = vmatpush.msra.mxu0 %v3177
    %3193 = vmatpush.msra.mxu0 %v3176
    %3194 = vmatpush.msra.mxu0 %v3175
    %3195 = vmatpush.msra.mxu0 %v3174
    %3196 = vmatmul.f32.gmra.mxu0 %v3134
    %v3197 = vpop.f32.mrf.mxu0
    %v3198 = vadd.f32 %v3179, %v3197
    %3199 = vmatmul.f32.gmra.mxu0 %v3137
    %v3200 = vpop.f32.mrf.mxu0
    %v3201 = vadd.f32 %v3179, %v3200
    %3202 = vmatmul.f32.gmra.mxu0 %v3140
    %v3203 = vpop.f32.mrf.mxu0
    %v3204 = vadd.f32 %v3179, %v3203
    %3205 = vmatmul.f32.gmra.mxu0 %v3143
    %v3206 = vpop.f32.mrf.mxu0
    %v3207 = vadd.f32 %v3179, %v3206
    %3208 = vdwg.mxu0
    %v3209 = vld [vmem:[%s2 + $0x3c0] sm:$0xff]
    %v3210 = vld [vmem:[%s2 + $0x3c8] sm:$0xff]
    %v3211 = vld [vmem:[%s2 + $0x3d0] sm:$0xff]
    %v3212 = vld [vmem:[%s2 + $0x3d8] sm:$0xff]
    %v3213 = vld [vmem:[%s2 + $0x79e] sm:$0x1]
    %v3214 = vperm.slane %v3213, 0
    %3215 = vmatpush.msra.mxu0 0.0
    %3216 = vmatpush.msra.mxu0 0.0
    %3217 = vmatpush.msra.mxu0 0.0
    %3218 = vmatpush.msra.mxu0 0.0
    %3219 = vmatpush.msra.mxu0 0.0
    %3220 = vmatpush.msra.mxu0 0.0
    %3221 = vmatpush.msra.mxu0 0.0
    %3222 = vmatpush.msra.mxu0 0.0
    %3223 = vmatpush.msra.mxu0 0.0
    %3224 = vmatpush.msra.mxu0 0.0
    %3225 = vmatpush.msra.mxu0 0.0
    %3226 = vmatpush.msra.mxu0 0.0
    %3227 = vmatpush.msra.mxu0 %v3212
    %3228 = vmatpush.msra.mxu0 %v3211
    %3229 = vmatpush.msra.mxu0 %v3210
    %3230 = vmatpush.msra.mxu0 %v3209
    %3231 = vmatmul.f32.gmra.mxu0 %v3134
    %v3232 = vpop.f32.mrf.mxu0
    %v3233 = vadd.f32 %v3214, %v3232
    %3234 = vmatmul.f32.gmra.mxu0 %v3137
    %v3235 = vpop.f32.mrf.mxu0
    %v3236 = vadd.f32 %v3214, %v3235
    %3237 = vmatmul.f32.gmra.mxu0 %v3140
    %v3238 = vpop.f32.mrf.mxu0
    %v3239 = vadd.f32 %v3214, %v3238
    %3240 = vmatmul.f32.gmra.mxu0 %v3143
    %v3241 = vpop.f32.mrf.mxu0
    %v3242 = vadd.f32 %v3214, %v3241
    %3243 = vdwg.mxu0
    %v3244 = vld [vmem:[%s2 + $0x3e0] sm:$0xff]
    %v3245 = vld [vmem:[%s2 + $0x3e8] sm:$0xff]
    %v3246 = vld [vmem:[%s2 + $0x3f0] sm:$0xff]
    %v3247 = vld [vmem:[%s2 + $0x3f8] sm:$0xff]
    %v3248 = vld [vmem:[%s2 + $0x79f] sm:$0x1]
    %v3249 = vperm.slane %v3248, 0
    %3250 = vmatpush.msra.mxu0 0.0
    %3251 = vmatpush.msra.mxu0 0.0
    %3252 = vmatpush.msra.mxu0 0.0
    %3253 = vmatpush.msra.mxu0 0.0
    %3254 = vmatpush.msra.mxu0 0.0
    %3255 = vmatpush.msra.mxu0 0.0
    %3256 = vmatpush.msra.mxu0 0.0
    %3257 = vmatpush.msra.mxu0 0.0
    %3258 = vmatpush.msra.mxu0 0.0
    %3259 = vmatpush.msra.mxu0 0.0
    %3260 = vmatpush.msra.mxu0 0.0
    %3261 = vmatpush.msra.mxu0 0.0
    %3262 = vmatpush.msra.mxu0 %v3247
    %3263 = vmatpush.msra.mxu0 %v3246
    %3264 = vmatpush.msra.mxu0 %v3245
    %3265 = vmatpush.msra.mxu0 %v3244
    %3266 = vmatmul.f32.gmra.mxu0 %v3134
    %v3267 = vpop.f32.mrf.mxu0
    %v3268 = vadd.f32 %v3249, %v3267
    %3269 = vmatmul.f32.gmra.mxu0 %v3137
    %v3270 = vpop.f32.mrf.mxu0
    %v3271 = vadd.f32 %v3249, %v3270
    %3272 = vmatmul.f32.gmra.mxu0 %v3140
    %v3273 = vpop.f32.mrf.mxu0
    %v3274 = vadd.f32 %v3249, %v3273
    %3275 = vmatmul.f32.gmra.mxu0 %v3143
    %v3276 = vpop.f32.mrf.mxu0
    %v3277 = vadd.f32 %v3249, %v3276
    %3278 = vdwg.mxu0
    %v3279 = vld [vmem:[%s2 + $0x400] sm:$0xff]
    %v3280 = vld [vmem:[%s2 + $0x408] sm:$0xff]
    %v3281 = vld [vmem:[%s2 + $0x410] sm:$0xff]
    %v3282 = vld [vmem:[%s2 + $0x418] sm:$0xff]
    %v3283 = vld [vmem:[%s2 + $0x7a0] sm:$0x1]
    %v3284 = vperm.slane %v3283, 0
    %3285 = vmatpush.msra.mxu0 0.0
    %3286 = vmatpush.msra.mxu0 0.0
    %3287 = vmatpush.msra.mxu0 0.0
    %3288 = vmatpush.msra.mxu0 0.0
    %3289 = vmatpush.msra.mxu0 0.0
    %3290 = vmatpush.msra.mxu0 0.0
    %3291 = vmatpush.msra.mxu0 0.0
    %3292 = vmatpush.msra.mxu0 0.0
    %3293 = vmatpush.msra.mxu0 0.0
    %3294 = vmatpush.msra.mxu0 0.0
    %3295 = vmatpush.msra.mxu0 0.0
    %3296 = vmatpush.msra.mxu0 0.0
    %3297 = vmatpush.msra.mxu0 %v3282
    %3298 = vmatpush.msra.mxu0 %v3281
    %3299 = vmatpush.msra.mxu0 %v3280
    %3300 = vmatpush.msra.mxu0 %v3279
    %3301 = vmatmul.f32.gmra.mxu0 %v3134
    %v3302 = vpop.f32.mrf.mxu0
    %v3303 = vadd.f32 %v3284, %v3302
    %3304 = vmatmul.f32.gmra.mxu0 %v3137
    %v3305 = vpop.f32.mrf.mxu0
    %v3306 = vadd.f32 %v3284, %v3305
    %3307 = vmatmul.f32.gmra.mxu0 %v3140
    %v3308 = vpop.f32.mrf.mxu0
    %v3309 = vadd.f32 %v3284, %v3308
    %3310 = vmatmul.f32.gmra.mxu0 %v3143
    %v3311 = vpop.f32.mrf.mxu0
    %v3312 = vadd.f32 %v3284, %v3311
    %3313 = vdwg.mxu0
    %v3314 = vld [vmem:[%s2 + $0x420] sm:$0xff]
    %v3315 = vld [vmem:[%s2 + $0x428] sm:$0xff]
    %v3316 = vld [vmem:[%s2 + $0x430] sm:$0xff]
    %v3317 = vld [vmem:[%s2 + $0x438] sm:$0xff]
    %v3318 = vld [vmem:[%s2 + $0x7a1] sm:$0x1]
    %v3319 = vperm.slane %v3318, 0
    %3320 = vmatpush.msra.mxu0 0.0
    %3321 = vmatpush.msra.mxu0 0.0
    %3322 = vmatpush.msra.mxu0 0.0
    %3323 = vmatpush.msra.mxu0 0.0
    %3324 = vmatpush.msra.mxu0 0.0
    %3325 = vmatpush.msra.mxu0 0.0
    %3326 = vmatpush.msra.mxu0 0.0
    %3327 = vmatpush.msra.mxu0 0.0
    %3328 = vmatpush.msra.mxu0 0.0
    %3329 = vmatpush.msra.mxu0 0.0
    %3330 = vmatpush.msra.mxu0 0.0
    %3331 = vmatpush.msra.mxu0 0.0
    %3332 = vmatpush.msra.mxu0 %v3317
    %3333 = vmatpush.msra.mxu0 %v3316
    %3334 = vmatpush.msra.mxu0 %v3315
    %3335 = vmatpush.msra.mxu0 %v3314
    %3336 = vmatmul.f32.gmra.mxu0 %v3134
    %v3337 = vpop.f32.mrf.mxu0
    %v3338 = vadd.f32 %v3319, %v3337
    %3339 = vmatmul.f32.gmra.mxu0 %v3137
    %v3340 = vpop.f32.mrf.mxu0
    %v3341 = vadd.f32 %v3319, %v3340
    %3342 = vmatmul.f32.gmra.mxu0 %v3140
    %v3343 = vpop.f32.mrf.mxu0
    %v3344 = vadd.f32 %v3319, %v3343
    %3345 = vmatmul.f32.gmra.mxu0 %v3143
    %v3346 = vpop.f32.mrf.mxu0
    %v3347 = vadd.f32 %v3319, %v3346
    %3348 = vdwg.mxu0
    %v3349 = vld [vmem:[%s2 + $0x440] sm:$0xff]
    %v3350 = vld [vmem:[%s2 + $0x448] sm:$0xff]
    %v3351 = vld [vmem:[%s2 + $0x450] sm:$0xff]
    %v3352 = vld [vmem:[%s2 + $0x458] sm:$0xff]
    %v3353 = vld [vmem:[%s2 + $0x7a2] sm:$0x1]
    %v3354 = vperm.slane %v3353, 0
    %3355 = vmatpush.msra.mxu0 0.0
    %3356 = vmatpush.msra.mxu0 0.0
    %3357 = vmatpush.msra.mxu0 0.0
    %3358 = vmatpush.msra.mxu0 0.0
    %3359 = vmatpush.msra.mxu0 0.0
    %3360 = vmatpush.msra.mxu0 0.0
    %3361 = vmatpush.msra.mxu0 0.0
    %3362 = vmatpush.msra.mxu0 0.0
    %3363 = vmatpush.msra.mxu0 0.0
    %3364 = vmatpush.msra.mxu0 0.0
    %3365 = vmatpush.msra.mxu0 0.0
    %3366 = vmatpush.msra.mxu0 0.0
    %3367 = vmatpush.msra.mxu0 %v3352
    %3368 = vmatpush.msra.mxu0 %v3351
    %3369 = vmatpush.msra.mxu0 %v3350
    %3370 = vmatpush.msra.mxu0 %v3349
    %3371 = vmatmul.f32.gmra.mxu0 %v3134
    %v3372 = vpop.f32.mrf.mxu0
    %v3373 = vadd.f32 %v3354, %v3372
    %3374 = vmatmul.f32.gmra.mxu0 %v3137
    %v3375 = vpop.f32.mrf.mxu0
    %v3376 = vadd.f32 %v3354, %v3375
    %3377 = vmatmul.f32.gmra.mxu0 %v3140
    %v3378 = vpop.f32.mrf.mxu0
    %v3379 = vadd.f32 %v3354, %v3378
    %3380 = vmatmul.f32.gmra.mxu0 %v3143
    %v3381 = vpop.f32.mrf.mxu0
    %v3382 = vadd.f32 %v3354, %v3381
    %3383 = vdwg.mxu0
    %v3384 = vld [vmem:[%s2 + $0x460] sm:$0xff]
    %v3385 = vld [vmem:[%s2 + $0x468] sm:$0xff]
    %v3386 = vld [vmem:[%s2 + $0x470] sm:$0xff]
    %v3387 = vld [vmem:[%s2 + $0x478] sm:$0xff]
    %v3388 = vld [vmem:[%s2 + $0x7a3] sm:$0x1]
    %v3389 = vperm.slane %v3388, 0
    %3390 = vmatpush.msra.mxu0 0.0
    %3391 = vmatpush.msra.mxu0 0.0
    %3392 = vmatpush.msra.mxu0 0.0
    %3393 = vmatpush.msra.mxu0 0.0
    %3394 = vmatpush.msra.mxu0 0.0
    %3395 = vmatpush.msra.mxu0 0.0
    %3396 = vmatpush.msra.mxu0 0.0
    %3397 = vmatpush.msra.mxu0 0.0
    %3398 = vmatpush.msra.mxu0 0.0
    %3399 = vmatpush.msra.mxu0 0.0
    %3400 = vmatpush.msra.mxu0 0.0
    %3401 = vmatpush.msra.mxu0 0.0
    %3402 = vmatpush.msra.mxu0 %v3387
    %3403 = vmatpush.msra.mxu0 %v3386
    %3404 = vmatpush.msra.mxu0 %v3385
    %3405 = vmatpush.msra.mxu0 %v3384
    %3406 = vmatmul.f32.gmra.mxu0 %v3134
    %v3407 = vpop.f32.mrf.mxu0
    %v3408 = vadd.f32 %v3389, %v3407
    %3409 = vmatmul.f32.gmra.mxu0 %v3137
    %v3410 = vpop.f32.mrf.mxu0
    %v3411 = vadd.f32 %v3389, %v3410
    %3412 = vmatmul.f32.gmra.mxu0 %v3140
    %v3413 = vpop.f32.mrf.mxu0
    %v3414 = vadd.f32 %v3389, %v3413
    %3415 = vmatmul.f32.gmra.mxu0 %v3143
    %v3416 = vpop.f32.mrf.mxu0
    %v3417 = vadd.f32 %v3389, %v3416
    %3418 = vdwg.mxu0
    %v3420 = vsel %vm428, %v3047, 0
    %v3423 = vsel %vm428, %v3163, 0
    %v3426 = vsel %vm428, %v3166, 0
    %3428 = vmatpush.xpose.msra.mxu0 0.0
    %3429 = vmatpush.xpose.msra.mxu0 0.0
    %3430 = vmatpush.xpose.msra.mxu0 0.0
    %3431 = vmatpush.xpose.msra.mxu0 0.0
    %3432 = vmatpush.xpose.msra.mxu0 0.0
    %3433 = vmatpush.xpose.msra.mxu0 0.0
    %3434 = vmatpush.xpose.msra.mxu0 0.0
    %3435 = vmatpush.xpose.msra.mxu0 0.0
    %3436 = vmatpush.xpose.msra.mxu0 0.0
    %3437 = vmatpush.xpose.msra.mxu0 0.0
    %3438 = vmatpush.xpose.msra.mxu0 0.0
    %3439 = vmatpush.xpose.msra.mxu0 0.0
    %3440 = vmatpush.xpose.msra.mxu0 0.0
    %3441 = vmatpush.xpose.msra.mxu0 0.0
    %3442 = vmatpush.xpose.msra.mxu0 %v3426
    %3443 = vmatpush.xpose.msra.mxu0 %v3423
    %3444 = vmatmul.f32.gmra.mxu0 %v3420
    %v3445 = vpop.f32.mrf.mxu0
    %v3446 = vadd.f32 0.0, %v3445
    %3447 = vdwg.mxu0
    %v3449 = vsel %vm428, %v3169, 0
    %v3452 = vsel %vm428, %v3172, 0
    %3454 = vmatpush.xpose.msra.mxu0 0.0
    %3455 = vmatpush.xpose.msra.mxu0 0.0
    %3456 = vmatpush.xpose.msra.mxu0 0.0
    %3457 = vmatpush.xpose.msra.mxu0 0.0
    %3458 = vmatpush.xpose.msra.mxu0 0.0
    %3459 = vmatpush.xpose.msra.mxu0 0.0
    %3460 = vmatpush.xpose.msra.mxu0 0.0
    %3461 = vmatpush.xpose.msra.mxu0 0.0
    %3462 = vmatpush.xpose.msra.mxu0 0.0
    %3463 = vmatpush.xpose.msra.mxu0 0.0
    %3464 = vmatpush.xpose.msra.mxu0 0.0
    %3465 = vmatpush.xpose.msra.mxu0 0.0
    %3466 = vmatpush.xpose.msra.mxu0 0.0
    %3467 = vmatpush.xpose.msra.mxu0 0.0
    %3468 = vmatpush.xpose.msra.mxu0 %v3452
    %3469 = vmatpush.xpose.msra.mxu0 %v3449
    %3470 = vmatmul.f32.gmra.mxu0 %v3420
    %v3471 = vpop.f32.mrf.mxu0
    %v3472 = vadd.f32 0.0, %v3471
    %3473 = vdwg.mxu0
    %v3475 = vsel %vm428, %v3073, 0
    %v3478 = vsel %vm428, %v3198, 0
    %v3481 = vsel %vm428, %v3201, 0
    %3483 = vmatpush.xpose.msra.mxu0 0.0
    %3484 = vmatpush.xpose.msra.mxu0 0.0
    %3485 = vmatpush.xpose.msra.mxu0 0.0
    %3486 = vmatpush.xpose.msra.mxu0 0.0
    %3487 = vmatpush.xpose.msra.mxu0 0.0
    %3488 = vmatpush.xpose.msra.mxu0 0.0
    %3489 = vmatpush.xpose.msra.mxu0 0.0
    %3490 = vmatpush.xpose.msra.mxu0 0.0
    %3491 = vmatpush.xpose.msra.mxu0 0.0
    %3492 = vmatpush.xpose.msra.mxu0 0.0
    %3493 = vmatpush.xpose.msra.mxu0 0.0
    %3494 = vmatpush.xpose.msra.mxu0 0.0
    %3495 = vmatpush.xpose.msra.mxu0 0.0
    %3496 = vmatpush.xpose.msra.mxu0 0.0
    %3497 = vmatpush.xpose.msra.mxu0 %v3481
    %3498 = vmatpush.xpose.msra.mxu0 %v3478
    %3499 = vmatmul.f32.gmra.mxu0 %v3475
    %v3500 = vpop.f32.mrf.mxu0
    %v3501 = vadd.f32 0.0, %v3500
    %3502 = vdwg.mxu0
    %v3504 = vsel %vm428, %v3204, 0
    %v3507 = vsel %vm428, %v3207, 0
    %3509 = vmatpush.xpose.msra.mxu0 0.0
    %3510 = vmatpush.xpose.msra.mxu0 0.0
    %3511 = vmatpush.xpose.msra.mxu0 0.0
    %3512 = vmatpush.xpose.msra.mxu0 0.0
    %3513 = vmatpush.xpose.msra.mxu0 0.0
    %3514 = vmatpush.xpose.msra.mxu0 0.0
    %3515 = vmatpush.xpose.msra.mxu0 0.0
    %3516 = vmatpush.xpose.msra.mxu0 0.0
    %3517 = vmatpush.xpose.msra.mxu0 0.0
    %3518 = vmatpush.xpose.msra.mxu0 0.0
    %3519 = vmatpush.xpose.msra.mxu0 0.0
    %3520 = vmatpush.xpose.msra.mxu0 0.0
    %3521 = vmatpush.xpose.msra.mxu0 0.0
    %3522 = vmatpush.xpose.msra.mxu0 0.0
    %3523 = vmatpush.xpose.msra.mxu0 %v3507
    %3524 = vmatpush.xpose.msra.mxu0 %v3504
    %3525 = vmatmul.f32.gmra.mxu0 %v3475
    %v3526 = vpop.f32.mrf.mxu0
    %v3527 = vadd.f32 0.0, %v3526
    %3528 = vdwg.mxu0
    %v3530 = vsel %vm428, %v3099, 0
    %v3533 = vsel %vm428, %v3233, 0
    %v3536 = vsel %vm428, %v3236, 0
    %3538 = vmatpush.xpose.msra.mxu0 0.0
    %3539 = vmatpush.xpose.msra.mxu0 0.0
    %3540 = vmatpush.xpose.msra.mxu0 0.0
    %3541 = vmatpush.xpose.msra.mxu0 0.0
    %3542 = vmatpush.xpose.msra.mxu0 0.0
    %3543 = vmatpush.xpose.msra.mxu0 0.0
    %3544 = vmatpush.xpose.msra.mxu0 0.0
    %3545 = vmatpush.xpose.msra.mxu0 0.0
    %3546 = vmatpush.xpose.msra.mxu0 0.0
    %3547 = vmatpush.xpose.msra.mxu0 0.0
    %3548 = vmatpush.xpose.msra.mxu0 0.0
    %3549 = vmatpush.xpose.msra.mxu0 0.0
    %3550 = vmatpush.xpose.msra.mxu0 0.0
    %3551 = vmatpush.xpose.msra.mxu0 0.0
    %3552 = vmatpush.xpose.msra.mxu0 %v3536
    %3553 = vmatpush.xpose.msra.mxu0 %v3533
    %3554 = vmatmul.f32.gmra.mxu0 %v3530
    %v3555 = vpop.f32.mrf.mxu0
    %v3556 = vadd.f32 0.0, %v3555
    %3557 = vdwg.mxu0
    %v3559 = vsel %vm428, %v3239, 0
    %v3562 = vsel %vm428, %v3242, 0
    %3564 = vmatpush.xpose.msra.mxu0 0.0
    %3565 = vmatpush.xpose.msra.mxu0 0.0
    %3566 = vmatpush.xpose.msra.mxu0 0.0
    %3567 = vmatpush.xpose.msra.mxu0 0.0
    %3568 = vmatpush.xpose.msra.mxu0 0.0
    %3569 = vmatpush.xpose.msra.mxu0 0.0
    %3570 = vmatpush.xpose.msra.mxu0 0.0
    %3571 = vmatpush.xpose.msra.mxu0 0.0
    %3572 = vmatpush.xpose.msra.mxu0 0.0
    %3573 = vmatpush.xpose.msra.mxu0 0.0
    %3574 = vmatpush.xpose.msra.mxu0 0.0
    %3575 = vmatpush.xpose.msra.mxu0 0.0
    %3576 = vmatpush.xpose.msra.mxu0 0.0
    %3577 = vmatpush.xpose.msra.mxu0 0.0
    %3578 = vmatpush.xpose.msra.mxu0 %v3562
    %3579 = vmatpush.xpose.msra.mxu0 %v3559
    %3580 = vmatmul.f32.gmra.mxu0 %v3530
    %v3581 = vpop.f32.mrf.mxu0
    %v3582 = vadd.f32 0.0, %v3581
    %3583 = vdwg.mxu0
    %v3585 = vsel %vm428, %v3125, 0
    %v3588 = vsel %vm428, %v3268, 0
    %v3591 = vsel %vm428, %v3271, 0
    %3593 = vmatpush.xpose.msra.mxu0 0.0
    %3594 = vmatpush.xpose.msra.mxu0 0.0
    %3595 = vmatpush.xpose.msra.mxu0 0.0
    %3596 = vmatpush.xpose.msra.mxu0 0.0
    %3597 = vmatpush.xpose.msra.mxu0 0.0
    %3598 = vmatpush.xpose.msra.mxu0 0.0
    %3599 = vmatpush.xpose.msra.mxu0 0.0
    %3600 = vmatpush.xpose.msra.mxu0 0.0
    %3601 = vmatpush.xpose.msra.mxu0 0.0
    %3602 = vmatpush.xpose.msra.mxu0 0.0
    %3603 = vmatpush.xpose.msra.mxu0 0.0
    %3604 = vmatpush.xpose.msra.mxu0 0.0
    %3605 = vmatpush.xpose.msra.mxu0 0.0
    %3606 = vmatpush.xpose.msra.mxu0 0.0
    %3607 = vmatpush.xpose.msra.mxu0 %v3591
    %3608 = vmatpush.xpose.msra.mxu0 %v3588
    %3609 = vmatmul.f32.gmra.mxu0 %v3585
    %v3610 = vpop.f32.mrf.mxu0
    %v3611 = vadd.f32 0.0, %v3610
    %3612 = vdwg.mxu0
    %v3614 = vsel %vm428, %v3274, 0
    %v3617 = vsel %vm428, %v3277, 0
    %3619 = vmatpush.xpose.msra.mxu0 0.0
    %3620 = vmatpush.xpose.msra.mxu0 0.0
    %3621 = vmatpush.xpose.msra.mxu0 0.0
    %3622 = vmatpush.xpose.msra.mxu0 0.0
    %3623 = vmatpush.xpose.msra.mxu0 0.0
    %3624 = vmatpush.xpose.msra.mxu0 0.0
    %3625 = vmatpush.xpose.msra.mxu0 0.0
    %3626 = vmatpush.xpose.msra.mxu0 0.0
    %3627 = vmatpush.xpose.msra.mxu0 0.0
    %3628 = vmatpush.xpose.msra.mxu0 0.0
    %3629 = vmatpush.xpose.msra.mxu0 0.0
    %3630 = vmatpush.xpose.msra.mxu0 0.0
    %3631 = vmatpush.xpose.msra.mxu0 0.0
    %3632 = vmatpush.xpose.msra.mxu0 0.0
    %3633 = vmatpush.xpose.msra.mxu0 %v3617
    %3634 = vmatpush.xpose.msra.mxu0 %v3614
    %3635 = vmatmul.f32.gmra.mxu0 %v3585
    %v3636 = vpop.f32.mrf.mxu0
    %v3637 = vadd.f32 0.0, %v3636
    %3638 = vdwg.mxu0
    %v3639 = vsel %vm649, %v3446, -inf
    %3640 = vmax.xlane.f32.xlu0 %v3639
    %v3641 = vpop.xlane.xlu0 %3640
    %v3642 = vsel %vm649, %v3472, -inf
    %3643 = vmax.xlane.f32.xlu0 %v3642
    %v3644 = vpop.xlane.xlu0 %3643
    %v3645 = vsel %vm649, %v3501, -inf
    %3646 = vmax.xlane.f32.xlu0 %v3645
    %v3647 = vpop.xlane.xlu0 %3646
    %v3648 = vsel %vm649, %v3527, -inf
    %3649 = vmax.xlane.f32.xlu0 %v3648
    %v3650 = vpop.xlane.xlu0 %3649
    %v3651 = vsel %vm649, %v3556, -inf
    %3652 = vmax.xlane.f32.xlu0 %v3651
    %v3653 = vpop.xlane.xlu0 %3652
    %v3654 = vsel %vm649, %v3582, -inf
    %3655 = vmax.xlane.f32.xlu0 %v3654
    %v3656 = vpop.xlane.xlu0 %3655
    %v3657 = vsel %vm649, %v3611, -inf
    %3658 = vmax.xlane.f32.xlu0 %v3657
    %v3659 = vpop.xlane.xlu0 %3658
    %v3660 = vsel %vm649, %v3637, -inf
    %3661 = vmax.xlane.f32.xlu0 %v3660
    %v3662 = vpop.xlane.xlu0 %3661
    %v3663 = vsub.f32 %v3446, %v3641
    %v3664 = vsub.f32 %v3472, %v3644
    %v3665 = vsub.f32 %v3501, %v3647
    %v3666 = vsub.f32 %v3527, %v3650
    %v3667 = vsub.f32 %v3556, %v3653
    %v3668 = vsub.f32 %v3582, %v3656
    %v3669 = vsub.f32 %v3611, %v3659
    %v3670 = vsub.f32 %v3637, %v3662
    %v3671 = vmul.f32 %v3663, 1.442695
    %v3672 = vpow.pop %v3671
    %v3673 = vmul.f32 %v3664, 1.442695
    %v3674 = vpow.pop %v3673
    %v3675 = vmul.f32 %v3665, 1.442695
    %v3676 = vpow.pop %v3675
    %v3677 = vmul.f32 %v3666, 1.442695
    %v3678 = vpow.pop %v3677
    %v3679 = vmul.f32 %v3667, 1.442695
    %v3680 = vpow.pop %v3679
    %v3681 = vmul.f32 %v3668, 1.442695
    %v3682 = vpow.pop %v3681
    %v3683 = vmul.f32 %v3669, 1.442695
    %v3684 = vpow.pop %v3683
    %v3685 = vmul.f32 %v3670, 1.442695
    %v3686 = vpow.pop %v3685
    %v3687 = vsel %vm649, %v3672, 0.0
    %3688 = vadd.xlane.f32.xlu0 %v3687
    %v3689 = vpop.xlane.xlu0 %3688
    %v3690 = vsel %vm649, %v3674, 0.0
    %3691 = vadd.xlane.f32.xlu0 %v3690
    %v3692 = vpop.xlane.xlu0 %3691
    %v3693 = vsel %vm649, %v3676, 0.0
    %3694 = vadd.xlane.f32.xlu0 %v3693
    %v3695 = vpop.xlane.xlu0 %3694
    %v3696 = vsel %vm649, %v3678, 0.0
    %3697 = vadd.xlane.f32.xlu0 %v3696
    %v3698 = vpop.xlane.xlu0 %3697
    %v3699 = vsel %vm649, %v3680, 0.0
    %3700 = vadd.xlane.f32.xlu0 %v3699
    %v3701 = vpop.xlane.xlu0 %3700
    %v3702 = vsel %vm649, %v3682, 0.0
    %3703 = vadd.xlane.f32.xlu0 %v3702
    %v3704 = vpop.xlane.xlu0 %3703
    %v3705 = vsel %vm649, %v3684, 0.0
    %3706 = vadd.xlane.f32.xlu0 %v3705
    %v3707 = vpop.xlane.xlu0 %3706
    %v3708 = vsel %vm649, %v3686, 0.0
    %3709 = vadd.xlane.f32.xlu0 %v3708
    %v3710 = vpop.xlane.xlu0 %3709
    %v3711 = vlog2.pop %v3689
    %v3712 = vmul.f32 %v3711, 0.6931472
    %v3713 = vlog2.pop %v3692
    %v3714 = vmul.f32 %v3713, 0.6931472
    %v3715 = vlog2.pop %v3695
    %v3716 = vmul.f32 %v3715, 0.6931472
    %v3717 = vlog2.pop %v3698
    %v3718 = vmul.f32 %v3717, 0.6931472
    %v3719 = vlog2.pop %v3701
    %v3720 = vmul.f32 %v3719, 0.6931472
    %v3721 = vlog2.pop %v3704
    %v3722 = vmul.f32 %v3721, 0.6931472
    %v3723 = vlog2.pop %v3707
    %v3724 = vmul.f32 %v3723, 0.6931472
    %v3725 = vlog2.pop %v3710
    %v3726 = vmul.f32 %v3725, 0.6931472
    %v3727 = vadd.f32 %v3641, %v3712
    %v3728 = vadd.f32 %v3644, %v3714
    %v3729 = vadd.f32 %v3647, %v3716
    %v3730 = vadd.f32 %v3650, %v3718
    %v3731 = vadd.f32 %v3653, %v3720
    %v3732 = vadd.f32 %v3656, %v3722
    %v3733 = vadd.f32 %v3659, %v3724
    %v3734 = vadd.f32 %v3662, %v3726
    %v3735 = vsub.f32 -2.0794415, %v3727
    %v3736 = vsub.f32 -2.0794415, %v3728
    %v3737 = vsub.f32 -2.0794415, %v3729
    %v3738 = vsub.f32 -2.0794415, %v3730
    %v3739 = vsub.f32 -2.0794415, %v3731
    %v3740 = vsub.f32 -2.0794415, %v3732
    %v3741 = vsub.f32 -2.0794415, %v3733
    %v3742 = vsub.f32 -2.0794415, %v3734
    %v3743 = vadd.f32 %v3446, %v3735
    %v3744 = vadd.f32 %v3472, %v3736
    %v3745 = vadd.f32 %v3501, %v3737
    %v3746 = vadd.f32 %v3527, %v3738
    %v3747 = vadd.f32 %v3556, %v3739
    %v3748 = vadd.f32 %v3582, %v3740
    %v3749 = vadd.f32 %v3611, %v3741
    %v3750 = vadd.f32 %v3637, %v3742
    %v3751 = vsel %vm649, %v3743, -inf
    %v3752 = vrot.slane %v3751, 4
    %v3753 = vmax.f32 %v3751, %v3752
    %v3754 = vrot.slane %v3753, 2
    %v3755 = vmax.f32 %v3753, %v3754
    %v3756 = vrot.slane %v3755, 1
    %v3757 = vmax.f32 %v3755, %v3756
    %v3758 = vsel %vm649, %v3744, -inf
    %v3759 = vrot.slane %v3758, 4
    %v3760 = vmax.f32 %v3758, %v3759
    %v3761 = vrot.slane %v3760, 2
    %v3762 = vmax.f32 %v3760, %v3761
    %v3763 = vrot.slane %v3762, 1
    %v3764 = vmax.f32 %v3762, %v3763
    %v3765 = vsel %vm649, %v3745, -inf
    %v3766 = vrot.slane %v3765, 4
    %v3767 = vmax.f32 %v3765, %v3766
    %v3768 = vrot.slane %v3767, 2
    %v3769 = vmax.f32 %v3767, %v3768
    %v3770 = vrot.slane %v3769, 1
    %v3771 = vmax.f32 %v3769, %v3770
    %v3772 = vsel %vm649, %v3746, -inf
    %v3773 = vrot.slane %v3772, 4
    %v3774 = vmax.f32 %v3772, %v3773
    %v3775 = vrot.slane %v3774, 2
    %v3776 = vmax.f32 %v3774, %v3775
    %v3777 = vrot.slane %v3776, 1
    %v3778 = vmax.f32 %v3776, %v3777
    %v3779 = vsel %vm649, %v3747, -inf
    %v3780 = vrot.slane %v3779, 4
    %v3781 = vmax.f32 %v3779, %v3780
    %v3782 = vrot.slane %v3781, 2
    %v3783 = vmax.f32 %v3781, %v3782
    %v3784 = vrot.slane %v3783, 1
    %v3785 = vmax.f32 %v3783, %v3784
    %v3786 = vsel %vm649, %v3748, -inf
    %v3787 = vrot.slane %v3786, 4
    %v3788 = vmax.f32 %v3786, %v3787
    %v3789 = vrot.slane %v3788, 2
    %v3790 = vmax.f32 %v3788, %v3789
    %v3791 = vrot.slane %v3790, 1
    %v3792 = vmax.f32 %v3790, %v3791
    %v3793 = vsel %vm649, %v3749, -inf
    %v3794 = vrot.slane %v3793, 4
    %v3795 = vmax.f32 %v3793, %v3794
    %v3796 = vrot.slane %v3795, 2
    %v3797 = vmax.f32 %v3795, %v3796
    %v3798 = vrot.slane %v3797, 1
    %v3799 = vmax.f32 %v3797, %v3798
    %v3800 = vsel %vm649, %v3750, -inf
    %v3801 = vrot.slane %v3800, 4
    %v3802 = vmax.f32 %v3800, %v3801
    %v3803 = vrot.slane %v3802, 2
    %v3804 = vmax.f32 %v3802, %v3803
    %v3805 = vrot.slane %v3804, 1
    %v3806 = vmax.f32 %v3804, %v3805
    %v3807 = vsub.f32 %v3743, %v3757
    %v3808 = vsub.f32 %v3744, %v3764
    %v3809 = vsub.f32 %v3745, %v3771
    %v3810 = vsub.f32 %v3746, %v3778
    %v3811 = vsub.f32 %v3747, %v3785
    %v3812 = vsub.f32 %v3748, %v3792
    %v3813 = vsub.f32 %v3749, %v3799
    %v3814 = vsub.f32 %v3750, %v3806
    %v3815 = vmul.f32 %v3807, 1.442695
    %v3816 = vpow.pop %v3815
    %v3817 = vmul.f32 %v3808, 1.442695
    %v3818 = vpow.pop %v3817
    %v3819 = vmul.f32 %v3809, 1.442695
    %v3820 = vpow.pop %v3819
    %v3821 = vmul.f32 %v3810, 1.442695
    %v3822 = vpow.pop %v3821
    %v3823 = vmul.f32 %v3811, 1.442695
    %v3824 = vpow.pop %v3823
    %v3825 = vmul.f32 %v3812, 1.442695
    %v3826 = vpow.pop %v3825
    %v3827 = vmul.f32 %v3813, 1.442695
    %v3828 = vpow.pop %v3827
    %v3829 = vmul.f32 %v3814, 1.442695
    %v3830 = vpow.pop %v3829
    %v3831 = vsel %vm649, %v3816, 0.0
    %v3832 = vrot.slane %v3831, 4
    %v3833 = vadd.f32 %v3831, %v3832
    %v3834 = vrot.slane %v3833, 2
    %v3835 = vadd.f32 %v3833, %v3834
    %v3836 = vrot.slane %v3835, 1
    %v3837 = vadd.f32 %v3835, %v3836
    %v3838 = vsel %vm649, %v3818, 0.0
    %v3839 = vrot.slane %v3838, 4
    %v3840 = vadd.f32 %v3838, %v3839
    %v3841 = vrot.slane %v3840, 2
    %v3842 = vadd.f32 %v3840, %v3841
    %v3843 = vrot.slane %v3842, 1
    %v3844 = vadd.f32 %v3842, %v3843
    %v3845 = vsel %vm649, %v3820, 0.0
    %v3846 = vrot.slane %v3845, 4
    %v3847 = vadd.f32 %v3845, %v3846
    %v3848 = vrot.slane %v3847, 2
    %v3849 = vadd.f32 %v3847, %v3848
    %v3850 = vrot.slane %v3849, 1
    %v3851 = vadd.f32 %v3849, %v3850
    %v3852 = vsel %vm649, %v3822, 0.0
    %v3853 = vrot.slane %v3852, 4
    %v3854 = vadd.f32 %v3852, %v3853
    %v3855 = vrot.slane %v3854, 2
    %v3856 = vadd.f32 %v3854, %v3855
    %v3857 = vrot.slane %v3856, 1
    %v3858 = vadd.f32 %v3856, %v3857
    %v3859 = vsel %vm649, %v3824, 0.0
    %v3860 = vrot.slane %v3859, 4
    %v3861 = vadd.f32 %v3859, %v3860
    %v3862 = vrot.slane %v3861, 2
    %v3863 = vadd.f32 %v3861, %v3862
    %v3864 = vrot.slane %v3863, 1
    %v3865 = vadd.f32 %v3863, %v3864
    %v3866 = vsel %vm649, %v3826, 0.0
    %v3867 = vrot.slane %v3866, 4
    %v3868 = vadd.f32 %v3866, %v3867
    %v3869 = vrot.slane %v3868, 2
    %v3870 = vadd.f32 %v3868, %v3869
    %v3871 = vrot.slane %v3870, 1
    %v3872 = vadd.f32 %v3870, %v3871
    %v3873 = vsel %vm649, %v3828, 0.0
    %v3874 = vrot.slane %v3873, 4
    %v3875 = vadd.f32 %v3873, %v3874
    %v3876 = vrot.slane %v3875, 2
    %v3877 = vadd.f32 %v3875, %v3876
    %v3878 = vrot.slane %v3877, 1
    %v3879 = vadd.f32 %v3877, %v3878
    %v3880 = vsel %vm649, %v3830, 0.0
    %v3881 = vrot.slane %v3880, 4
    %v3882 = vadd.f32 %v3880, %v3881
    %v3883 = vrot.slane %v3882, 2
    %v3884 = vadd.f32 %v3882, %v3883
    %v3885 = vrot.slane %v3884, 1
    %v3886 = vadd.f32 %v3884, %v3885
    %v3887 = vlog2.pop %v3837
    %v3888 = vmul.f32 %v3887, 0.6931472
    %v3889 = vlog2.pop %v3844
    %v3890 = vmul.f32 %v3889, 0.6931472
    %v3891 = vlog2.pop %v3851
    %v3892 = vmul.f32 %v3891, 0.6931472
    %v3893 = vlog2.pop %v3858
    %v3894 = vmul.f32 %v3893, 0.6931472
    %v3895 = vlog2.pop %v3865
    %v3896 = vmul.f32 %v3895, 0.6931472
    %v3897 = vlog2.pop %v3872
    %v3898 = vmul.f32 %v3897, 0.6931472
    %v3899 = vlog2.pop %v3879
    %v3900 = vmul.f32 %v3899, 0.6931472
    %v3901 = vlog2.pop %v3886
    %v3902 = vmul.f32 %v3901, 0.6931472
    %v3903 = vadd.f32 %v3757, %v3888
    %v3904 = vadd.f32 %v3764, %v3890
    %v3905 = vadd.f32 %v3771, %v3892
    %v3906 = vadd.f32 %v3778, %v3894
    %v3907 = vadd.f32 %v3785, %v3896
    %v3908 = vadd.f32 %v3792, %v3898
    %v3909 = vadd.f32 %v3799, %v3900
    %v3910 = vadd.f32 %v3806, %v3902
    %v3911 = vsub.f32 -0.693147, %v3903
    %v3912 = vsub.f32 -0.693147, %v3904
    %v3913 = vsub.f32 -0.693147, %v3905
    %v3914 = vsub.f32 -0.693147, %v3906
    %v3915 = vsub.f32 -0.693147, %v3907
    %v3916 = vsub.f32 -0.693147, %v3908
    %v3917 = vsub.f32 -0.693147, %v3909
    %v3918 = vsub.f32 -0.693147, %v3910
    %v3919 = vadd.f32 %v3743, %v3911
    %v3920 = vadd.f32 %v3744, %v3912
    %v3921 = vadd.f32 %v3745, %v3913
    %v3922 = vadd.f32 %v3746, %v3914
    %v3923 = vadd.f32 %v3747, %v3915
    %v3924 = vadd.f32 %v3748, %v3916
    %v3925 = vadd.f32 %v3749, %v3917
    %v3926 = vadd.f32 %v3750, %v3918
    %v3927 = vmul.f32 %v3919, 1.442695
    %v3928 = vpow.pop %v3927
    %v3929 = vmul.f32 %v3920, 1.442695
    %v3930 = vpow.pop %v3929
    %v3931 = vmul.f32 %v3921, 1.442695
    %v3932 = vpow.pop %v3931
    %v3933 = vmul.f32 %v3922, 1.442695
    %v3934 = vpow.pop %v3933
    %v3935 = vmul.f32 %v3923, 1.442695
    %v3936 = vpow.pop %v3935
    %v3937 = vmul.f32 %v3924, 1.442695
    %v3938 = vpow.pop %v3937
    %v3939 = vmul.f32 %v3925, 1.442695
    %v3940 = vpow.pop %v3939
    %v3941 = vmul.f32 %v3926, 1.442695
    %v3942 = vpow.pop %v3941
    %v3944 = vsel %vm649, %v3928, 0
    %3946 = vmatpush.msra.mxu0 0.0
    %3947 = vmatpush.msra.mxu0 0.0
    %3948 = vmatpush.msra.mxu0 0.0
    %3949 = vmatpush.msra.mxu0 0.0
    %3950 = vmatpush.msra.mxu0 0.0
    %3951 = vmatpush.msra.mxu0 0.0
    %3952 = vmatpush.msra.mxu0 0.0
    %3953 = vmatpush.msra.mxu0 0.0
    %3954 = vmatpush.msra.mxu0 0.0
    %3955 = vmatpush.msra.mxu0 0.0
    %3956 = vmatpush.msra.mxu0 0.0
    %3957 = vmatpush.msra.mxu0 0.0
    %3958 = vmatpush.msra.mxu0 0.0
    %3959 = vmatpush.msra.mxu0 0.0
    %3960 = vmatpush.msra.mxu0 %v3306
    %3961 = vmatpush.msra.mxu0 %v3303
    %3962 = vmatmul.f32.gmra.mxu0 %v3944
    %v3963 = vpop.f32.mrf.mxu0
    %v3964 = vadd.f32 0.0, %v3963
    %3965 = vdwg.mxu0
    %v3967 = vsel %vm649, %v3930, 0
    %3969 = vmatpush.msra.mxu0 0.0
    %3970 = vmatpush.msra.mxu0 0.0
    %3971 = vmatpush.msra.mxu0 0.0
    %3972 = vmatpush.msra.mxu0 0.0
    %3973 = vmatpush.msra.mxu0 0.0
    %3974 = vmatpush.msra.mxu0 0.0
    %3975 = vmatpush.msra.mxu0 0.0
    %3976 = vmatpush.msra.mxu0 0.0
    %3977 = vmatpush.msra.mxu0 0.0
    %3978 = vmatpush.msra.mxu0 0.0
    %3979 = vmatpush.msra.mxu0 0.0
    %3980 = vmatpush.msra.mxu0 0.0
    %3981 = vmatpush.msra.mxu0 0.0
    %3982 = vmatpush.msra.mxu0 0.0
    %3983 = vmatpush.msra.mxu0 %v3312
    %3984 = vmatpush.msra.mxu0 %v3309
    %3985 = vmatmul.f32.gmra.mxu0 %v3967
    %v3986 = vpop.f32.mrf.mxu0
    %v3987 = vadd.f32 0.0, %v3986
    %3988 = vdwg.mxu0
    %v3990 = vsel %vm649, %v3932, 0
    %3992 = vmatpush.msra.mxu0 0.0
    %3993 = vmatpush.msra.mxu0 0.0
    %3994 = vmatpush.msra.mxu0 0.0
    %3995 = vmatpush.msra.mxu0 0.0
    %3996 = vmatpush.msra.mxu0 0.0
    %3997 = vmatpush.msra.mxu0 0.0
    %3998 = vmatpush.msra.mxu0 0.0
    %3999 = vmatpush.msra.mxu0 0.0
    %4000 = vmatpush.msra.mxu0 0.0
    %4001 = vmatpush.msra.mxu0 0.0
    %4002 = vmatpush.msra.mxu0 0.0
    %4003 = vmatpush.msra.mxu0 0.0
    %4004 = vmatpush.msra.mxu0 0.0
    %4005 = vmatpush.msra.mxu0 0.0
    %4006 = vmatpush.msra.mxu0 %v3341
    %4007 = vmatpush.msra.mxu0 %v3338
    %4008 = vmatmul.f32.gmra.mxu0 %v3990
    %v4009 = vpop.f32.mrf.mxu0
    %v4010 = vadd.f32 0.0, %v4009
    %4011 = vdwg.mxu0
    %v4013 = vsel %vm649, %v3934, 0
    %4015 = vmatpush.msra.mxu0 0.0
    %4016 = vmatpush.msra.mxu0 0.0
    %4017 = vmatpush.msra.mxu0 0.0
    %4018 = vmatpush.msra.mxu0 0.0
    %4019 = vmatpush.msra.mxu0 0.0
    %4020 = vmatpush.msra.mxu0 0.0
    %4021 = vmatpush.msra.mxu0 0.0
    %4022 = vmatpush.msra.mxu0 0.0
    %4023 = vmatpush.msra.mxu0 0.0
    %4024 = vmatpush.msra.mxu0 0.0
    %4025 = vmatpush.msra.mxu0 0.0
    %4026 = vmatpush.msra.mxu0 0.0
    %4027 = vmatpush.msra.mxu0 0.0
    %4028 = vmatpush.msra.mxu0 0.0
    %4029 = vmatpush.msra.mxu0 %v3347
    %4030 = vmatpush.msra.mxu0 %v3344
    %4031 = vmatmul.f32.gmra.mxu0 %v4013
    %v4032 = vpop.f32.mrf.mxu0
    %v4033 = vadd.f32 0.0, %v4032
    %4034 = vdwg.mxu0
    %v4036 = vsel %vm649, %v3936, 0
    %4038 = vmatpush.msra.mxu0 0.0
    %4039 = vmatpush.msra.mxu0 0.0
    %4040 = vmatpush.msra.mxu0 0.0
    %4041 = vmatpush.msra.mxu0 0.0
    %4042 = vmatpush.msra.mxu0 0.0
    %4043 = vmatpush.msra.mxu0 0.0
    %4044 = vmatpush.msra.mxu0 0.0
    %4045 = vmatpush.msra.mxu0 0.0
    %4046 = vmatpush.msra.mxu0 0.0
    %4047 = vmatpush.msra.mxu0 0.0
    %4048 = vmatpush.msra.mxu0 0.0
    %4049 = vmatpush.msra.mxu0 0.0
    %4050 = vmatpush.msra.mxu0 0.0
    %4051 = vmatpush.msra.mxu0 0.0
    %4052 = vmatpush.msra.mxu0 %v3376
    %4053 = vmatpush.msra.mxu0 %v3373
    %4054 = vmatmul.f32.gmra.mxu0 %v4036
    %v4055 = vpop.f32.mrf.mxu0
    %v4056 = vadd.f32 0.0, %v4055
    %4057 = vdwg.mxu0
    %v4059 = vsel %vm649, %v3938, 0
    %4061 = vmatpush.msra.mxu0 0.0
    %4062 = vmatpush.msra.mxu0 0.0
    %4063 = vmatpush.msra.mxu0 0.0
    %4064 = vmatpush.msra.mxu0 0.0
    %4065 = vmatpush.msra.mxu0 0.0
    %4066 = vmatpush.msra.mxu0 0.0
    %4067 = vmatpush.msra.mxu0 0.0
    %4068 = vmatpush.msra.mxu0 0.0
    %4069 = vmatpush.msra.mxu0 0.0
    %4070 = vmatpush.msra.mxu0 0.0
    %4071 = vmatpush.msra.mxu0 0.0
    %4072 = vmatpush.msra.mxu0 0.0
    %4073 = vmatpush.msra.mxu0 0.0
    %4074 = vmatpush.msra.mxu0 0.0
    %4075 = vmatpush.msra.mxu0 %v3382
    %4076 = vmatpush.msra.mxu0 %v3379
    %4077 = vmatmul.f32.gmra.mxu0 %v4059
    %v4078 = vpop.f32.mrf.mxu0
    %v4079 = vadd.f32 0.0, %v4078
    %4080 = vdwg.mxu0
    %v4082 = vsel %vm649, %v3940, 0
    %4084 = vmatpush.msra.mxu0 0.0
    %4085 = vmatpush.msra.mxu0 0.0
    %4086 = vmatpush.msra.mxu0 0.0
    %4087 = vmatpush.msra.mxu0 0.0
    %4088 = vmatpush.msra.mxu0 0.0
    %4089 = vmatpush.msra.mxu0 0.0
    %4090 = vmatpush.msra.mxu0 0.0
    %4091 = vmatpush.msra.mxu0 0.0
    %4092 = vmatpush.msra.mxu0 0.0
    %4093 = vmatpush.msra.mxu0 0.0
    %4094 = vmatpush.msra.mxu0 0.0
    %4095 = vmatpush.msra.mxu0 0.0
    %4096 = vmatpush.msra.mxu0 0.0
    %4097 = vmatpush.msra.mxu0 0.0
    %4098 = vmatpush.msra.mxu0 %v3411
    %4099 = vmatpush.msra.mxu0 %v3408
    %4100 = vmatmul.f32.gmra.mxu0 %v4082
    %v4101 = vpop.f32.mrf.mxu0
    %v4102 = vadd.f32 0.0, %v4101
    %4103 = vdwg.mxu0
    %v4105 = vsel %vm649, %v3942, 0
    %4107 = vmatpush.msra.mxu0 0.0
    %4108 = vmatpush.msra.mxu0 0.0
    %4109 = vmatpush.msra.mxu0 0.0
    %4110 = vmatpush.msra.mxu0 0.0
    %4111 = vmatpush.msra.mxu0 0.0
    %4112 = vmatpush.msra.mxu0 0.0
    %4113 = vmatpush.msra.mxu0 0.0
    %4114 = vmatpush.msra.mxu0 0.0
    %4115 = vmatpush.msra.mxu0 0.0
    %4116 = vmatpush.msra.mxu0 0.0
    %4117 = vmatpush.msra.mxu0 0.0
    %4118 = vmatpush.msra.mxu0 0.0
    %4119 = vmatpush.msra.mxu0 0.0
    %4120 = vmatpush.msra.mxu0 0.0
    %4121 = vmatpush.msra.mxu0 %v3417
    %4122 = vmatpush.msra.mxu0 %v3414
    %4123 = vmatmul.f32.gmra.mxu0 %v4105
    %v4124 = vpop.f32.mrf.mxu0
    %v4125 = vadd.f32 0.0, %v4124
    %4126 = vdwg.mxu0
    %v4127 = vadd.f32 %v3047, %v3964
    %v4128 = vadd.f32 %v3047, %v3987
    %v4129 = vadd.f32 %v3073, %v4010
    %v4130 = vadd.f32 %v3073, %v4033
    %v4131 = vadd.f32 %v3099, %v4056
    %v4132 = vadd.f32 %v3099, %v4079
    %v4133 = vadd.f32 %v3125, %v4102
    %v4134 = vadd.f32 %v3125, %v4125
    %4137 = vrot.lane.b32.xlu0 %v4129, 8
    %v4138 = vpop.permute.xlu0 %4137
    %4139 = vrot.lane.b32.xlu0 %v4130, 8
    %v4140 = vpop.permute.xlu0 %4139
    %4145 = vrot.lane.b32.xlu0 %v4131, 16
    %v4146 = vpop.permute.xlu0 %4145
    %4147 = vrot.lane.b32.xlu0 %v4132, 16
    %v4148 = vpop.permute.xlu0 %4147
    %4153 = vrot.lane.b32.xlu0 %v4133, 24
    %v4154 = vpop.permute.xlu0 %4153
    %4155 = vrot.lane.b32.xlu0 %v4134, 24
    %v4156 = vpop.permute.xlu0 %4155
    %v4159 = vsel %vm428, %v4127, %v4138
    %v4160 = vsel %vm428, %v4128, %v4140
    %v4161 = vsel %vm649, %v4159, %v4146
    %v4162 = vsel %vm649, %v4160, %v4148
    %v4163 = vsel %vm1174, %v4161, %v4154
    %v4164 = vsel %vm1174, %v4162, %v4156
    %v4165 = vld [vmem:[%s3 + $0x50] sm:$0xff]
    %v4166 = vld [vmem:[%s3 + $0x58] sm:$0xff]
    %v4167 = vld [vmem:[%s3 + $0x60] sm:$0xff]
    %v4168 = vld [vmem:[%s3 + $0x68] sm:$0xff]
    %v4169 = vld [vmem:[%s3 + $0x70] sm:$0x1]
    %v4170 = vld [vmem:[%s3 + $0x71] sm:$0x1]
    %v4171 = vld [vmem:[%s3 + $0x72] sm:$0x1]
    %v4172 = vld [vmem:[%s3 + $0x73] sm:$0x1]
    %v4173 = vld [vmem:[%s3 + $0x74] sm:$0x1]
    %v4174 = vsel %vm34, %v4163, 0.0
    %4175 = vadd.xlane.f32.xlu0 %v4174
    %v4176 = vpop.xlane.xlu0 %4175
    %v4177 = vsel %vm34, %v4164, 0.0
    %4178 = vadd.xlane.f32.xlu0 %v4177
    %v4179 = vpop.xlane.xlu0 %4178
    %v4180 = vmul.f32 %v4176, %v1198
    %v4181 = vmul.f32 %v4179, %v1198
    %v4182 = vsub.f32 %v4163, %v4180
    %v4183 = vsub.f32 %v4164, %v4181
    %v4184 = vmul.f32 %v4182, %v4182
    %v4185 = vmul.f32 %v4183, %v4183
    %v4186 = vsel %vm34, %v4184, 0.0
    %4187 = vadd.xlane.f32.xlu0 %v4186
    %v4188 = vpop.xlane.xlu0 %4187
    %v4189 = vsel %vm34, %v4185, 0.0
    %4190 = vadd.xlane.f32.xlu0 %v4189
    %v4191 = vpop.xlane.xlu0 %4190
    %v4192 = vmul.f32 %v4188, %v1198
    %v4193 = vmul.f32 %v4191, %v1198
    %v4194 = vadd.f32 %v4192, 1e-05
    %v4195 = vadd.f32 %v4193, 1e-05
    %v4196 = vrsqrt.pop %v4194
    %v4197 = vmul.f32 %v4196, %v4194
    %v4198 = vmul.f32 %v4197, %v4196
    %v4199 = vmul.f32 0.5, %v4198
    %v4200 = vsub.f32 1.5, %v4199
    %v4201 = vmul.f32 %v4196, %v4200
    %vm4202 = vweird.f32 %v4194
    %vm4203 = vweird.f32 %v4196
    %vm4204 = vmor %vm4202, %vm4203
    %v4205 = vsel %vm4204, %v4196, %v4201
    %v4206 = vrsqrt.pop %v4195
    %v4207 = vmul.f32 %v4206, %v4195
    %v4208 = vmul.f32 %v4207, %v4206
    %v4209 = vmul.f32 0.5, %v4208
    %v4210 = vsub.f32 1.5, %v4209
    %v4211 = vmul.f32 %v4206, %v4210
    %vm4212 = vweird.f32 %v4195
    %vm4213 = vweird.f32 %v4206
    %vm4214 = vmor %vm4212, %vm4213
    %v4215 = vsel %vm4214, %v4206, %v4211
    %v4216 = vmul.f32 %v4182, %v4205
    %v4217 = vmul.f32 %v4183, %v4215
    %v4218 = vperm.slane %v4170, 0
    %v4219 = vmul.f32 %v4216, %v4218
    %v4220 = vmul.f32 %v4217, %v4218
    %v4221 = vperm.slane %v4171, 0
    %v4222 = vadd.f32 %v4219, %v4221
    %v4223 = vadd.f32 %v4220, %v4221
    %v4224 = vperm.slane %v4169, 0
    %v4226 = vsel %vm34, %v4222, 0
    %v4229 = vsel %vm34, %v4223, 0
    %4231 = vmatpush.msra.mxu0 0.0
    %4232 = vmatpush.msra.mxu0 0.0
    %4233 = vmatpush.msra.mxu0 0.0
    %4234 = vmatpush.msra.mxu0 0.0
    %4235 = vmatpush.msra.mxu0 0.0
    %4236 = vmatpush.msra.mxu0 0.0
    %4237 = vmatpush.msra.mxu0 0.0
    %4238 = vmatpush.msra.mxu0 0.0
    %4239 = vmatpush.msra.mxu0 0.0
    %4240 = vmatpush.msra.mxu0 0.0
    %4241 = vmatpush.msra.mxu0 0.0
    %4242 = vmatpush.msra.mxu0 0.0
    %4243 = vmatpush.msra.mxu0 %v4168
    %4244 = vmatpush.msra.mxu0 %v4167
    %4245 = vmatpush.msra.mxu0 %v4166
    %4246 = vmatpush.msra.mxu0 %v4165
    %4247 = vmatmul.f32.gmra.mxu0 %v4226
    %v4248 = vpop.f32.mrf.mxu0
    %v4249 = vadd.f32 %v4224, %v4248
    %4250 = vmatmul.f32.gmra.mxu0 %v4229
    %v4251 = vpop.f32.mrf.mxu0
    %v4252 = vadd.f32 %v4224, %v4251
    %4253 = vdwg.mxu0
    %v4254 = vmax.f32 %v4249, 0.0
    %v4255 = vmax.f32 %v4252, 0.0
    %v4256 = vadd.f32 %v4222, %v4254
    %v4257 = vadd.f32 %v4223, %v4255
    %v4258 = vsel %vm34, %v4256, 0.0
    %4259 = vadd.xlane.f32.xlu0 %v4258
    %v4260 = vpop.xlane.xlu0 %4259
    %v4261 = vsel %vm34, %v4257, 0.0
    %4262 = vadd.xlane.f32.xlu0 %v4261
    %v4263 = vpop.xlane.xlu0 %4262
    %v4264 = vmul.f32 %v4260, %v1198
    %v4265 = vmul.f32 %v4263, %v1198
    %v4266 = vsub.f32 %v4256, %v4264
    %v4267 = vsub.f32 %v4257, %v4265
    %v4268 = vmul.f32 %v4266, %v4266
    %v4269 = vmul.f32 %v4267, %v4267
    %v4270 = vsel %vm34, %v4268, 0.0
    %4271 = vadd.xlane.f32.xlu0 %v4270
    %v4272 = vpop.xlane.xlu0 %4271
    %v4273 = vsel %vm34, %v4269, 0.0
    %4274 = vadd.xlane.f32.xlu0 %v4273
    %v4275 = vpop.xlane.xlu0 %4274
    %v4276 = vmul.f32 %v4272, %v1198
    %v4277 = vmul.f32 %v4275, %v1198
    %v4278 = vadd.f32 %v4276, 1e-05
    %v4279 = vadd.f32 %v4277, 1e-05
    %v4280 = vrsqrt.pop %v4278
    %v4281 = vmul.f32 %v4280, %v4278
    %v4282 = vmul.f32 %v4281, %v4280
    %v4283 = vmul.f32 0.5, %v4282
    %v4284 = vsub.f32 1.5, %v4283
    %v4285 = vmul.f32 %v4280, %v4284
    %vm4286 = vweird.f32 %v4278
    %vm4287 = vweird.f32 %v4280
    %vm4288 = vmor %vm4286, %vm4287
    %v4289 = vsel %vm4288, %v4280, %v4285
    %v4290 = vrsqrt.pop %v4279
    %v4291 = vmul.f32 %v4290, %v4279
    %v4292 = vmul.f32 %v4291, %v4290
    %v4293 = vmul.f32 0.5, %v4292
    %v4294 = vsub.f32 1.5, %v4293
    %v4295 = vmul.f32 %v4290, %v4294
    %vm4296 = vweird.f32 %v4279
    %vm4297 = vweird.f32 %v4290
    %vm4298 = vmor %vm4296, %vm4297
    %v4299 = vsel %vm4298, %v4290, %v4295
    %v4300 = vmul.f32 %v4266, %v4289
    %v4301 = vmul.f32 %v4267, %v4299
    %v4302 = vperm.slane %v4172, 0
    %v4303 = vmul.f32 %v4300, %v4302
    %v4304 = vmul.f32 %v4301, %v4302
    %v4305 = vperm.slane %v4173, 0
    %v4306 = vadd.f32 %v4303, %v4305
    %v4307 = vadd.f32 %v4304, %v4305
    %v4308 = vld [vmem:[%s2 + $0x480] sm:$0xff]
    %v4309 = vld [vmem:[%s2 + $0x488] sm:$0xff]
    %v4310 = vld [vmem:[%s2 + $0x490] sm:$0xff]
    %v4311 = vld [vmem:[%s2 + $0x498] sm:$0xff]
    %v4312 = vld [vmem:[%s2 + $0x7a4] sm:$0x1]
    %v4313 = vperm.slane %v4312, 0
    %4314 = vmatpush.msra.mxu0 0.0
    %4315 = vmatpush.msra.mxu0 0.0
    %4316 = vmatpush.msra.mxu0 0.0
    %4317 = vmatpush.msra.mxu0 0.0
    %4318 = vmatpush.msra.mxu0 0.0
    %4319 = vmatpush.msra.mxu0 0.0
    %4320 = vmatpush.msra.mxu0 0.0
    %4321 = vmatpush.msra.mxu0 0.0
    %4322 = vmatpush.msra.mxu0 0.0
    %4323 = vmatpush.msra.mxu0 0.0
    %4324 = vmatpush.msra.mxu0 0.0
    %4325 = vmatpush.msra.mxu0 0.0
    %4326 = vmatpush.msra.mxu0 %v4311
    %4327 = vmatpush.msra.mxu0 %v4310
    %4328 = vmatpush.msra.mxu0 %v4309
    %4329 = vmatpush.msra.mxu0 %v4308
    %4330 = vmatmul.f32.gmra.mxu0 %v3134
    %v4331 = vpop.f32.mrf.mxu0
    %v4332 = vadd.f32 %v4313, %v4331
    %4333 = vmatmul.f32.gmra.mxu0 %v3137
    %v4334 = vpop.f32.mrf.mxu0
    %v4335 = vadd.f32 %v4313, %v4334
    %4336 = vmatmul.f32.gmra.mxu0 %v3140
    %v4337 = vpop.f32.mrf.mxu0
    %v4338 = vadd.f32 %v4313, %v4337
    %4339 = vmatmul.f32.gmra.mxu0 %v3143
    %v4340 = vpop.f32.mrf.mxu0
    %v4341 = vadd.f32 %v4313, %v4340
    %4342 = vdwg.mxu0
    %v4343 = vld [vmem:[%s2 + $0x4a0] sm:$0xff]
    %v4344 = vld [vmem:[%s2 + $0x4a8] sm:$0xff]
    %v4345 = vld [vmem:[%s2 + $0x4b0] sm:$0xff]
    %v4346 = vld [vmem:[%s2 + $0x4b8] sm:$0xff]
    %v4347 = vld [vmem:[%s2 + $0x7a5] sm:$0x1]
    %v4348 = vperm.slane %v4347, 0
    %4349 = vmatpush.msra.mxu0 0.0
    %4350 = vmatpush.msra.mxu0 0.0
    %4351 = vmatpush.msra.mxu0 0.0
    %4352 = vmatpush.msra.mxu0 0.0
    %4353 = vmatpush.msra.mxu0 0.0
    %4354 = vmatpush.msra.mxu0 0.0
    %4355 = vmatpush.msra.mxu0 0.0
    %4356 = vmatpush.msra.mxu0 0.0
    %4357 = vmatpush.msra.mxu0 0.0
    %4358 = vmatpush.msra.mxu0 0.0
    %4359 = vmatpush.msra.mxu0 0.0
    %4360 = vmatpush.msra.mxu0 0.0
    %4361 = vmatpush.msra.mxu0 %v4346
    %4362 = vmatpush.msra.mxu0 %v4345
    %4363 = vmatpush.msra.mxu0 %v4344
    %4364 = vmatpush.msra.mxu0 %v4343
    %4365 = vmatmul.f32.gmra.mxu0 %v3134
    %v4366 = vpop.f32.mrf.mxu0
    %v4367 = vadd.f32 %v4348, %v4366
    %4368 = vmatmul.f32.gmra.mxu0 %v3137
    %v4369 = vpop.f32.mrf.mxu0
    %v4370 = vadd.f32 %v4348, %v4369
    %4371 = vmatmul.f32.gmra.mxu0 %v3140
    %v4372 = vpop.f32.mrf.mxu0
    %v4373 = vadd.f32 %v4348, %v4372
    %4374 = vmatmul.f32.gmra.mxu0 %v3143
    %v4375 = vpop.f32.mrf.mxu0
    %v4376 = vadd.f32 %v4348, %v4375
    %4377 = vdwg.mxu0
    %v4378 = vld [vmem:[%s2 + $0x4c0] sm:$0xff]
    %v4379 = vld [vmem:[%s2 + $0x4c8] sm:$0xff]
    %v4380 = vld [vmem:[%s2 + $0x4d0] sm:$0xff]
    %v4381 = vld [vmem:[%s2 + $0x4d8] sm:$0xff]
    %v4382 = vld [vmem:[%s2 + $0x7a6] sm:$0x1]
    %v4383 = vperm.slane %v4382, 0
    %4384 = vmatpush.msra.mxu0 0.0
    %4385 = vmatpush.msra.mxu0 0.0
    %4386 = vmatpush.msra.mxu0 0.0
    %4387 = vmatpush.msra.mxu0 0.0
    %4388 = vmatpush.msra.mxu0 0.0
    %4389 = vmatpush.msra.mxu0 0.0
    %4390 = vmatpush.msra.mxu0 0.0
    %4391 = vmatpush.msra.mxu0 0.0
    %4392 = vmatpush.msra.mxu0 0.0
    %4393 = vmatpush.msra.mxu0 0.0
    %4394 = vmatpush.msra.mxu0 0.0
    %4395 = vmatpush.msra.mxu0 0.0
    %4396 = vmatpush.msra.mxu0 %v4381
    %4397 = vmatpush.msra.mxu0 %v4380
    %4398 = vmatpush.msra.mxu0 %v4379
    %4399 = vmatpush.msra.mxu0 %v4378
    %4400 = vmatmul.f32.gmra.mxu0 %v3134
    %v4401 = vpop.f32.mrf.mxu0
    %v4402 = vadd.f32 %v4383, %v4401
    %4403 = vmatmul.f32.gmra.mxu0 %v3137
    %v4404 = vpop.f32.mrf.mxu0
    %v4405 = vadd.f32 %v4383, %v4404
    %4406 = vmatmul.f32.gmra.mxu0 %v3140
    %v4407 = vpop.f32.mrf.mxu0
    %v4408 = vadd.f32 %v4383, %v4407
    %4409 = vmatmul.f32.gmra.mxu0 %v3143
    %v4410 = vpop.f32.mrf.mxu0
    %v4411 = vadd.f32 %v4383, %v4410
    %4412 = vdwg.mxu0
    %v4413 = vld [vmem:[%s2 + $0x4e0] sm:$0xff]
    %v4414 = vld [vmem:[%s2 + $0x4e8] sm:$0xff]
    %v4415 = vld [vmem:[%s2 + $0x4f0] sm:$0xff]
    %v4416 = vld [vmem:[%s2 + $0x4f8] sm:$0xff]
    %v4417 = vld [vmem:[%s2 + $0x7a7] sm:$0x1]
    %v4418 = vperm.slane %v4417, 0
    %4419 = vmatpush.msra.mxu0 0.0
    %4420 = vmatpush.msra.mxu0 0.0
    %4421 = vmatpush.msra.mxu0 0.0
    %4422 = vmatpush.msra.mxu0 0.0
    %4423 = vmatpush.msra.mxu0 0.0
    %4424 = vmatpush.msra.mxu0 0.0
    %4425 = vmatpush.msra.mxu0 0.0
    %4426 = vmatpush.msra.mxu0 0.0
    %4427 = vmatpush.msra.mxu0 0.0
    %4428 = vmatpush.msra.mxu0 0.0
    %4429 = vmatpush.msra.mxu0 0.0
    %4430 = vmatpush.msra.mxu0 0.0
    %4431 = vmatpush.msra.mxu0 %v4416
    %4432 = vmatpush.msra.mxu0 %v4415
    %4433 = vmatpush.msra.mxu0 %v4414
    %4434 = vmatpush.msra.mxu0 %v4413
    %4435 = vmatmul.f32.gmra.mxu0 %v3134
    %v4436 = vpop.f32.mrf.mxu0
    %v4437 = vadd.f32 %v4418, %v4436
    %4438 = vmatmul.f32.gmra.mxu0 %v3137
    %v4439 = vpop.f32.mrf.mxu0
    %v4440 = vadd.f32 %v4418, %v4439
    %4441 = vmatmul.f32.gmra.mxu0 %v3140
    %v4442 = vpop.f32.mrf.mxu0
    %v4443 = vadd.f32 %v4418, %v4442
    %4444 = vmatmul.f32.gmra.mxu0 %v3143
    %v4445 = vpop.f32.mrf.mxu0
    %v4446 = vadd.f32 %v4418, %v4445
    %4447 = vdwg.mxu0
    %v4448 = vld [vmem:[%s2 + $0x500] sm:$0xff]
    %v4449 = vld [vmem:[%s2 + $0x508] sm:$0xff]
    %v4450 = vld [vmem:[%s2 + $0x510] sm:$0xff]
    %v4451 = vld [vmem:[%s2 + $0x518] sm:$0xff]
    %v4452 = vld [vmem:[%s2 + $0x7a8] sm:$0x1]
    %v4453 = vperm.slane %v4452, 0
    %v4455 = vsel %vm34, %v4306, 0
    %v4458 = vsel %vm34, %v4307, 0
    %4460 = vmatpush.msra.mxu0 0.0
    %4461 = vmatpush.msra.mxu0 0.0
    %4462 = vmatpush.msra.mxu0 0.0
    %4463 = vmatpush.msra.mxu0 0.0
    %4464 = vmatpush.msra.mxu0 0.0
    %4465 = vmatpush.msra.mxu0 0.0
    %4466 = vmatpush.msra.mxu0 0.0
    %4467 = vmatpush.msra.mxu0 0.0
    %4468 = vmatpush.msra.mxu0 0.0
    %4469 = vmatpush.msra.mxu0 0.0
    %4470 = vmatpush.msra.mxu0 0.0
    %4471 = vmatpush.msra.mxu0 0.0
    %4472 = vmatpush.msra.mxu0 %v4451
    %4473 = vmatpush.msra.mxu0 %v4450
    %4474 = vmatpush.msra.mxu0 %v4449
    %4475 = vmatpush.msra.mxu0 %v4448
    %4476 = vmatmul.f32.gmra.mxu0 %v4455
    %v4477 = vpop.f32.mrf.mxu0
    %v4478 = vadd.f32 %v4453, %v4477
    %4479 = vmatmul.f32.gmra.mxu0 %v4458
    %v4480 = vpop.f32.mrf.mxu0
    %v4481 = vadd.f32 %v4453, %v4480
    %4482 = vdwg.mxu0
    %v4483 = vld [vmem:[%s2 + $0x520] sm:$0xff]
    %v4484 = vld [vmem:[%s2 + $0x528] sm:$0xff]
    %v4485 = vld [vmem:[%s2 + $0x530] sm:$0xff]
    %v4486 = vld [vmem:[%s2 + $0x538] sm:$0xff]
    %v4487 = vld [vmem:[%s2 + $0x7a9] sm:$0x1]
    %v4488 = vperm.slane %v4487, 0
    %4489 = vmatpush.msra.mxu0 0.0
    %4490 = vmatpush.msra.mxu0 0.0
    %4491 = vmatpush.msra.mxu0 0.0
    %4492 = vmatpush.msra.mxu0 0.0
    %4493 = vmatpush.msra.mxu0 0.0
    %4494 = vmatpush.msra.mxu0 0.0
    %4495 = vmatpush.msra.mxu0 0.0
    %4496 = vmatpush.msra.mxu0 0.0
    %4497 = vmatpush.msra.mxu0 0.0
    %4498 = vmatpush.msra.mxu0 0.0
    %4499 = vmatpush.msra.mxu0 0.0
    %4500 = vmatpush.msra.mxu0 0.0
    %4501 = vmatpush.msra.mxu0 %v4486
    %4502 = vmatpush.msra.mxu0 %v4485
    %4503 = vmatpush.msra.mxu0 %v4484
    %4504 = vmatpush.msra.mxu0 %v4483
    %4505 = vmatmul.f32.gmra.mxu0 %v4455
    %v4506 = vpop.f32.mrf.mxu0
    %v4507 = vadd.f32 %v4488, %v4506
    %4508 = vmatmul.f32.gmra.mxu0 %v4458
    %v4509 = vpop.f32.mrf.mxu0
    %v4510 = vadd.f32 %v4488, %v4509
    %4511 = vdwg.mxu0
    %v4512 = vld [vmem:[%s2 + $0x540] sm:$0xff]
    %v4513 = vld [vmem:[%s2 + $0x548] sm:$0xff]
    %v4514 = vld [vmem:[%s2 + $0x550] sm:$0xff]
    %v4515 = vld [vmem:[%s2 + $0x558] sm:$0xff]
    %v4516 = vld [vmem:[%s2 + $0x7aa] sm:$0x1]
    %v4517 = vperm.slane %v4516, 0
    %4518 = vmatpush.msra.mxu0 0.0
    %4519 = vmatpush.msra.mxu0 0.0
    %4520 = vmatpush.msra.mxu0 0.0
    %4521 = vmatpush.msra.mxu0 0.0
    %4522 = vmatpush.msra.mxu0 0.0
    %4523 = vmatpush.msra.mxu0 0.0
    %4524 = vmatpush.msra.mxu0 0.0
    %4525 = vmatpush.msra.mxu0 0.0
    %4526 = vmatpush.msra.mxu0 0.0
    %4527 = vmatpush.msra.mxu0 0.0
    %4528 = vmatpush.msra.mxu0 0.0
    %4529 = vmatpush.msra.mxu0 0.0
    %4530 = vmatpush.msra.mxu0 %v4515
    %4531 = vmatpush.msra.mxu0 %v4514
    %4532 = vmatpush.msra.mxu0 %v4513
    %4533 = vmatpush.msra.mxu0 %v4512
    %4534 = vmatmul.f32.gmra.mxu0 %v4455
    %v4535 = vpop.f32.mrf.mxu0
    %v4536 = vadd.f32 %v4517, %v4535
    %4537 = vmatmul.f32.gmra.mxu0 %v4458
    %v4538 = vpop.f32.mrf.mxu0
    %v4539 = vadd.f32 %v4517, %v4538
    %4540 = vdwg.mxu0
    %v4541 = vld [vmem:[%s2 + $0x560] sm:$0xff]
    %v4542 = vld [vmem:[%s2 + $0x568] sm:$0xff]
    %v4543 = vld [vmem:[%s2 + $0x570] sm:$0xff]
    %v4544 = vld [vmem:[%s2 + $0x578] sm:$0xff]
    %v4545 = vld [vmem:[%s2 + $0x7ab] sm:$0x1]
    %v4546 = vperm.slane %v4545, 0
    %4547 = vmatpush.msra.mxu0 0.0
    %4548 = vmatpush.msra.mxu0 0.0
    %4549 = vmatpush.msra.mxu0 0.0
    %4550 = vmatpush.msra.mxu0 0.0
    %4551 = vmatpush.msra.mxu0 0.0
    %4552 = vmatpush.msra.mxu0 0.0
    %4553 = vmatpush.msra.mxu0 0.0
    %4554 = vmatpush.msra.mxu0 0.0
    %4555 = vmatpush.msra.mxu0 0.0
    %4556 = vmatpush.msra.mxu0 0.0
    %4557 = vmatpush.msra.mxu0 0.0
    %4558 = vmatpush.msra.mxu0 0.0
    %4559 = vmatpush.msra.mxu0 %v4544
    %4560 = vmatpush.msra.mxu0 %v4543
    %4561 = vmatpush.msra.mxu0 %v4542
    %4562 = vmatpush.msra.mxu0 %v4541
    %4563 = vmatmul.f32.gmra.mxu0 %v4455
    %v4564 = vpop.f32.mrf.mxu0
    %v4565 = vadd.f32 %v4546, %v4564
    %4566 = vmatmul.f32.gmra.mxu0 %v4458
    %v4567 = vpop.f32.mrf.mxu0
    %v4568 = vadd.f32 %v4546, %v4567
    %4569 = vdwg.mxu0
    %v4570 = vld [vmem:[%s2 + $0x580] sm:$0xff]
    %v4571 = vld [vmem:[%s2 + $0x588] sm:$0xff]
    %v4572 = vld [vmem:[%s2 + $0x590] sm:$0xff]
    %v4573 = vld [vmem:[%s2 + $0x598] sm:$0xff]
    %v4574 = vld [vmem:[%s2 + $0x7ac] sm:$0x1]
    %v4575 = vperm.slane %v4574, 0
    %4576 = vmatpush.msra.mxu0 0.0
    %4577 = vmatpush.msra.mxu0 0.0
    %4578 = vmatpush.msra.mxu0 0.0
    %4579 = vmatpush.msra.mxu0 0.0
    %4580 = vmatpush.msra.mxu0 0.0
    %4581 = vmatpush.msra.mxu0 0.0
    %4582 = vmatpush.msra.mxu0 0.0
    %4583 = vmatpush.msra.mxu0 0.0
    %4584 = vmatpush.msra.mxu0 0.0
    %4585 = vmatpush.msra.mxu0 0.0
    %4586 = vmatpush.msra.mxu0 0.0
    %4587 = vmatpush.msra.mxu0 0.0
    %4588 = vmatpush.msra.mxu0 %v4573
    %4589 = vmatpush.msra.mxu0 %v4572
    %4590 = vmatpush.msra.mxu0 %v4571
    %4591 = vmatpush.msra.mxu0 %v4570
    %4592 = vmatmul.f32.gmra.mxu0 %v4455
    %v4593 = vpop.f32.mrf.mxu0
    %v4594 = vadd.f32 %v4575, %v4593
    %4595 = vmatmul.f32.gmra.mxu0 %v4458
    %v4596 = vpop.f32.mrf.mxu0
    %v4597 = vadd.f32 %v4575, %v4596
    %4598 = vdwg.mxu0
    %v4599 = vld [vmem:[%s2 + $0x5a0] sm:$0xff]
    %v4600 = vld [vmem:[%s2 + $0x5a8] sm:$0xff]
    %v4601 = vld [vmem:[%s2 + $0x5b0] sm:$0xff]
    %v4602 = vld [vmem:[%s2 + $0x5b8] sm:$0xff]
    %v4603 = vld [vmem:[%s2 + $0x7ad] sm:$0x1]
    %v4604 = vperm.slane %v4603, 0
    %4605 = vmatpush.msra.mxu0 0.0
    %4606 = vmatpush.msra.mxu0 0.0
    %4607 = vmatpush.msra.mxu0 0.0
    %4608 = vmatpush.msra.mxu0 0.0
    %4609 = vmatpush.msra.mxu0 0.0
    %4610 = vmatpush.msra.mxu0 0.0
    %4611 = vmatpush.msra.mxu0 0.0
    %4612 = vmatpush.msra.mxu0 0.0
    %4613 = vmatpush.msra.mxu0 0.0
    %4614 = vmatpush.msra.mxu0 0.0
    %4615 = vmatpush.msra.mxu0 0.0
    %4616 = vmatpush.msra.mxu0 0.0
    %4617 = vmatpush.msra.mxu0 %v4602
    %4618 = vmatpush.msra.mxu0 %v4601
    %4619 = vmatpush.msra.mxu0 %v4600
    %4620 = vmatpush.msra.mxu0 %v4599
    %4621 = vmatmul.f32.gmra.mxu0 %v4455
    %v4622 = vpop.f32.mrf.mxu0
    %v4623 = vadd.f32 %v4604, %v4622
    %4624 = vmatmul.f32.gmra.mxu0 %v4458
    %v4625 = vpop.f32.mrf.mxu0
    %v4626 = vadd.f32 %v4604, %v4625
    %4627 = vdwg.mxu0
    %v4628 = vld [vmem:[%s2 + $0x5c0] sm:$0xff]
    %v4629 = vld [vmem:[%s2 + $0x5c8] sm:$0xff]
    %v4630 = vld [vmem:[%s2 + $0x5d0] sm:$0xff]
    %v4631 = vld [vmem:[%s2 + $0x5d8] sm:$0xff]
    %v4632 = vld [vmem:[%s2 + $0x7ae] sm:$0x1]
    %v4633 = vperm.slane %v4632, 0
    %4634 = vmatpush.msra.mxu0 0.0
    %4635 = vmatpush.msra.mxu0 0.0
    %4636 = vmatpush.msra.mxu0 0.0
    %4637 = vmatpush.msra.mxu0 0.0
    %4638 = vmatpush.msra.mxu0 0.0
    %4639 = vmatpush.msra.mxu0 0.0
    %4640 = vmatpush.msra.mxu0 0.0
    %4641 = vmatpush.msra.mxu0 0.0
    %4642 = vmatpush.msra.mxu0 0.0
    %4643 = vmatpush.msra.mxu0 0.0
    %4644 = vmatpush.msra.mxu0 0.0
    %4645 = vmatpush.msra.mxu0 0.0
    %4646 = vmatpush.msra.mxu0 %v4631
    %4647 = vmatpush.msra.mxu0 %v4630
    %4648 = vmatpush.msra.mxu0 %v4629
    %4649 = vmatpush.msra.mxu0 %v4628
    %4650 = vmatmul.f32.gmra.mxu0 %v4455
    %v4651 = vpop.f32.mrf.mxu0
    %v4652 = vadd.f32 %v4633, %v4651
    %4653 = vmatmul.f32.gmra.mxu0 %v4458
    %v4654 = vpop.f32.mrf.mxu0
    %v4655 = vadd.f32 %v4633, %v4654
    %4656 = vdwg.mxu0
    %v4657 = vld [vmem:[%s2 + $0x5e0] sm:$0xff]
    %v4658 = vld [vmem:[%s2 + $0x5e8] sm:$0xff]
    %v4659 = vld [vmem:[%s2 + $0x5f0] sm:$0xff]
    %v4660 = vld [vmem:[%s2 + $0x5f8] sm:$0xff]
    %v4661 = vld [vmem:[%s2 + $0x7af] sm:$0x1]
    %v4662 = vperm.slane %v4661, 0
    %4663 = vmatpush.msra.mxu0 0.0
    %4664 = vmatpush.msra.mxu0 0.0
    %4665 = vmatpush.msra.mxu0 0.0
    %4666 = vmatpush.msra.mxu0 0.0
    %4667 = vmatpush.msra.mxu0 0.0
    %4668 = vmatpush.msra.mxu0 0.0
    %4669 = vmatpush.msra.mxu0 0.0
    %4670 = vmatpush.msra.mxu0 0.0
    %4671 = vmatpush.msra.mxu0 0.0
    %4672 = vmatpush.msra.mxu0 0.0
    %4673 = vmatpush.msra.mxu0 0.0
    %4674 = vmatpush.msra.mxu0 0.0
    %4675 = vmatpush.msra.mxu0 %v4660
    %4676 = vmatpush.msra.mxu0 %v4659
    %4677 = vmatpush.msra.mxu0 %v4658
    %4678 = vmatpush.msra.mxu0 %v4657
    %4679 = vmatmul.f32.gmra.mxu0 %v4455
    %v4680 = vpop.f32.mrf.mxu0
    %v4681 = vadd.f32 %v4662, %v4680
    %4682 = vmatmul.f32.gmra.mxu0 %v4458
    %v4683 = vpop.f32.mrf.mxu0
    %v4684 = vadd.f32 %v4662, %v4683
    %4685 = vdwg.mxu0
    %v4687 = vsel %vm428, %v4332, 0
    %v4690 = vsel %vm428, %v4335, 0
    %v4693 = vsel %vm428, %v4478, 0
    %4695 = vmatpush.xpose.msra.mxu0 0.0
    %4696 = vmatpush.xpose.msra.mxu0 0.0
    %4697 = vmatpush.xpose.msra.mxu0 0.0
    %4698 = vmatpush.xpose.msra.mxu0 0.0
    %4699 = vmatpush.xpose.msra.mxu0 0.0
    %4700 = vmatpush.xpose.msra.mxu0 0.0
    %4701 = vmatpush.xpose.msra.mxu0 0.0
    %4702 = vmatpush.xpose.msra.mxu0 0.0
    %4703 = vmatpush.xpose.msra.mxu0 0.0
    %4704 = vmatpush.xpose.msra.mxu0 0.0
    %4705 = vmatpush.xpose.msra.mxu0 0.0
    %4706 = vmatpush.xpose.msra.mxu0 0.0
    %4707 = vmatpush.xpose.msra.mxu0 0.0
    %4708 = vmatpush.xpose.msra.mxu0 0.0
    %4709 = vmatpush.xpose.msra.mxu0 0.0
    %4710 = vmatpush.xpose.msra.mxu0 %v4693
    %4711 = vmatmul.f32.gmra.mxu0 %v4687
    %v4712 = vpop.f32.mrf.mxu0
    %v4713 = vadd.f32 0.0, %v4712
    %4714 = vmatmul.f32.gmra.mxu0 %v4690
    %v4715 = vpop.f32.mrf.mxu0
    %v4716 = vadd.f32 0.0, %v4715
    %4717 = vdwg.mxu0
    %v4719 = vsel %vm428, %v4338, 0
    %v4722 = vsel %vm428, %v4341, 0
    %v4725 = vsel %vm428, %v4481, 0
    %4727 = vmatpush.xpose.msra.mxu0 0.0
    %4728 = vmatpush.xpose.msra.mxu0 0.0
    %4729 = vmatpush.xpose.msra.mxu0 0.0
    %4730 = vmatpush.xpose.msra.mxu0 0.0
    %4731 = vmatpush.xpose.msra.mxu0 0.0
    %4732 = vmatpush.xpose.msra.mxu0 0.0
    %4733 = vmatpush.xpose.msra.mxu0 0.0
    %4734 = vmatpush.xpose.msra.mxu0 0.0
    %4735 = vmatpush.xpose.msra.mxu0 0.0
    %4736 = vmatpush.xpose.msra.mxu0 0.0
    %4737 = vmatpush.xpose.msra.mxu0 0.0
    %4738 = vmatpush.xpose.msra.mxu0 0.0
    %4739 = vmatpush.xpose.msra.mxu0 0.0
    %4740 = vmatpush.xpose.msra.mxu0 0.0
    %4741 = vmatpush.xpose.msra.mxu0 0.0
    %4742 = vmatpush.xpose.msra.mxu0 %v4725
    %4743 = vmatmul.f32.gmra.mxu0 %v4719
    %v4744 = vpop.f32.mrf.mxu0
    %v4745 = vadd.f32 0.0, %v4744
    %4746 = vmatmul.f32.gmra.mxu0 %v4722
    %v4747 = vpop.f32.mrf.mxu0
    %v4748 = vadd.f32 0.0, %v4747
    %4749 = vdwg.mxu0
    %v4751 = vsel %vm428, %v4367, 0
    %v4754 = vsel %vm428, %v4370, 0
    %v4757 = vsel %vm428, %v4507, 0
    %4759 = vmatpush.xpose.msra.mxu0 0.0
    %4760 = vmatpush.xpose.msra.mxu0 0.0
    %4761 = vmatpush.xpose.msra.mxu0 0.0
    %4762 = vmatpush.xpose.msra.mxu0 0.0
    %4763 = vmatpush.xpose.msra.mxu0 0.0
    %4764 = vmatpush.xpose.msra.mxu0 0.0
    %4765 = vmatpush.xpose.msra.mxu0 0.0
    %4766 = vmatpush.xpose.msra.mxu0 0.0
    %4767 = vmatpush.xpose.msra.mxu0 0.0
    %4768 = vmatpush.xpose.msra.mxu0 0.0
    %4769 = vmatpush.xpose.msra.mxu0 0.0
    %4770 = vmatpush.xpose.msra.mxu0 0.0
    %4771 = vmatpush.xpose.msra.mxu0 0.0
    %4772 = vmatpush.xpose.msra.mxu0 0.0
    %4773 = vmatpush.xpose.msra.mxu0 0.0
    %4774 = vmatpush.xpose.msra.mxu0 %v4757
    %4775 = vmatmul.f32.gmra.mxu0 %v4751
    %v4776 = vpop.f32.mrf.mxu0
    %v4777 = vadd.f32 0.0, %v4776
    %4778 = vmatmul.f32.gmra.mxu0 %v4754
    %v4779 = vpop.f32.mrf.mxu0
    %v4780 = vadd.f32 0.0, %v4779
    %4781 = vdwg.mxu0
    %v4783 = vsel %vm428, %v4373, 0
    %v4786 = vsel %vm428, %v4376, 0
    %v4789 = vsel %vm428, %v4510, 0
    %4791 = vmatpush.xpose.msra.mxu0 0.0
    %4792 = vmatpush.xpose.msra.mxu0 0.0
    %4793 = vmatpush.xpose.msra.mxu0 0.0
    %4794 = vmatpush.xpose.msra.mxu0 0.0
    %4795 = vmatpush.xpose.msra.mxu0 0.0
    %4796 = vmatpush.xpose.msra.mxu0 0.0
    %4797 = vmatpush.xpose.msra.mxu0 0.0
    %4798 = vmatpush.xpose.msra.mxu0 0.0
    %4799 = vmatpush.xpose.msra.mxu0 0.0
    %4800 = vmatpush.xpose.msra.mxu0 0.0
    %4801 = vmatpush.xpose.msra.mxu0 0.0
    %4802 = vmatpush.xpose.msra.mxu0 0.0
    %4803 = vmatpush.xpose.msra.mxu0 0.0
    %4804 = vmatpush.xpose.msra.mxu0 0.0
    %4805 = vmatpush.xpose.msra.mxu0 0.0
    %4806 = vmatpush.xpose.msra.mxu0 %v4789
    %4807 = vmatmul.f32.gmra.mxu0 %v4783
    %v4808 = vpop.f32.mrf.mxu0
    %v4809 = vadd.f32 0.0, %v4808
    %4810 = vmatmul.f32.gmra.mxu0 %v4786
    %v4811 = vpop.f32.mrf.mxu0
    %v4812 = vadd.f32 0.0, %v4811
    %4813 = vdwg.mxu0
    %v4815 = vsel %vm428, %v4402, 0
    %v4818 = vsel %vm428, %v4405, 0
    %v4821 = vsel %vm428, %v4536, 0
    %4823 = vmatpush.xpose.msra.mxu0 0.0
    %4824 = vmatpush.xpose.msra.mxu0 0.0
    %4825 = vmatpush.xpose.msra.mxu0 0.0
    %4826 = vmatpush.xpose.msra.mxu0 0.0
    %4827 = vmatpush.xpose.msra.mxu0 0.0
    %4828 = vmatpush.xpose.msra.mxu0 0.0
    %4829 = vmatpush.xpose.msra.mxu0 0.0
    %4830 = vmatpush.xpose.msra.mxu0 0.0
    %4831 = vmatpush.xpose.msra.mxu0 0.0
    %4832 = vmatpush.xpose.msra.mxu0 0.0
    %4833 = vmatpush.xpose.msra.mxu0 0.0
    %4834 = vmatpush.xpose.msra.mxu0 0.0
    %4835 = vmatpush.xpose.msra.mxu0 0.0
    %4836 = vmatpush.xpose.msra.mxu0 0.0
    %4837 = vmatpush.xpose.msra.mxu0 0.0
    %4838 = vmatpush.xpose.msra.mxu0 %v4821
    %4839 = vmatmul.f32.gmra.mxu0 %v4815
    %v4840 = vpop.f32.mrf.mxu0
    %v4841 = vadd.f32 0.0, %v4840
    %4842 = vmatmul.f32.gmra.mxu0 %v4818
    %v4843 = vpop.f32.mrf.mxu0
    %v4844 = vadd.f32 0.0, %v4843
    %4845 = vdwg.mxu0
    %v4847 = vsel %vm428, %v4408, 0
    %v4850 = vsel %vm428, %v4411, 0
    %v4853 = vsel %vm428, %v4539, 0
    %4855 = vmatpush.xpose.msra.mxu0 0.0
    %4856 = vmatpush.xpose.msra.mxu0 0.0
    %4857 = vmatpush.xpose.msra.mxu0 0.0
    %4858 = vmatpush.xpose.msra.mxu0 0.0
    %4859 = vmatpush.xpose.msra.mxu0 0.0
    %4860 = vmatpush.xpose.msra.mxu0 0.0
    %4861 = vmatpush.xpose.msra.mxu0 0.0
    %4862 = vmatpush.xpose.msra.mxu0 0.0
    %4863 = vmatpush.xpose.msra.mxu0 0.0
    %4864 = vmatpush.xpose.msra.mxu0 0.0
    %4865 = vmatpush.xpose.msra.mxu0 0.0
    %4866 = vmatpush.xpose.msra.mxu0 0.0
    %4867 = vmatpush.xpose.msra.mxu0 0.0
    %4868 = vmatpush.xpose.msra.mxu0 0.0
    %4869 = vmatpush.xpose.msra.mxu0 0.0
    %4870 = vmatpush.xpose.msra.mxu0 %v4853
    %4871 = vmatmul.f32.gmra.mxu0 %v4847
    %v4872 = vpop.f32.mrf.mxu0
    %v4873 = vadd.f32 0.0, %v4872
    %4874 = vmatmul.f32.gmra.mxu0 %v4850
    %v4875 = vpop.f32.mrf.mxu0
    %v4876 = vadd.f32 0.0, %v4875
    %4877 = vdwg.mxu0
    %v4879 = vsel %vm428, %v4437, 0
    %v4882 = vsel %vm428, %v4440, 0
    %v4885 = vsel %vm428, %v4565, 0
    %4887 = vmatpush.xpose.msra.mxu0 0.0
    %4888 = vmatpush.xpose.msra.mxu0 0.0
    %4889 = vmatpush.xpose.msra.mxu0 0.0
    %4890 = vmatpush.xpose.msra.mxu0 0.0
    %4891 = vmatpush.xpose.msra.mxu0 0.0
    %4892 = vmatpush.xpose.msra.mxu0 0.0
    %4893 = vmatpush.xpose.msra.mxu0 0.0
    %4894 = vmatpush.xpose.msra.mxu0 0.0
    %4895 = vmatpush.xpose.msra.mxu0 0.0
    %4896 = vmatpush.xpose.msra.mxu0 0.0
    %4897 = vmatpush.xpose.msra.mxu0 0.0
    %4898 = vmatpush.xpose.msra.mxu0 0.0
    %4899 = vmatpush.xpose.msra.mxu0 0.0
    %4900 = vmatpush.xpose.msra.mxu0 0.0
    %4901 = vmatpush.xpose.msra.mxu0 0.0
    %4902 = vmatpush.xpose.msra.mxu0 %v4885
    %4903 = vmatmul.f32.gmra.mxu0 %v4879
    %v4904 = vpop.f32.mrf.mxu0
    %v4905 = vadd.f32 0.0, %v4904
    %4906 = vmatmul.f32.gmra.mxu0 %v4882
    %v4907 = vpop.f32.mrf.mxu0
    %v4908 = vadd.f32 0.0, %v4907
    %4909 = vdwg.mxu0
    %v4911 = vsel %vm428, %v4443, 0
    %v4914 = vsel %vm428, %v4446, 0
    %v4917 = vsel %vm428, %v4568, 0
    %4919 = vmatpush.xpose.msra.mxu0 0.0
    %4920 = vmatpush.xpose.msra.mxu0 0.0
    %4921 = vmatpush.xpose.msra.mxu0 0.0
    %4922 = vmatpush.xpose.msra.mxu0 0.0
    %4923 = vmatpush.xpose.msra.mxu0 0.0
    %4924 = vmatpush.xpose.msra.mxu0 0.0
    %4925 = vmatpush.xpose.msra.mxu0 0.0
    %4926 = vmatpush.xpose.msra.mxu0 0.0
    %4927 = vmatpush.xpose.msra.mxu0 0.0
    %4928 = vmatpush.xpose.msra.mxu0 0.0
    %4929 = vmatpush.xpose.msra.mxu0 0.0
    %4930 = vmatpush.xpose.msra.mxu0 0.0
    %4931 = vmatpush.xpose.msra.mxu0 0.0
    %4932 = vmatpush.xpose.msra.mxu0 0.0
    %4933 = vmatpush.xpose.msra.mxu0 0.0
    %4934 = vmatpush.xpose.msra.mxu0 %v4917
    %4935 = vmatmul.f32.gmra.mxu0 %v4911
    %v4936 = vpop.f32.mrf.mxu0
    %v4937 = vadd.f32 0.0, %v4936
    %4938 = vmatmul.f32.gmra.mxu0 %v4914
    %v4939 = vpop.f32.mrf.mxu0
    %v4940 = vadd.f32 0.0, %v4939
    %4941 = vdwg.mxu0
    %v4942 = vsel %vm428, %v4713, -inf
    %4943 = vmax.xlane.f32.xlu0 %v4942
    %v4944 = vpop.xlane.xlu0 %4943
    %v4945 = vsel %vm428, %v4716, -inf
    %4946 = vmax.xlane.f32.xlu0 %v4945
    %v4947 = vpop.xlane.xlu0 %4946
    %v4948 = vsel %vm428, %v4745, -inf
    %4949 = vmax.xlane.f32.xlu0 %v4948
    %v4950 = vpop.xlane.xlu0 %4949
    %v4951 = vsel %vm428, %v4748, -inf
    %4952 = vmax.xlane.f32.xlu0 %v4951
    %v4953 = vpop.xlane.xlu0 %4952
    %v4954 = vsel %vm428, %v4777, -inf
    %4955 = vmax.xlane.f32.xlu0 %v4954
    %v4956 = vpop.xlane.xlu0 %4955
    %v4957 = vsel %vm428, %v4780, -inf
    %4958 = vmax.xlane.f32.xlu0 %v4957
    %v4959 = vpop.xlane.xlu0 %4958
    %v4960 = vsel %vm428, %v4809, -inf
    %4961 = vmax.xlane.f32.xlu0 %v4960
    %v4962 = vpop.xlane.xlu0 %4961
    %v4963 = vsel %vm428, %v4812, -inf
    %4964 = vmax.xlane.f32.xlu0 %v4963
    %v4965 = vpop.xlane.xlu0 %4964
    %v4966 = vsel %vm428, %v4841, -inf
    %4967 = vmax.xlane.f32.xlu0 %v4966
    %v4968 = vpop.xlane.xlu0 %4967
    %v4969 = vsel %vm428, %v4844, -inf
    %4970 = vmax.xlane.f32.xlu0 %v4969
    %v4971 = vpop.xlane.xlu0 %4970
    %v4972 = vsel %vm428, %v4873, -inf
    %4973 = vmax.xlane.f32.xlu0 %v4972
    %v4974 = vpop.xlane.xlu0 %4973
    %v4975 = vsel %vm428, %v4876, -inf
    %4976 = vmax.xlane.f32.xlu0 %v4975
    %v4977 = vpop.xlane.xlu0 %4976
    %v4978 = vsel %vm428, %v4905, -inf
    %4979 = vmax.xlane.f32.xlu0 %v4978
    %v4980 = vpop.xlane.xlu0 %4979
    %v4981 = vsel %vm428, %v4908, -inf
    %4982 = vmax.xlane.f32.xlu0 %v4981
    %v4983 = vpop.xlane.xlu0 %4982
    %v4984 = vsel %vm428, %v4937, -inf
    %4985 = vmax.xlane.f32.xlu0 %v4984
    %v4986 = vpop.xlane.xlu0 %4985
    %v4987 = vsel %vm428, %v4940, -inf
    %4988 = vmax.xlane.f32.xlu0 %v4987
    %v4989 = vpop.xlane.xlu0 %4988
    %v4990 = vsub.f32 %v4713, %v4944
    %v4991 = vsub.f32 %v4716, %v4947
    %v4992 = vsub.f32 %v4745, %v4950
    %v4993 = vsub.f32 %v4748, %v4953
    %v4994 = vsub.f32 %v4777, %v4956
    %v4995 = vsub.f32 %v4780, %v4959
    %v4996 = vsub.f32 %v4809, %v4962
    %v4997 = vsub.f32 %v4812, %v4965
    %v4998 = vsub.f32 %v4841, %v4968
    %v4999 = vsub.f32 %v4844, %v4971
    %v5000 = vsub.f32 %v4873, %v4974
    %v5001 = vsub.f32 %v4876, %v4977
    %v5002 = vsub.f32 %v4905, %v4980
    %v5003 = vsub.f32 %v4908, %v4983
    %v5004 = vsub.f32 %v4937, %v4986
    %v5005 = vsub.f32 %v4940, %v4989
    %v5006 = vmul.f32 %v4990, 1.442695
    %v5007 = vpow.pop %v5006
    %v5008 = vmul.f32 %v4991, 1.442695
    %v5009 = vpow.pop %v5008
    %v5010 = vmul.f32 %v4992, 1.442695
    %v5011 = vpow.pop %v5010
    %v5012 = vmul.f32 %v4993, 1.442695
    %v5013 = vpow.pop %v5012
    %v5014 = vmul.f32 %v4994, 1.442695
    %v5015 = vpow.pop %v5014
    %v5016 = vmul.f32 %v4995, 1.442695
    %v5017 = vpow.pop %v5016
    %v5018 = vmul.f32 %v4996, 1.442695
    %v5019 = vpow.pop %v5018
    %v5020 = vmul.f32 %v4997, 1.442695
    %v5021 = vpow.pop %v5020
    %v5022 = vmul.f32 %v4998, 1.442695
    %v5023 = vpow.pop %v5022
    %v5024 = vmul.f32 %v4999, 1.442695
    %v5025 = vpow.pop %v5024
    %v5026 = vmul.f32 %v5000, 1.442695
    %v5027 = vpow.pop %v5026
    %v5028 = vmul.f32 %v5001, 1.442695
    %v5029 = vpow.pop %v5028
    %v5030 = vmul.f32 %v5002, 1.442695
    %v5031 = vpow.pop %v5030
    %v5032 = vmul.f32 %v5003, 1.442695
    %v5033 = vpow.pop %v5032
    %v5034 = vmul.f32 %v5004, 1.442695
    %v5035 = vpow.pop %v5034
    %v5036 = vmul.f32 %v5005, 1.442695
    %v5037 = vpow.pop %v5036
    %v5038 = vsel %vm428, %v5007, 0.0
    %5039 = vadd.xlane.f32.xlu0 %v5038
    %v5040 = vpop.xlane.xlu0 %5039
    %v5041 = vsel %vm428, %v5009, 0.0
    %5042 = vadd.xlane.f32.xlu0 %v5041
    %v5043 = vpop.xlane.xlu0 %5042
    %v5044 = vsel %vm428, %v5011, 0.0
    %5045 = vadd.xlane.f32.xlu0 %v5044
    %v5046 = vpop.xlane.xlu0 %5045
    %v5047 = vsel %vm428, %v5013, 0.0
    %5048 = vadd.xlane.f32.xlu0 %v5047
    %v5049 = vpop.xlane.xlu0 %5048
    %v5050 = vsel %vm428, %v5015, 0.0
    %5051 = vadd.xlane.f32.xlu0 %v5050
    %v5052 = vpop.xlane.xlu0 %5051
    %v5053 = vsel %vm428, %v5017, 0.0
    %5054 = vadd.xlane.f32.xlu0 %v5053
    %v5055 = vpop.xlane.xlu0 %5054
    %v5056 = vsel %vm428, %v5019, 0.0
    %5057 = vadd.xlane.f32.xlu0 %v5056
    %v5058 = vpop.xlane.xlu0 %5057
    %v5059 = vsel %vm428, %v5021, 0.0
    %5060 = vadd.xlane.f32.xlu0 %v5059
    %v5061 = vpop.xlane.xlu0 %5060
    %v5062 = vsel %vm428, %v5023, 0.0
    %5063 = vadd.xlane.f32.xlu0 %v5062
    %v5064 = vpop.xlane.xlu0 %5063
    %v5065 = vsel %vm428, %v5025, 0.0
    %5066 = vadd.xlane.f32.xlu0 %v5065
    %v5067 = vpop.xlane.xlu0 %5066
    %v5068 = vsel %vm428, %v5027, 0.0
    %5069 = vadd.xlane.f32.xlu0 %v5068
    %v5070 = vpop.xlane.xlu0 %5069
    %v5071 = vsel %vm428, %v5029, 0.0
    %5072 = vadd.xlane.f32.xlu0 %v5071
    %v5073 = vpop.xlane.xlu0 %5072
    %v5074 = vsel %vm428, %v5031, 0.0
    %5075 = vadd.xlane.f32.xlu0 %v5074
    %v5076 = vpop.xlane.xlu0 %5075
    %v5077 = vsel %vm428, %v5033, 0.0
    %5078 = vadd.xlane.f32.xlu0 %v5077
    %v5079 = vpop.xlane.xlu0 %5078
    %v5080 = vsel %vm428, %v5035, 0.0
    %5081 = vadd.xlane.f32.xlu0 %v5080
    %v5082 = vpop.xlane.xlu0 %5081
    %v5083 = vsel %vm428, %v5037, 0.0
    %5084 = vadd.xlane.f32.xlu0 %v5083
    %v5085 = vpop.xlane.xlu0 %5084
    %v5086 = vlog2.pop %v5040
    %v5087 = vmul.f32 %v5086, 0.6931472
    %v5088 = vlog2.pop %v5043
    %v5089 = vmul.f32 %v5088, 0.6931472
    %v5090 = vlog2.pop %v5046
    %v5091 = vmul.f32 %v5090, 0.6931472
    %v5092 = vlog2.pop %v5049
    %v5093 = vmul.f32 %v5092, 0.6931472
    %v5094 = vlog2.pop %v5052
    %v5095 = vmul.f32 %v5094, 0.6931472
    %v5096 = vlog2.pop %v5055
    %v5097 = vmul.f32 %v5096, 0.6931472
    %v5098 = vlog2.pop %v5058
    %v5099 = vmul.f32 %v5098, 0.6931472
    %v5100 = vlog2.pop %v5061
    %v5101 = vmul.f32 %v5100, 0.6931472
    %v5102 = vlog2.pop %v5064
    %v5103 = vmul.f32 %v5102, 0.6931472
    %v5104 = vlog2.pop %v5067
    %v5105 = vmul.f32 %v5104, 0.6931472
    %v5106 = vlog2.pop %v5070
    %v5107 = vmul.f32 %v5106, 0.6931472
    %v5108 = vlog2.pop %v5073
    %v5109 = vmul.f32 %v5108, 0.6931472
    %v5110 = vlog2.pop %v5076
    %v5111 = vmul.f32 %v5110, 0.6931472
    %v5112 = vlog2.pop %v5079
    %v5113 = vmul.f32 %v5112, 0.6931472
    %v5114 = vlog2.pop %v5082
    %v5115 = vmul.f32 %v5114, 0.6931472
    %v5116 = vlog2.pop %v5085
    %v5117 = vmul.f32 %v5116, 0.6931472
    %v5118 = vadd.f32 %v4944, %v5087
    %v5119 = vadd.f32 %v4947, %v5089
    %v5120 = vadd.f32 %v4950, %v5091
    %v5121 = vadd.f32 %v4953, %v5093
    %v5122 = vadd.f32 %v4956, %v5095
    %v5123 = vadd.f32 %v4959, %v5097
    %v5124 = vadd.f32 %v4962, %v5099
    %v5125 = vadd.f32 %v4965, %v5101
    %v5126 = vadd.f32 %v4968, %v5103
    %v5127 = vadd.f32 %v4971, %v5105
    %v5128 = vadd.f32 %v4974, %v5107
    %v5129 = vadd.f32 %v4977, %v5109
    %v5130 = vadd.f32 %v4980, %v5111
    %v5131 = vadd.f32 %v4983, %v5113
    %v5132 = vadd.f32 %v4986, %v5115
    %v5133 = vadd.f32 %v4989, %v5117
    %v5134 = vsub.f32 -2.7725885, %v5118
    %v5135 = vsub.f32 -2.7725885, %v5119
    %v5136 = vsub.f32 -2.7725885, %v5120
    %v5137 = vsub.f32 -2.7725885, %v5121
    %v5138 = vsub.f32 -2.7725885, %v5122
    %v5139 = vsub.f32 -2.7725885, %v5123
    %v5140 = vsub.f32 -2.7725885, %v5124
    %v5141 = vsub.f32 -2.7725885, %v5125
    %v5142 = vsub.f32 -2.7725885, %v5126
    %v5143 = vsub.f32 -2.7725885, %v5127
    %v5144 = vsub.f32 -2.7725885, %v5128
    %v5145 = vsub.f32 -2.7725885, %v5129
    %v5146 = vsub.f32 -2.7725885, %v5130
    %v5147 = vsub.f32 -2.7725885, %v5131
    %v5148 = vsub.f32 -2.7725885, %v5132
    %v5149 = vsub.f32 -2.7725885, %v5133
    %v5150 = vadd.f32 %v4713, %v5134
    %v5151 = vadd.f32 %v4716, %v5135
    %v5152 = vadd.f32 %v4745, %v5136
    %v5153 = vadd.f32 %v4748, %v5137
    %v5154 = vadd.f32 %v4777, %v5138
    %v5155 = vadd.f32 %v4780, %v5139
    %v5156 = vadd.f32 %v4809, %v5140
    %v5157 = vadd.f32 %v4812, %v5141
    %v5158 = vadd.f32 %v4841, %v5142
    %v5159 = vadd.f32 %v4844, %v5143
    %v5160 = vadd.f32 %v4873, %v5144
    %v5161 = vadd.f32 %v4876, %v5145
    %v5162 = vadd.f32 %v4905, %v5146
    %v5163 = vadd.f32 %v4908, %v5147
    %v5164 = vadd.f32 %v4937, %v5148
    %v5165 = vadd.f32 %v4940, %v5149
    %v5166 = vsel %vm428, %v5150, -inf
    %v5167 = vsel %vm428, %v5151, -inf
    %v5168 = vmax.f32 %v5166, %v5167
    %v5169 = vrot.slane %v5168, 4
    %v5170 = vmax.f32 %v5168, %v5169
    %v5171 = vrot.slane %v5170, 2
    %v5172 = vmax.f32 %v5170, %v5171
    %v5173 = vrot.slane %v5172, 1
    %v5174 = vmax.f32 %v5172, %v5173
    %v5175 = vsel %vm428, %v5152, -inf
    %v5176 = vsel %vm428, %v5153, -inf
    %v5177 = vmax.f32 %v5175, %v5176
    %v5178 = vrot.slane %v5177, 4
    %v5179 = vmax.f32 %v5177, %v5178
    %v5180 = vrot.slane %v5179, 2
    %v5181 = vmax.f32 %v5179, %v5180
    %v5182 = vrot.slane %v5181, 1
    %v5183 = vmax.f32 %v5181, %v5182
    %v5184 = vsel %vm428, %v5154, -inf
    %v5185 = vsel %vm428, %v5155, -inf
    %v5186 = vmax.f32 %v5184, %v5185
    %v5187 = vrot.slane %v5186, 4
    %v5188 = vmax.f32 %v5186, %v5187
    %v5189 = vrot.slane %v5188, 2
    %v5190 = vmax.f32 %v5188, %v5189
    %v5191 = vrot.slane %v5190, 1
    %v5192 = vmax.f32 %v5190, %v5191
    %v5193 = vsel %vm428, %v5156, -inf
    %v5194 = vsel %vm428, %v5157, -inf
    %v5195 = vmax.f32 %v5193, %v5194
    %v5196 = vrot.slane %v5195, 4
    %v5197 = vmax.f32 %v5195, %v5196
    %v5198 = vrot.slane %v5197, 2
    %v5199 = vmax.f32 %v5197, %v5198
    %v5200 = vrot.slane %v5199, 1
    %v5201 = vmax.f32 %v5199, %v5200
    %v5202 = vsel %vm428, %v5158, -inf
    %v5203 = vsel %vm428, %v5159, -inf
    %v5204 = vmax.f32 %v5202, %v5203
    %v5205 = vrot.slane %v5204, 4
    %v5206 = vmax.f32 %v5204, %v5205
    %v5207 = vrot.slane %v5206, 2
    %v5208 = vmax.f32 %v5206, %v5207
    %v5209 = vrot.slane %v5208, 1
    %v5210 = vmax.f32 %v5208, %v5209
    %v5211 = vsel %vm428, %v5160, -inf
    %v5212 = vsel %vm428, %v5161, -inf
    %v5213 = vmax.f32 %v5211, %v5212
    %v5214 = vrot.slane %v5213, 4
    %v5215 = vmax.f32 %v5213, %v5214
    %v5216 = vrot.slane %v5215, 2
    %v5217 = vmax.f32 %v5215, %v5216
    %v5218 = vrot.slane %v5217, 1
    %v5219 = vmax.f32 %v5217, %v5218
    %v5220 = vsel %vm428, %v5162, -inf
    %v5221 = vsel %vm428, %v5163, -inf
    %v5222 = vmax.f32 %v5220, %v5221
    %v5223 = vrot.slane %v5222, 4
    %v5224 = vmax.f32 %v5222, %v5223
    %v5225 = vrot.slane %v5224, 2
    %v5226 = vmax.f32 %v5224, %v5225
    %v5227 = vrot.slane %v5226, 1
    %v5228 = vmax.f32 %v5226, %v5227
    %v5229 = vsel %vm428, %v5164, -inf
    %v5230 = vsel %vm428, %v5165, -inf
    %v5231 = vmax.f32 %v5229, %v5230
    %v5232 = vrot.slane %v5231, 4
    %v5233 = vmax.f32 %v5231, %v5232
    %v5234 = vrot.slane %v5233, 2
    %v5235 = vmax.f32 %v5233, %v5234
    %v5236 = vrot.slane %v5235, 1
    %v5237 = vmax.f32 %v5235, %v5236
    %v5238 = vsub.f32 %v5150, %v5174
    %v5239 = vsub.f32 %v5151, %v5174
    %v5240 = vsub.f32 %v5152, %v5183
    %v5241 = vsub.f32 %v5153, %v5183
    %v5242 = vsub.f32 %v5154, %v5192
    %v5243 = vsub.f32 %v5155, %v5192
    %v5244 = vsub.f32 %v5156, %v5201
    %v5245 = vsub.f32 %v5157, %v5201
    %v5246 = vsub.f32 %v5158, %v5210
    %v5247 = vsub.f32 %v5159, %v5210
    %v5248 = vsub.f32 %v5160, %v5219
    %v5249 = vsub.f32 %v5161, %v5219
    %v5250 = vsub.f32 %v5162, %v5228
    %v5251 = vsub.f32 %v5163, %v5228
    %v5252 = vsub.f32 %v5164, %v5237
    %v5253 = vsub.f32 %v5165, %v5237
    %v5254 = vmul.f32 %v5238, 1.442695
    %v5255 = vpow.pop %v5254
    %v5256 = vmul.f32 %v5239, 1.442695
    %v5257 = vpow.pop %v5256
    %v5258 = vmul.f32 %v5240, 1.442695
    %v5259 = vpow.pop %v5258
    %v5260 = vmul.f32 %v5241, 1.442695
    %v5261 = vpow.pop %v5260
    %v5262 = vmul.f32 %v5242, 1.442695
    %v5263 = vpow.pop %v5262
    %v5264 = vmul.f32 %v5243, 1.442695
    %v5265 = vpow.pop %v5264
    %v5266 = vmul.f32 %v5244, 1.442695
    %v5267 = vpow.pop %v5266
    %v5268 = vmul.f32 %v5245, 1.442695
    %v5269 = vpow.pop %v5268
    %v5270 = vmul.f32 %v5246, 1.442695
    %v5271 = vpow.pop %v5270
    %v5272 = vmul.f32 %v5247, 1.442695
    %v5273 = vpow.pop %v5272
    %v5274 = vmul.f32 %v5248, 1.442695
    %v5275 = vpow.pop %v5274
    %v5276 = vmul.f32 %v5249, 1.442695
    %v5277 = vpow.pop %v5276
    %v5278 = vmul.f32 %v5250, 1.442695
    %v5279 = vpow.pop %v5278
    %v5280 = vmul.f32 %v5251, 1.442695
    %v5281 = vpow.pop %v5280
    %v5282 = vmul.f32 %v5252, 1.442695
    %v5283 = vpow.pop %v5282
    %v5284 = vmul.f32 %v5253, 1.442695
    %v5285 = vpow.pop %v5284
    %v5286 = vsel %vm428, %v5255, 0.0
    %v5287 = vsel %vm428, %v5257, 0.0
    %v5288 = vadd.f32 %v5286, %v5287
    %v5289 = vrot.slane %v5288, 4
    %v5290 = vadd.f32 %v5288, %v5289
    %v5291 = vrot.slane %v5290, 2
    %v5292 = vadd.f32 %v5290, %v5291
    %v5293 = vrot.slane %v5292, 1
    %v5294 = vadd.f32 %v5292, %v5293
    %v5295 = vsel %vm428, %v5259, 0.0
    %v5296 = vsel %vm428, %v5261, 0.0
    %v5297 = vadd.f32 %v5295, %v5296
    %v5298 = vrot.slane %v5297, 4
    %v5299 = vadd.f32 %v5297, %v5298
    %v5300 = vrot.slane %v5299, 2
    %v5301 = vadd.f32 %v5299, %v5300
    %v5302 = vrot.slane %v5301, 1
    %v5303 = vadd.f32 %v5301, %v5302
    %v5304 = vsel %vm428, %v5263, 0.0
    %v5305 = vsel %vm428, %v5265, 0.0
    %v5306 = vadd.f32 %v5304, %v5305
    %v5307 = vrot.slane %v5306, 4
    %v5308 = vadd.f32 %v5306, %v5307
    %v5309 = vrot.slane %v5308, 2
    %v5310 = vadd.f32 %v5308, %v5309
    %v5311 = vrot.slane %v5310, 1
    %v5312 = vadd.f32 %v5310, %v5311
    %v5313 = vsel %vm428, %v5267, 0.0
    %v5314 = vsel %vm428, %v5269, 0.0
    %v5315 = vadd.f32 %v5313, %v5314
    %v5316 = vrot.slane %v5315, 4
    %v5317 = vadd.f32 %v5315, %v5316
    %v5318 = vrot.slane %v5317, 2
    %v5319 = vadd.f32 %v5317, %v5318
    %v5320 = vrot.slane %v5319, 1
    %v5321 = vadd.f32 %v5319, %v5320
    %v5322 = vsel %vm428, %v5271, 0.0
    %v5323 = vsel %vm428, %v5273, 0.0
    %v5324 = vadd.f32 %v5322, %v5323
    %v5325 = vrot.slane %v5324, 4
    %v5326 = vadd.f32 %v5324, %v5325
    %v5327 = vrot.slane %v5326, 2
    %v5328 = vadd.f32 %v5326, %v5327
    %v5329 = vrot.slane %v5328, 1
    %v5330 = vadd.f32 %v5328, %v5329
    %v5331 = vsel %vm428, %v5275, 0.0
    %v5332 = vsel %vm428, %v5277, 0.0
    %v5333 = vadd.f32 %v5331, %v5332
    %v5334 = vrot.slane %v5333, 4
    %v5335 = vadd.f32 %v5333, %v5334
    %v5336 = vrot.slane %v5335, 2
    %v5337 = vadd.f32 %v5335, %v5336
    %v5338 = vrot.slane %v5337, 1
    %v5339 = vadd.f32 %v5337, %v5338
    %v5340 = vsel %vm428, %v5279, 0.0
    %v5341 = vsel %vm428, %v5281, 0.0
    %v5342 = vadd.f32 %v5340, %v5341
    %v5343 = vrot.slane %v5342, 4
    %v5344 = vadd.f32 %v5342, %v5343
    %v5345 = vrot.slane %v5344, 2
    %v5346 = vadd.f32 %v5344, %v5345
    %v5347 = vrot.slane %v5346, 1
    %v5348 = vadd.f32 %v5346, %v5347
    %v5349 = vsel %vm428, %v5283, 0.0
    %v5350 = vsel %vm428, %v5285, 0.0
    %v5351 = vadd.f32 %v5349, %v5350
    %v5352 = vrot.slane %v5351, 4
    %v5353 = vadd.f32 %v5351, %v5352
    %v5354 = vrot.slane %v5353, 2
    %v5355 = vadd.f32 %v5353, %v5354
    %v5356 = vrot.slane %v5355, 1
    %v5357 = vadd.f32 %v5355, %v5356
    %v5358 = vlog2.pop %v5294
    %v5359 = vmul.f32 %v5358, 0.6931472
    %v5360 = vlog2.pop %v5303
    %v5361 = vmul.f32 %v5360, 0.6931472
    %v5362 = vlog2.pop %v5312
    %v5363 = vmul.f32 %v5362, 0.6931472
    %v5364 = vlog2.pop %v5321
    %v5365 = vmul.f32 %v5364, 0.6931472
    %v5366 = vlog2.pop %v5330
    %v5367 = vmul.f32 %v5366, 0.6931472
    %v5368 = vlog2.pop %v5339
    %v5369 = vmul.f32 %v5368, 0.6931472
    %v5370 = vlog2.pop %v5348
    %v5371 = vmul.f32 %v5370, 0.6931472
    %v5372 = vlog2.pop %v5357
    %v5373 = vmul.f32 %v5372, 0.6931472
    %v5374 = vadd.f32 %v5174, %v5359
    %v5375 = vadd.f32 %v5183, %v5361
    %v5376 = vadd.f32 %v5192, %v5363
    %v5377 = vadd.f32 %v5201, %v5365
    %v5378 = vadd.f32 %v5210, %v5367
    %v5379 = vadd.f32 %v5219, %v5369
    %v5380 = vadd.f32 %v5228, %v5371
    %v5381 = vadd.f32 %v5237, %v5373
    %v5382 = vsub.f32 0.69314724, %v5374
    %v5383 = vsub.f32 0.69314724, %v5375
    %v5384 = vsub.f32 0.69314724, %v5376
    %v5385 = vsub.f32 0.69314724, %v5377
    %v5386 = vsub.f32 0.69314724, %v5378
    %v5387 = vsub.f32 0.69314724, %v5379
    %v5388 = vsub.f32 0.69314724, %v5380
    %v5389 = vsub.f32 0.69314724, %v5381
    %v5390 = vadd.f32 %v5150, %v5382
    %v5391 = vadd.f32 %v5151, %v5382
    %v5392 = vadd.f32 %v5152, %v5383
    %v5393 = vadd.f32 %v5153, %v5383
    %v5394 = vadd.f32 %v5154, %v5384
    %v5395 = vadd.f32 %v5155, %v5384
    %v5396 = vadd.f32 %v5156, %v5385
    %v5397 = vadd.f32 %v5157, %v5385
    %v5398 = vadd.f32 %v5158, %v5386
    %v5399 = vadd.f32 %v5159, %v5386
    %v5400 = vadd.f32 %v5160, %v5387
    %v5401 = vadd.f32 %v5161, %v5387
    %v5402 = vadd.f32 %v5162, %v5388
    %v5403 = vadd.f32 %v5163, %v5388
    %v5404 = vadd.f32 %v5164, %v5389
    %v5405 = vadd.f32 %v5165, %v5389
    %v5406 = vmul.f32 %v5390, 1.442695
    %v5407 = vpow.pop %v5406
    %v5408 = vmul.f32 %v5391, 1.442695
    %v5409 = vpow.pop %v5408
    %v5410 = vmul.f32 %v5392, 1.442695
    %v5411 = vpow.pop %v5410
    %v5412 = vmul.f32 %v5393, 1.442695
    %v5413 = vpow.pop %v5412
    %v5414 = vmul.f32 %v5394, 1.442695
    %v5415 = vpow.pop %v5414
    %v5416 = vmul.f32 %v5395, 1.442695
    %v5417 = vpow.pop %v5416
    %v5418 = vmul.f32 %v5396, 1.442695
    %v5419 = vpow.pop %v5418
    %v5420 = vmul.f32 %v5397, 1.442695
    %v5421 = vpow.pop %v5420
    %v5422 = vmul.f32 %v5398, 1.442695
    %v5423 = vpow.pop %v5422
    %v5424 = vmul.f32 %v5399, 1.442695
    %v5425 = vpow.pop %v5424
    %v5426 = vmul.f32 %v5400, 1.442695
    %v5427 = vpow.pop %v5426
    %v5428 = vmul.f32 %v5401, 1.442695
    %v5429 = vpow.pop %v5428
    %v5430 = vmul.f32 %v5402, 1.442695
    %v5431 = vpow.pop %v5430
    %v5432 = vmul.f32 %v5403, 1.442695
    %v5433 = vpow.pop %v5432
    %v5434 = vmul.f32 %v5404, 1.442695
    %v5435 = vpow.pop %v5434
    %v5436 = vmul.f32 %v5405, 1.442695
    %v5437 = vpow.pop %v5436
    %v5439 = vsel %vm428, %v5407, 0
    %v5442 = vsel %vm428, %v5409, 0
    %5444 = vmatpush.msra.mxu0 0.0
    %5445 = vmatpush.msra.mxu0 0.0
    %5446 = vmatpush.msra.mxu0 0.0
    %5447 = vmatpush.msra.mxu0 0.0
    %5448 = vmatpush.msra.mxu0 0.0
    %5449 = vmatpush.msra.mxu0 0.0
    %5450 = vmatpush.msra.mxu0 0.0
    %5451 = vmatpush.msra.mxu0 0.0
    %5452 = vmatpush.msra.mxu0 0.0
    %5453 = vmatpush.msra.mxu0 0.0
    %5454 = vmatpush.msra.mxu0 0.0
    %5455 = vmatpush.msra.mxu0 0.0
    %5456 = vmatpush.msra.mxu0 0.0
    %5457 = vmatpush.msra.mxu0 0.0
    %5458 = vmatpush.msra.mxu0 0.0
    %5459 = vmatpush.msra.mxu0 %v4594
    %5460 = vmatmul.f32.gmra.mxu0 %v5439
    %v5461 = vpop.f32.mrf.mxu0
    %v5462 = vadd.f32 0.0, %v5461
    %5463 = vmatmul.f32.gmra.mxu0 %v5442
    %v5464 = vpop.f32.mrf.mxu0
    %v5465 = vadd.f32 0.0, %v5464
    %5466 = vdwg.mxu0
    %v5468 = vsel %vm428, %v5411, 0
    %v5471 = vsel %vm428, %v5413, 0
    %5473 = vmatpush.msra.mxu0 0.0
    %5474 = vmatpush.msra.mxu0 0.0
    %5475 = vmatpush.msra.mxu0 0.0
    %5476 = vmatpush.msra.mxu0 0.0
    %5477 = vmatpush.msra.mxu0 0.0
    %5478 = vmatpush.msra.mxu0 0.0
    %5479 = vmatpush.msra.mxu0 0.0
    %5480 = vmatpush.msra.mxu0 0.0
    %5481 = vmatpush.msra.mxu0 0.0
    %5482 = vmatpush.msra.mxu0 0.0
    %5483 = vmatpush.msra.mxu0 0.0
    %5484 = vmatpush.msra.mxu0 0.0
    %5485 = vmatpush.msra.mxu0 0.0
    %5486 = vmatpush.msra.mxu0 0.0
    %5487 = vmatpush.msra.mxu0 0.0
    %5488 = vmatpush.msra.mxu0 %v4597
    %5489 = vmatmul.f32.gmra.mxu0 %v5468
    %v5490 = vpop.f32.mrf.mxu0
    %v5491 = vadd.f32 0.0, %v5490
    %5492 = vmatmul.f32.gmra.mxu0 %v5471
    %v5493 = vpop.f32.mrf.mxu0
    %v5494 = vadd.f32 0.0, %v5493
    %5495 = vdwg.mxu0
    %v5497 = vsel %vm428, %v5415, 0
    %v5500 = vsel %vm428, %v5417, 0
    %5502 = vmatpush.msra.mxu0 0.0
    %5503 = vmatpush.msra.mxu0 0.0
    %5504 = vmatpush.msra.mxu0 0.0
    %5505 = vmatpush.msra.mxu0 0.0
    %5506 = vmatpush.msra.mxu0 0.0
    %5507 = vmatpush.msra.mxu0 0.0
    %5508 = vmatpush.msra.mxu0 0.0
    %5509 = vmatpush.msra.mxu0 0.0
    %5510 = vmatpush.msra.mxu0 0.0
    %5511 = vmatpush.msra.mxu0 0.0
    %5512 = vmatpush.msra.mxu0 0.0
    %5513 = vmatpush.msra.mxu0 0.0
    %5514 = vmatpush.msra.mxu0 0.0
    %5515 = vmatpush.msra.mxu0 0.0
    %5516 = vmatpush.msra.mxu0 0.0
    %5517 = vmatpush.msra.mxu0 %v4623
    %5518 = vmatmul.f32.gmra.mxu0 %v5497
    %v5519 = vpop.f32.mrf.mxu0
    %v5520 = vadd.f32 0.0, %v5519
    %5521 = vmatmul.f32.gmra.mxu0 %v5500
    %v5522 = vpop.f32.mrf.mxu0
    %v5523 = vadd.f32 0.0, %v5522
    %5524 = vdwg.mxu0
    %v5526 = vsel %vm428, %v5419, 0
    %v5529 = vsel %vm428, %v5421, 0
    %5531 = vmatpush.msra.mxu0 0.0
    %5532 = vmatpush.msra.mxu0 0.0
    %5533 = vmatpush.msra.mxu0 0.0
    %5534 = vmatpush.msra.mxu0 0.0
    %5535 = vmatpush.msra.mxu0 0.0
    %5536 = vmatpush.msra.mxu0 0.0
    %5537 = vmatpush.msra.mxu0 0.0
    %5538 = vmatpush.msra.mxu0 0.0
    %5539 = vmatpush.msra.mxu0 0.0
    %5540 = vmatpush.msra.mxu0 0.0
    %5541 = vmatpush.msra.mxu0 0.0
    %5542 = vmatpush.msra.mxu0 0.0
    %5543 = vmatpush.msra.mxu0 0.0
    %5544 = vmatpush.msra.mxu0 0.0
    %5545 = vmatpush.msra.mxu0 0.0
    %5546 = vmatpush.msra.mxu0 %v4626
    %5547 = vmatmul.f32.gmra.mxu0 %v5526
    %v5548 = vpop.f32.mrf.mxu0
    %v5549 = vadd.f32 0.0, %v5548
    %5550 = vmatmul.f32.gmra.mxu0 %v5529
    %v5551 = vpop.f32.mrf.mxu0
    %v5552 = vadd.f32 0.0, %v5551
    %5553 = vdwg.mxu0
    %v5555 = vsel %vm428, %v5423, 0
    %v5558 = vsel %vm428, %v5425, 0
    %5560 = vmatpush.msra.mxu0 0.0
    %5561 = vmatpush.msra.mxu0 0.0
    %5562 = vmatpush.msra.mxu0 0.0
    %5563 = vmatpush.msra.mxu0 0.0
    %5564 = vmatpush.msra.mxu0 0.0
    %5565 = vmatpush.msra.mxu0 0.0
    %5566 = vmatpush.msra.mxu0 0.0
    %5567 = vmatpush.msra.mxu0 0.0
    %5568 = vmatpush.msra.mxu0 0.0
    %5569 = vmatpush.msra.mxu0 0.0
    %5570 = vmatpush.msra.mxu0 0.0
    %5571 = vmatpush.msra.mxu0 0.0
    %5572 = vmatpush.msra.mxu0 0.0
    %5573 = vmatpush.msra.mxu0 0.0
    %5574 = vmatpush.msra.mxu0 0.0
    %5575 = vmatpush.msra.mxu0 %v4652
    %5576 = vmatmul.f32.gmra.mxu0 %v5555
    %v5577 = vpop.f32.mrf.mxu0
    %v5578 = vadd.f32 0.0, %v5577
    %5579 = vmatmul.f32.gmra.mxu0 %v5558
    %v5580 = vpop.f32.mrf.mxu0
    %v5581 = vadd.f32 0.0, %v5580
    %5582 = vdwg.mxu0
    %v5584 = vsel %vm428, %v5427, 0
    %v5587 = vsel %vm428, %v5429, 0
    %5589 = vmatpush.msra.mxu0 0.0
    %5590 = vmatpush.msra.mxu0 0.0
    %5591 = vmatpush.msra.mxu0 0.0
    %5592 = vmatpush.msra.mxu0 0.0
    %5593 = vmatpush.msra.mxu0 0.0
    %5594 = vmatpush.msra.mxu0 0.0
    %5595 = vmatpush.msra.mxu0 0.0
    %5596 = vmatpush.msra.mxu0 0.0
    %5597 = vmatpush.msra.mxu0 0.0
    %5598 = vmatpush.msra.mxu0 0.0
    %5599 = vmatpush.msra.mxu0 0.0
    %5600 = vmatpush.msra.mxu0 0.0
    %5601 = vmatpush.msra.mxu0 0.0
    %5602 = vmatpush.msra.mxu0 0.0
    %5603 = vmatpush.msra.mxu0 0.0
    %5604 = vmatpush.msra.mxu0 %v4655
    %5605 = vmatmul.f32.gmra.mxu0 %v5584
    %v5606 = vpop.f32.mrf.mxu0
    %v5607 = vadd.f32 0.0, %v5606
    %5608 = vmatmul.f32.gmra.mxu0 %v5587
    %v5609 = vpop.f32.mrf.mxu0
    %v5610 = vadd.f32 0.0, %v5609
    %5611 = vdwg.mxu0
    %v5613 = vsel %vm428, %v5431, 0
    %v5616 = vsel %vm428, %v5433, 0
    %5618 = vmatpush.msra.mxu0 0.0
    %5619 = vmatpush.msra.mxu0 0.0
    %5620 = vmatpush.msra.mxu0 0.0
    %5621 = vmatpush.msra.mxu0 0.0
    %5622 = vmatpush.msra.mxu0 0.0
    %5623 = vmatpush.msra.mxu0 0.0
    %5624 = vmatpush.msra.mxu0 0.0
    %5625 = vmatpush.msra.mxu0 0.0
    %5626 = vmatpush.msra.mxu0 0.0
    %5627 = vmatpush.msra.mxu0 0.0
    %5628 = vmatpush.msra.mxu0 0.0
    %5629 = vmatpush.msra.mxu0 0.0
    %5630 = vmatpush.msra.mxu0 0.0
    %5631 = vmatpush.msra.mxu0 0.0
    %5632 = vmatpush.msra.mxu0 0.0
    %5633 = vmatpush.msra.mxu0 %v4681
    %5634 = vmatmul.f32.gmra.mxu0 %v5613
    %v5635 = vpop.f32.mrf.mxu0
    %v5636 = vadd.f32 0.0, %v5635
    %5637 = vmatmul.f32.gmra.mxu0 %v5616
    %v5638 = vpop.f32.mrf.mxu0
    %v5639 = vadd.f32 0.0, %v5638
    %5640 = vdwg.mxu0
    %v5642 = vsel %vm428, %v5435, 0
    %v5645 = vsel %vm428, %v5437, 0
    %5647 = vmatpush.msra.mxu0 0.0
    %5648 = vmatpush.msra.mxu0 0.0
    %5649 = vmatpush.msra.mxu0 0.0
    %5650 = vmatpush.msra.mxu0 0.0
    %5651 = vmatpush.msra.mxu0 0.0
    %5652 = vmatpush.msra.mxu0 0.0
    %5653 = vmatpush.msra.mxu0 0.0
    %5654 = vmatpush.msra.mxu0 0.0
    %5655 = vmatpush.msra.mxu0 0.0
    %5656 = vmatpush.msra.mxu0 0.0
    %5657 = vmatpush.msra.mxu0 0.0
    %5658 = vmatpush.msra.mxu0 0.0
    %5659 = vmatpush.msra.mxu0 0.0
    %5660 = vmatpush.msra.mxu0 0.0
    %5661 = vmatpush.msra.mxu0 0.0
    %5662 = vmatpush.msra.mxu0 %v4684
    %5663 = vmatmul.f32.gmra.mxu0 %v5642
    %v5664 = vpop.f32.mrf.mxu0
    %v5665 = vadd.f32 0.0, %v5664
    %5666 = vmatmul.f32.gmra.mxu0 %v5645
    %v5667 = vpop.f32.mrf.mxu0
    %v5668 = vadd.f32 0.0, %v5667
    %5669 = vdwg.mxu0
    %v5670 = vadd.f32 %v4332, %v5462
    %v5671 = vadd.f32 %v4335, %v5465
    %v5672 = vadd.f32 %v4338, %v5491
    %v5673 = vadd.f32 %v4341, %v5494
    %v5674 = vadd.f32 %v4367, %v5520
    %v5675 = vadd.f32 %v4370, %v5523
    %v5676 = vadd.f32 %v4373, %v5549
    %v5677 = vadd.f32 %v4376, %v5552
    %v5678 = vadd.f32 %v4402, %v5578
    %v5679 = vadd.f32 %v4405, %v5581
    %v5680 = vadd.f32 %v4408, %v5607
    %v5681 = vadd.f32 %v4411, %v5610
    %v5682 = vadd.f32 %v4437, %v5636
    %v5683 = vadd.f32 %v4440, %v5639
    %v5684 = vadd.f32 %v4443, %v5665
    %v5685 = vadd.f32 %v4446, %v5668
    %5690 = vrot.lane.b32.xlu0 %v5674, 8
    %v5691 = vpop.permute.xlu0 %5690
    %5692 = vrot.lane.b32.xlu0 %v5675, 8
    %v5693 = vpop.permute.xlu0 %5692
    %5694 = vrot.lane.b32.xlu0 %v5676, 8
    %v5695 = vpop.permute.xlu0 %5694
    %5696 = vrot.lane.b32.xlu0 %v5677, 8
    %v5697 = vpop.permute.xlu0 %5696
    %5706 = vrot.lane.b32.xlu0 %v5678, 16
    %v5707 = vpop.permute.xlu0 %5706
    %5708 = vrot.lane.b32.xlu0 %v5679, 16
    %v5709 = vpop.permute.xlu0 %5708
    %5710 = vrot.lane.b32.xlu0 %v5680, 16
    %v5711 = vpop.permute.xlu0 %5710
    %5712 = vrot.lane.b32.xlu0 %v5681, 16
    %v5713 = vpop.permute.xlu0 %5712
    %5722 = vrot.lane.b32.xlu0 %v5682, 24
    %v5723 = vpop.permute.xlu0 %5722
    %5724 = vrot.lane.b32.xlu0 %v5683, 24
    %v5725 = vpop.permute.xlu0 %5724
    %5726 = vrot.lane.b32.xlu0 %v5684, 24
    %v5727 = vpop.permute.xlu0 %5726
    %5728 = vrot.lane.b32.xlu0 %v5685, 24
    %v5729 = vpop.permute.xlu0 %5728
    %v5734 = vsel %vm428, %v5670, %v5691
    %v5735 = vsel %vm428, %v5671, %v5693
    %v5736 = vsel %vm428, %v5672, %v5695
    %v5737 = vsel %vm428, %v5673, %v5697
    %v5738 = vsel %vm649, %v5734, %v5707
    %v5739 = vsel %vm649, %v5735, %v5709
    %v5740 = vsel %vm649, %v5736, %v5711
    %v5741 = vsel %vm649, %v5737, %v5713
    %v5742 = vsel %vm1174, %v5738, %v5723
    %v5743 = vsel %vm1174, %v5739, %v5725
    %v5744 = vsel %vm1174, %v5740, %v5727
    %v5745 = vsel %vm1174, %v5741, %v5729
    %v5746 = vld [vmem:[%s3 + $0x78] sm:$0xff]
    %v5747 = vld [vmem:[%s3 + $0x80] sm:$0xff]
    %v5748 = vld [vmem:[%s3 + $0x88] sm:$0xff]
    %v5749 = vld [vmem:[%s3 + $0x90] sm:$0xff]
    %v5750 = vld [vmem:[%s3 + $0x98] sm:$0x1]
    %v5751 = vld [vmem:[%s3 + $0x99] sm:$0x1]
    %v5752 = vld [vmem:[%s3 + $0x9a] sm:$0x1]
    %v5753 = vld [vmem:[%s3 + $0x9b] sm:$0x1]
    %v5754 = vld [vmem:[%s3 + $0x9c] sm:$0x1]
    %v5755 = vsel %vm34, %v5742, 0.0
    %5756 = vadd.xlane.f32.xlu0 %v5755
    %v5757 = vpop.xlane.xlu0 %5756
    %v5758 = vsel %vm34, %v5743, 0.0
    %5759 = vadd.xlane.f32.xlu0 %v5758
    %v5760 = vpop.xlane.xlu0 %5759
    %v5761 = vsel %vm34, %v5744, 0.0
    %5762 = vadd.xlane.f32.xlu0 %v5761
    %v5763 = vpop.xlane.xlu0 %5762
    %v5764 = vsel %vm34, %v5745, 0.0
    %5765 = vadd.xlane.f32.xlu0 %v5764
    %v5766 = vpop.xlane.xlu0 %5765
    %v5767 = vmul.f32 %v5757, %v1198
    %v5768 = vmul.f32 %v5760, %v1198
    %v5769 = vmul.f32 %v5763, %v1198
    %v5770 = vmul.f32 %v5766, %v1198
    %v5771 = vsub.f32 %v5742, %v5767
    %v5772 = vsub.f32 %v5743, %v5768
    %v5773 = vsub.f32 %v5744, %v5769
    %v5774 = vsub.f32 %v5745, %v5770
    %v5775 = vmul.f32 %v5771, %v5771
    %v5776 = vmul.f32 %v5772, %v5772
    %v5777 = vmul.f32 %v5773, %v5773
    %v5778 = vmul.f32 %v5774, %v5774
    %v5779 = vsel %vm34, %v5775, 0.0
    %5780 = vadd.xlane.f32.xlu0 %v5779
    %v5781 = vpop.xlane.xlu0 %5780
    %v5782 = vsel %vm34, %v5776, 0.0
    %5783 = vadd.xlane.f32.xlu0 %v5782
    %v5784 = vpop.xlane.xlu0 %5783
    %v5785 = vsel %vm34, %v5777, 0.0
    %5786 = vadd.xlane.f32.xlu0 %v5785
    %v5787 = vpop.xlane.xlu0 %5786
    %v5788 = vsel %vm34, %v5778, 0.0
    %5789 = vadd.xlane.f32.xlu0 %v5788
    %v5790 = vpop.xlane.xlu0 %5789
    %v5791 = vmul.f32 %v5781, %v1198
    %v5792 = vmul.f32 %v5784, %v1198
    %v5793 = vmul.f32 %v5787, %v1198
    %v5794 = vmul.f32 %v5790, %v1198
    %v5795 = vadd.f32 %v5791, 1e-05
    %v5796 = vadd.f32 %v5792, 1e-05
    %v5797 = vadd.f32 %v5793, 1e-05
    %v5798 = vadd.f32 %v5794, 1e-05
    %v5799 = vrsqrt.pop %v5795
    %v5800 = vmul.f32 %v5799, %v5795
    %v5801 = vmul.f32 %v5800, %v5799
    %v5802 = vmul.f32 0.5, %v5801
    %v5803 = vsub.f32 1.5, %v5802
    %v5804 = vmul.f32 %v5799, %v5803
    %vm5805 = vweird.f32 %v5795
    %vm5806 = vweird.f32 %v5799
    %vm5807 = vmor %vm5805, %vm5806
    %v5808 = vsel %vm5807, %v5799, %v5804
    %v5809 = vrsqrt.pop %v5796
    %v5810 = vmul.f32 %v5809, %v5796
    %v5811 = vmul.f32 %v5810, %v5809
    %v5812 = vmul.f32 0.5, %v5811
    %v5813 = vsub.f32 1.5, %v5812
    %v5814 = vmul.f32 %v5809, %v5813
    %vm5815 = vweird.f32 %v5796
    %vm5816 = vweird.f32 %v5809
    %vm5817 = vmor %vm5815, %vm5816
    %v5818 = vsel %vm5817, %v5809, %v5814
    %v5819 = vrsqrt.pop %v5797
    %v5820 = vmul.f32 %v5819, %v5797
    %v5821 = vmul.f32 %v5820, %v5819
    %v5822 = vmul.f32 0.5, %v5821
    %v5823 = vsub.f32 1.5, %v5822
    %v5824 = vmul.f32 %v5819, %v5823
    %vm5825 = vweird.f32 %v5797
    %vm5826 = vweird.f32 %v5819
    %vm5827 = vmor %vm5825, %vm5826
    %v5828 = vsel %vm5827, %v5819, %v5824
    %v5829 = vrsqrt.pop %v5798
    %v5830 = vmul.f32 %v5829, %v5798
    %v5831 = vmul.f32 %v5830, %v5829
    %v5832 = vmul.f32 0.5, %v5831
    %v5833 = vsub.f32 1.5, %v5832
    %v5834 = vmul.f32 %v5829, %v5833
    %vm5835 = vweird.f32 %v5798
    %vm5836 = vweird.f32 %v5829
    %vm5837 = vmor %vm5835, %vm5836
    %v5838 = vsel %vm5837, %v5829, %v5834
    %v5839 = vmul.f32 %v5771, %v5808
    %v5840 = vmul.f32 %v5772, %v5818
    %v5841 = vmul.f32 %v5773, %v5828
    %v5842 = vmul.f32 %v5774, %v5838
    %v5843 = vperm.slane %v5751, 0
    %v5844 = vmul.f32 %v5839, %v5843
    %v5845 = vmul.f32 %v5840, %v5843
    %v5846 = vmul.f32 %v5841, %v5843
    %v5847 = vmul.f32 %v5842, %v5843
    %v5848 = vperm.slane %v5752, 0
    %v5849 = vadd.f32 %v5844, %v5848
    %v5850 = vadd.f32 %v5845, %v5848
    %v5851 = vadd.f32 %v5846, %v5848
    %v5852 = vadd.f32 %v5847, %v5848
    %v5853 = vperm.slane %v5750, 0
    %v5855 = vsel %vm34, %v5849, 0
    %v5858 = vsel %vm34, %v5850, 0
    %v5861 = vsel %vm34, %v5851, 0
    %v5864 = vsel %vm34, %v5852, 0
    %5866 = vmatpush.msra.mxu0 0.0
    %5867 = vmatpush.msra.mxu0 0.0
    %5868 = vmatpush.msra.mxu0 0.0
    %5869 = vmatpush.msra.mxu0 0.0
    %5870 = vmatpush.msra.mxu0 0.0
    %5871 = vmatpush.msra.mxu0 0.0
    %5872 = vmatpush.msra.mxu0 0.0
    %5873 = vmatpush.msra.mxu0 0.0
    %5874 = vmatpush.msra.mxu0 0.0
    %5875 = vmatpush.msra.mxu0 0.0
    %5876 = vmatpush.msra.mxu0 0.0
    %5877 = vmatpush.msra.mxu0 0.0
    %5878 = vmatpush.msra.mxu0 %v5749
    %5879 = vmatpush.msra.mxu0 %v5748
    %5880 = vmatpush.msra.mxu0 %v5747
    %5881 = vmatpush.msra.mxu0 %v5746
    %5882 = vmatmul.f32.gmra.mxu0 %v5855
    %v5883 = vpop.f32.mrf.mxu0
    %v5884 = vadd.f32 %v5853, %v5883
    %5885 = vmatmul.f32.gmra.mxu0 %v5858
    %v5886 = vpop.f32.mrf.mxu0
    %v5887 = vadd.f32 %v5853, %v5886
    %5888 = vmatmul.f32.gmra.mxu0 %v5861
    %v5889 = vpop.f32.mrf.mxu0
    %v5890 = vadd.f32 %v5853, %v5889
    %5891 = vmatmul.f32.gmra.mxu0 %v5864
    %v5892 = vpop.f32.mrf.mxu0
    %v5893 = vadd.f32 %v5853, %v5892
    %5894 = vdwg.mxu0
    %v5895 = vmax.f32 %v5884, 0.0
    %v5896 = vmax.f32 %v5887, 0.0
    %v5897 = vmax.f32 %v5890, 0.0
    %v5898 = vmax.f32 %v5893, 0.0
    %v5899 = vadd.f32 %v5849, %v5895
    %v5900 = vadd.f32 %v5850, %v5896
    %v5901 = vadd.f32 %v5851, %v5897
    %v5902 = vadd.f32 %v5852, %v5898
    %v5903 = vsel %vm34, %v5899, 0.0
    %5904 = vadd.xlane.f32.xlu0 %v5903
    %v5905 = vpop.xlane.xlu0 %5904
    %v5906 = vsel %vm34, %v5900, 0.0
    %5907 = vadd.xlane.f32.xlu0 %v5906
    %v5908 = vpop.xlane.xlu0 %5907
    %v5909 = vsel %vm34, %v5901, 0.0
    %5910 = vadd.xlane.f32.xlu0 %v5909
    %v5911 = vpop.xlane.xlu0 %5910
    %v5912 = vsel %vm34, %v5902, 0.0
    %5913 = vadd.xlane.f32.xlu0 %v5912
    %v5914 = vpop.xlane.xlu0 %5913
    %v5915 = vmul.f32 %v5905, %v1198
    %v5916 = vmul.f32 %v5908, %v1198
    %v5917 = vmul.f32 %v5911, %v1198
    %v5918 = vmul.f32 %v5914, %v1198
    %v5919 = vsub.f32 %v5899, %v5915
    %v5920 = vsub.f32 %v5900, %v5916
    %v5921 = vsub.f32 %v5901, %v5917
    %v5922 = vsub.f32 %v5902, %v5918
    %v5923 = vmul.f32 %v5919, %v5919
    %v5924 = vmul.f32 %v5920, %v5920
    %v5925 = vmul.f32 %v5921, %v5921
    %v5926 = vmul.f32 %v5922, %v5922
    %v5927 = vsel %vm34, %v5923, 0.0
    %5928 = vadd.xlane.f32.xlu0 %v5927
    %v5929 = vpop.xlane.xlu0 %5928
    %v5930 = vsel %vm34, %v5924, 0.0
    %5931 = vadd.xlane.f32.xlu0 %v5930
    %v5932 = vpop.xlane.xlu0 %5931
    %v5933 = vsel %vm34, %v5925, 0.0
    %5934 = vadd.xlane.f32.xlu0 %v5933
    %v5935 = vpop.xlane.xlu0 %5934
    %v5936 = vsel %vm34, %v5926, 0.0
    %5937 = vadd.xlane.f32.xlu0 %v5936
    %v5938 = vpop.xlane.xlu0 %5937
    %v5939 = vmul.f32 %v5929, %v1198
    %v5940 = vmul.f32 %v5932, %v1198
    %v5941 = vmul.f32 %v5935, %v1198
    %v5942 = vmul.f32 %v5938, %v1198
    %v5943 = vadd.f32 %v5939, 1e-05
    %v5944 = vadd.f32 %v5940, 1e-05
    %v5945 = vadd.f32 %v5941, 1e-05
    %v5946 = vadd.f32 %v5942, 1e-05
    %v5947 = vrsqrt.pop %v5943
    %v5948 = vmul.f32 %v5947, %v5943
    %v5949 = vmul.f32 %v5948, %v5947
    %v5950 = vmul.f32 0.5, %v5949
    %v5951 = vsub.f32 1.5, %v5950
    %v5952 = vmul.f32 %v5947, %v5951
    %vm5953 = vweird.f32 %v5943
    %vm5954 = vweird.f32 %v5947
    %vm5955 = vmor %vm5953, %vm5954
    %v5956 = vsel %vm5955, %v5947, %v5952
    %v5957 = vrsqrt.pop %v5944
    %v5958 = vmul.f32 %v5957, %v5944
    %v5959 = vmul.f32 %v5958, %v5957
    %v5960 = vmul.f32 0.5, %v5959
    %v5961 = vsub.f32 1.5, %v5960
    %v5962 = vmul.f32 %v5957, %v5961
    %vm5963 = vweird.f32 %v5944
    %vm5964 = vweird.f32 %v5957
    %vm5965 = vmor %vm5963, %vm5964
    %v5966 = vsel %vm5965, %v5957, %v5962
    %v5967 = vrsqrt.pop %v5945
    %v5968 = vmul.f32 %v5967, %v5945
    %v5969 = vmul.f32 %v5968, %v5967
    %v5970 = vmul.f32 0.5, %v5969
    %v5971 = vsub.f32 1.5, %v5970
    %v5972 = vmul.f32 %v5967, %v5971
    %vm5973 = vweird.f32 %v5945
    %vm5974 = vweird.f32 %v5967
    %vm5975 = vmor %vm5973, %vm5974
    %v5976 = vsel %vm5975, %v5967, %v5972
    %v5977 = vrsqrt.pop %v5946
    %v5978 = vmul.f32 %v5977, %v5946
    %v5979 = vmul.f32 %v5978, %v5977
    %v5980 = vmul.f32 0.5, %v5979
    %v5981 = vsub.f32 1.5, %v5980
    %v5982 = vmul.f32 %v5977, %v5981
    %vm5983 = vweird.f32 %v5946
    %vm5984 = vweird.f32 %v5977
    %vm5985 = vmor %vm5983, %vm5984
    %v5986 = vsel %vm5985, %v5977, %v5982
    %v5987 = vmul.f32 %v5919, %v5956
    %v5988 = vmul.f32 %v5920, %v5966
    %v5989 = vmul.f32 %v5921, %v5976
    %v5990 = vmul.f32 %v5922, %v5986
    %v5991 = vperm.slane %v5753, 0
    %v5992 = vmul.f32 %v5987, %v5991
    %v5993 = vmul.f32 %v5988, %v5991
    %v5994 = vmul.f32 %v5989, %v5991
    %v5995 = vmul.f32 %v5990, %v5991
    %v5996 = vperm.slane %v5754, 0
    %v5997 = vadd.f32 %v5992, %v5996
    %v5998 = vadd.f32 %v5993, %v5996
    %v5999 = vadd.f32 %v5994, %v5996
    %v6000 = vadd.f32 %v5995, %v5996
    %v6001 = vld [vmem:[%s2 + $0x600] sm:$0xff]
    %v6002 = vld [vmem:[%s2 + $0x608] sm:$0xff]
    %v6003 = vld [vmem:[%s2 + $0x610] sm:$0xff]
    %v6004 = vld [vmem:[%s2 + $0x618] sm:$0xff]
    %v6005 = vld [vmem:[%s2 + $0x7b0] sm:$0x1]
    %v6007 = vsel %vm34, %v27, 0
    %6009 = vmatpush.msra.mxu0 0.0
    %6010 = vmatpush.msra.mxu0 0.0
    %6011 = vmatpush.msra.mxu0 0.0
    %6012 = vmatpush.msra.mxu0 0.0
    %6013 = vmatpush.msra.mxu0 0.0
    %6014 = vmatpush.msra.mxu0 0.0
    %6015 = vmatpush.msra.mxu0 0.0
    %6016 = vmatpush.msra.mxu0 0.0
    %6017 = vmatpush.msra.mxu0 0.0
    %6018 = vmatpush.msra.mxu0 0.0
    %6019 = vmatpush.msra.mxu0 0.0
    %6020 = vmatpush.msra.mxu0 0.0
    %6021 = vmatpush.msra.mxu0 %v6004
    %6022 = vmatpush.msra.mxu0 %v6003
    %6023 = vmatpush.msra.mxu0 %v6002
    %6024 = vmatpush.msra.mxu0 %v6001
    %6025 = vmatmul.f32.gmra.mxu0 %v6007
    %v6026 = vpop.f32.mrf.mxu0
    %v6027 = vadd.f32 %v6005, %v6026
    %6028 = vdwg.mxu0
    %v6029 = vld [vmem:[%s2 + $0x620] sm:$0xff]
    %v6030 = vld [vmem:[%s2 + $0x628] sm:$0xff]
    %v6031 = vld [vmem:[%s2 + $0x630] sm:$0xff]
    %v6032 = vld [vmem:[%s2 + $0x638] sm:$0xff]
    %v6033 = vld [vmem:[%s2 + $0x7b1] sm:$0x1]
    %6034 = vmatpush.msra.mxu0 0.0
    %6035 = vmatpush.msra.mxu0 0.0
    %6036 = vmatpush.msra.mxu0 0.0
    %6037 = vmatpush.msra.mxu0 0.0
    %6038 = vmatpush.msra.mxu0 0.0
    %6039 = vmatpush.msra.mxu0 0.0
    %6040 = vmatpush.msra.mxu0 0.0
    %6041 = vmatpush.msra.mxu0 0.0
    %6042 = vmatpush.msra.mxu0 0.0
    %6043 = vmatpush.msra.mxu0 0.0
    %6044 = vmatpush.msra.mxu0 0.0
    %6045 = vmatpush.msra.mxu0 0.0
    %6046 = vmatpush.msra.mxu0 %v6032
    %6047 = vmatpush.msra.mxu0 %v6031
    %6048 = vmatpush.msra.mxu0 %v6030
    %6049 = vmatpush.msra.mxu0 %v6029
    %6050 = vmatmul.f32.gmra.mxu0 %v6007
    %v6051 = vpop.f32.mrf.mxu0
    %v6052 = vadd.f32 %v6033, %v6051
    %6053 = vdwg.mxu0
    %v6054 = vld [vmem:[%s2 + $0x640] sm:$0xff]
    %v6055 = vld [vmem:[%s2 + $0x648] sm:$0xff]
    %v6056 = vld [vmem:[%s2 + $0x650] sm:$0xff]
    %v6057 = vld [vmem:[%s2 + $0x658] sm:$0xff]
    %v6058 = vld [vmem:[%s2 + $0x7b2] sm:$0x1]
    %6059 = vmatpush.msra.mxu0 0.0
    %6060 = vmatpush.msra.mxu0 0.0
    %6061 = vmatpush.msra.mxu0 0.0
    %6062 = vmatpush.msra.mxu0 0.0
    %6063 = vmatpush.msra.mxu0 0.0
    %6064 = vmatpush.msra.mxu0 0.0
    %6065 = vmatpush.msra.mxu0 0.0
    %6066 = vmatpush.msra.mxu0 0.0
    %6067 = vmatpush.msra.mxu0 0.0
    %6068 = vmatpush.msra.mxu0 0.0
    %6069 = vmatpush.msra.mxu0 0.0
    %6070 = vmatpush.msra.mxu0 0.0
    %6071 = vmatpush.msra.mxu0 %v6057
    %6072 = vmatpush.msra.mxu0 %v6056
    %6073 = vmatpush.msra.mxu0 %v6055
    %6074 = vmatpush.msra.mxu0 %v6054
    %6075 = vmatmul.f32.gmra.mxu0 %v6007
    %v6076 = vpop.f32.mrf.mxu0
    %v6077 = vadd.f32 %v6058, %v6076
    %6078 = vdwg.mxu0
    %v6079 = vld [vmem:[%s2 + $0x660] sm:$0xff]
    %v6080 = vld [vmem:[%s2 + $0x668] sm:$0xff]
    %v6081 = vld [vmem:[%s2 + $0x670] sm:$0xff]
    %v6082 = vld [vmem:[%s2 + $0x678] sm:$0xff]
    %v6083 = vld [vmem:[%s2 + $0x7b3] sm:$0x1]
    %6084 = vmatpush.msra.mxu0 0.0
    %6085 = vmatpush.msra.mxu0 0.0
    %6086 = vmatpush.msra.mxu0 0.0
    %6087 = vmatpush.msra.mxu0 0.0
    %6088 = vmatpush.msra.mxu0 0.0
    %6089 = vmatpush.msra.mxu0 0.0
    %6090 = vmatpush.msra.mxu0 0.0
    %6091 = vmatpush.msra.mxu0 0.0
    %6092 = vmatpush.msra.mxu0 0.0
    %6093 = vmatpush.msra.mxu0 0.0
    %6094 = vmatpush.msra.mxu0 0.0
    %6095 = vmatpush.msra.mxu0 0.0
    %6096 = vmatpush.msra.mxu0 %v6082
    %6097 = vmatpush.msra.mxu0 %v6081
    %6098 = vmatpush.msra.mxu0 %v6080
    %6099 = vmatpush.msra.mxu0 %v6079
    %6100 = vmatmul.f32.gmra.mxu0 %v6007
    %v6101 = vpop.f32.mrf.mxu0
    %v6102 = vadd.f32 %v6083, %v6101
    %6103 = vdwg.mxu0
    %v6104 = vld [vmem:[%s2 + $0x680] sm:$0xff]
    %v6105 = vld [vmem:[%s2 + $0x688] sm:$0xff]
    %v6106 = vld [vmem:[%s2 + $0x690] sm:$0xff]
    %v6107 = vld [vmem:[%s2 + $0x698] sm:$0xff]
    %v6108 = vld [vmem:[%s2 + $0x7b4] sm:$0x1]
    %v6109 = vperm.slane %v6108, 0
    %v6111 = vsel %vm34, %v5997, 0
    %v6114 = vsel %vm34, %v5998, 0
    %v6117 = vsel %vm34, %v5999, 0
    %v6120 = vsel %vm34, %v6000, 0
    %6122 = vmatpush.msra.mxu0 0.0
    %6123 = vmatpush.msra.mxu0 0.0
    %6124 = vmatpush.msra.mxu0 0.0
    %6125 = vmatpush.msra.mxu0 0.0
    %6126 = vmatpush.msra.mxu0 0.0
    %6127 = vmatpush.msra.mxu0 0.0
    %6128 = vmatpush.msra.mxu0 0.0
    %6129 = vmatpush.msra.mxu0 0.0
    %6130 = vmatpush.msra.mxu0 0.0
    %6131 = vmatpush.msra.mxu0 0.0
    %6132 = vmatpush.msra.mxu0 0.0
    %6133 = vmatpush.msra.mxu0 0.0
    %6134 = vmatpush.msra.mxu0 %v6107
    %6135 = vmatpush.msra.mxu0 %v6106
    %6136 = vmatpush.msra.mxu0 %v6105
    %6137 = vmatpush.msra.mxu0 %v6104
    %6138 = vmatmul.f32.gmra.mxu0 %v6111
    %v6139 = vpop.f32.mrf.mxu0
    %v6140 = vadd.f32 %v6109, %v6139
    %6141 = vmatmul.f32.gmra.mxu0 %v6114
    %v6142 = vpop.f32.mrf.mxu0
    %v6143 = vadd.f32 %v6109, %v6142
    %6144 = vmatmul.f32.gmra.mxu0 %v6117
    %v6145 = vpop.f32.mrf.mxu0
    %v6146 = vadd.f32 %v6109, %v6145
    %6147 = vmatmul.f32.gmra.mxu0 %v6120
    %v6148 = vpop.f32.mrf.mxu0
    %v6149 = vadd.f32 %v6109, %v6148
    %6150 = vdwg.mxu0
    %v6151 = vld [vmem:[%s2 + $0x6a0] sm:$0xff]
    %v6152 = vld [vmem:[%s2 + $0x6a8] sm:$0xff]
    %v6153 = vld [vmem:[%s2 + $0x6b0] sm:$0xff]
    %v6154 = vld [vmem:[%s2 + $0x6b8] sm:$0xff]
    %v6155 = vld [vmem:[%s2 + $0x7b5] sm:$0x1]
    %v6156 = vperm.slane %v6155, 0
    %6157 = vmatpush.msra.mxu0 0.0
    %6158 = vmatpush.msra.mxu0 0.0
    %6159 = vmatpush.msra.mxu0 0.0
    %6160 = vmatpush.msra.mxu0 0.0
    %6161 = vmatpush.msra.mxu0 0.0
    %6162 = vmatpush.msra.mxu0 0.0
    %6163 = vmatpush.msra.mxu0 0.0
    %6164 = vmatpush.msra.mxu0 0.0
    %6165 = vmatpush.msra.mxu0 0.0
    %6166 = vmatpush.msra.mxu0 0.0
    %6167 = vmatpush.msra.mxu0 0.0
    %6168 = vmatpush.msra.mxu0 0.0
    %6169 = vmatpush.msra.mxu0 %v6154
    %6170 = vmatpush.msra.mxu0 %v6153
    %6171 = vmatpush.msra.mxu0 %v6152
    %6172 = vmatpush.msra.mxu0 %v6151
    %6173 = vmatmul.f32.gmra.mxu0 %v6111
    %v6174 = vpop.f32.mrf.mxu0
    %v6175 = vadd.f32 %v6156, %v6174
    %6176 = vmatmul.f32.gmra.mxu0 %v6114
    %v6177 = vpop.f32.mrf.mxu0
    %v6178 = vadd.f32 %v6156, %v6177
    %6179 = vmatmul.f32.gmra.mxu0 %v6117
    %v6180 = vpop.f32.mrf.mxu0
    %v6181 = vadd.f32 %v6156, %v6180
    %6182 = vmatmul.f32.gmra.mxu0 %v6120
    %v6183 = vpop.f32.mrf.mxu0
    %v6184 = vadd.f32 %v6156, %v6183
    %6185 = vdwg.mxu0
    %v6186 = vld [vmem:[%s2 + $0x6c0] sm:$0xff]
    %v6187 = vld [vmem:[%s2 + $0x6c8] sm:$0xff]
    %v6188 = vld [vmem:[%s2 + $0x6d0] sm:$0xff]
    %v6189 = vld [vmem:[%s2 + $0x6d8] sm:$0xff]
    %v6190 = vld [vmem:[%s2 + $0x7b6] sm:$0x1]
    %v6191 = vperm.slane %v6190, 0
    %6192 = vmatpush.msra.mxu0 0.0
    %6193 = vmatpush.msra.mxu0 0.0
    %6194 = vmatpush.msra.mxu0 0.0
    %6195 = vmatpush.msra.mxu0 0.0
    %6196 = vmatpush.msra.mxu0 0.0
    %6197 = vmatpush.msra.mxu0 0.0
    %6198 = vmatpush.msra.mxu0 0.0
    %6199 = vmatpush.msra.mxu0 0.0
    %6200 = vmatpush.msra.mxu0 0.0
    %6201 = vmatpush.msra.mxu0 0.0
    %6202 = vmatpush.msra.mxu0 0.0
    %6203 = vmatpush.msra.mxu0 0.0
    %6204 = vmatpush.msra.mxu0 %v6189
    %6205 = vmatpush.msra.mxu0 %v6188
    %6206 = vmatpush.msra.mxu0 %v6187
    %6207 = vmatpush.msra.mxu0 %v6186
    %6208 = vmatmul.f32.gmra.mxu0 %v6111
    %v6209 = vpop.f32.mrf.mxu0
    %v6210 = vadd.f32 %v6191, %v6209
    %6211 = vmatmul.f32.gmra.mxu0 %v6114
    %v6212 = vpop.f32.mrf.mxu0
    %v6213 = vadd.f32 %v6191, %v6212
    %6214 = vmatmul.f32.gmra.mxu0 %v6117
    %v6215 = vpop.f32.mrf.mxu0
    %v6216 = vadd.f32 %v6191, %v6215
    %6217 = vmatmul.f32.gmra.mxu0 %v6120
    %v6218 = vpop.f32.mrf.mxu0
    %v6219 = vadd.f32 %v6191, %v6218
    %6220 = vdwg.mxu0
    %v6221 = vld [vmem:[%s2 + $0x6e0] sm:$0xff]
    %v6222 = vld [vmem:[%s2 + $0x6e8] sm:$0xff]
    %v6223 = vld [vmem:[%s2 + $0x6f0] sm:$0xff]
    %v6224 = vld [vmem:[%s2 + $0x6f8] sm:$0xff]
    %v6225 = vld [vmem:[%s2 + $0x7b7] sm:$0x1]
    %v6226 = vperm.slane %v6225, 0
    %6227 = vmatpush.msra.mxu0 0.0
    %6228 = vmatpush.msra.mxu0 0.0
    %6229 = vmatpush.msra.mxu0 0.0
    %6230 = vmatpush.msra.mxu0 0.0
    %6231 = vmatpush.msra.mxu0 0.0
    %6232 = vmatpush.msra.mxu0 0.0
    %6233 = vmatpush.msra.mxu0 0.0
    %6234 = vmatpush.msra.mxu0 0.0
    %6235 = vmatpush.msra.mxu0 0.0
    %6236 = vmatpush.msra.mxu0 0.0
    %6237 = vmatpush.msra.mxu0 0.0
    %6238 = vmatpush.msra.mxu0 0.0
    %6239 = vmatpush.msra.mxu0 %v6224
    %6240 = vmatpush.msra.mxu0 %v6223
    %6241 = vmatpush.msra.mxu0 %v6222
    %6242 = vmatpush.msra.mxu0 %v6221
    %6243 = vmatmul.f32.gmra.mxu0 %v6111
    %v6244 = vpop.f32.mrf.mxu0
    %v6245 = vadd.f32 %v6226, %v6244
    %6246 = vmatmul.f32.gmra.mxu0 %v6114
    %v6247 = vpop.f32.mrf.mxu0
    %v6248 = vadd.f32 %v6226, %v6247
    %6249 = vmatmul.f32.gmra.mxu0 %v6117
    %v6250 = vpop.f32.mrf.mxu0
    %v6251 = vadd.f32 %v6226, %v6250
    %6252 = vmatmul.f32.gmra.mxu0 %v6120
    %v6253 = vpop.f32.mrf.mxu0
    %v6254 = vadd.f32 %v6226, %v6253
    %6255 = vdwg.mxu0
    %v6256 = vld [vmem:[%s2 + $0x700] sm:$0xff]
    %v6257 = vld [vmem:[%s2 + $0x708] sm:$0xff]
    %v6258 = vld [vmem:[%s2 + $0x710] sm:$0xff]
    %v6259 = vld [vmem:[%s2 + $0x718] sm:$0xff]
    %v6260 = vld [vmem:[%s2 + $0x7b8] sm:$0x1]
    %v6261 = vperm.slane %v6260, 0
    %6262 = vmatpush.msra.mxu0 0.0
    %6263 = vmatpush.msra.mxu0 0.0
    %6264 = vmatpush.msra.mxu0 0.0
    %6265 = vmatpush.msra.mxu0 0.0
    %6266 = vmatpush.msra.mxu0 0.0
    %6267 = vmatpush.msra.mxu0 0.0
    %6268 = vmatpush.msra.mxu0 0.0
    %6269 = vmatpush.msra.mxu0 0.0
    %6270 = vmatpush.msra.mxu0 0.0
    %6271 = vmatpush.msra.mxu0 0.0
    %6272 = vmatpush.msra.mxu0 0.0
    %6273 = vmatpush.msra.mxu0 0.0
    %6274 = vmatpush.msra.mxu0 %v6259
    %6275 = vmatpush.msra.mxu0 %v6258
    %6276 = vmatpush.msra.mxu0 %v6257
    %6277 = vmatpush.msra.mxu0 %v6256
    %6278 = vmatmul.f32.gmra.mxu0 %v6111
    %v6279 = vpop.f32.mrf.mxu0
    %v6280 = vadd.f32 %v6261, %v6279
    %6281 = vmatmul.f32.gmra.mxu0 %v6114
    %v6282 = vpop.f32.mrf.mxu0
    %v6283 = vadd.f32 %v6261, %v6282
    %6284 = vmatmul.f32.gmra.mxu0 %v6117
    %v6285 = vpop.f32.mrf.mxu0
    %v6286 = vadd.f32 %v6261, %v6285
    %6287 = vmatmul.f32.gmra.mxu0 %v6120
    %v6288 = vpop.f32.mrf.mxu0
    %v6289 = vadd.f32 %v6261, %v6288
    %6290 = vdwg.mxu0
    %v6291 = vld [vmem:[%s2 + $0x720] sm:$0xff]
    %v6292 = vld [vmem:[%s2 + $0x728] sm:$0xff]
    %v6293 = vld [vmem:[%s2 + $0x730] sm:$0xff]
    %v6294 = vld [vmem:[%s2 + $0x738] sm:$0xff]
    %v6295 = vld [vmem:[%s2 + $0x7b9] sm:$0x1]
    %v6296 = vperm.slane %v6295, 0
    %6297 = vmatpush.msra.mxu0 0.0
    %6298 = vmatpush.msra.mxu0 0.0
    %6299 = vmatpush.msra.mxu0 0.0
    %6300 = vmatpush.msra.mxu0 0.0
    %6301 = vmatpush.msra.mxu0 0.0
    %6302 = vmatpush.msra.mxu0 0.0
    %6303 = vmatpush.msra.mxu0 0.0
    %6304 = vmatpush.msra.mxu0 0.0
    %6305 = vmatpush.msra.mxu0 0.0
    %6306 = vmatpush.msra.mxu0 0.0
    %6307 = vmatpush.msra.mxu0 0.0
    %6308 = vmatpush.msra.mxu0 0.0
    %6309 = vmatpush.msra.mxu0 %v6294
    %6310 = vmatpush.msra.mxu0 %v6293
    %6311 = vmatpush.msra.mxu0 %v6292
    %6312 = vmatpush.msra.mxu0 %v6291
    %6313 = vmatmul.f32.gmra.mxu0 %v6111
    %v6314 = vpop.f32.mrf.mxu0
    %v6315 = vadd.f32 %v6296, %v6314
    %6316 = vmatmul.f32.gmra.mxu0 %v6114
    %v6317 = vpop.f32.mrf.mxu0
    %v6318 = vadd.f32 %v6296, %v6317
    %6319 = vmatmul.f32.gmra.mxu0 %v6117
    %v6320 = vpop.f32.mrf.mxu0
    %v6321 = vadd.f32 %v6296, %v6320
    %6322 = vmatmul.f32.gmra.mxu0 %v6120
    %v6323 = vpop.f32.mrf.mxu0
    %v6324 = vadd.f32 %v6296, %v6323
    %6325 = vdwg.mxu0
    %v6326 = vld [vmem:[%s2 + $0x740] sm:$0xff]
    %v6327 = vld [vmem:[%s2 + $0x748] sm:$0xff]
    %v6328 = vld [vmem:[%s2 + $0x750] sm:$0xff]
    %v6329 = vld [vmem:[%s2 + $0x758] sm:$0xff]
    %v6330 = vld [vmem:[%s2 + $0x7ba] sm:$0x1]
    %v6331 = vperm.slane %v6330, 0
    %6332 = vmatpush.msra.mxu0 0.0
    %6333 = vmatpush.msra.mxu0 0.0
    %6334 = vmatpush.msra.mxu0 0.0
    %6335 = vmatpush.msra.mxu0 0.0
    %6336 = vmatpush.msra.mxu0 0.0
    %6337 = vmatpush.msra.mxu0 0.0
    %6338 = vmatpush.msra.mxu0 0.0
    %6339 = vmatpush.msra.mxu0 0.0
    %6340 = vmatpush.msra.mxu0 0.0
    %6341 = vmatpush.msra.mxu0 0.0
    %6342 = vmatpush.msra.mxu0 0.0
    %6343 = vmatpush.msra.mxu0 0.0
    %6344 = vmatpush.msra.mxu0 %v6329
    %6345 = vmatpush.msra.mxu0 %v6328
    %6346 = vmatpush.msra.mxu0 %v6327
    %6347 = vmatpush.msra.mxu0 %v6326
    %6348 = vmatmul.f32.gmra.mxu0 %v6111
    %v6349 = vpop.f32.mrf.mxu0
    %v6350 = vadd.f32 %v6331, %v6349
    %6351 = vmatmul.f32.gmra.mxu0 %v6114
    %v6352 = vpop.f32.mrf.mxu0
    %v6353 = vadd.f32 %v6331, %v6352
    %6354 = vmatmul.f32.gmra.mxu0 %v6117
    %v6355 = vpop.f32.mrf.mxu0
    %v6356 = vadd.f32 %v6331, %v6355
    %6357 = vmatmul.f32.gmra.mxu0 %v6120
    %v6358 = vpop.f32.mrf.mxu0
    %v6359 = vadd.f32 %v6331, %v6358
    %6360 = vdwg.mxu0
    %v6361 = vld [vmem:[%s2 + $0x760] sm:$0xff]
    %v6362 = vld [vmem:[%s2 + $0x768] sm:$0xff]
    %v6363 = vld [vmem:[%s2 + $0x770] sm:$0xff]
    %v6364 = vld [vmem:[%s2 + $0x778] sm:$0xff]
    %v6365 = vld [vmem:[%s2 + $0x7bb] sm:$0x1]
    %v6366 = vperm.slane %v6365, 0
    %6367 = vmatpush.msra.mxu0 0.0
    %6368 = vmatpush.msra.mxu0 0.0
    %6369 = vmatpush.msra.mxu0 0.0
    %6370 = vmatpush.msra.mxu0 0.0
    %6371 = vmatpush.msra.mxu0 0.0
    %6372 = vmatpush.msra.mxu0 0.0
    %6373 = vmatpush.msra.mxu0 0.0
    %6374 = vmatpush.msra.mxu0 0.0
    %6375 = vmatpush.msra.mxu0 0.0
    %6376 = vmatpush.msra.mxu0 0.0
    %6377 = vmatpush.msra.mxu0 0.0
    %6378 = vmatpush.msra.mxu0 0.0
    %6379 = vmatpush.msra.mxu0 %v6364
    %6380 = vmatpush.msra.mxu0 %v6363
    %6381 = vmatpush.msra.mxu0 %v6362
    %6382 = vmatpush.msra.mxu0 %v6361
    %6383 = vmatmul.f32.gmra.mxu0 %v6111
    %v6384 = vpop.f32.mrf.mxu0
    %v6385 = vadd.f32 %v6366, %v6384
    %6386 = vmatmul.f32.gmra.mxu0 %v6114
    %v6387 = vpop.f32.mrf.mxu0
    %v6388 = vadd.f32 %v6366, %v6387
    %6389 = vmatmul.f32.gmra.mxu0 %v6117
    %v6390 = vpop.f32.mrf.mxu0
    %v6391 = vadd.f32 %v6366, %v6390
    %6392 = vmatmul.f32.gmra.mxu0 %v6120
    %v6393 = vpop.f32.mrf.mxu0
    %v6394 = vadd.f32 %v6366, %v6393
    %6395 = vdwg.mxu0
    %v6397 = vsel %vm428, %v6027, 0
    %v6400 = vsel %vm428, %v6140, 0
    %v6403 = vsel %vm428, %v6143, 0
    %6405 = vmatpush.xpose.msra.mxu0 0.0
    %6406 = vmatpush.xpose.msra.mxu0 0.0
    %6407 = vmatpush.xpose.msra.mxu0 0.0
    %6408 = vmatpush.xpose.msra.mxu0 0.0
    %6409 = vmatpush.xpose.msra.mxu0 0.0
    %6410 = vmatpush.xpose.msra.mxu0 0.0
    %6411 = vmatpush.xpose.msra.mxu0 0.0
    %6412 = vmatpush.xpose.msra.mxu0 0.0
    %6413 = vmatpush.xpose.msra.mxu0 0.0
    %6414 = vmatpush.xpose.msra.mxu0 0.0
    %6415 = vmatpush.xpose.msra.mxu0 0.0
    %6416 = vmatpush.xpose.msra.mxu0 0.0
    %6417 = vmatpush.xpose.msra.mxu0 0.0
    %6418 = vmatpush.xpose.msra.mxu0 0.0
    %6419 = vmatpush.xpose.msra.mxu0 %v6403
    %6420 = vmatpush.xpose.msra.mxu0 %v6400
    %6421 = vmatmul.f32.gmra.mxu0 %v6397
    %v6422 = vpop.f32.mrf.mxu0
    %v6423 = vadd.f32 0.0, %v6422
    %6424 = vdwg.mxu0
    %v6426 = vsel %vm428, %v6146, 0
    %v6429 = vsel %vm428, %v6149, 0
    %6431 = vmatpush.xpose.msra.mxu0 0.0
    %6432 = vmatpush.xpose.msra.mxu0 0.0
    %6433 = vmatpush.xpose.msra.mxu0 0.0
    %6434 = vmatpush.xpose.msra.mxu0 0.0
    %6435 = vmatpush.xpose.msra.mxu0 0.0
    %6436 = vmatpush.xpose.msra.mxu0 0.0
    %6437 = vmatpush.xpose.msra.mxu0 0.0
    %6438 = vmatpush.xpose.msra.mxu0 0.0
    %6439 = vmatpush.xpose.msra.mxu0 0.0
    %6440 = vmatpush.xpose.msra.mxu0 0.0
    %6441 = vmatpush.xpose.msra.mxu0 0.0
    %6442 = vmatpush.xpose.msra.mxu0 0.0
    %6443 = vmatpush.xpose.msra.mxu0 0.0
    %6444 = vmatpush.xpose.msra.mxu0 0.0
    %6445 = vmatpush.xpose.msra.mxu0 %v6429
    %6446 = vmatpush.xpose.msra.mxu0 %v6426
    %6447 = vmatmul.f32.gmra.mxu0 %v6397
    %v6448 = vpop.f32.mrf.mxu0
    %v6449 = vadd.f32 0.0, %v6448
    %6450 = vdwg.mxu0
    %v6452 = vsel %vm428, %v6052, 0
    %v6455 = vsel %vm428, %v6175, 0
    %v6458 = vsel %vm428, %v6178, 0
    %6460 = vmatpush.xpose.msra.mxu0 0.0
    %6461 = vmatpush.xpose.msra.mxu0 0.0
    %6462 = vmatpush.xpose.msra.mxu0 0.0
    %6463 = vmatpush.xpose.msra.mxu0 0.0
    %6464 = vmatpush.xpose.msra.mxu0 0.0
    %6465 = vmatpush.xpose.msra.mxu0 0.0
    %6466 = vmatpush.xpose.msra.mxu0 0.0
    %6467 = vmatpush.xpose.msra.mxu0 0.0
    %6468 = vmatpush.xpose.msra.mxu0 0.0
    %6469 = vmatpush.xpose.msra.mxu0 0.0
    %6470 = vmatpush.xpose.msra.mxu0 0.0
    %6471 = vmatpush.xpose.msra.mxu0 0.0
    %6472 = vmatpush.xpose.msra.mxu0 0.0
    %6473 = vmatpush.xpose.msra.mxu0 0.0
    %6474 = vmatpush.xpose.msra.mxu0 %v6458
    %6475 = vmatpush.xpose.msra.mxu0 %v6455
    %6476 = vmatmul.f32.gmra.mxu0 %v6452
    %v6477 = vpop.f32.mrf.mxu0
    %v6478 = vadd.f32 0.0, %v6477
    %6479 = vdwg.mxu0
    %v6481 = vsel %vm428, %v6181, 0
    %v6484 = vsel %vm428, %v6184, 0
    %6486 = vmatpush.xpose.msra.mxu0 0.0
    %6487 = vmatpush.xpose.msra.mxu0 0.0
    %6488 = vmatpush.xpose.msra.mxu0 0.0
    %6489 = vmatpush.xpose.msra.mxu0 0.0
    %6490 = vmatpush.xpose.msra.mxu0 0.0
    %6491 = vmatpush.xpose.msra.mxu0 0.0
    %6492 = vmatpush.xpose.msra.mxu0 0.0
    %6493 = vmatpush.xpose.msra.mxu0 0.0
    %6494 = vmatpush.xpose.msra.mxu0 0.0
    %6495 = vmatpush.xpose.msra.mxu0 0.0
    %6496 = vmatpush.xpose.msra.mxu0 0.0
    %6497 = vmatpush.xpose.msra.mxu0 0.0
    %6498 = vmatpush.xpose.msra.mxu0 0.0
    %6499 = vmatpush.xpose.msra.mxu0 0.0
    %6500 = vmatpush.xpose.msra.mxu0 %v6484
    %6501 = vmatpush.xpose.msra.mxu0 %v6481
    %6502 = vmatmul.f32.gmra.mxu0 %v6452
    %v6503 = vpop.f32.mrf.mxu0
    %v6504 = vadd.f32 0.0, %v6503
    %6505 = vdwg.mxu0
    %v6507 = vsel %vm428, %v6077, 0
    %v6510 = vsel %vm428, %v6210, 0
    %v6513 = vsel %vm428, %v6213, 0
    %6515 = vmatpush.xpose.msra.mxu0 0.0
    %6516 = vmatpush.xpose.msra.mxu0 0.0
    %6517 = vmatpush.xpose.msra.mxu0 0.0
    %6518 = vmatpush.xpose.msra.mxu0 0.0
    %6519 = vmatpush.xpose.msra.mxu0 0.0
    %6520 = vmatpush.xpose.msra.mxu0 0.0
    %6521 = vmatpush.xpose.msra.mxu0 0.0
    %6522 = vmatpush.xpose.msra.mxu0 0.0
    %6523 = vmatpush.xpose.msra.mxu0 0.0
    %6524 = vmatpush.xpose.msra.mxu0 0.0
    %6525 = vmatpush.xpose.msra.mxu0 0.0
    %6526 = vmatpush.xpose.msra.mxu0 0.0
    %6527 = vmatpush.xpose.msra.mxu0 0.0
    %6528 = vmatpush.xpose.msra.mxu0 0.0
    %6529 = vmatpush.xpose.msra.mxu0 %v6513
    %6530 = vmatpush.xpose.msra.mxu0 %v6510
    %6531 = vmatmul.f32.gmra.mxu0 %v6507
    %v6532 = vpop.f32.mrf.mxu0
    %v6533 = vadd.f32 0.0, %v6532
    %6534 = vdwg.mxu0
    %v6536 = vsel %vm428, %v6216, 0
    %v6539 = vsel %vm428, %v6219, 0
    %6541 = vmatpush.xpose.msra.mxu0 0.0
    %6542 = vmatpush.xpose.msra.mxu0 0.0
    %6543 = vmatpush.xpose.msra.mxu0 0.0
    %6544 = vmatpush.xpose.msra.mxu0 0.0
    %6545 = vmatpush.xpose.msra.mxu0 0.0
    %6546 = vmatpush.xpose.msra.mxu0 0.0
    %6547 = vmatpush.xpose.msra.mxu0 0.0
    %6548 = vmatpush.xpose.msra.mxu0 0.0
    %6549 = vmatpush.xpose.msra.mxu0 0.0
    %6550 = vmatpush.xpose.msra.mxu0 0.0
    %6551 = vmatpush.xpose.msra.mxu0 0.0
    %6552 = vmatpush.xpose.msra.mxu0 0.0
    %6553 = vmatpush.xpose.msra.mxu0 0.0
    %6554 = vmatpush.xpose.msra.mxu0 0.0
    %6555 = vmatpush.xpose.msra.mxu0 %v6539
    %6556 = vmatpush.xpose.msra.mxu0 %v6536
    %6557 = vmatmul.f32.gmra.mxu0 %v6507
    %v6558 = vpop.f32.mrf.mxu0
    %v6559 = vadd.f32 0.0, %v6558
    %6560 = vdwg.mxu0
    %v6562 = vsel %vm428, %v6102, 0
    %v6565 = vsel %vm428, %v6245, 0
    %v6568 = vsel %vm428, %v6248, 0
    %6570 = vmatpush.xpose.msra.mxu0 0.0
    %6571 = vmatpush.xpose.msra.mxu0 0.0
    %6572 = vmatpush.xpose.msra.mxu0 0.0
    %6573 = vmatpush.xpose.msra.mxu0 0.0
    %6574 = vmatpush.xpose.msra.mxu0 0.0
    %6575 = vmatpush.xpose.msra.mxu0 0.0
    %6576 = vmatpush.xpose.msra.mxu0 0.0
    %6577 = vmatpush.xpose.msra.mxu0 0.0
    %6578 = vmatpush.xpose.msra.mxu0 0.0
    %6579 = vmatpush.xpose.msra.mxu0 0.0
    %6580 = vmatpush.xpose.msra.mxu0 0.0
    %6581 = vmatpush.xpose.msra.mxu0 0.0
    %6582 = vmatpush.xpose.msra.mxu0 0.0
    %6583 = vmatpush.xpose.msra.mxu0 0.0
    %6584 = vmatpush.xpose.msra.mxu0 %v6568
    %6585 = vmatpush.xpose.msra.mxu0 %v6565
    %6586 = vmatmul.f32.gmra.mxu0 %v6562
    %v6587 = vpop.f32.mrf.mxu0
    %v6588 = vadd.f32 0.0, %v6587
    %6589 = vdwg.mxu0
    %v6591 = vsel %vm428, %v6251, 0
    %v6594 = vsel %vm428, %v6254, 0
    %6596 = vmatpush.xpose.msra.mxu0 0.0
    %6597 = vmatpush.xpose.msra.mxu0 0.0
    %6598 = vmatpush.xpose.msra.mxu0 0.0
    %6599 = vmatpush.xpose.msra.mxu0 0.0
    %6600 = vmatpush.xpose.msra.mxu0 0.0
    %6601 = vmatpush.xpose.msra.mxu0 0.0
    %6602 = vmatpush.xpose.msra.mxu0 0.0
    %6603 = vmatpush.xpose.msra.mxu0 0.0
    %6604 = vmatpush.xpose.msra.mxu0 0.0
    %6605 = vmatpush.xpose.msra.mxu0 0.0
    %6606 = vmatpush.xpose.msra.mxu0 0.0
    %6607 = vmatpush.xpose.msra.mxu0 0.0
    %6608 = vmatpush.xpose.msra.mxu0 0.0
    %6609 = vmatpush.xpose.msra.mxu0 0.0
    %6610 = vmatpush.xpose.msra.mxu0 %v6594
    %6611 = vmatpush.xpose.msra.mxu0 %v6591
    %6612 = vmatmul.f32.gmra.mxu0 %v6562
    %v6613 = vpop.f32.mrf.mxu0
    %v6614 = vadd.f32 0.0, %v6613
    %6615 = vdwg.mxu0
    %vm6616 = vcmask 122880
    %v6617 = vsel %vm6616, %v6423, -inf
    %6618 = vmax.xlane.f32.xlu0 %v6617
    %v6619 = vpop.xlane.xlu0 %6618
    %v6620 = vsel %vm6616, %v6449, -inf
    %6621 = vmax.xlane.f32.xlu0 %v6620
    %v6622 = vpop.xlane.xlu0 %6621
    %v6623 = vsel %vm6616, %v6478, -inf
    %6624 = vmax.xlane.f32.xlu0 %v6623
    %v6625 = vpop.xlane.xlu0 %6624
    %v6626 = vsel %vm6616, %v6504, -inf
    %6627 = vmax.xlane.f32.xlu0 %v6626
    %v6628 = vpop.xlane.xlu0 %6627
    %v6629 = vsel %vm6616, %v6533, -inf
    %6630 = vmax.xlane.f32.xlu0 %v6629
    %v6631 = vpop.xlane.xlu0 %6630
    %v6632 = vsel %vm6616, %v6559, -inf
    %6633 = vmax.xlane.f32.xlu0 %v6632
    %v6634 = vpop.xlane.xlu0 %6633
    %v6635 = vsel %vm6616, %v6588, -inf
    %6636 = vmax.xlane.f32.xlu0 %v6635
    %v6637 = vpop.xlane.xlu0 %6636
    %v6638 = vsel %vm6616, %v6614, -inf
    %6639 = vmax.xlane.f32.xlu0 %v6638
    %v6640 = vpop.xlane.xlu0 %6639
    %v6641 = vsub.f32 %v6423, %v6619
    %v6642 = vsub.f32 %v6449, %v6622
    %v6643 = vsub.f32 %v6478, %v6625
    %v6644 = vsub.f32 %v6504, %v6628
    %v6645 = vsub.f32 %v6533, %v6631
    %v6646 = vsub.f32 %v6559, %v6634
    %v6647 = vsub.f32 %v6588, %v6637
    %v6648 = vsub.f32 %v6614, %v6640
    %v6649 = vmul.f32 %v6641, 1.442695
    %v6650 = vpow.pop %v6649
    %v6651 = vmul.f32 %v6642, 1.442695
    %v6652 = vpow.pop %v6651
    %v6653 = vmul.f32 %v6643, 1.442695
    %v6654 = vpow.pop %v6653
    %v6655 = vmul.f32 %v6644, 1.442695
    %v6656 = vpow.pop %v6655
    %v6657 = vmul.f32 %v6645, 1.442695
    %v6658 = vpow.pop %v6657
    %v6659 = vmul.f32 %v6646, 1.442695
    %v6660 = vpow.pop %v6659
    %v6661 = vmul.f32 %v6647, 1.442695
    %v6662 = vpow.pop %v6661
    %v6663 = vmul.f32 %v6648, 1.442695
    %v6664 = vpow.pop %v6663
    %v6665 = vsel %vm6616, %v6650, 0.0
    %6666 = vadd.xlane.f32.xlu0 %v6665
    %v6667 = vpop.xlane.xlu0 %6666
    %v6668 = vsel %vm6616, %v6652, 0.0
    %6669 = vadd.xlane.f32.xlu0 %v6668
    %v6670 = vpop.xlane.xlu0 %6669
    %v6671 = vsel %vm6616, %v6654, 0.0
    %6672 = vadd.xlane.f32.xlu0 %v6671
    %v6673 = vpop.xlane.xlu0 %6672
    %v6674 = vsel %vm6616, %v6656, 0.0
    %6675 = vadd.xlane.f32.xlu0 %v6674
    %v6676 = vpop.xlane.xlu0 %6675
    %v6677 = vsel %vm6616, %v6658, 0.0
    %6678 = vadd.xlane.f32.xlu0 %v6677
    %v6679 = vpop.xlane.xlu0 %6678
    %v6680 = vsel %vm6616, %v6660, 0.0
    %6681 = vadd.xlane.f32.xlu0 %v6680
    %v6682 = vpop.xlane.xlu0 %6681
    %v6683 = vsel %vm6616, %v6662, 0.0
    %6684 = vadd.xlane.f32.xlu0 %v6683
    %v6685 = vpop.xlane.xlu0 %6684
    %v6686 = vsel %vm6616, %v6664, 0.0
    %6687 = vadd.xlane.f32.xlu0 %v6686
    %v6688 = vpop.xlane.xlu0 %6687
    %v6689 = vlog2.pop %v6667
    %v6690 = vmul.f32 %v6689, 0.6931472
    %v6691 = vlog2.pop %v6670
    %v6692 = vmul.f32 %v6691, 0.6931472
    %v6693 = vlog2.pop %v6673
    %v6694 = vmul.f32 %v6693, 0.6931472
    %v6695 = vlog2.pop %v6676
    %v6696 = vmul.f32 %v6695, 0.6931472
    %v6697 = vlog2.pop %v6679
    %v6698 = vmul.f32 %v6697, 0.6931472
    %v6699 = vlog2.pop %v6682
    %v6700 = vmul.f32 %v6699, 0.6931472
    %v6701 = vlog2.pop %v6685
    %v6702 = vmul.f32 %v6701, 0.6931472
    %v6703 = vlog2.pop %v6688
    %v6704 = vmul.f32 %v6703, 0.6931472
    %v6705 = vadd.f32 %v6619, %v6690
    %v6706 = vadd.f32 %v6622, %v6692
    %v6707 = vadd.f32 %v6625, %v6694
    %v6708 = vadd.f32 %v6628, %v6696
    %v6709 = vadd.f32 %v6631, %v6698
    %v6710 = vadd.f32 %v6634, %v6700
    %v6711 = vadd.f32 %v6637, %v6702
    %v6712 = vadd.f32 %v6640, %v6704
    %v6713 = vsub.f32 1e-08, %v6705
    %v6714 = vsub.f32 1e-08, %v6706
    %v6715 = vsub.f32 1e-08, %v6707
    %v6716 = vsub.f32 1e-08, %v6708
    %v6717 = vsub.f32 1e-08, %v6709
    %v6718 = vsub.f32 1e-08, %v6710
    %v6719 = vsub.f32 1e-08, %v6711
    %v6720 = vsub.f32 1e-08, %v6712
    %v6721 = vadd.f32 %v6423, %v6713
    %v6722 = vadd.f32 %v6449, %v6714
    %v6723 = vadd.f32 %v6478, %v6715
    %v6724 = vadd.f32 %v6504, %v6716
    %v6725 = vadd.f32 %v6533, %v6717
    %v6726 = vadd.f32 %v6559, %v6718
    %v6727 = vadd.f32 %v6588, %v6719
    %v6728 = vadd.f32 %v6614, %v6720
    %v6729 = vsub.f32 %v6721, %v6721
    %v6730 = vsub.f32 %v6722, %v6722
    %v6731 = vsub.f32 %v6723, %v6723
    %v6732 = vsub.f32 %v6724, %v6724
    %v6733 = vsub.f32 %v6725, %v6725
    %v6734 = vsub.f32 %v6726, %v6726
    %v6735 = vsub.f32 %v6727, %v6727
    %v6736 = vsub.f32 %v6728, %v6728
    %v6737 = vmul.f32 %v6729, 1.442695
    %v6738 = vpow.pop %v6737
    %v6739 = vmul.f32 %v6730, 1.442695
    %v6740 = vpow.pop %v6739
    %v6741 = vmul.f32 %v6731, 1.442695
    %v6742 = vpow.pop %v6741
    %v6743 = vmul.f32 %v6732, 1.442695
    %v6744 = vpow.pop %v6743
    %v6745 = vmul.f32 %v6733, 1.442695
    %v6746 = vpow.pop %v6745
    %v6747 = vmul.f32 %v6734, 1.442695
    %v6748 = vpow.pop %v6747
    %v6749 = vmul.f32 %v6735, 1.442695
    %v6750 = vpow.pop %v6749
    %v6751 = vmul.f32 %v6736, 1.442695
    %v6752 = vpow.pop %v6751
    %v6753 = vadd.f32 %v6738, 0.0
    %v6754 = vadd.f32 %v6740, 0.0
    %v6755 = vadd.f32 %v6742, 0.0
    %v6756 = vadd.f32 %v6744, 0.0
    %v6757 = vadd.f32 %v6746, 0.0
    %v6758 = vadd.f32 %v6748, 0.0
    %v6759 = vadd.f32 %v6750, 0.0
    %v6760 = vadd.f32 %v6752, 0.0
    %v6761 = vlog2.pop %v6753
    %v6762 = vmul.f32 %v6761, 0.6931472
    %v6763 = vlog2.pop %v6754
    %v6764 = vmul.f32 %v6763, 0.6931472
    %v6765 = vlog2.pop %v6755
    %v6766 = vmul.f32 %v6765, 0.6931472
    %v6767 = vlog2.pop %v6756
    %v6768 = vmul.f32 %v6767, 0.6931472
    %v6769 = vlog2.pop %v6757
    %v6770 = vmul.f32 %v6769, 0.6931472
    %v6771 = vlog2.pop %v6758
    %v6772 = vmul.f32 %v6771, 0.6931472
    %v6773 = vlog2.pop %v6759
    %v6774 = vmul.f32 %v6773, 0.6931472
    %v6775 = vlog2.pop %v6760
    %v6776 = vmul.f32 %v6775, 0.6931472
    %v6777 = vadd.f32 %v6721, %v6762
    %v6778 = vadd.f32 %v6722, %v6764
    %v6779 = vadd.f32 %v6723, %v6766
    %v6780 = vadd.f32 %v6724, %v6768
    %v6781 = vadd.f32 %v6725, %v6770
    %v6782 = vadd.f32 %v6726, %v6772
    %v6783 = vadd.f32 %v6727, %v6774
    %v6784 = vadd.f32 %v6728, %v6776
    %v6785 = vsub.f32 -2.7725885, %v6777
    %v6786 = vsub.f32 -2.7725885, %v6778
    %v6787 = vsub.f32 -2.7725885, %v6779
    %v6788 = vsub.f32 -2.7725885, %v6780
    %v6789 = vsub.f32 -2.7725885, %v6781
    %v6790 = vsub.f32 -2.7725885, %v6782
    %v6791 = vsub.f32 -2.7725885, %v6783
    %v6792 = vsub.f32 -2.7725885, %v6784
    %v6793 = vadd.f32 %v6721, %v6785
    %v6794 = vadd.f32 %v6722, %v6786
    %v6795 = vadd.f32 %v6723, %v6787
    %v6796 = vadd.f32 %v6724, %v6788
    %v6797 = vadd.f32 %v6725, %v6789
    %v6798 = vadd.f32 %v6726, %v6790
    %v6799 = vadd.f32 %v6727, %v6791
    %v6800 = vadd.f32 %v6728, %v6792
    %v6801 = vmul.f32 %v6793, 1.442695
    %v6802 = vpow.pop %v6801
    %v6803 = vmul.f32 %v6794, 1.442695
    %v6804 = vpow.pop %v6803
    %v6805 = vmul.f32 %v6795, 1.442695
    %v6806 = vpow.pop %v6805
    %v6807 = vmul.f32 %v6796, 1.442695
    %v6808 = vpow.pop %v6807
    %v6809 = vmul.f32 %v6797, 1.442695
    %v6810 = vpow.pop %v6809
    %v6811 = vmul.f32 %v6798, 1.442695
    %v6812 = vpow.pop %v6811
    %v6813 = vmul.f32 %v6799, 1.442695
    %v6814 = vpow.pop %v6813
    %v6815 = vmul.f32 %v6800, 1.442695
    %v6816 = vpow.pop %v6815
    %v6818 = vsel %vm649, %v6802, 0
    %6820 = vmatpush.msra.mxu0 0.0
    %6821 = vmatpush.msra.mxu0 0.0
    %6822 = vmatpush.msra.mxu0 0.0
    %6823 = vmatpush.msra.mxu0 0.0
    %6824 = vmatpush.msra.mxu0 0.0
    %6825 = vmatpush.msra.mxu0 0.0
    %6826 = vmatpush.msra.mxu0 0.0
    %6827 = vmatpush.msra.mxu0 0.0
    %6828 = vmatpush.msra.mxu0 0.0
    %6829 = vmatpush.msra.mxu0 0.0
    %6830 = vmatpush.msra.mxu0 0.0
    %6831 = vmatpush.msra.mxu0 0.0
    %6832 = vmatpush.msra.mxu0 0.0
    %6833 = vmatpush.msra.mxu0 0.0
    %6834 = vmatpush.msra.mxu0 %v6283
    %6835 = vmatpush.msra.mxu0 %v6280
    %6836 = vmatmul.f32.gmra.mxu0 %v6818
    %v6837 = vpop.f32.mrf.mxu0
    %v6838 = vadd.f32 0.0, %v6837
    %6839 = vdwg.mxu0
    %v6841 = vsel %vm649, %v6804, 0
    %6843 = vmatpush.msra.mxu0 0.0
    %6844 = vmatpush.msra.mxu0 0.0
    %6845 = vmatpush.msra.mxu0 0.0
    %6846 = vmatpush.msra.mxu0 0.0
    %6847 = vmatpush.msra.mxu0 0.0
    %6848 = vmatpush.msra.mxu0 0.0
    %6849 = vmatpush.msra.mxu0 0.0
    %6850 = vmatpush.msra.mxu0 0.0
    %6851 = vmatpush.msra.mxu0 0.0
    %6852 = vmatpush.msra.mxu0 0.0
    %6853 = vmatpush.msra.mxu0 0.0
    %6854 = vmatpush.msra.mxu0 0.0
    %6855 = vmatpush.msra.mxu0 0.0
    %6856 = vmatpush.msra.mxu0 0.0
    %6857 = vmatpush.msra.mxu0 %v6289
    %6858 = vmatpush.msra.mxu0 %v6286
    %6859 = vmatmul.f32.gmra.mxu0 %v6841
    %v6860 = vpop.f32.mrf.mxu0
    %v6861 = vadd.f32 0.0, %v6860
    %6862 = vdwg.mxu0
    %v6864 = vsel %vm649, %v6806, 0
    %6866 = vmatpush.msra.mxu0 0.0
    %6867 = vmatpush.msra.mxu0 0.0
    %6868 = vmatpush.msra.mxu0 0.0
    %6869 = vmatpush.msra.mxu0 0.0
    %6870 = vmatpush.msra.mxu0 0.0
    %6871 = vmatpush.msra.mxu0 0.0
    %6872 = vmatpush.msra.mxu0 0.0
    %6873 = vmatpush.msra.mxu0 0.0
    %6874 = vmatpush.msra.mxu0 0.0
    %6875 = vmatpush.msra.mxu0 0.0
    %6876 = vmatpush.msra.mxu0 0.0
    %6877 = vmatpush.msra.mxu0 0.0
    %6878 = vmatpush.msra.mxu0 0.0
    %6879 = vmatpush.msra.mxu0 0.0
    %6880 = vmatpush.msra.mxu0 %v6318
    %6881 = vmatpush.msra.mxu0 %v6315
    %6882 = vmatmul.f32.gmra.mxu0 %v6864
    %v6883 = vpop.f32.mrf.mxu0
    %v6884 = vadd.f32 0.0, %v6883
    %6885 = vdwg.mxu0
    %v6887 = vsel %vm649, %v6808, 0
    %6889 = vmatpush.msra.mxu0 0.0
    %6890 = vmatpush.msra.mxu0 0.0
    %6891 = vmatpush.msra.mxu0 0.0
    %6892 = vmatpush.msra.mxu0 0.0
    %6893 = vmatpush.msra.mxu0 0.0
    %6894 = vmatpush.msra.mxu0 0.0
    %6895 = vmatpush.msra.mxu0 0.0
    %6896 = vmatpush.msra.mxu0 0.0
    %6897 = vmatpush.msra.mxu0 0.0
    %6898 = vmatpush.msra.mxu0 0.0
    %6899 = vmatpush.msra.mxu0 0.0
    %6900 = vmatpush.msra.mxu0 0.0
    %6901 = vmatpush.msra.mxu0 0.0
    %6902 = vmatpush.msra.mxu0 0.0
    %6903 = vmatpush.msra.mxu0 %v6324
    %6904 = vmatpush.msra.mxu0 %v6321
    %6905 = vmatmul.f32.gmra.mxu0 %v6887
    %v6906 = vpop.f32.mrf.mxu0
    %v6907 = vadd.f32 0.0, %v6906
    %6908 = vdwg.mxu0
    %v6910 = vsel %vm649, %v6810, 0
    %6912 = vmatpush.msra.mxu0 0.0
    %6913 = vmatpush.msra.mxu0 0.0
    %6914 = vmatpush.msra.mxu0 0.0
    %6915 = vmatpush.msra.mxu0 0.0
    %6916 = vmatpush.msra.mxu0 0.0
    %6917 = vmatpush.msra.mxu0 0.0
    %6918 = vmatpush.msra.mxu0 0.0
    %6919 = vmatpush.msra.mxu0 0.0
    %6920 = vmatpush.msra.mxu0 0.0
    %6921 = vmatpush.msra.mxu0 0.0
    %6922 = vmatpush.msra.mxu0 0.0
    %6923 = vmatpush.msra.mxu0 0.0
    %6924 = vmatpush.msra.mxu0 0.0
    %6925 = vmatpush.msra.mxu0 0.0
    %6926 = vmatpush.msra.mxu0 %v6353
    %6927 = vmatpush.msra.mxu0 %v6350
    %6928 = vmatmul.f32.gmra.mxu0 %v6910
    %v6929 = vpop.f32.mrf.mxu0
    %v6930 = vadd.f32 0.0, %v6929
    %6931 = vdwg.mxu0
    %v6933 = vsel %vm649, %v6812, 0
    %6935 = vmatpush.msra.mxu0 0.0
    %6936 = vmatpush.msra.mxu0 0.0
    %6937 = vmatpush.msra.mxu0 0.0
    %6938 = vmatpush.msra.mxu0 0.0
    %6939 = vmatpush.msra.mxu0 0.0
    %6940 = vmatpush.msra.mxu0 0.0
    %6941 = vmatpush.msra.mxu0 0.0
    %6942 = vmatpush.msra.mxu0 0.0
    %6943 = vmatpush.msra.mxu0 0.0
    %6944 = vmatpush.msra.mxu0 0.0
    %6945 = vmatpush.msra.mxu0 0.0
    %6946 = vmatpush.msra.mxu0 0.0
    %6947 = vmatpush.msra.mxu0 0.0
    %6948 = vmatpush.msra.mxu0 0.0
    %6949 = vmatpush.msra.mxu0 %v6359
    %6950 = vmatpush.msra.mxu0 %v6356
    %6951 = vmatmul.f32.gmra.mxu0 %v6933
    %v6952 = vpop.f32.mrf.mxu0
    %v6953 = vadd.f32 0.0, %v6952
    %6954 = vdwg.mxu0
    %v6956 = vsel %vm649, %v6814, 0
    %6958 = vmatpush.msra.mxu0 0.0
    %6959 = vmatpush.msra.mxu0 0.0
    %6960 = vmatpush.msra.mxu0 0.0
    %6961 = vmatpush.msra.mxu0 0.0
    %6962 = vmatpush.msra.mxu0 0.0
    %6963 = vmatpush.msra.mxu0 0.0
    %6964 = vmatpush.msra.mxu0 0.0
    %6965 = vmatpush.msra.mxu0 0.0
    %6966 = vmatpush.msra.mxu0 0.0
    %6967 = vmatpush.msra.mxu0 0.0
    %6968 = vmatpush.msra.mxu0 0.0
    %6969 = vmatpush.msra.mxu0 0.0
    %6970 = vmatpush.msra.mxu0 0.0
    %6971 = vmatpush.msra.mxu0 0.0
    %6972 = vmatpush.msra.mxu0 %v6388
    %6973 = vmatpush.msra.mxu0 %v6385
    %6974 = vmatmul.f32.gmra.mxu0 %v6956
    %v6975 = vpop.f32.mrf.mxu0
    %v6976 = vadd.f32 0.0, %v6975
    %6977 = vdwg.mxu0
    %v6979 = vsel %vm649, %v6816, 0
    %6981 = vmatpush.msra.mxu0 0.0
    %6982 = vmatpush.msra.mxu0 0.0
    %6983 = vmatpush.msra.mxu0 0.0
    %6984 = vmatpush.msra.mxu0 0.0
    %6985 = vmatpush.msra.mxu0 0.0
    %6986 = vmatpush.msra.mxu0 0.0
    %6987 = vmatpush.msra.mxu0 0.0
    %6988 = vmatpush.msra.mxu0 0.0
    %6989 = vmatpush.msra.mxu0 0.0
    %6990 = vmatpush.msra.mxu0 0.0
    %6991 = vmatpush.msra.mxu0 0.0
    %6992 = vmatpush.msra.mxu0 0.0
    %6993 = vmatpush.msra.mxu0 0.0
    %6994 = vmatpush.msra.mxu0 0.0
    %6995 = vmatpush.msra.mxu0 %v6394
    %6996 = vmatpush.msra.mxu0 %v6391
    %6997 = vmatmul.f32.gmra.mxu0 %v6979
    %v6998 = vpop.f32.mrf.mxu0
    %v6999 = vadd.f32 0.0, %v6998
    %7000 = vdwg.mxu0
    %v7001 = vadd.f32 %v6027, %v6838
    %v7002 = vadd.f32 %v6027, %v6861
    %v7003 = vadd.f32 %v6052, %v6884
    %v7004 = vadd.f32 %v6052, %v6907
    %v7005 = vadd.f32 %v6077, %v6930
    %v7006 = vadd.f32 %v6077, %v6953
    %v7007 = vadd.f32 %v6102, %v6976
    %v7008 = vadd.f32 %v6102, %v6999
    %7011 = vrot.lane.b32.xlu0 %v7003, 8
    %v7012 = vpop.permute.xlu0 %7011
    %7013 = vrot.lane.b32.xlu0 %v7004, 8
    %v7014 = vpop.permute.xlu0 %7013
    %7019 = vrot.lane.b32.xlu0 %v7005, 16
    %v7020 = vpop.permute.xlu0 %7019
    %7021 = vrot.lane.b32.xlu0 %v7006, 16
    %v7022 = vpop.permute.xlu0 %7021
    %7027 = vrot.lane.b32.xlu0 %v7007, 24
    %v7028 = vpop.permute.xlu0 %7027
    %7029 = vrot.lane.b32.xlu0 %v7008, 24
    %v7030 = vpop.permute.xlu0 %7029
    %v7033 = vsel %vm428, %v7001, %v7012
    %v7034 = vsel %vm428, %v7002, %v7014
    %v7035 = vsel %vm649, %v7033, %v7020
    %v7036 = vsel %vm649, %v7034, %v7022
    %v7037 = vsel %vm1174, %v7035, %v7028
    %v7038 = vsel %vm1174, %v7036, %v7030
    %v7040 = vrot.slane %v7038, 7
    %vm7042 = vcmask 1040384
    %v7043 = vsel %vm7042, %v7037, %v7040
    %v7044 = vld [vmem:[%s3 + $0xa0] sm:$0xff]
    %v7045 = vld [vmem:[%s3 + $0xa8] sm:$0xff]
    %v7046 = vld [vmem:[%s3 + $0xb0] sm:$0xff]
    %v7047 = vld [vmem:[%s3 + $0xb8] sm:$0xff]
    %v7048 = vld [vmem:[%s3 + $0xc0] sm:$0x1]
    %v7049 = vld [vmem:[%s3 + $0xc1] sm:$0x1]
    %v7050 = vld [vmem:[%s3 + $0xc2] sm:$0x1]
    %v7051 = vld [vmem:[%s3 + $0xc3] sm:$0x1]
    %v7052 = vld [vmem:[%s3 + $0xc4] sm:$0x1]
    %vm7053 = vcmask 254976
    %v7054 = vsel %vm7053, %v7043, 0.0
    %7055 = vadd.xlane.f32.xlu0 %v7054
    %v7056 = vpop.xlane.xlu0 %7055
    %v7057 = vmul.f32 %v7056, %v1198
    %v7058 = vsub.f32 %v7043, %v7057
    %v7059 = vmul.f32 %v7058, %v7058
    %v7060 = vsel %vm7053, %v7059, 0.0
    %7061 = vadd.xlane.f32.xlu0 %v7060
    %v7062 = vpop.xlane.xlu0 %7061
    %v7063 = vmul.f32 %v7062, %v1198
    %v7064 = vadd.f32 %v7063, 1e-05
    %v7065 = vrsqrt.pop %v7064
    %v7066 = vmul.f32 %v7065, %v7064
    %v7067 = vmul.f32 %v7066, %v7065
    %v7068 = vmul.f32 0.5, %v7067
    %v7069 = vsub.f32 1.5, %v7068
    %v7070 = vmul.f32 %v7065, %v7069
    %vm7071 = vweird.f32 %v7064
    %vm7072 = vweird.f32 %v7065
    %vm7073 = vmor %vm7071, %vm7072
    %v7074 = vsel %vm7073, %v7065, %v7070
    %v7075 = vmul.f32 %v7058, %v7074
    %v7076 = vperm.slane %v7049, 0
    %v7077 = vmul.f32 %v7075, %v7076
    %v7078 = vperm.slane %v7050, 0
    %v7079 = vadd.f32 %v7077, %v7078
    %v7080 = vperm.slane %v7048, 0
    %v7082 = vsel %vm34, %v7079, 0
    %7084 = vmatpush.msra.mxu0 0.0
    %7085 = vmatpush.msra.mxu0 0.0
    %7086 = vmatpush.msra.mxu0 0.0
    %7087 = vmatpush.msra.mxu0 0.0
    %7088 = vmatpush.msra.mxu0 0.0
    %7089 = vmatpush.msra.mxu0 0.0
    %7090 = vmatpush.msra.mxu0 0.0
    %7091 = vmatpush.msra.mxu0 0.0
    %7092 = vmatpush.msra.mxu0 0.0
    %7093 = vmatpush.msra.mxu0 0.0
    %7094 = vmatpush.msra.mxu0 0.0
    %7095 = vmatpush.msra.mxu0 0.0
    %7096 = vmatpush.msra.mxu0 %v7047
    %7097 = vmatpush.msra.mxu0 %v7046
    %7098 = vmatpush.msra.mxu0 %v7045
    %7099 = vmatpush.msra.mxu0 %v7044
    %7100 = vmatmul.f32.gmra.mxu0 %v7082
    %v7101 = vpop.f32.mrf.mxu0
    %v7102 = vadd.f32 %v7080, %v7101
    %7103 = vdwg.mxu0
    %v7104 = vmax.f32 %v7102, 0.0
    %v7105 = vadd.f32 %v7079, %v7104
    %v7106 = vsel %vm7053, %v7105, 0.0
    %7107 = vadd.xlane.f32.xlu0 %v7106
    %v7108 = vpop.xlane.xlu0 %7107
    %v7109 = vmul.f32 %v7108, %v1198
    %v7110 = vsub.f32 %v7105, %v7109
    %v7111 = vmul.f32 %v7110, %v7110
    %v7112 = vsel %vm7053, %v7111, 0.0
    %7113 = vadd.xlane.f32.xlu0 %v7112
    %v7114 = vpop.xlane.xlu0 %7113
    %v7115 = vmul.f32 %v7114, %v1198
    %v7116 = vadd.f32 %v7115, 1e-05
    %v7117 = vrsqrt.pop %v7116
    %v7118 = vmul.f32 %v7117, %v7116
    %v7119 = vmul.f32 %v7118, %v7117
    %v7120 = vmul.f32 0.5, %v7119
    %v7121 = vsub.f32 1.5, %v7120
    %v7122 = vmul.f32 %v7117, %v7121
    %vm7123 = vweird.f32 %v7116
    %vm7124 = vweird.f32 %v7117
    %vm7125 = vmor %vm7123, %vm7124
    %v7126 = vsel %vm7125, %v7117, %v7122
    %v7127 = vmul.f32 %v7110, %v7126
    %v7128 = vperm.slane %v7051, 0
    %v7129 = vmul.f32 %v7127, %v7128
    %v7130 = vperm.slane %v7052, 0
    %v7131 = vadd.f32 %v7129, %v7130
    %v7132 = vld [vmem:[%s4] sm:$0xff]
    %v7133 = vld [vmem:[%s4 + $0x8] sm:$0xff]
    %v7134 = vld [vmem:[%s4 + $0x10] sm:$0xff]
    %v7135 = vld [vmem:[%s4 + $0x18] sm:$0xff]
    %v7136 = vld [vmem:[%s4 + $0x20] sm:$0x1]
    %v7137 = vperm.slane %v7136, 0
    %v7139 = vsel %vm34, %v7131, 0
    %7141 = vmatpush.msra.mxu0 0.0
    %7142 = vmatpush.msra.mxu0 0.0
    %7143 = vmatpush.msra.mxu0 0.0
    %7144 = vmatpush.msra.mxu0 0.0
    %7145 = vmatpush.msra.mxu0 0.0
    %7146 = vmatpush.msra.mxu0 0.0
    %7147 = vmatpush.msra.mxu0 0.0
    %7148 = vmatpush.msra.mxu0 0.0
    %7149 = vmatpush.msra.mxu0 0.0
    %7150 = vmatpush.msra.mxu0 0.0
    %7151 = vmatpush.msra.mxu0 0.0
    %7152 = vmatpush.msra.mxu0 0.0
    %7153 = vmatpush.msra.mxu0 %v7135
    %7154 = vmatpush.msra.mxu0 %v7134
    %7155 = vmatpush.msra.mxu0 %v7133
    %7156 = vmatpush.msra.mxu0 %v7132
    %7157 = vmatmul.f32.gmra.mxu0 %v7139
    %v7158 = vpop.f32.mrf.mxu0
    %v7159 = vadd.f32 %v7137, %v7158
    %7160 = vdwg.mxu0
    %7161 = vst [vmem:[#allocation2] sm:$0x3] %v7159
    // Predicated region
    $region22: #{model_net_sink.1} parent=1 // pred_check
      _
    $region23: #{model_net_sink.1} parent=1 // pred_check_branch
      %7163 = sbr.rel (0) target = $region25
    $region24: #{model_net_sink.1} parent=1 // pred_region
      %7165 = vsyncadd [#allocation3], 0
      %s7167 = sshll.u32 [#allocation2], 4
      %s7168 = int_to_ptr.vmem [resolvable:$true] %s7167
      %s7169 = sshll.u32 %s5, 4
      %s7170 = int_to_ptr.hbm [resolvable:$true] %s7169
      %7172 = dma.vmem_to_hbm [thread:$0]  %s7168, 32, %s7170, [#allocation3]
    $region25: #{model_net_sink.1} parent=1 // pred_fallthru
      _
    // Predicated region
    $region26: #{model_net_sink.1} parent=1 // pred_check
      _
    $region27: #{model_net_sink.1} parent=1 // pred_check_branch
      %7174 = sbr.rel (0) target = $region29
    $region28: #{model_net_sink.1} parent=1 // pred_region
      %7176 = dma.done [#allocation3], 32
    $region29: #{model_net_sink.1} parent=1 // pred_fallthru
      _
    %7177 = vsyncpa [#allocation3], 1

</llo_original>
